<compile_context>
chip_gen: v7x
topology: tpu7x:2x2x1
jax: 0.10.0
libtpu: 0.0.40
codegen_flags: <defaults>
</compile_context>

<pallas_src>
import jax
import jax.numpy as jnp
from jax.experimental import pallas as pl
from jax.experimental.pallas import tpu as pltpu


DILATIONS = (6, 12, 18)
PAD = max(DILATIONS)                 # spatial zero-padding applied in the wrapper
_PREC = jax.lax.Precision.HIGHEST    # demo: exact f32 numerics on the MXU


def _dot(a, b):
    return jnp.dot(a, b, precision=_PREC, preferred_element_type=jnp.float32)


def _round_up(x, m):
    return (x + m - 1) // m * m


def _make_aspp2_kernel(H, W, Wp, L_pad, Cin):
    """Build the ASPP2 kernel for a fixed (static) spatial geometry."""
    q0 = PAD * Wp + PAD              # flat index (padded space) of output (0, 0)
    inv_hw = 1.0 / float(H * W)
    # Tap order MUST match the wrapper's packed-weight column blocks:
    #   [1x1 conv] + [dil 6 taps (r,s) row-major] + [dil 12 ...] + [dil 18 ...]
    offsets = [0] + [kh * d * Wp + kw * d
                     for d in DILATIONS
                     for kh in (-1, 0, 1)
                     for kw in (-1, 0, 1)]
    n_taps = len(offsets)            # 28

    def kernel(x_ref, wpk_ref, wg_ref, b_ref, o_ref, slab_ref):
        # x_ref   : (Cin, Npf_pad)     zero-padded, flattened spatial (lane axis)
        # wpk_ref : (Cout, 28*Cin)     final-1x1-folded weights, all taps stacked on K
        # wg_ref  : (Cout, Cin)        final-1x1-folded GAP-branch 1x1 weight
        # b_ref   : (Cout, 1)          fully folded bias
        # o_ref   : (Cout, L_pad)      lane-dense output slab
        # slab_ref: (28*Cin, L_pad)    VMEM scratch: shifted-slice slab (K axis)

        # Build the K-stacked slab: one contiguous static lane-slice per tap.
        for j, off in enumerate(offsets):
            slab_ref[j * Cin:(j + 1) * Cin, :] = \
                x_ref[:, q0 + off:q0 + off + L_pad]

        # Single large MXU contraction: 1x1 + 27 dilated taps, final 1x1 folded in.
        acc = _dot(wpk_ref[...], slab_ref[...])                    # (Cout, L_pad)

        # Global-average-pool branch. Sum only the contiguous output window;
        # everything in it that is not a real pixel is zero padding, so the sum
        # equals the true image sum.  Bilinear 1x1 -> HxW upsample
        # (align_corners=True) is a constant broadcast, so this stays (Cout, 1).
        pooled = jnp.sum(x_ref[:, q0:q0 + L_pad], axis=1,
                         keepdims=True) * inv_hw                   # (Cin, 1)
        extra = _dot(wg_ref[...], pooled) + b_ref[...]             # (Cout, 1)

        o_ref[...] = (acc + extra).astype(o_ref.dtype)

    return kernel, n_taps


def aspp2_forward(x, params):
    """ASPP2 forward. x: (B, Cin, H, W) float32."""
    (w_gap, b_gap, w_a1, b_a1, w_a6, b_a6,
     w_a12, b_a12, w_a18, b_a18, w_out, b_out) = params

    B, Cin, H, W = x.shape
    Cout = w_gap.shape[0]
    Hp, Wp = H + 2 * PAD, W + 2 * PAD
    q0 = PAD * Wp + PAD
    # Lane-dense output length: multiple of 128 and >= H*Wp so the wrapper can
    # reshape without an extra pad pass (and >= (H-1)*Wp + W, the valid span).
    L_pad = _round_up(H * Wp, 128)
    # Flat padded-input length: must cover the largest shifted read.
    Npf_pad = _round_up(2 * q0 + L_pad, 128)

    # Zero-pad spatial dims, flatten to a single padded-spatial (lane) axis,
    # then extend with zeros so every shifted slice of length L_pad is in-range.
    x_pf = jnp.pad(x, ((0, 0), (0, 0), (PAD, PAD), (PAD, PAD))).reshape(B, Cin, Hp * Wp)
    x_pf = jnp.pad(x_pf, ((0, 0), (0, 0), (0, Npf_pad - Hp * Wp)))

    # --- fold conv_1x1_output into the branch weights / biases (static, XLA-side) ---
    # Concat order in the PyTorch module: [img, a1, a6, a12, a18].
    wf = w_out.reshape(Cout, 5, Cout)
    fold = lambda a, b: jnp.dot(a, b, precision=_PREC)
    wg_f = fold(wf[:, 0], w_gap.reshape(Cout, Cin))                 # (Cout, Cin)
    blocks = [fold(wf[:, 1], w_a1.reshape(Cout, Cin))]              # 1x1 branch
    for i, wd in enumerate((w_a6, w_a12, w_a18)):
        taps = wd.transpose(2, 3, 0, 1).reshape(9, Cout, Cin)       # (r,s) row-major
        blocks += [fold(wf[:, 2 + i], taps[t]) for t in range(9)]
    w_pk = jnp.concatenate(blocks, axis=1)                          # (Cout, 28*Cin)
    b_f = (b_out
           + fold(wf[:, 0], b_gap) + fold(wf[:, 1], b_a1)
           + fold(wf[:, 2], b_a6) + fold(wf[:, 3], b_a12)
           + fold(wf[:, 4], b_a18)).reshape(Cout, 1)                # (Cout, 1)

    kernel, n_taps = _make_aspp2_kernel(H, W, Wp, L_pad, Cin)

    out_flat = pl.pallas_call(
        kernel,
        out_shape=jax.ShapeDtypeStruct((B, Cout, L_pad), x.dtype),
        grid_spec=pltpu.PrefetchScalarGridSpec(
            num_scalar_prefetch=0,
            grid=(B,),
            in_specs=[
                pl.BlockSpec((pl.Squeezed(), Cin, Npf_pad), lambda b: (b, 0, 0)),
                pl.BlockSpec((Cout, n_taps * Cin), lambda b: (0, 0)),
                pl.BlockSpec((Cout, Cin), lambda b: (0, 0)),
                pl.BlockSpec((Cout, 1), lambda b: (0, 0)),
            ],
            out_specs=pl.BlockSpec((pl.Squeezed(), Cout, L_pad), lambda b: (b, 0, 0)),
            scratch_shapes=[pltpu.VMEM((n_taps * Cin, L_pad), jnp.float32)],
        ),
        compiler_params=pltpu.CompilerParams(
            dimension_semantics=("parallel",),        # batch across TensorCores
            # v5e/v6e: can be raised toward ~96 MiB for bigger blocks;
            # v7x: keep <= ~48 MiB and re-tile spatially instead (see TODO above).
            vmem_limit_bytes=32 * 1024 * 1024,
        ),
    )(x_pf, w_pk, wg_f, b_f)

    # Lane q maps to (h, w) = (q // Wp, q % Wp) for w < W; L_pad >= H*Wp so a
    # plain slice + reshape recovers NCHW — no output pad pass needed.
    return out_flat[:, :, :H * Wp].reshape(B, Cout, H, Wp)[:, :, :, :W]


def reference(x, params):
    """Pure-JAX ASPP2 (matches the PyTorch forward)."""
    (w_gap, b_gap, w_a1, b_a1, w_a6, b_a6,
     w_a12, b_a12, w_a18, b_a18, w_out, b_out) = params
    B, _, H, W = x.shape
    Cout = w_gap.shape[0]
    dn = ('NCHW', 'OIHW', 'NCHW')

    def conv(inp, w, b, dil=1, pad=0):
        y = jax.lax.conv_general_dilated(
            inp, w, window_strides=(1, 1),
            padding=((pad, pad), (pad, pad)),
            rhs_dilation=(dil, dil),
            dimension_numbers=dn,
            precision=_PREC)
        return y + b[None, :, None, None]

    pooled = x.mean(axis=(2, 3), keepdims=True)            # AdaptiveAvgPool2d(1)
    img = conv(pooled, w_gap, b_gap)                        # (B, Cout, 1, 1)
    img = jnp.broadcast_to(img, (B, Cout, H, W))            # bilinear 1x1->HxW
    a1 = conv(x, w_a1, b_a1)
    a6 = conv(x, w_a6, b_a6, dil=6, pad=6)
    a12 = conv(x, w_a12, b_a12, dil=12, pad=12)
    a18 = conv(x, w_a18, b_a18, dil=18, pad=18)
    cat = jnp.concatenate([img, a1, a6, a12, a18], axis=1)
    return conv(cat, w_out, b_out)


if __name__ == "__main__":
    B, Cin, Cout, H, W = 2, 8, 8, 16, 16

    key = jax.random.PRNGKey(0)
    ks = jax.random.split(key, 13)

    def rnd(k, shape, scale=0.1):
        return jax.random.normal(k, shape, dtype=jnp.float32) * scale

    x = jax.random.normal(ks[0], (B, Cin, H, W), dtype=jnp.float32)
    w_gap, b_gap = rnd(ks[1], (Cout, Cin, 1, 1)), rnd(ks[2], (Cout,))
    w_a1, b_a1 = rnd(ks[3], (Cout, Cin, 1, 1)), rnd(ks[4], (Cout,))
    w_a6, b_a6 = rnd(ks[5], (Cout, Cin, 3, 3)), rnd(ks[6], (Cout,))
    w_a12, b_a12 = rnd(ks[7], (Cout, Cin, 3, 3)), rnd(ks[8], (Cout,))
    w_a18, b_a18 = rnd(ks[9], (Cout, Cin, 3, 3)), rnd(ks[10], (Cout,))
    w_out, b_out = rnd(ks[11], (Cout, 5 * Cout, 1, 1)), rnd(ks[12], (Cout,))
    params = (w_gap, b_gap, w_a1, b_a1, w_a6, b_a6,
              w_a12, b_a12, w_a18, b_a18, w_out, b_out)

    out = aspp2_forward(x, params)
    out = jax.block_until_ready(out)

    ref = reference(x, params)
    assert out.shape == (B, Cout, H, W), out.shape
    max_err = float(jnp.max(jnp.abs(out - ref)))
    assert jnp.allclose(out, ref, atol=5e-3, rtol=5e-3), f"mismatch vs reference: {max_err}"
    print("KERNEL_OK")
</pallas_src>

<mosaic_0001>
module attributes {stable_mosaic.version = 11 : i64} {
  func.func @kernel(%arg0: i32, %arg1: memref<1x8x2816xf32, #tpu.memory_space<vmem>>, %arg2: memref<8x224xf32, #tpu.memory_space<vmem>>, %arg3: memref<8x8xf32, #tpu.memory_space<vmem>>, %arg4: memref<8x1xf32, #tpu.memory_space<vmem>>, %arg5: memref<1x8x896xf32, #tpu.memory_space<vmem>>, %arg6: memref<224x896xf32, #tpu.memory_space<vmem>>) attributes {dimension_semantics = [#tpu.dimension_semantics<parallel>], iteration_bounds = array<i64: 2>, scalar_prefetch = 0 : i64, scratch_operands = 1 : i64, tpu.core_type = #tpu.core_type<tc>, window_params = [{transform_indices = @transform_0, window_bounds = array<i64: 1, 8, 2816>}, {pipeline_mode = #tpu.pipeline_mode<synchronous>, transform_indices = @transform_1, window_bounds = array<i64: 8, 224>}, {pipeline_mode = #tpu.pipeline_mode<synchronous>, transform_indices = @transform_2, window_bounds = array<i64: 8, 8>}, {pipeline_mode = #tpu.pipeline_mode<synchronous>, transform_indices = @transform_3, window_bounds = array<i64: 8, 1>}, {transform_indices = @transform_4, window_bounds = array<i64: 1, 8, 896>}]} {
    %c0 = arith.constant 0 : index
    %c0_0 = arith.constant 0 : index
    %c954 = arith.constant 954 : index
    %0 = vector.load %arg1[%c0, %c0_0, %c954] : memref<1x8x2816xf32, #tpu.memory_space<vmem>>, vector<1x8x896xf32>
    %1 = vector.shape_cast %0 : vector<1x8x896xf32> to vector<8x896xf32>
    %c0_1 = arith.constant 0 : index
    %c0_2 = arith.constant 0 : index
    %2 = vector.load %arg6[%c0_1, %c0_2] : memref<224x896xf32, #tpu.memory_space<vmem>>, vector<8x896xf32>
    tpu.vector_store %arg6[%c0_1, %c0_2], %1 {strides = array<i32>} : memref<224x896xf32, #tpu.memory_space<vmem>>, vector<8x896xf32>,
    %c0_3 = arith.constant 0 : index
    %c0_4 = arith.constant 0 : index
    %c636 = arith.constant 636 : index
    %3 = vector.load %arg1[%c0_3, %c0_4, %c636] : memref<1x8x2816xf32, #tpu.memory_space<vmem>>, vector<1x8x896xf32>
    %4 = vector.shape_cast %3 : vector<1x8x896xf32> to vector<8x896xf32>
    %c8 = arith.constant 8 : index
    %c0_5 = arith.constant 0 : index
    %5 = vector.load %arg6[%c8, %c0_5] : memref<224x896xf32, #tpu.memory_space<vmem>>, vector<8x896xf32>
    tpu.vector_store %arg6[%c8, %c0_5], %4 {strides = array<i32>} : memref<224x896xf32, #tpu.memory_space<vmem>>, vector<8x896xf32>,
    %c0_6 = arith.constant 0 : index
    %c0_7 = arith.constant 0 : index
    %c642 = arith.constant 642 : index
    %6 = vector.load %arg1[%c0_6, %c0_7, %c642] : memref<1x8x2816xf32, #tpu.memory_space<vmem>>, vector<1x8x896xf32>
    %7 = vector.shape_cast %6 : vector<1x8x896xf32> to vector<8x896xf32>
    %c16 = arith.constant 16 : index
    %c0_8 = arith.constant 0 : index
    %8 = vector.load %arg6[%c16, %c0_8] : memref<224x896xf32, #tpu.memory_space<vmem>>, vector<8x896xf32>
    tpu.vector_store %arg6[%c16, %c0_8], %7 {strides = array<i32>} : memref<224x896xf32, #tpu.memory_space<vmem>>, vector<8x896xf32>,
    %c0_9 = arith.constant 0 : index
    %c0_10 = arith.constant 0 : index
    %c648 = arith.constant 648 : index
    %9 = vector.load %arg1[%c0_9, %c0_10, %c648] : memref<1x8x2816xf32, #tpu.memory_space<vmem>>, vector<1x8x896xf32>
    %10 = vector.shape_cast %9 : vector<1x8x896xf32> to vector<8x896xf32>
    %c24 = arith.constant 24 : index
    %c0_11 = arith.constant 0 : index
    %11 = vector.load %arg6[%c24, %c0_11] : memref<224x896xf32, #tpu.memory_space<vmem>>, vector<8x896xf32>
    tpu.vector_store %arg6[%c24, %c0_11], %10 {strides = array<i32>} : memref<224x896xf32, #tpu.memory_space<vmem>>, vector<8x896xf32>,
    %c0_12 = arith.constant 0 : index
    %c0_13 = arith.constant 0 : index
    %c948 = arith.constant 948 : index
    %12 = vector.load %arg1[%c0_12, %c0_13, %c948] : memref<1x8x2816xf32, #tpu.memory_space<vmem>>, vector<1x8x896xf32>
    %13 = vector.shape_cast %12 : vector<1x8x896xf32> to vector<8x896xf32>
    %c32 = arith.constant 32 : index
    %c0_14 = arith.constant 0 : index
    %14 = vector.load %arg6[%c32, %c0_14] : memref<224x896xf32, #tpu.memory_space<vmem>>, vector<8x896xf32>
    tpu.vector_store %arg6[%c32, %c0_14], %13 {strides = array<i32>} : memref<224x896xf32, #tpu.memory_space<vmem>>, vector<8x896xf32>,
    %c0_15 = arith.constant 0 : index
    %c0_16 = arith.constant 0 : index
    %c954_17 = arith.constant 954 : index
    %15 = vector.load %arg1[%c0_15, %c0_16, %c954_17] : memref<1x8x2816xf32, #tpu.memory_space<vmem>>, vector<1x8x896xf32>
    %16 = vector.shape_cast %15 : vector<1x8x896xf32> to vector<8x896xf32>
    %c40 = arith.constant 40 : index
    %c0_18 = arith.constant 0 : index
    %17 = vector.load %arg6[%c40, %c0_18] : memref<224x896xf32, #tpu.memory_space<vmem>>, vector<8x896xf32>
    tpu.vector_store %arg6[%c40, %c0_18], %16 {strides = array<i32>} : memref<224x896xf32, #tpu.memory_space<vmem>>, vector<8x896xf32>,
    %c0_19 = arith.constant 0 : index
    %c0_20 = arith.constant 0 : index
    %c960 = arith.constant 960 : index
    %18 = vector.load %arg1[%c0_19, %c0_20, %c960] : memref<1x8x2816xf32, #tpu.memory_space<vmem>>, vector<1x8x896xf32>
    %19 = vector.shape_cast %18 : vector<1x8x896xf32> to vector<8x896xf32>
    %c48 = arith.constant 48 : index
    %c0_21 = arith.constant 0 : index
    %20 = vector.load %arg6[%c48, %c0_21] : memref<224x896xf32, #tpu.memory_space<vmem>>, vector<8x896xf32>
    tpu.vector_store %arg6[%c48, %c0_21], %19 {strides = array<i32>} : memref<224x896xf32, #tpu.memory_space<vmem>>, vector<8x896xf32>,
    %c0_22 = arith.constant 0 : index
    %c0_23 = arith.constant 0 : index
    %c1260 = arith.constant 1260 : index
    %21 = vector.load %arg1[%c0_22, %c0_23, %c1260] : memref<1x8x2816xf32, #tpu.memory_space<vmem>>, vector<1x8x896xf32>
    %22 = vector.shape_cast %21 : vector<1x8x896xf32> to vector<8x896xf32>
    %c56 = arith.constant 56 : index
    %c0_24 = arith.constant 0 : index
    %23 = vector.load %arg6[%c56, %c0_24] : memref<224x896xf32, #tpu.memory_space<vmem>>, vector<8x896xf32>
    tpu.vector_store %arg6[%c56, %c0_24], %22 {strides = array<i32>} : memref<224x896xf32, #tpu.memory_space<vmem>>, vector<8x896xf32>,
    %c0_25 = arith.constant 0 : index
    %c0_26 = arith.constant 0 : index
    %c1266 = arith.constant 1266 : index
    %24 = vector.load %arg1[%c0_25, %c0_26, %c1266] : memref<1x8x2816xf32, #tpu.memory_space<vmem>>, vector<1x8x896xf32>
    %25 = vector.shape_cast %24 : vector<1x8x896xf32> to vector<8x896xf32>
    %c64 = arith.constant 64 : index
    %c0_27 = arith.constant 0 : index
    %26 = vector.load %arg6[%c64, %c0_27] : memref<224x896xf32, #tpu.memory_space<vmem>>, vector<8x896xf32>
    tpu.vector_store %arg6[%c64, %c0_27], %25 {strides = array<i32>} : memref<224x896xf32, #tpu.memory_space<vmem>>, vector<8x896xf32>,
    %c0_28 = arith.constant 0 : index
    %c0_29 = arith.constant 0 : index
    %c1272 = arith.constant 1272 : index
    %27 = vector.load %arg1[%c0_28, %c0_29, %c1272] : memref<1x8x2816xf32, #tpu.memory_space<vmem>>, vector<1x8x896xf32>
    %28 = vector.shape_cast %27 : vector<1x8x896xf32> to vector<8x896xf32>
    %c72 = arith.constant 72 : index
    %c0_30 = arith.constant 0 : index
    %29 = vector.load %arg6[%c72, %c0_30] : memref<224x896xf32, #tpu.memory_space<vmem>>, vector<8x896xf32>
    tpu.vector_store %arg6[%c72, %c0_30], %28 {strides = array<i32>} : memref<224x896xf32, #tpu.memory_space<vmem>>, vector<8x896xf32>,
    %c0_31 = arith.constant 0 : index
    %c0_32 = arith.constant 0 : index
    %c318 = arith.constant 318 : index
    %30 = vector.load %arg1[%c0_31, %c0_32, %c318] : memref<1x8x2816xf32, #tpu.memory_space<vmem>>, vector<1x8x896xf32>
    %31 = vector.shape_cast %30 : vector<1x8x896xf32> to vector<8x896xf32>
    %c80 = arith.constant 80 : index
    %c0_33 = arith.constant 0 : index
    %32 = vector.load %arg6[%c80, %c0_33] : memref<224x896xf32, #tpu.memory_space<vmem>>, vector<8x896xf32>
    tpu.vector_store %arg6[%c80, %c0_33], %31 {strides = array<i32>} : memref<224x896xf32, #tpu.memory_space<vmem>>, vector<8x896xf32>,
    %c0_34 = arith.constant 0 : index
    %c0_35 = arith.constant 0 : index
    %c330 = arith.constant 330 : index
    %33 = vector.load %arg1[%c0_34, %c0_35, %c330] : memref<1x8x2816xf32, #tpu.memory_space<vmem>>, vector<1x8x896xf32>
    %34 = vector.shape_cast %33 : vector<1x8x896xf32> to vector<8x896xf32>
    %c88 = arith.constant 88 : index
    %c0_36 = arith.constant 0 : index
    %35 = vector.load %arg6[%c88, %c0_36] : memref<224x896xf32, #tpu.memory_space<vmem>>, vector<8x896xf32>
    tpu.vector_store %arg6[%c88, %c0_36], %34 {strides = array<i32>} : memref<224x896xf32, #tpu.memory_space<vmem>>, vector<8x896xf32>,
    %c0_37 = arith.constant 0 : index
    %c0_38 = arith.constant 0 : index
    %c342 = arith.constant 342 : index
    %36 = vector.load %arg1[%c0_37, %c0_38, %c342] : memref<1x8x2816xf32, #tpu.memory_space<vmem>>, vector<1x8x896xf32>
    %37 = vector.shape_cast %36 : vector<1x8x896xf32> to vector<8x896xf32>
    %c96 = arith.constant 96 : index
    %c0_39 = arith.constant 0 : index
    %38 = vector.load %arg6[%c96, %c0_39] : memref<224x896xf32, #tpu.memory_space<vmem>>, vector<8x896xf32>
    tpu.vector_store %arg6[%c96, %c0_39], %37 {strides = array<i32>} : memref<224x896xf32, #tpu.memory_space<vmem>>, vector<8x896xf32>,
    %c0_40 = arith.constant 0 : index
    %c0_41 = arith.constant 0 : index
    %c942 = arith.constant 942 : index
    %39 = vector.load %arg1[%c0_40, %c0_41, %c942] : memref<1x8x2816xf32, #tpu.memory_space<vmem>>, vector<1x8x896xf32>
    %40 = vector.shape_cast %39 : vector<1x8x896xf32> to vector<8x896xf32>
    %c104 = arith.constant 104 : index
    %c0_42 = arith.constant 0 : index
    %41 = vector.load %arg6[%c104, %c0_42] : memref<224x896xf32, #tpu.memory_space<vmem>>, vector<8x896xf32>
    tpu.vector_store %arg6[%c104, %c0_42], %40 {strides = array<i32>} : memref<224x896xf32, #tpu.memory_space<vmem>>, vector<8x896xf32>,
    %c0_43 = arith.constant 0 : index
    %c0_44 = arith.constant 0 : index
    %c954_45 = arith.constant 954 : index
    %42 = vector.load %arg1[%c0_43, %c0_44, %c954_45] : memref<1x8x2816xf32, #tpu.memory_space<vmem>>, vector<1x8x896xf32>
    %43 = vector.shape_cast %42 : vector<1x8x896xf32> to vector<8x896xf32>
    %c112 = arith.constant 112 : index
    %c0_46 = arith.constant 0 : index
    %44 = vector.load %arg6[%c112, %c0_46] : memref<224x896xf32, #tpu.memory_space<vmem>>, vector<8x896xf32>
    tpu.vector_store %arg6[%c112, %c0_46], %43 {strides = array<i32>} : memref<224x896xf32, #tpu.memory_space<vmem>>, vector<8x896xf32>,
    %c0_47 = arith.constant 0 : index
    %c0_48 = arith.constant 0 : index
    %c966 = arith.constant 966 : index
    %45 = vector.load %arg1[%c0_47, %c0_48, %c966] : memref<1x8x2816xf32, #tpu.memory_space<vmem>>, vector<1x8x896xf32>
    %46 = vector.shape_cast %45 : vector<1x8x896xf32> to vector<8x896xf32>
    %c120 = arith.constant 120 : index
    %c0_49 = arith.constant 0 : index
    %47 = vector.load %arg6[%c120, %c0_49] : memref<224x896xf32, #tpu.memory_space<vmem>>, vector<8x896xf32>
    tpu.vector_store %arg6[%c120, %c0_49], %46 {strides = array<i32>} : memref<224x896xf32, #tpu.memory_space<vmem>>, vector<8x896xf32>,
    %c0_50 = arith.constant 0 : index
    %c0_51 = arith.constant 0 : index
    %c1566 = arith.constant 1566 : index
    %48 = vector.load %arg1[%c0_50, %c0_51, %c1566] : memref<1x8x2816xf32, #tpu.memory_space<vmem>>, vector<1x8x896xf32>
    %49 = vector.shape_cast %48 : vector<1x8x896xf32> to vector<8x896xf32>
    %c128 = arith.constant 128 : index
    %c0_52 = arith.constant 0 : index
    %50 = vector.load %arg6[%c128, %c0_52] : memref<224x896xf32, #tpu.memory_space<vmem>>, vector<8x896xf32>
    tpu.vector_store %arg6[%c128, %c0_52], %49 {strides = array<i32>} : memref<224x896xf32, #tpu.memory_space<vmem>>, vector<8x896xf32>,
    %c0_53 = arith.constant 0 : index
    %c0_54 = arith.constant 0 : index
    %c1578 = arith.constant 1578 : index
    %51 = vector.load %arg1[%c0_53, %c0_54, %c1578] : memref<1x8x2816xf32, #tpu.memory_space<vmem>>, vector<1x8x896xf32>
    %52 = vector.shape_cast %51 : vector<1x8x896xf32> to vector<8x896xf32>
    %c136 = arith.constant 136 : index
    %c0_55 = arith.constant 0 : index
    %53 = vector.load %arg6[%c136, %c0_55] : memref<224x896xf32, #tpu.memory_space<vmem>>, vector<8x896xf32>
    tpu.vector_store %arg6[%c136, %c0_55], %52 {strides = array<i32>} : memref<224x896xf32, #tpu.memory_space<vmem>>, vector<8x896xf32>,
    %c0_56 = arith.constant 0 : index
    %c0_57 = arith.constant 0 : index
    %c1590 = arith.constant 1590 : index
    %54 = vector.load %arg1[%c0_56, %c0_57, %c1590] : memref<1x8x2816xf32, #tpu.memory_space<vmem>>, vector<1x8x896xf32>
    %55 = vector.shape_cast %54 : vector<1x8x896xf32> to vector<8x896xf32>
    %c144 = arith.constant 144 : index
    %c0_58 = arith.constant 0 : index
    %56 = vector.load %arg6[%c144, %c0_58] : memref<224x896xf32, #tpu.memory_space<vmem>>, vector<8x896xf32>
    tpu.vector_store %arg6[%c144, %c0_58], %55 {strides = array<i32>} : memref<224x896xf32, #tpu.memory_space<vmem>>, vector<8x896xf32>,
    %c0_59 = arith.constant 0 : index
    %c0_60 = arith.constant 0 : index
    %c0_61 = arith.constant 0 : index
    %57 = vector.load %arg1[%c0_59, %c0_60, %c0_61] : memref<1x8x2816xf32, #tpu.memory_space<vmem>>, vector<1x8x896xf32>
    %58 = vector.shape_cast %57 : vector<1x8x896xf32> to vector<8x896xf32>
    %c152 = arith.constant 152 : index
    %c0_62 = arith.constant 0 : index
    %59 = vector.load %arg6[%c152, %c0_62] : memref<224x896xf32, #tpu.memory_space<vmem>>, vector<8x896xf32>
    tpu.vector_store %arg6[%c152, %c0_62], %58 {strides = array<i32>} : memref<224x896xf32, #tpu.memory_space<vmem>>, vector<8x896xf32>,
    %c0_63 = arith.constant 0 : index
    %c0_64 = arith.constant 0 : index
    %c18 = arith.constant 18 : index
    %60 = vector.load %arg1[%c0_63, %c0_64, %c18] : memref<1x8x2816xf32, #tpu.memory_space<vmem>>, vector<1x8x896xf32>
    %61 = vector.shape_cast %60 : vector<1x8x896xf32> to vector<8x896xf32>
    %c160 = arith.constant 160 : index
    %c0_65 = arith.constant 0 : index
    %62 = vector.load %arg6[%c160, %c0_65] : memref<224x896xf32, #tpu.memory_space<vmem>>, vector<8x896xf32>
    tpu.vector_store %arg6[%c160, %c0_65], %61 {strides = array<i32>} : memref<224x896xf32, #tpu.memory_space<vmem>>, vector<8x896xf32>,
    %c0_66 = arith.constant 0 : index
    %c0_67 = arith.constant 0 : index
    %c36 = arith.constant 36 : index
    %63 = vector.load %arg1[%c0_66, %c0_67, %c36] : memref<1x8x2816xf32, #tpu.memory_space<vmem>>, vector<1x8x896xf32>
    %64 = vector.shape_cast %63 : vector<1x8x896xf32> to vector<8x896xf32>
    %c168 = arith.constant 168 : index
    %c0_68 = arith.constant 0 : index
    %65 = vector.load %arg6[%c168, %c0_68] : memref<224x896xf32, #tpu.memory_space<vmem>>, vector<8x896xf32>
    tpu.vector_store %arg6[%c168, %c0_68], %64 {strides = array<i32>} : memref<224x896xf32, #tpu.memory_space<vmem>>, vector<8x896xf32>,
    %c0_69 = arith.constant 0 : index
    %c0_70 = arith.constant 0 : index
    %c936 = arith.constant 936 : index
    %66 = vector.load %arg1[%c0_69, %c0_70, %c936] : memref<1x8x2816xf32, #tpu.memory_space<vmem>>, vector<1x8x896xf32>
    %67 = vector.shape_cast %66 : vector<1x8x896xf32> to vector<8x896xf32>
    %c176 = arith.constant 176 : index
    %c0_71 = arith.constant 0 : index
    %68 = vector.load %arg6[%c176, %c0_71] : memref<224x896xf32, #tpu.memory_space<vmem>>, vector<8x896xf32>
    tpu.vector_store %arg6[%c176, %c0_71], %67 {strides = array<i32>} : memref<224x896xf32, #tpu.memory_space<vmem>>, vector<8x896xf32>,
    %c0_72 = arith.constant 0 : index
    %c0_73 = arith.constant 0 : index
    %c954_74 = arith.constant 954 : index
    %69 = vector.load %arg1[%c0_72, %c0_73, %c954_74] : memref<1x8x2816xf32, #tpu.memory_space<vmem>>, vector<1x8x896xf32>
    %70 = vector.shape_cast %69 : vector<1x8x896xf32> to vector<8x896xf32>
    %c184 = arith.constant 184 : index
    %c0_75 = arith.constant 0 : index
    %71 = vector.load %arg6[%c184, %c0_75] : memref<224x896xf32, #tpu.memory_space<vmem>>, vector<8x896xf32>
    tpu.vector_store %arg6[%c184, %c0_75], %70 {strides = array<i32>} : memref<224x896xf32, #tpu.memory_space<vmem>>, vector<8x896xf32>,
    %c0_76 = arith.constant 0 : index
    %c0_77 = arith.constant 0 : index
    %c972 = arith.constant 972 : index
    %72 = vector.load %arg1[%c0_76, %c0_77, %c972] : memref<1x8x2816xf32, #tpu.memory_space<vmem>>, vector<1x8x896xf32>
    %73 = vector.shape_cast %72 : vector<1x8x896xf32> to vector<8x896xf32>
    %c192 = arith.constant 192 : index
    %c0_78 = arith.constant 0 : index
    %74 = vector.load %arg6[%c192, %c0_78] : memref<224x896xf32, #tpu.memory_space<vmem>>, vector<8x896xf32>
    tpu.vector_store %arg6[%c192, %c0_78], %73 {strides = array<i32>} : memref<224x896xf32, #tpu.memory_space<vmem>>, vector<8x896xf32>,
    %c0_79 = arith.constant 0 : index
    %c0_80 = arith.constant 0 : index
    %c1872 = arith.constant 1872 : index
    %75 = vector.load %arg1[%c0_79, %c0_80, %c1872] : memref<1x8x2816xf32, #tpu.memory_space<vmem>>, vector<1x8x896xf32>
    %76 = vector.shape_cast %75 : vector<1x8x896xf32> to vector<8x896xf32>
    %c200 = arith.constant 200 : index
    %c0_81 = arith.constant 0 : index
    %77 = vector.load %arg6[%c200, %c0_81] : memref<224x896xf32, #tpu.memory_space<vmem>>, vector<8x896xf32>
    tpu.vector_store %arg6[%c200, %c0_81], %76 {strides = array<i32>} : memref<224x896xf32, #tpu.memory_space<vmem>>, vector<8x896xf32>,
    %c0_82 = arith.constant 0 : index
    %c0_83 = arith.constant 0 : index
    %c1890 = arith.constant 1890 : index
    %78 = vector.load %arg1[%c0_82, %c0_83, %c1890] : memref<1x8x2816xf32, #tpu.memory_space<vmem>>, vector<1x8x896xf32>
    %79 = vector.shape_cast %78 : vector<1x8x896xf32> to vector<8x896xf32>
    %c208 = arith.constant 208 : index
    %c0_84 = arith.constant 0 : index
    %80 = vector.load %arg6[%c208, %c0_84] : memref<224x896xf32, #tpu.memory_space<vmem>>, vector<8x896xf32>
    tpu.vector_store %arg6[%c208, %c0_84], %79 {strides = array<i32>} : memref<224x896xf32, #tpu.memory_space<vmem>>, vector<8x896xf32>,
    %c0_85 = arith.constant 0 : index
    %c0_86 = arith.constant 0 : index
    %c1908 = arith.constant 1908 : index
    %81 = vector.load %arg1[%c0_85, %c0_86, %c1908] : memref<1x8x2816xf32, #tpu.memory_space<vmem>>, vector<1x8x896xf32>
    %82 = vector.shape_cast %81 : vector<1x8x896xf32> to vector<8x896xf32>
    %c216 = arith.constant 216 : index
    %c0_87 = arith.constant 0 : index
    %83 = vector.load %arg6[%c216, %c0_87] : memref<224x896xf32, #tpu.memory_space<vmem>>, vector<8x896xf32>
    tpu.vector_store %arg6[%c216, %c0_87], %82 {strides = array<i32>} : memref<224x896xf32, #tpu.memory_space<vmem>>, vector<8x896xf32>,
    %c0_88 = arith.constant 0 : index
    %c0_89 = arith.constant 0 : index
    %84 = vector.load %arg2[%c0_88, %c0_89] : memref<8x224xf32, #tpu.memory_space<vmem>>, vector<8x224xf32>
    %c0_90 = arith.constant 0 : index
    %c0_91 = arith.constant 0 : index
    %85 = vector.load %arg6[%c0_90, %c0_91] : memref<224x896xf32, #tpu.memory_space<vmem>>, vector<224x896xf32>
    %cst = arith.constant dense<0.000000e+00> : vector<8x896xf32>
    %86 = tpu.matmul %84, %85, %cst {dimension_numbers = #tpu.dot_dimension_numbers<[1], [0], [0], [1], [0, 0, 1, 1], [], []>, precision = #tpu.contract_precision<fp32>} : vector<8x224xf32>, vector<224x896xf32>, vector<8x896xf32> -> vector<8x896xf32>
    %c0_92 = arith.constant 0 : index
    %c0_93 = arith.constant 0 : index
    %c954_94 = arith.constant 954 : index
    %87 = vector.load %arg1[%c0_92, %c0_93, %c954_94] : memref<1x8x2816xf32, #tpu.memory_space<vmem>>, vector<1x8x896xf32>
    %88 = vector.shape_cast %87 : vector<1x8x896xf32> to vector<8x896xf32>
    %cst_95 = arith.constant dense<0.000000e+00> : vector<8xf32>
    %89 = vector.multi_reduction <add>, %88, %cst_95 [1] : vector<8x896xf32> to vector<8xf32>
    %90 = vector.shape_cast %89 : vector<8xf32> to vector<8x1xf32>
    %cst_96 = arith.constant 3.906250e-03 : f32
    %91 = vector.broadcast %cst_96 : f32 to vector<8x1xf32>
    %92 = arith.mulf %90, %91 : vector<8x1xf32>
    %c0_97 = arith.constant 0 : index
    %c0_98 = arith.constant 0 : index
    %93 = vector.load %arg3[%c0_97, %c0_98] : memref<8x8xf32, #tpu.memory_space<vmem>>, vector<8x8xf32>
    %cst_99 = arith.constant dense<0.000000e+00> : vector<8x1xf32>
    %94 = tpu.matmul %93, %92, %cst_99 {dimension_numbers = #tpu.dot_dimension_numbers<[1], [0], [0], [1], [0, 0, 1, 1], [], []>, precision = #tpu.contract_precision<fp32>} : vector<8x8xf32>, vector<8x1xf32>, vector<8x1xf32> -> vector<8x1xf32>
    %c0_100 = arith.constant 0 : index
    %c0_101 = arith.constant 0 : index
    %95 = vector.load %arg4[%c0_100, %c0_101] : memref<8x1xf32, #tpu.memory_space<vmem>>, vector<8x1xf32>
    %96 = arith.addf %94, %95 : vector<8x1xf32>
    %97 = vector.broadcast %96 : vector<8x1xf32> to vector<8x896xf32>
    %98 = arith.addf %86, %97 : vector<8x896xf32>
    %c0_102 = arith.constant 0 : index
    %c0_103 = arith.constant 0 : index
    %c0_104 = arith.constant 0 : index
    %99 = vector.load %arg5[%c0_102, %c0_103, %c0_104] : memref<1x8x896xf32, #tpu.memory_space<vmem>>, vector<1x8x896xf32>
    %100 = vector.shape_cast %99 : vector<1x8x896xf32> to vector<8x896xf32>
    %101 = vector.shape_cast %98 : vector<8x896xf32> to vector<1x8x896xf32>
    tpu.vector_store %arg5[%c0_102, %c0_103, %c0_104], %101 {strides = array<i32>} : memref<1x8x896xf32, #tpu.memory_space<vmem>>, vector<1x8x896xf32>,
    return
  }
  func.func @transform_0(%arg0: i32) -> (i32, i32, i32) {
    %c0_i32 = arith.constant 0 : i32
    %c0_i32_0 = arith.constant 0 : i32
    %c0_i32_1 = arith.constant 0 : i32
    return %arg0, %c0_i32, %c0_i32_0 : i32, i32, i32
  }
  func.func @transform_1(%arg0: i32) -> (i32, i32) {
    %c0_i32 = arith.constant 0 : i32
    %c0_i32_0 = arith.constant 0 : i32
    %c0_i32_1 = arith.constant 0 : i32
    return %c0_i32, %c0_i32_0 : i32, i32
  }
  func.func @transform_2(%arg0: i32) -> (i32, i32) {
    %c0_i32 = arith.constant 0 : i32
    %c0_i32_0 = arith.constant 0 : i32
    %c0_i32_1 = arith.constant 0 : i32
    return %c0_i32, %c0_i32_0 : i32, i32
  }
  func.func @transform_3(%arg0: i32) -> (i32, i32) {
    %c0_i32 = arith.constant 0 : i32
    %c0_i32_0 = arith.constant 0 : i32
    %c0_i32_1 = arith.constant 0 : i32
    return %c0_i32, %c0_i32_0 : i32, i32
  }
  func.func @transform_4(%arg0: i32) -> (i32, i32, i32) {
    %c0_i32 = arith.constant 0 : i32
    %c0_i32_0 = arith.constant 0 : i32
    %c0_i32_1 = arith.constant 0 : i32
    return %arg0, %c0_i32, %c0_i32_0 : i32, i32, i32
  }
}

</mosaic_0001>

<llo_original>
// kernel: tpu_custom_call.1
$region0: #{tpu_custom_call.1}
  #allocation0 [shape = 'u32[]', space=smem, size = 0x4, offset = 0x4, fixed_abs, tag = 'smem constant byte address 0x4 - core index']
  #allocation1 [shape = 'u32[144,128]{1,0:T(1,128)}', space=vmem, size = 0x12000, scoped, tag = 'internal scratch']
  #allocation2 [shape = 'f32[224,896]{1,0:T(8,128)}', space=vmem, size = 0xc4000, scoped, tag = 'scratch operand']
  %s0 = inlined_call_operand.hbm [shape: f32[2,8,2816], index: 0, kind: input, shape index: {}]
  %s1 = inlined_call_operand.hbm [shape: f32[8,224], index: 1, kind: input, shape index: {}]
  %s2 = inlined_call_operand.vmem [shape: f32[8,8], index: 2, kind: input, shape index: {}]
  %s3 = inlined_call_operand.vmem [shape: f32[8,1], index: 3, kind: input, shape index: {}]
  %s4 = inlined_call_operand.hbm [shape: f32[2,8,896], index: 4, kind: output, shape index: {}]
  %s5 = sld [smem:[#allocation0]]
  $region57: #{tpu_custom_call.1} parent=0
    _
  %s7 = ssub.s32 1, %s5
  %s8 = scalar_select 0, %s7, %s5
  $region1: #{tpu_custom_call.1} parent=0
    #allocation3 [shape = 'u8[180224]{0}', space=vmem, size = 0x2c000, scoped, tag = 'input window, operand 0']
    #allocation4 [shape = 's32[2]{0}', space=sflag, size = 0x8, scoped, tag = 'scoped memory for tpu_custom_call.1']
    #allocation5 [shape = 's32[2]{0}', space=sflag, size = 0x8, scoped, tag = 'scoped memory for tpu_custom_call.1']
    #allocation6 [shape = 'u8[8192]{0}', space=vmem, size = 0x2000, scoped, tag = 'input window, operand 1, single buffered']
    #allocation7 [shape = 's32[1]{0}', space=sflag, size = 0x4, scoped, tag = 'scoped memory for tpu_custom_call.1']
    #allocation8 [shape = 'u8[57344]{0}', space=vmem, size = 0xe000, scoped, tag = 'output window, operand 0']
    %9 = vsyncpa [#allocation4], 0
    %s10 = scalar_lea.sflag [#allocation4], 1
    %11 = vsyncpa %s10, 0
    %12 = vsyncpa [#allocation7], 0
    %13 = vsyncpa [#allocation5], 0
    %s14 = scalar_lea.sflag [#allocation5], 1
    %15 = vsyncpa %s14, 0
    loop: start=0, step=1, limit=4
    $region2: #{tpu_custom_call.1} parent=1 // loop_pre_header
      _
    $region3: #{tpu_custom_call.1} parent=1 // loop_header
      %s17 = sphi 0, %s21
      %p18 = scmp.ge.s32.totalorder %s17, 4
      %s27 = sphi 0, %s29
      %s30 = sphi 0, %s27
      %s31 = sphi 0, %s30
      %s47 = sphi 0, %s31
      %s51 = sphi 0, %s51
      %s53 = sphi 0, %s51
      %s54 = sphi 0, %s53
      %s68 = sphi 0, %s54
      %s72 = sphi 0, %s72
      %s74 = sphi 0, %s72
      %s75 = sphi 0, %s74
      %s89 = sphi 0, %s75
      %s93 = sphi 0, %s93
      %s95 = sphi 0, %s93
      %s96 = sphi 0, %s95
      %s110 = sphi 0, %s96
      %s116 = sphi 0, %s118
      %s119 = sphi 0, %s116
      %s120 = sphi 0, %s119
      %s136 = sphi 0, %s120
    $region4: #{tpu_custom_call.1} parent=1 // loop_header_branch
      %20 = sbr.rel (%p18) target = $region8
    $region5: #{tpu_custom_call.1} parent=1 // loop_body
      %s22 = ssub.s32 %s17, 1
      %s23 = ssub.s32 %s17, 2
      %s24 = sadd.s32 %s17, 1
      %s25 = ssub.s32 %s17, %s24
      %p26 = scmp.eq.s32.totalorder %s25, 0
      %s28 = sadd.s32 %s27, 1
      %s29 = scalar_select %p26, %s27, %s28
      %p32 = pneg %p26
      %p33 = scmp.eq.s32.totalorder %s17, 1
      %p34 = por %p32, %p33
      %p35 = scmp.ne.s32.totalorder %s27, %s30
      %p36 = scmp.eq.s32.totalorder %s17, 0
      %p37 = por %p35, %p36
      %p38 = scmp.ne.s32.totalorder %s27, %s30
      %p39 = scmp.eq.s32.totalorder %s22, 1
      %p40 = por %p38, %p39
      %p41 = scmp.ne.s32.totalorder %s30, %s31
      %p42 = scmp.eq.s32.totalorder %s22, 0
      %p43 = por %p41, %p42
      %p44 = scmp.ne.s32.totalorder %s30, %s31
      %p45 = scmp.eq.s32.totalorder %s23, 1
      %p46 = por %p44, %p45
      %p48 = scmp.ne.s32.totalorder %s31, %s47
      %p49 = scmp.eq.s32.totalorder %s23, 0
      %p50 = por %p48, %p49
      %s52 = sadd.s32 %s51, 1
      %p55 = scmp.eq.s32.totalorder %s17, 1
      %p56 = scmp.ne.s32.totalorder %s51, %s53
      %p57 = scmp.eq.s32.totalorder %s17, 0
      %p58 = por %p56, %p57
      %p59 = scmp.ne.s32.totalorder %s51, %s53
      %p60 = scmp.eq.s32.totalorder %s22, 1
      %p61 = por %p59, %p60
      %p62 = scmp.ne.s32.totalorder %s53, %s54
      %p63 = scmp.eq.s32.totalorder %s22, 0
      %p64 = por %p62, %p63
      %p65 = scmp.ne.s32.totalorder %s53, %s54
      %p66 = scmp.eq.s32.totalorder %s23, 1
      %p67 = por %p65, %p66
      %p69 = scmp.ne.s32.totalorder %s54, %s68
      %p70 = scmp.eq.s32.totalorder %s23, 0
      %p71 = por %p69, %p70
      %s73 = sadd.s32 %s72, 1
      %p76 = scmp.eq.s32.totalorder %s17, 1
      %p77 = scmp.ne.s32.totalorder %s72, %s74
      %p78 = scmp.eq.s32.totalorder %s17, 0
      %p79 = por %p77, %p78
      %p80 = scmp.ne.s32.totalorder %s72, %s74
      %p81 = scmp.eq.s32.totalorder %s22, 1
      %p82 = por %p80, %p81
      %p83 = scmp.ne.s32.totalorder %s74, %s75
      %p84 = scmp.eq.s32.totalorder %s22, 0
      %p85 = por %p83, %p84
      %p86 = scmp.ne.s32.totalorder %s74, %s75
      %p87 = scmp.eq.s32.totalorder %s23, 1
      %p88 = por %p86, %p87
      %p90 = scmp.ne.s32.totalorder %s75, %s89
      %p91 = scmp.eq.s32.totalorder %s23, 0
      %p92 = por %p90, %p91
      %s94 = sadd.s32 %s93, 1
      %p97 = scmp.eq.s32.totalorder %s17, 1
      %p98 = scmp.ne.s32.totalorder %s93, %s95
      %p99 = scmp.eq.s32.totalorder %s17, 0
      %p100 = por %p98, %p99
      %p101 = scmp.ne.s32.totalorder %s93, %s95
      %p102 = scmp.eq.s32.totalorder %s22, 1
      %p103 = por %p101, %p102
      %p104 = scmp.ne.s32.totalorder %s95, %s96
      %p105 = scmp.eq.s32.totalorder %s22, 0
      %p106 = por %p104, %p105
      %p107 = scmp.ne.s32.totalorder %s95, %s96
      %p108 = scmp.eq.s32.totalorder %s23, 1
      %p109 = por %p107, %p108
      %p111 = scmp.ne.s32.totalorder %s96, %s110
      %p112 = scmp.eq.s32.totalorder %s23, 0
      %p113 = por %p111, %p112
      %s114 = ssub.s32 %s17, %s24
      %p115 = scmp.eq.s32.totalorder %s114, 0
      %s117 = sadd.s32 %s116, 1
      %s118 = scalar_select %p115, %s116, %s117
      %p121 = pneg %p115
      %p122 = scmp.eq.s32.totalorder %s17, 1
      %p123 = por %p121, %p122
      %p124 = scmp.ne.s32.totalorder %s116, %s119
      %p125 = scmp.eq.s32.totalorder %s17, 0
      %p126 = por %p124, %p125
      %p127 = scmp.ne.s32.totalorder %s116, %s119
      %p128 = scmp.eq.s32.totalorder %s22, 1
      %p129 = por %p127, %p128
      %p130 = scmp.ne.s32.totalorder %s119, %s120
      %p131 = scmp.eq.s32.totalorder %s22, 0
      %p132 = por %p130, %p131
      %p133 = scmp.ne.s32.totalorder %s119, %s120
      %p134 = scmp.eq.s32.totalorder %s23, 1
      %p135 = por %p133, %p134
      %p137 = scmp.ne.s32.totalorder %s120, %s136
      %p138 = scmp.eq.s32.totalorder %s23, 0
      %p139 = por %p137, %p138
      %p140 = scmp.le.s32.totalorder 1, %s17
      %p141 = scmp.lt.s32.totalorder %s17, 3
      %p142 = pnand %p140, %p141
      %p143 = pneg %p142
      // Predicated region
      $region9: #{tpu_custom_call.1} parent=5 // pred_check
        _
      $region10: #{tpu_custom_call.1} parent=5 // pred_check_branch
        %145 = sbr.rel (%p142) target = $region12
      $region11: #{tpu_custom_call.1} parent=5 // pred_region
        %s146 = ssub.s32 %s17, 1
        // Predicated region
        $region13: #{tpu_custom_call.1} parent=11 // pred_check
          %p147 = pneg %p64
        $region14: #{tpu_custom_call.1} parent=11 // pred_check_branch
          %149 = sbr.rel (%p147) target = $region16
        $region15: #{tpu_custom_call.1} parent=11 // pred_region
          %s151 = ssub.s32 256, 256
          %152 = vsyncadd [#allocation7], %s151
          %s154 = sshll.u32 [#allocation6], 4
          %s155 = int_to_ptr.vmem [resolvable:$true] %s154
          %157 = dma.hbm_to_vmem [thread:$0]  %s1, 256, %s155, [#allocation7]
        $region16: #{tpu_custom_call.1} parent=11 // pred_fallthru
          _
        // Predicated region
        $region17: #{tpu_custom_call.1} parent=11 // pred_check
          %p158 = pneg %p85
        $region18: #{tpu_custom_call.1} parent=11 // pred_check_branch
          %160 = sbr.rel (%p158) target = $region20
        $region19: #{tpu_custom_call.1} parent=11 // pred_region
          _
        $region20: #{tpu_custom_call.1} parent=11 // pred_fallthru
          _
        // Predicated region
        $region21: #{tpu_custom_call.1} parent=11 // pred_check
          %p161 = pneg %p106
        $region22: #{tpu_custom_call.1} parent=11 // pred_check_branch
          %163 = sbr.rel (%p161) target = $region24
        $region23: #{tpu_custom_call.1} parent=11 // pred_region
          _
        $region24: #{tpu_custom_call.1} parent=11 // pred_fallthru
          _
      $region12: #{tpu_custom_call.1} parent=5 // pred_fallthru
        _
      %p164 = scmp.lt.s32.totalorder %s17, 2
      // Predicated region
      $region25: #{tpu_custom_call.1} parent=5 // pred_check
        %p165 = pneg %p164
      $region26: #{tpu_custom_call.1} parent=5 // pred_check_branch
        %167 = sbr.rel (%p165) target = $region28
      $region27: #{tpu_custom_call.1} parent=5 // pred_region
        // Predicated region
        $region29: #{tpu_custom_call.1} parent=27 // pred_check
          %p168 = pneg %p37
        $region30: #{tpu_custom_call.1} parent=27 // pred_check_branch
          %170 = sbr.rel (%p168) target = $region32
        $region31: #{tpu_custom_call.1} parent=27 // pred_region
          %s171 = sand.u32 %s27, 1
          %s172 = scalar_lea.sflag [#allocation4], %s171
          %s173 = sand.u32 %s27, 1
          %s174 = smul.addr %s173, 176
          %s175 = scalar_lea.vmem [#allocation3], %s174
          %s177 = ssub.s32 2816, 2816
          %178 = vsyncadd %s172, %s177
          %s179 = smul.addr %s17, 22
          %s180 = smul.addr %s179, 128
          %s181 = scalar_lea.hbm %s0, %s180
          %s183 = sshll.u32 %s175, 4
          %s184 = int_to_ptr.vmem [resolvable:$true] %s183
          %186 = dma.hbm_to_vmem [thread:$0]  %s181, 2816, %s184, %s172
        $region32: #{tpu_custom_call.1} parent=27 // pred_fallthru
          _
      $region28: #{tpu_custom_call.1} parent=5 // pred_fallthru
        _
      %p187 = scmp.le.s32.totalorder 1, %s17
      %p188 = scmp.lt.s32.totalorder %s17, 3
      %p189 = pnand %p187, %p188
      %p190 = pneg %p189
      // Predicated region
      $region33: #{tpu_custom_call.1} parent=5 // pred_check
        _
      $region34: #{tpu_custom_call.1} parent=5 // pred_check_branch
        %192 = sbr.rel (%p189) target = $region36
      $region35: #{tpu_custom_call.1} parent=5 // pred_region
        %s193 = ssub.s32 %s17, 1
        %s194 = sand.u32 %s30, 1
        %s195 = scalar_lea.sflag [#allocation4], %s194
        %s196 = sand.u32 %s30, 1
        %s197 = smul.addr %s196, 176
        %s198 = scalar_lea.vmem [#allocation3], %s197
        // Predicated region
        $region37: #{tpu_custom_call.1} parent=35 // pred_check
          %p199 = pneg %p43
        $region38: #{tpu_custom_call.1} parent=35 // pred_check_branch
          %201 = sbr.rel (%p199) target = $region40
        $region39: #{tpu_custom_call.1} parent=35 // pred_region
          %202 = dma.done %s195, 2816
        $region40: #{tpu_custom_call.1} parent=35 // pred_fallthru
          _
        // Predicated region
        $region41: #{tpu_custom_call.1} parent=35 // pred_check
          %p203 = pneg %p64
        $region42: #{tpu_custom_call.1} parent=35 // pred_check_branch
          %205 = sbr.rel (%p203) target = $region44
        $region43: #{tpu_custom_call.1} parent=35 // pred_region
          %206 = dma.done [#allocation7], 256
        $region44: #{tpu_custom_call.1} parent=35 // pred_fallthru
          _
        %s207 = sand.u32 %s30, 1
        %s208 = scalar_lea.sflag [#allocation4], %s207
        %s209 = sand.u32 %s30, 1
        %s210 = smul.addr %s209, 176
        %s211 = scalar_lea.vmem [#allocation3], %s210
        %p212 = pneg %p43
        %p213 = pneg %p40
        %p214 = pneg %p64
        %p215 = pneg %p61
        %p216 = pneg %p85
        %p217 = pneg %p82
        %p218 = pneg %p106
        %p219 = pneg %p103
        %p220 = pneg %p132
        %p221 = pneg %p129
        %s222 = sand.u32 %s119, 1
        %s223 = scalar_lea.sflag [#allocation5], %s222
        %s224 = sand.u32 %s119, 1
        %s225 = smul.addr %s224, 56
        %s226 = scalar_lea.vmem [#allocation8], %s225
        %v227 = vld [vmem:[%s198 + $0x38] sm:$0xff]
        %v228 = vld [vmem:[%s198 + $0x40] sm:$0xff]
        %v229 = vld [vmem:[%s198 + $0x48] sm:$0xff]
        %v230 = vld [vmem:[%s198 + $0x50] sm:$0xff]
        %v231 = vld [vmem:[%s198 + $0x58] sm:$0xff]
        %v232 = vld [vmem:[%s198 + $0x60] sm:$0xff]
        %v233 = vld [vmem:[%s198 + $0x68] sm:$0xff]
        %v234 = vld [vmem:[%s198 + $0x70] sm:$0xff]
        %243 = vrot.lane.b32.xlu0 %v227, 70
        %v244 = vpop.permute.xlu0 %243
        %245 = vrot.lane.b32.xlu0 %v228, 70
        %v246 = vpop.permute.xlu0 %245
        %247 = vrot.lane.b32.xlu0 %v229, 70
        %v248 = vpop.permute.xlu0 %247
        %249 = vrot.lane.b32.xlu0 %v230, 70
        %v250 = vpop.permute.xlu0 %249
        %251 = vrot.lane.b32.xlu0 %v231, 70
        %v252 = vpop.permute.xlu0 %251
        %253 = vrot.lane.b32.xlu0 %v232, 70
        %v254 = vpop.permute.xlu0 %253
        %255 = vrot.lane.b32.xlu0 %v233, 70
        %v256 = vpop.permute.xlu0 %255
        %257 = vrot.lane.b32.xlu0 %v234, 70
        %v258 = vpop.permute.xlu0 %257
        %vm259 = vcmask 572416
        %v260 = vsel %vm259, %v244, %v246
        %v261 = vsel %vm259, %v246, %v248
        %v262 = vsel %vm259, %v248, %v250
        %v263 = vsel %vm259, %v250, %v252
        %v264 = vsel %vm259, %v252, %v254
        %v265 = vsel %vm259, %v254, %v256
        %v266 = vsel %vm259, %v256, %v258
        %274 = vst [vmem:[#allocation2] sm:$0xff] %v260
        %275 = vst [vmem:[#allocation2 + $0x8] sm:$0xff] %v261
        %276 = vst [vmem:[#allocation2 + $0x10] sm:$0xff] %v262
        %277 = vst [vmem:[#allocation2 + $0x18] sm:$0xff] %v263
        %278 = vst [vmem:[#allocation2 + $0x20] sm:$0xff] %v264
        %279 = vst [vmem:[#allocation2 + $0x28] sm:$0xff] %v265
        %280 = vst [vmem:[#allocation2 + $0x30] sm:$0xff] %v266
        %v281 = vld [vmem:[%s198 + $0x20] sm:$0xff]
        %v282 = vld [vmem:[%s198 + $0x28] sm:$0xff]
        %v283 = vld [vmem:[%s198 + $0x30] sm:$0xff]
        %v284 = vld [vmem:[%s198 + $0x38] sm:$0xff]
        %v285 = vld [vmem:[%s198 + $0x40] sm:$0xff]
        %v286 = vld [vmem:[%s198 + $0x48] sm:$0xff]
        %v287 = vld [vmem:[%s198 + $0x50] sm:$0xff]
        %v288 = vld [vmem:[%s198 + $0x58] sm:$0xff]
        %297 = vrot.lane.b32.xlu0 %v281, 4
        %v298 = vpop.permute.xlu0 %297
        %299 = vrot.lane.b32.xlu0 %v282, 4
        %v300 = vpop.permute.xlu0 %299
        %301 = vrot.lane.b32.xlu0 %v283, 4
        %v302 = vpop.permute.xlu0 %301
        %303 = vrot.lane.b32.xlu0 %v284, 4
        %v304 = vpop.permute.xlu0 %303
        %305 = vrot.lane.b32.xlu0 %v285, 4
        %v306 = vpop.permute.xlu0 %305
        %307 = vrot.lane.b32.xlu0 %v286, 4
        %v308 = vpop.permute.xlu0 %307
        %309 = vrot.lane.b32.xlu0 %v287, 4
        %v310 = vpop.permute.xlu0 %309
        %311 = vrot.lane.b32.xlu0 %v288, 4
        %v312 = vpop.permute.xlu0 %311
        %vm313 = vcmask 31744
        %v314 = vsel %vm313, %v298, %v300
        %v315 = vsel %vm313, %v300, %v302
        %v316 = vsel %vm313, %v302, %v304
        %v317 = vsel %vm313, %v304, %v306
        %v318 = vsel %vm313, %v306, %v308
        %v319 = vsel %vm313, %v308, %v310
        %v320 = vsel %vm313, %v310, %v312
        %328 = vst [vmem:[#allocation2 + $0x38] sm:$0xff] %v314
        %329 = vst [vmem:[#allocation2 + $0x40] sm:$0xff] %v315
        %330 = vst [vmem:[#allocation2 + $0x48] sm:$0xff] %v316
        %331 = vst [vmem:[#allocation2 + $0x50] sm:$0xff] %v317
        %332 = vst [vmem:[#allocation2 + $0x58] sm:$0xff] %v318
        %333 = vst [vmem:[#allocation2 + $0x60] sm:$0xff] %v319
        %334 = vst [vmem:[#allocation2 + $0x68] sm:$0xff] %v320
        %v335 = vld [vmem:[%s198 + $0x28] sm:$0xff]
        %v336 = vld [vmem:[%s198 + $0x30] sm:$0xff]
        %v337 = vld [vmem:[%s198 + $0x38] sm:$0xff]
        %v338 = vld [vmem:[%s198 + $0x40] sm:$0xff]
        %v339 = vld [vmem:[%s198 + $0x48] sm:$0xff]
        %v340 = vld [vmem:[%s198 + $0x50] sm:$0xff]
        %v341 = vld [vmem:[%s198 + $0x58] sm:$0xff]
        %v342 = vld [vmem:[%s198 + $0x60] sm:$0xff]
        %351 = vrot.lane.b32.xlu0 %v335, 126
        %v352 = vpop.permute.xlu0 %351
        %353 = vrot.lane.b32.xlu0 %v336, 126
        %v354 = vpop.permute.xlu0 %353
        %355 = vrot.lane.b32.xlu0 %v337, 126
        %v356 = vpop.permute.xlu0 %355
        %357 = vrot.lane.b32.xlu0 %v338, 126
        %v358 = vpop.permute.xlu0 %357
        %359 = vrot.lane.b32.xlu0 %v339, 126
        %v360 = vpop.permute.xlu0 %359
        %361 = vrot.lane.b32.xlu0 %v340, 126
        %v362 = vpop.permute.xlu0 %361
        %363 = vrot.lane.b32.xlu0 %v341, 126
        %v364 = vpop.permute.xlu0 %363
        %365 = vrot.lane.b32.xlu0 %v342, 126
        %v366 = vpop.permute.xlu0 %365
        %vm367 = vcmask 1031168
        %v368 = vsel %vm367, %v352, %v354
        %v369 = vsel %vm367, %v354, %v356
        %v370 = vsel %vm367, %v356, %v358
        %v371 = vsel %vm367, %v358, %v360
        %v372 = vsel %vm367, %v360, %v362
        %v373 = vsel %vm367, %v362, %v364
        %v374 = vsel %vm367, %v364, %v366
        %382 = vst [vmem:[#allocation2 + $0x70] sm:$0xff] %v368
        %383 = vst [vmem:[#allocation2 + $0x78] sm:$0xff] %v369
        %384 = vst [vmem:[#allocation2 + $0x80] sm:$0xff] %v370
        %385 = vst [vmem:[#allocation2 + $0x88] sm:$0xff] %v371
        %386 = vst [vmem:[#allocation2 + $0x90] sm:$0xff] %v372
        %387 = vst [vmem:[#allocation2 + $0x98] sm:$0xff] %v373
        %388 = vst [vmem:[#allocation2 + $0xa0] sm:$0xff] %v374
        %v389 = vld [vmem:[%s198 + $0x28] sm:$0xff]
        %v390 = vld [vmem:[%s198 + $0x30] sm:$0xff]
        %v391 = vld [vmem:[%s198 + $0x38] sm:$0xff]
        %v392 = vld [vmem:[%s198 + $0x40] sm:$0xff]
        %v393 = vld [vmem:[%s198 + $0x48] sm:$0xff]
        %v394 = vld [vmem:[%s198 + $0x50] sm:$0xff]
        %v395 = vld [vmem:[%s198 + $0x58] sm:$0xff]
        %v396 = vld [vmem:[%s198 + $0x60] sm:$0xff]
        %405 = vrot.lane.b32.xlu0 %v389, 120
        %v406 = vpop.permute.xlu0 %405
        %407 = vrot.lane.b32.xlu0 %v390, 120
        %v408 = vpop.permute.xlu0 %407
        %409 = vrot.lane.b32.xlu0 %v391, 120
        %v410 = vpop.permute.xlu0 %409
        %411 = vrot.lane.b32.xlu0 %v392, 120
        %v412 = vpop.permute.xlu0 %411
        %413 = vrot.lane.b32.xlu0 %v393, 120
        %v414 = vpop.permute.xlu0 %413
        %415 = vrot.lane.b32.xlu0 %v394, 120
        %v416 = vpop.permute.xlu0 %415
        %417 = vrot.lane.b32.xlu0 %v395, 120
        %v418 = vpop.permute.xlu0 %417
        %419 = vrot.lane.b32.xlu0 %v396, 120
        %v420 = vpop.permute.xlu0 %419
        %vm421 = vcmask 982016
        %v422 = vsel %vm421, %v406, %v408
        %v423 = vsel %vm421, %v408, %v410
        %v424 = vsel %vm421, %v410, %v412
        %v425 = vsel %vm421, %v412, %v414
        %v426 = vsel %vm421, %v414, %v416
        %v427 = vsel %vm421, %v416, %v418
        %v428 = vsel %vm421, %v418, %v420
        %436 = vst [vmem:[#allocation2 + $0xa8] sm:$0xff] %v422
        %437 = vst [vmem:[#allocation2 + $0xb0] sm:$0xff] %v423
        %438 = vst [vmem:[#allocation2 + $0xb8] sm:$0xff] %v424
        %439 = vst [vmem:[#allocation2 + $0xc0] sm:$0xff] %v425
        %440 = vst [vmem:[#allocation2 + $0xc8] sm:$0xff] %v426
        %441 = vst [vmem:[#allocation2 + $0xd0] sm:$0xff] %v427
        %442 = vst [vmem:[#allocation2 + $0xd8] sm:$0xff] %v428
        %v443 = vld [vmem:[%s198 + $0x38] sm:$0xff]
        %v444 = vld [vmem:[%s198 + $0x40] sm:$0xff]
        %v445 = vld [vmem:[%s198 + $0x48] sm:$0xff]
        %v446 = vld [vmem:[%s198 + $0x50] sm:$0xff]
        %v447 = vld [vmem:[%s198 + $0x58] sm:$0xff]
        %v448 = vld [vmem:[%s198 + $0x60] sm:$0xff]
        %v449 = vld [vmem:[%s198 + $0x68] sm:$0xff]
        %v450 = vld [vmem:[%s198 + $0x70] sm:$0xff]
        %459 = vrot.lane.b32.xlu0 %v443, 76
        %v460 = vpop.permute.xlu0 %459
        %461 = vrot.lane.b32.xlu0 %v444, 76
        %v462 = vpop.permute.xlu0 %461
        %463 = vrot.lane.b32.xlu0 %v445, 76
        %v464 = vpop.permute.xlu0 %463
        %465 = vrot.lane.b32.xlu0 %v446, 76
        %v466 = vpop.permute.xlu0 %465
        %467 = vrot.lane.b32.xlu0 %v447, 76
        %v468 = vpop.permute.xlu0 %467
        %469 = vrot.lane.b32.xlu0 %v448, 76
        %v470 = vpop.permute.xlu0 %469
        %471 = vrot.lane.b32.xlu0 %v449, 76
        %v472 = vpop.permute.xlu0 %471
        %473 = vrot.lane.b32.xlu0 %v450, 76
        %v474 = vpop.permute.xlu0 %473
        %vm475 = vcmask 621568
        %v476 = vsel %vm475, %v460, %v462
        %v477 = vsel %vm475, %v462, %v464
        %v478 = vsel %vm475, %v464, %v466
        %v479 = vsel %vm475, %v466, %v468
        %v480 = vsel %vm475, %v468, %v470
        %v481 = vsel %vm475, %v470, %v472
        %v482 = vsel %vm475, %v472, %v474
        %490 = vst [vmem:[#allocation2 + $0xe0] sm:$0xff] %v476
        %491 = vst [vmem:[#allocation2 + $0xe8] sm:$0xff] %v477
        %492 = vst [vmem:[#allocation2 + $0xf0] sm:$0xff] %v478
        %493 = vst [vmem:[#allocation2 + $0xf8] sm:$0xff] %v479
        %494 = vst [vmem:[#allocation2 + $0x100] sm:$0xff] %v480
        %495 = vst [vmem:[#allocation2 + $0x108] sm:$0xff] %v481
        %496 = vst [vmem:[#allocation2 + $0x110] sm:$0xff] %v482
        %v497 = vld [vmem:[%s198 + $0x38] sm:$0xff]
        %v498 = vld [vmem:[%s198 + $0x40] sm:$0xff]
        %v499 = vld [vmem:[%s198 + $0x48] sm:$0xff]
        %v500 = vld [vmem:[%s198 + $0x50] sm:$0xff]
        %v501 = vld [vmem:[%s198 + $0x58] sm:$0xff]
        %v502 = vld [vmem:[%s198 + $0x60] sm:$0xff]
        %v503 = vld [vmem:[%s198 + $0x68] sm:$0xff]
        %v504 = vld [vmem:[%s198 + $0x70] sm:$0xff]
        %513 = vrot.lane.b32.xlu0 %v497, 70
        %v514 = vpop.permute.xlu0 %513
        %515 = vrot.lane.b32.xlu0 %v498, 70
        %v516 = vpop.permute.xlu0 %515
        %517 = vrot.lane.b32.xlu0 %v499, 70
        %v518 = vpop.permute.xlu0 %517
        %519 = vrot.lane.b32.xlu0 %v500, 70
        %v520 = vpop.permute.xlu0 %519
        %521 = vrot.lane.b32.xlu0 %v501, 70
        %v522 = vpop.permute.xlu0 %521
        %523 = vrot.lane.b32.xlu0 %v502, 70
        %v524 = vpop.permute.xlu0 %523
        %525 = vrot.lane.b32.xlu0 %v503, 70
        %v526 = vpop.permute.xlu0 %525
        %527 = vrot.lane.b32.xlu0 %v504, 70
        %v528 = vpop.permute.xlu0 %527
        %v529 = vsel %vm259, %v514, %v516
        %v530 = vsel %vm259, %v516, %v518
        %v531 = vsel %vm259, %v518, %v520
        %v532 = vsel %vm259, %v520, %v522
        %v533 = vsel %vm259, %v522, %v524
        %v534 = vsel %vm259, %v524, %v526
        %v535 = vsel %vm259, %v526, %v528
        %543 = vst [vmem:[#allocation2 + $0x118] sm:$0xff] %v529
        %544 = vst [vmem:[#allocation2 + $0x120] sm:$0xff] %v530
        %545 = vst [vmem:[#allocation2 + $0x128] sm:$0xff] %v531
        %546 = vst [vmem:[#allocation2 + $0x130] sm:$0xff] %v532
        %547 = vst [vmem:[#allocation2 + $0x138] sm:$0xff] %v533
        %548 = vst [vmem:[#allocation2 + $0x140] sm:$0xff] %v534
        %549 = vst [vmem:[#allocation2 + $0x148] sm:$0xff] %v535
        %v550 = vld [vmem:[%s198 + $0x38] sm:$0xff]
        %v551 = vld [vmem:[%s198 + $0x40] sm:$0xff]
        %v552 = vld [vmem:[%s198 + $0x48] sm:$0xff]
        %v553 = vld [vmem:[%s198 + $0x50] sm:$0xff]
        %v554 = vld [vmem:[%s198 + $0x58] sm:$0xff]
        %v555 = vld [vmem:[%s198 + $0x60] sm:$0xff]
        %v556 = vld [vmem:[%s198 + $0x68] sm:$0xff]
        %v557 = vld [vmem:[%s198 + $0x70] sm:$0xff]
        %566 = vrot.lane.b32.xlu0 %v550, 64
        %v567 = vpop.permute.xlu0 %566
        %568 = vrot.lane.b32.xlu0 %v551, 64
        %v569 = vpop.permute.xlu0 %568
        %570 = vrot.lane.b32.xlu0 %v552, 64
        %v571 = vpop.permute.xlu0 %570
        %572 = vrot.lane.b32.xlu0 %v553, 64
        %v573 = vpop.permute.xlu0 %572
        %574 = vrot.lane.b32.xlu0 %v554, 64
        %v575 = vpop.permute.xlu0 %574
        %576 = vrot.lane.b32.xlu0 %v555, 64
        %v577 = vpop.permute.xlu0 %576
        %578 = vrot.lane.b32.xlu0 %v556, 64
        %v579 = vpop.permute.xlu0 %578
        %580 = vrot.lane.b32.xlu0 %v557, 64
        %v581 = vpop.permute.xlu0 %580
        %vm582 = vcmask 523264
        %v583 = vsel %vm582, %v567, %v569
        %v584 = vsel %vm582, %v569, %v571
        %v585 = vsel %vm582, %v571, %v573
        %v586 = vsel %vm582, %v573, %v575
        %v587 = vsel %vm582, %v575, %v577
        %v588 = vsel %vm582, %v577, %v579
        %v589 = vsel %vm582, %v579, %v581
        %597 = vst [vmem:[#allocation2 + $0x150] sm:$0xff] %v583
        %598 = vst [vmem:[#allocation2 + $0x158] sm:$0xff] %v584
        %599 = vst [vmem:[#allocation2 + $0x160] sm:$0xff] %v585
        %600 = vst [vmem:[#allocation2 + $0x168] sm:$0xff] %v586
        %601 = vst [vmem:[#allocation2 + $0x170] sm:$0xff] %v587
        %602 = vst [vmem:[#allocation2 + $0x178] sm:$0xff] %v588
        %603 = vst [vmem:[#allocation2 + $0x180] sm:$0xff] %v589
        %v604 = vld [vmem:[%s198 + $0x48] sm:$0xff]
        %v605 = vld [vmem:[%s198 + $0x50] sm:$0xff]
        %v606 = vld [vmem:[%s198 + $0x58] sm:$0xff]
        %v607 = vld [vmem:[%s198 + $0x60] sm:$0xff]
        %v608 = vld [vmem:[%s198 + $0x68] sm:$0xff]
        %v609 = vld [vmem:[%s198 + $0x70] sm:$0xff]
        %v610 = vld [vmem:[%s198 + $0x78] sm:$0xff]
        %v611 = vld [vmem:[%s198 + $0x80] sm:$0xff]
        %620 = vrot.lane.b32.xlu0 %v604, 20
        %v621 = vpop.permute.xlu0 %620
        %622 = vrot.lane.b32.xlu0 %v605, 20
        %v623 = vpop.permute.xlu0 %622
        %624 = vrot.lane.b32.xlu0 %v606, 20
        %v625 = vpop.permute.xlu0 %624
        %626 = vrot.lane.b32.xlu0 %v607, 20
        %v627 = vpop.permute.xlu0 %626
        %628 = vrot.lane.b32.xlu0 %v608, 20
        %v629 = vpop.permute.xlu0 %628
        %630 = vrot.lane.b32.xlu0 %v609, 20
        %v631 = vpop.permute.xlu0 %630
        %632 = vrot.lane.b32.xlu0 %v610, 20
        %v633 = vpop.permute.xlu0 %632
        %634 = vrot.lane.b32.xlu0 %v611, 20
        %v635 = vpop.permute.xlu0 %634
        %vm636 = vcmask 162816
        %v637 = vsel %vm636, %v621, %v623
        %v638 = vsel %vm636, %v623, %v625
        %v639 = vsel %vm636, %v625, %v627
        %v640 = vsel %vm636, %v627, %v629
        %v641 = vsel %vm636, %v629, %v631
        %v642 = vsel %vm636, %v631, %v633
        %v643 = vsel %vm636, %v633, %v635
        %651 = vst [vmem:[#allocation2 + $0x188] sm:$0xff] %v637
        %652 = vst [vmem:[#allocation2 + $0x190] sm:$0xff] %v638
        %653 = vst [vmem:[#allocation2 + $0x198] sm:$0xff] %v639
        %654 = vst [vmem:[#allocation2 + $0x1a0] sm:$0xff] %v640
        %655 = vst [vmem:[#allocation2 + $0x1a8] sm:$0xff] %v641
        %656 = vst [vmem:[#allocation2 + $0x1b0] sm:$0xff] %v642
        %657 = vst [vmem:[#allocation2 + $0x1b8] sm:$0xff] %v643
        %v658 = vld [vmem:[%s198 + $0x48] sm:$0xff]
        %v659 = vld [vmem:[%s198 + $0x50] sm:$0xff]
        %v660 = vld [vmem:[%s198 + $0x58] sm:$0xff]
        %v661 = vld [vmem:[%s198 + $0x60] sm:$0xff]
        %v662 = vld [vmem:[%s198 + $0x68] sm:$0xff]
        %v663 = vld [vmem:[%s198 + $0x70] sm:$0xff]
        %v664 = vld [vmem:[%s198 + $0x78] sm:$0xff]
        %v665 = vld [vmem:[%s198 + $0x80] sm:$0xff]
        %674 = vrot.lane.b32.xlu0 %v658, 14
        %v675 = vpop.permute.xlu0 %674
        %676 = vrot.lane.b32.xlu0 %v659, 14
        %v677 = vpop.permute.xlu0 %676
        %678 = vrot.lane.b32.xlu0 %v660, 14
        %v679 = vpop.permute.xlu0 %678
        %680 = vrot.lane.b32.xlu0 %v661, 14
        %v681 = vpop.permute.xlu0 %680
        %682 = vrot.lane.b32.xlu0 %v662, 14
        %v683 = vpop.permute.xlu0 %682
        %684 = vrot.lane.b32.xlu0 %v663, 14
        %v685 = vpop.permute.xlu0 %684
        %686 = vrot.lane.b32.xlu0 %v664, 14
        %v687 = vpop.permute.xlu0 %686
        %688 = vrot.lane.b32.xlu0 %v665, 14
        %v689 = vpop.permute.xlu0 %688
        %vm690 = vcmask 113664
        %v691 = vsel %vm690, %v675, %v677
        %v692 = vsel %vm690, %v677, %v679
        %v693 = vsel %vm690, %v679, %v681
        %v694 = vsel %vm690, %v681, %v683
        %v695 = vsel %vm690, %v683, %v685
        %v696 = vsel %vm690, %v685, %v687
        %v697 = vsel %vm690, %v687, %v689
        %705 = vst [vmem:[#allocation2 + $0x1c0] sm:$0xff] %v691
        %706 = vst [vmem:[#allocation2 + $0x1c8] sm:$0xff] %v692
        %707 = vst [vmem:[#allocation2 + $0x1d0] sm:$0xff] %v693
        %708 = vst [vmem:[#allocation2 + $0x1d8] sm:$0xff] %v694
        %709 = vst [vmem:[#allocation2 + $0x1e0] sm:$0xff] %v695
        %710 = vst [vmem:[#allocation2 + $0x1e8] sm:$0xff] %v696
        %711 = vst [vmem:[#allocation2 + $0x1f0] sm:$0xff] %v697
        %v712 = vld [vmem:[%s198 + $0x48] sm:$0xff]
        %v713 = vld [vmem:[%s198 + $0x50] sm:$0xff]
        %v714 = vld [vmem:[%s198 + $0x58] sm:$0xff]
        %v715 = vld [vmem:[%s198 + $0x60] sm:$0xff]
        %v716 = vld [vmem:[%s198 + $0x68] sm:$0xff]
        %v717 = vld [vmem:[%s198 + $0x70] sm:$0xff]
        %v718 = vld [vmem:[%s198 + $0x78] sm:$0xff]
        %v719 = vld [vmem:[%s198 + $0x80] sm:$0xff]
        %728 = vrot.lane.b32.xlu0 %v712, 8
        %v729 = vpop.permute.xlu0 %728
        %730 = vrot.lane.b32.xlu0 %v713, 8
        %v731 = vpop.permute.xlu0 %730
        %732 = vrot.lane.b32.xlu0 %v714, 8
        %v733 = vpop.permute.xlu0 %732
        %734 = vrot.lane.b32.xlu0 %v715, 8
        %v735 = vpop.permute.xlu0 %734
        %736 = vrot.lane.b32.xlu0 %v716, 8
        %v737 = vpop.permute.xlu0 %736
        %738 = vrot.lane.b32.xlu0 %v717, 8
        %v739 = vpop.permute.xlu0 %738
        %740 = vrot.lane.b32.xlu0 %v718, 8
        %v741 = vpop.permute.xlu0 %740
        %742 = vrot.lane.b32.xlu0 %v719, 8
        %v743 = vpop.permute.xlu0 %742
        %vm744 = vcmask 64512
        %v745 = vsel %vm744, %v729, %v731
        %v746 = vsel %vm744, %v731, %v733
        %v747 = vsel %vm744, %v733, %v735
        %v748 = vsel %vm744, %v735, %v737
        %v749 = vsel %vm744, %v737, %v739
        %v750 = vsel %vm744, %v739, %v741
        %v751 = vsel %vm744, %v741, %v743
        %759 = vst [vmem:[#allocation2 + $0x1f8] sm:$0xff] %v745
        %760 = vst [vmem:[#allocation2 + $0x200] sm:$0xff] %v746
        %761 = vst [vmem:[#allocation2 + $0x208] sm:$0xff] %v747
        %762 = vst [vmem:[#allocation2 + $0x210] sm:$0xff] %v748
        %763 = vst [vmem:[#allocation2 + $0x218] sm:$0xff] %v749
        %764 = vst [vmem:[#allocation2 + $0x220] sm:$0xff] %v750
        %765 = vst [vmem:[#allocation2 + $0x228] sm:$0xff] %v751
        %v766 = vld [vmem:[%s198 + $0x10] sm:$0xff]
        %v767 = vld [vmem:[%s198 + $0x18] sm:$0xff]
        %v768 = vld [vmem:[%s198 + $0x20] sm:$0xff]
        %v769 = vld [vmem:[%s198 + $0x28] sm:$0xff]
        %v770 = vld [vmem:[%s198 + $0x30] sm:$0xff]
        %v771 = vld [vmem:[%s198 + $0x38] sm:$0xff]
        %v772 = vld [vmem:[%s198 + $0x40] sm:$0xff]
        %v773 = vld [vmem:[%s198 + $0x48] sm:$0xff]
        %782 = vrot.lane.b32.xlu0 %v766, 66
        %v783 = vpop.permute.xlu0 %782
        %784 = vrot.lane.b32.xlu0 %v767, 66
        %v785 = vpop.permute.xlu0 %784
        %786 = vrot.lane.b32.xlu0 %v768, 66
        %v787 = vpop.permute.xlu0 %786
        %788 = vrot.lane.b32.xlu0 %v769, 66
        %v789 = vpop.permute.xlu0 %788
        %790 = vrot.lane.b32.xlu0 %v770, 66
        %v791 = vpop.permute.xlu0 %790
        %792 = vrot.lane.b32.xlu0 %v771, 66
        %v793 = vpop.permute.xlu0 %792
        %794 = vrot.lane.b32.xlu0 %v772, 66
        %v795 = vpop.permute.xlu0 %794
        %796 = vrot.lane.b32.xlu0 %v773, 66
        %v797 = vpop.permute.xlu0 %796
        %vm798 = vcmask 539648
        %v799 = vsel %vm798, %v783, %v785
        %v800 = vsel %vm798, %v785, %v787
        %v801 = vsel %vm798, %v787, %v789
        %v802 = vsel %vm798, %v789, %v791
        %v803 = vsel %vm798, %v791, %v793
        %v804 = vsel %vm798, %v793, %v795
        %v805 = vsel %vm798, %v795, %v797
        %813 = vst [vmem:[#allocation2 + $0x230] sm:$0xff] %v799
        %814 = vst [vmem:[#allocation2 + $0x238] sm:$0xff] %v800
        %815 = vst [vmem:[#allocation2 + $0x240] sm:$0xff] %v801
        %816 = vst [vmem:[#allocation2 + $0x248] sm:$0xff] %v802
        %817 = vst [vmem:[#allocation2 + $0x250] sm:$0xff] %v803
        %818 = vst [vmem:[#allocation2 + $0x258] sm:$0xff] %v804
        %819 = vst [vmem:[#allocation2 + $0x260] sm:$0xff] %v805
        %v820 = vld [vmem:[%s198 + $0x10] sm:$0xff]
        %v821 = vld [vmem:[%s198 + $0x18] sm:$0xff]
        %v822 = vld [vmem:[%s198 + $0x20] sm:$0xff]
        %v823 = vld [vmem:[%s198 + $0x28] sm:$0xff]
        %v824 = vld [vmem:[%s198 + $0x30] sm:$0xff]
        %v825 = vld [vmem:[%s198 + $0x38] sm:$0xff]
        %v826 = vld [vmem:[%s198 + $0x40] sm:$0xff]
        %v827 = vld [vmem:[%s198 + $0x48] sm:$0xff]
        %836 = vrot.lane.b32.xlu0 %v820, 54
        %v837 = vpop.permute.xlu0 %836
        %838 = vrot.lane.b32.xlu0 %v821, 54
        %v839 = vpop.permute.xlu0 %838
        %840 = vrot.lane.b32.xlu0 %v822, 54
        %v841 = vpop.permute.xlu0 %840
        %842 = vrot.lane.b32.xlu0 %v823, 54
        %v843 = vpop.permute.xlu0 %842
        %844 = vrot.lane.b32.xlu0 %v824, 54
        %v845 = vpop.permute.xlu0 %844
        %846 = vrot.lane.b32.xlu0 %v825, 54
        %v847 = vpop.permute.xlu0 %846
        %848 = vrot.lane.b32.xlu0 %v826, 54
        %v849 = vpop.permute.xlu0 %848
        %850 = vrot.lane.b32.xlu0 %v827, 54
        %v851 = vpop.permute.xlu0 %850
        %vm852 = vcmask 441344
        %v853 = vsel %vm852, %v837, %v839
        %v854 = vsel %vm852, %v839, %v841
        %v855 = vsel %vm852, %v841, %v843
        %v856 = vsel %vm852, %v843, %v845
        %v857 = vsel %vm852, %v845, %v847
        %v858 = vsel %vm852, %v847, %v849
        %v859 = vsel %vm852, %v849, %v851
        %867 = vst [vmem:[#allocation2 + $0x268] sm:$0xff] %v853
        %868 = vst [vmem:[#allocation2 + $0x270] sm:$0xff] %v854
        %869 = vst [vmem:[#allocation2 + $0x278] sm:$0xff] %v855
        %870 = vst [vmem:[#allocation2 + $0x280] sm:$0xff] %v856
        %871 = vst [vmem:[#allocation2 + $0x288] sm:$0xff] %v857
        %872 = vst [vmem:[#allocation2 + $0x290] sm:$0xff] %v858
        %873 = vst [vmem:[#allocation2 + $0x298] sm:$0xff] %v859
        %v874 = vld [vmem:[%s198 + $0x10] sm:$0xff]
        %v875 = vld [vmem:[%s198 + $0x18] sm:$0xff]
        %v876 = vld [vmem:[%s198 + $0x20] sm:$0xff]
        %v877 = vld [vmem:[%s198 + $0x28] sm:$0xff]
        %v878 = vld [vmem:[%s198 + $0x30] sm:$0xff]
        %v879 = vld [vmem:[%s198 + $0x38] sm:$0xff]
        %v880 = vld [vmem:[%s198 + $0x40] sm:$0xff]
        %v881 = vld [vmem:[%s198 + $0x48] sm:$0xff]
        %890 = vrot.lane.b32.xlu0 %v874, 42
        %v891 = vpop.permute.xlu0 %890
        %892 = vrot.lane.b32.xlu0 %v875, 42
        %v893 = vpop.permute.xlu0 %892
        %894 = vrot.lane.b32.xlu0 %v876, 42
        %v895 = vpop.permute.xlu0 %894
        %896 = vrot.lane.b32.xlu0 %v877, 42
        %v897 = vpop.permute.xlu0 %896
        %898 = vrot.lane.b32.xlu0 %v878, 42
        %v899 = vpop.permute.xlu0 %898
        %900 = vrot.lane.b32.xlu0 %v879, 42
        %v901 = vpop.permute.xlu0 %900
        %902 = vrot.lane.b32.xlu0 %v880, 42
        %v903 = vpop.permute.xlu0 %902
        %904 = vrot.lane.b32.xlu0 %v881, 42
        %v905 = vpop.permute.xlu0 %904
        %vm906 = vcmask 343040
        %v907 = vsel %vm906, %v891, %v893
        %v908 = vsel %vm906, %v893, %v895
        %v909 = vsel %vm906, %v895, %v897
        %v910 = vsel %vm906, %v897, %v899
        %v911 = vsel %vm906, %v899, %v901
        %v912 = vsel %vm906, %v901, %v903
        %v913 = vsel %vm906, %v903, %v905
        %921 = vst [vmem:[#allocation2 + $0x2a0] sm:$0xff] %v907
        %922 = vst [vmem:[#allocation2 + $0x2a8] sm:$0xff] %v908
        %923 = vst [vmem:[#allocation2 + $0x2b0] sm:$0xff] %v909
        %924 = vst [vmem:[#allocation2 + $0x2b8] sm:$0xff] %v910
        %925 = vst [vmem:[#allocation2 + $0x2c0] sm:$0xff] %v911
        %926 = vst [vmem:[#allocation2 + $0x2c8] sm:$0xff] %v912
        %927 = vst [vmem:[#allocation2 + $0x2d0] sm:$0xff] %v913
        %v928 = vld [vmem:[%s198 + $0x38] sm:$0xff]
        %v929 = vld [vmem:[%s198 + $0x40] sm:$0xff]
        %v930 = vld [vmem:[%s198 + $0x48] sm:$0xff]
        %v931 = vld [vmem:[%s198 + $0x50] sm:$0xff]
        %v932 = vld [vmem:[%s198 + $0x58] sm:$0xff]
        %v933 = vld [vmem:[%s198 + $0x60] sm:$0xff]
        %v934 = vld [vmem:[%s198 + $0x68] sm:$0xff]
        %v935 = vld [vmem:[%s198 + $0x70] sm:$0xff]
        %944 = vrot.lane.b32.xlu0 %v928, 82
        %v945 = vpop.permute.xlu0 %944
        %946 = vrot.lane.b32.xlu0 %v929, 82
        %v947 = vpop.permute.xlu0 %946
        %948 = vrot.lane.b32.xlu0 %v930, 82
        %v949 = vpop.permute.xlu0 %948
        %950 = vrot.lane.b32.xlu0 %v931, 82
        %v951 = vpop.permute.xlu0 %950
        %952 = vrot.lane.b32.xlu0 %v932, 82
        %v953 = vpop.permute.xlu0 %952
        %954 = vrot.lane.b32.xlu0 %v933, 82
        %v955 = vpop.permute.xlu0 %954
        %956 = vrot.lane.b32.xlu0 %v934, 82
        %v957 = vpop.permute.xlu0 %956
        %958 = vrot.lane.b32.xlu0 %v935, 82
        %v959 = vpop.permute.xlu0 %958
        %vm960 = vcmask 670720
        %v961 = vsel %vm960, %v945, %v947
        %v962 = vsel %vm960, %v947, %v949
        %v963 = vsel %vm960, %v949, %v951
        %v964 = vsel %vm960, %v951, %v953
        %v965 = vsel %vm960, %v953, %v955
        %v966 = vsel %vm960, %v955, %v957
        %v967 = vsel %vm960, %v957, %v959
        %975 = vst [vmem:[#allocation2 + $0x2d8] sm:$0xff] %v961
        %976 = vst [vmem:[#allocation2 + $0x2e0] sm:$0xff] %v962
        %977 = vst [vmem:[#allocation2 + $0x2e8] sm:$0xff] %v963
        %978 = vst [vmem:[#allocation2 + $0x2f0] sm:$0xff] %v964
        %979 = vst [vmem:[#allocation2 + $0x2f8] sm:$0xff] %v965
        %980 = vst [vmem:[#allocation2 + $0x300] sm:$0xff] %v966
        %981 = vst [vmem:[#allocation2 + $0x308] sm:$0xff] %v967
        %v982 = vld [vmem:[%s198 + $0x38] sm:$0xff]
        %v983 = vld [vmem:[%s198 + $0x40] sm:$0xff]
        %v984 = vld [vmem:[%s198 + $0x48] sm:$0xff]
        %v985 = vld [vmem:[%s198 + $0x50] sm:$0xff]
        %v986 = vld [vmem:[%s198 + $0x58] sm:$0xff]
        %v987 = vld [vmem:[%s198 + $0x60] sm:$0xff]
        %v988 = vld [vmem:[%s198 + $0x68] sm:$0xff]
        %v989 = vld [vmem:[%s198 + $0x70] sm:$0xff]
        %998 = vrot.lane.b32.xlu0 %v982, 70
        %v999 = vpop.permute.xlu0 %998
        %1000 = vrot.lane.b32.xlu0 %v983, 70
        %v1001 = vpop.permute.xlu0 %1000
        %1002 = vrot.lane.b32.xlu0 %v984, 70
        %v1003 = vpop.permute.xlu0 %1002
        %1004 = vrot.lane.b32.xlu0 %v985, 70
        %v1005 = vpop.permute.xlu0 %1004
        %1006 = vrot.lane.b32.xlu0 %v986, 70
        %v1007 = vpop.permute.xlu0 %1006
        %1008 = vrot.lane.b32.xlu0 %v987, 70
        %v1009 = vpop.permute.xlu0 %1008
        %1010 = vrot.lane.b32.xlu0 %v988, 70
        %v1011 = vpop.permute.xlu0 %1010
        %1012 = vrot.lane.b32.xlu0 %v989, 70
        %v1013 = vpop.permute.xlu0 %1012
        %v1014 = vsel %vm259, %v999, %v1001
        %v1015 = vsel %vm259, %v1001, %v1003
        %v1016 = vsel %vm259, %v1003, %v1005
        %v1017 = vsel %vm259, %v1005, %v1007
        %v1018 = vsel %vm259, %v1007, %v1009
        %v1019 = vsel %vm259, %v1009, %v1011
        %v1020 = vsel %vm259, %v1011, %v1013
        %1028 = vst [vmem:[#allocation2 + $0x310] sm:$0xff] %v1014
        %1029 = vst [vmem:[#allocation2 + $0x318] sm:$0xff] %v1015
        %1030 = vst [vmem:[#allocation2 + $0x320] sm:$0xff] %v1016
        %1031 = vst [vmem:[#allocation2 + $0x328] sm:$0xff] %v1017
        %1032 = vst [vmem:[#allocation2 + $0x330] sm:$0xff] %v1018
        %1033 = vst [vmem:[#allocation2 + $0x338] sm:$0xff] %v1019
        %1034 = vst [vmem:[#allocation2 + $0x340] sm:$0xff] %v1020
        %v1035 = vld [vmem:[%s198 + $0x38] sm:$0xff]
        %v1036 = vld [vmem:[%s198 + $0x40] sm:$0xff]
        %v1037 = vld [vmem:[%s198 + $0x48] sm:$0xff]
        %v1038 = vld [vmem:[%s198 + $0x50] sm:$0xff]
        %v1039 = vld [vmem:[%s198 + $0x58] sm:$0xff]
        %v1040 = vld [vmem:[%s198 + $0x60] sm:$0xff]
        %v1041 = vld [vmem:[%s198 + $0x68] sm:$0xff]
        %v1042 = vld [vmem:[%s198 + $0x70] sm:$0xff]
        %1051 = vrot.lane.b32.xlu0 %v1035, 58
        %v1052 = vpop.permute.xlu0 %1051
        %1053 = vrot.lane.b32.xlu0 %v1036, 58
        %v1054 = vpop.permute.xlu0 %1053
        %1055 = vrot.lane.b32.xlu0 %v1037, 58
        %v1056 = vpop.permute.xlu0 %1055
        %1057 = vrot.lane.b32.xlu0 %v1038, 58
        %v1058 = vpop.permute.xlu0 %1057
        %1059 = vrot.lane.b32.xlu0 %v1039, 58
        %v1060 = vpop.permute.xlu0 %1059
        %1061 = vrot.lane.b32.xlu0 %v1040, 58
        %v1062 = vpop.permute.xlu0 %1061
        %1063 = vrot.lane.b32.xlu0 %v1041, 58
        %v1064 = vpop.permute.xlu0 %1063
        %1065 = vrot.lane.b32.xlu0 %v1042, 58
        %v1066 = vpop.permute.xlu0 %1065
        %vm1067 = vcmask 474112
        %v1068 = vsel %vm1067, %v1052, %v1054
        %v1069 = vsel %vm1067, %v1054, %v1056
        %v1070 = vsel %vm1067, %v1056, %v1058
        %v1071 = vsel %vm1067, %v1058, %v1060
        %v1072 = vsel %vm1067, %v1060, %v1062
        %v1073 = vsel %vm1067, %v1062, %v1064
        %v1074 = vsel %vm1067, %v1064, %v1066
        %1082 = vst [vmem:[#allocation2 + $0x348] sm:$0xff] %v1068
        %1083 = vst [vmem:[#allocation2 + $0x350] sm:$0xff] %v1069
        %1084 = vst [vmem:[#allocation2 + $0x358] sm:$0xff] %v1070
        %1085 = vst [vmem:[#allocation2 + $0x360] sm:$0xff] %v1071
        %1086 = vst [vmem:[#allocation2 + $0x368] sm:$0xff] %v1072
        %1087 = vst [vmem:[#allocation2 + $0x370] sm:$0xff] %v1073
        %1088 = vst [vmem:[#allocation2 + $0x378] sm:$0xff] %v1074
        %v1089 = vld [vmem:[%s198 + $0x60] sm:$0xff]
        %v1090 = vld [vmem:[%s198 + $0x68] sm:$0xff]
        %v1091 = vld [vmem:[%s198 + $0x70] sm:$0xff]
        %v1092 = vld [vmem:[%s198 + $0x78] sm:$0xff]
        %v1093 = vld [vmem:[%s198 + $0x80] sm:$0xff]
        %v1094 = vld [vmem:[%s198 + $0x88] sm:$0xff]
        %v1095 = vld [vmem:[%s198 + $0x90] sm:$0xff]
        %v1096 = vld [vmem:[%s198 + $0x98] sm:$0xff]
        %1105 = vrot.lane.b32.xlu0 %v1089, 98
        %v1106 = vpop.permute.xlu0 %1105
        %1107 = vrot.lane.b32.xlu0 %v1090, 98
        %v1108 = vpop.permute.xlu0 %1107
        %1109 = vrot.lane.b32.xlu0 %v1091, 98
        %v1110 = vpop.permute.xlu0 %1109
        %1111 = vrot.lane.b32.xlu0 %v1092, 98
        %v1112 = vpop.permute.xlu0 %1111
        %1113 = vrot.lane.b32.xlu0 %v1093, 98
        %v1114 = vpop.permute.xlu0 %1113
        %1115 = vrot.lane.b32.xlu0 %v1094, 98
        %v1116 = vpop.permute.xlu0 %1115
        %1117 = vrot.lane.b32.xlu0 %v1095, 98
        %v1118 = vpop.permute.xlu0 %1117
        %1119 = vrot.lane.b32.xlu0 %v1096, 98
        %v1120 = vpop.permute.xlu0 %1119
        %vm1121 = vcmask 801792
        %v1122 = vsel %vm1121, %v1106, %v1108
        %v1123 = vsel %vm1121, %v1108, %v1110
        %v1124 = vsel %vm1121, %v1110, %v1112
        %v1125 = vsel %vm1121, %v1112, %v1114
        %v1126 = vsel %vm1121, %v1114, %v1116
        %v1127 = vsel %vm1121, %v1116, %v1118
        %v1128 = vsel %vm1121, %v1118, %v1120
        %1136 = vst [vmem:[#allocation2 + $0x380] sm:$0xff] %v1122
        %1137 = vst [vmem:[#allocation2 + $0x388] sm:$0xff] %v1123
        %1138 = vst [vmem:[#allocation2 + $0x390] sm:$0xff] %v1124
        %1139 = vst [vmem:[#allocation2 + $0x398] sm:$0xff] %v1125
        %1140 = vst [vmem:[#allocation2 + $0x3a0] sm:$0xff] %v1126
        %1141 = vst [vmem:[#allocation2 + $0x3a8] sm:$0xff] %v1127
        %1142 = vst [vmem:[#allocation2 + $0x3b0] sm:$0xff] %v1128
        %v1143 = vld [vmem:[%s198 + $0x60] sm:$0xff]
        %v1144 = vld [vmem:[%s198 + $0x68] sm:$0xff]
        %v1145 = vld [vmem:[%s198 + $0x70] sm:$0xff]
        %v1146 = vld [vmem:[%s198 + $0x78] sm:$0xff]
        %v1147 = vld [vmem:[%s198 + $0x80] sm:$0xff]
        %v1148 = vld [vmem:[%s198 + $0x88] sm:$0xff]
        %v1149 = vld [vmem:[%s198 + $0x90] sm:$0xff]
        %v1150 = vld [vmem:[%s198 + $0x98] sm:$0xff]
        %1159 = vrot.lane.b32.xlu0 %v1143, 86
        %v1160 = vpop.permute.xlu0 %1159
        %1161 = vrot.lane.b32.xlu0 %v1144, 86
        %v1162 = vpop.permute.xlu0 %1161
        %1163 = vrot.lane.b32.xlu0 %v1145, 86
        %v1164 = vpop.permute.xlu0 %1163
        %1165 = vrot.lane.b32.xlu0 %v1146, 86
        %v1166 = vpop.permute.xlu0 %1165
        %1167 = vrot.lane.b32.xlu0 %v1147, 86
        %v1168 = vpop.permute.xlu0 %1167
        %1169 = vrot.lane.b32.xlu0 %v1148, 86
        %v1170 = vpop.permute.xlu0 %1169
        %1171 = vrot.lane.b32.xlu0 %v1149, 86
        %v1172 = vpop.permute.xlu0 %1171
        %1173 = vrot.lane.b32.xlu0 %v1150, 86
        %v1174 = vpop.permute.xlu0 %1173
        %vm1175 = vcmask 703488
        %v1176 = vsel %vm1175, %v1160, %v1162
        %v1177 = vsel %vm1175, %v1162, %v1164
        %v1178 = vsel %vm1175, %v1164, %v1166
        %v1179 = vsel %vm1175, %v1166, %v1168
        %v1180 = vsel %vm1175, %v1168, %v1170
        %v1181 = vsel %vm1175, %v1170, %v1172
        %v1182 = vsel %vm1175, %v1172, %v1174
        %1190 = vst [vmem:[#allocation2 + $0x3b8] sm:$0xff] %v1176
        %1191 = vst [vmem:[#allocation2 + $0x3c0] sm:$0xff] %v1177
        %1192 = vst [vmem:[#allocation2 + $0x3c8] sm:$0xff] %v1178
        %1193 = vst [vmem:[#allocation2 + $0x3d0] sm:$0xff] %v1179
        %1194 = vst [vmem:[#allocation2 + $0x3d8] sm:$0xff] %v1180
        %1195 = vst [vmem:[#allocation2 + $0x3e0] sm:$0xff] %v1181
        %1196 = vst [vmem:[#allocation2 + $0x3e8] sm:$0xff] %v1182
        %v1197 = vld [vmem:[%s198 + $0x60] sm:$0xff]
        %v1198 = vld [vmem:[%s198 + $0x68] sm:$0xff]
        %v1199 = vld [vmem:[%s198 + $0x70] sm:$0xff]
        %v1200 = vld [vmem:[%s198 + $0x78] sm:$0xff]
        %v1201 = vld [vmem:[%s198 + $0x80] sm:$0xff]
        %v1202 = vld [vmem:[%s198 + $0x88] sm:$0xff]
        %v1203 = vld [vmem:[%s198 + $0x90] sm:$0xff]
        %v1204 = vld [vmem:[%s198 + $0x98] sm:$0xff]
        %1213 = vrot.lane.b32.xlu0 %v1197, 74
        %v1214 = vpop.permute.xlu0 %1213
        %1215 = vrot.lane.b32.xlu0 %v1198, 74
        %v1216 = vpop.permute.xlu0 %1215
        %1217 = vrot.lane.b32.xlu0 %v1199, 74
        %v1218 = vpop.permute.xlu0 %1217
        %1219 = vrot.lane.b32.xlu0 %v1200, 74
        %v1220 = vpop.permute.xlu0 %1219
        %1221 = vrot.lane.b32.xlu0 %v1201, 74
        %v1222 = vpop.permute.xlu0 %1221
        %1223 = vrot.lane.b32.xlu0 %v1202, 74
        %v1224 = vpop.permute.xlu0 %1223
        %1225 = vrot.lane.b32.xlu0 %v1203, 74
        %v1226 = vpop.permute.xlu0 %1225
        %1227 = vrot.lane.b32.xlu0 %v1204, 74
        %v1228 = vpop.permute.xlu0 %1227
        %vm1229 = vcmask 605184
        %v1230 = vsel %vm1229, %v1214, %v1216
        %v1231 = vsel %vm1229, %v1216, %v1218
        %v1232 = vsel %vm1229, %v1218, %v1220
        %v1233 = vsel %vm1229, %v1220, %v1222
        %v1234 = vsel %vm1229, %v1222, %v1224
        %v1235 = vsel %vm1229, %v1224, %v1226
        %v1236 = vsel %vm1229, %v1226, %v1228
        %1244 = vst [vmem:[#allocation2 + $0x3f0] sm:$0xff] %v1230
        %1245 = vst [vmem:[#allocation2 + $0x3f8] sm:$0xff] %v1231
        %1246 = vst [vmem:[#allocation2 + $0x400] sm:$0xff] %v1232
        %1247 = vst [vmem:[#allocation2 + $0x408] sm:$0xff] %v1233
        %1248 = vst [vmem:[#allocation2 + $0x410] sm:$0xff] %v1234
        %1249 = vst [vmem:[#allocation2 + $0x418] sm:$0xff] %v1235
        %1250 = vst [vmem:[#allocation2 + $0x420] sm:$0xff] %v1236
        %v1251 = vld [vmem:[%s198] sm:$0xff]
        %v1252 = vld [vmem:[%s198 + $0x8] sm:$0xff]
        %v1253 = vld [vmem:[%s198 + $0x10] sm:$0xff]
        %v1254 = vld [vmem:[%s198 + $0x18] sm:$0xff]
        %v1255 = vld [vmem:[%s198 + $0x20] sm:$0xff]
        %v1256 = vld [vmem:[%s198 + $0x28] sm:$0xff]
        %v1257 = vld [vmem:[%s198 + $0x30] sm:$0xff]
        %1258 = vst [vmem:[#allocation2 + $0x428] sm:$0xff] %v1251
        %1259 = vst [vmem:[#allocation2 + $0x430] sm:$0xff] %v1252
        %1260 = vst [vmem:[#allocation2 + $0x438] sm:$0xff] %v1253
        %1261 = vst [vmem:[#allocation2 + $0x440] sm:$0xff] %v1254
        %1262 = vst [vmem:[#allocation2 + $0x448] sm:$0xff] %v1255
        %1263 = vst [vmem:[#allocation2 + $0x450] sm:$0xff] %v1256
        %1264 = vst [vmem:[#allocation2 + $0x458] sm:$0xff] %v1257
        %v1265 = vld [vmem:[%s198] sm:$0xff]
        %v1266 = vld [vmem:[%s198 + $0x8] sm:$0xff]
        %v1267 = vld [vmem:[%s198 + $0x10] sm:$0xff]
        %v1268 = vld [vmem:[%s198 + $0x18] sm:$0xff]
        %v1269 = vld [vmem:[%s198 + $0x20] sm:$0xff]
        %v1270 = vld [vmem:[%s198 + $0x28] sm:$0xff]
        %v1271 = vld [vmem:[%s198 + $0x30] sm:$0xff]
        %v1272 = vld [vmem:[%s198 + $0x38] sm:$0xff]
        %1281 = vrot.lane.b32.xlu0 %v1265, 110
        %v1282 = vpop.permute.xlu0 %1281
        %1283 = vrot.lane.b32.xlu0 %v1266, 110
        %v1284 = vpop.permute.xlu0 %1283
        %1285 = vrot.lane.b32.xlu0 %v1267, 110
        %v1286 = vpop.permute.xlu0 %1285
        %1287 = vrot.lane.b32.xlu0 %v1268, 110
        %v1288 = vpop.permute.xlu0 %1287
        %1289 = vrot.lane.b32.xlu0 %v1269, 110
        %v1290 = vpop.permute.xlu0 %1289
        %1291 = vrot.lane.b32.xlu0 %v1270, 110
        %v1292 = vpop.permute.xlu0 %1291
        %1293 = vrot.lane.b32.xlu0 %v1271, 110
        %v1294 = vpop.permute.xlu0 %1293
        %1295 = vrot.lane.b32.xlu0 %v1272, 110
        %v1296 = vpop.permute.xlu0 %1295
        %vm1297 = vcmask 900096
        %v1298 = vsel %vm1297, %v1282, %v1284
        %v1299 = vsel %vm1297, %v1284, %v1286
        %v1300 = vsel %vm1297, %v1286, %v1288
        %v1301 = vsel %vm1297, %v1288, %v1290
        %v1302 = vsel %vm1297, %v1290, %v1292
        %v1303 = vsel %vm1297, %v1292, %v1294
        %v1304 = vsel %vm1297, %v1294, %v1296
        %1312 = vst [vmem:[#allocation2 + $0x460] sm:$0xff] %v1298
        %1313 = vst [vmem:[#allocation2 + $0x468] sm:$0xff] %v1299
        %1314 = vst [vmem:[#allocation2 + $0x470] sm:$0xff] %v1300
        %1315 = vst [vmem:[#allocation2 + $0x478] sm:$0xff] %v1301
        %1316 = vst [vmem:[#allocation2 + $0x480] sm:$0xff] %v1302
        %1317 = vst [vmem:[#allocation2 + $0x488] sm:$0xff] %v1303
        %1318 = vst [vmem:[#allocation2 + $0x490] sm:$0xff] %v1304
        %v1319 = vld [vmem:[%s198] sm:$0xff]
        %v1320 = vld [vmem:[%s198 + $0x8] sm:$0xff]
        %v1321 = vld [vmem:[%s198 + $0x10] sm:$0xff]
        %v1322 = vld [vmem:[%s198 + $0x18] sm:$0xff]
        %v1323 = vld [vmem:[%s198 + $0x20] sm:$0xff]
        %v1324 = vld [vmem:[%s198 + $0x28] sm:$0xff]
        %v1325 = vld [vmem:[%s198 + $0x30] sm:$0xff]
        %v1326 = vld [vmem:[%s198 + $0x38] sm:$0xff]
        %1335 = vrot.lane.b32.xlu0 %v1319, 92
        %v1336 = vpop.permute.xlu0 %1335
        %1337 = vrot.lane.b32.xlu0 %v1320, 92
        %v1338 = vpop.permute.xlu0 %1337
        %1339 = vrot.lane.b32.xlu0 %v1321, 92
        %v1340 = vpop.permute.xlu0 %1339
        %1341 = vrot.lane.b32.xlu0 %v1322, 92
        %v1342 = vpop.permute.xlu0 %1341
        %1343 = vrot.lane.b32.xlu0 %v1323, 92
        %v1344 = vpop.permute.xlu0 %1343
        %1345 = vrot.lane.b32.xlu0 %v1324, 92
        %v1346 = vpop.permute.xlu0 %1345
        %1347 = vrot.lane.b32.xlu0 %v1325, 92
        %v1348 = vpop.permute.xlu0 %1347
        %1349 = vrot.lane.b32.xlu0 %v1326, 92
        %v1350 = vpop.permute.xlu0 %1349
        %vm1351 = vcmask 752640
        %v1352 = vsel %vm1351, %v1336, %v1338
        %v1353 = vsel %vm1351, %v1338, %v1340
        %v1354 = vsel %vm1351, %v1340, %v1342
        %v1355 = vsel %vm1351, %v1342, %v1344
        %v1356 = vsel %vm1351, %v1344, %v1346
        %v1357 = vsel %vm1351, %v1346, %v1348
        %v1358 = vsel %vm1351, %v1348, %v1350
        %1366 = vst [vmem:[#allocation2 + $0x498] sm:$0xff] %v1352
        %1367 = vst [vmem:[#allocation2 + $0x4a0] sm:$0xff] %v1353
        %1368 = vst [vmem:[#allocation2 + $0x4a8] sm:$0xff] %v1354
        %1369 = vst [vmem:[#allocation2 + $0x4b0] sm:$0xff] %v1355
        %1370 = vst [vmem:[#allocation2 + $0x4b8] sm:$0xff] %v1356
        %1371 = vst [vmem:[#allocation2 + $0x4c0] sm:$0xff] %v1357
        %1372 = vst [vmem:[#allocation2 + $0x4c8] sm:$0xff] %v1358
        %v1373 = vld [vmem:[%s198 + $0x38] sm:$0xff]
        %v1374 = vld [vmem:[%s198 + $0x40] sm:$0xff]
        %v1375 = vld [vmem:[%s198 + $0x48] sm:$0xff]
        %v1376 = vld [vmem:[%s198 + $0x50] sm:$0xff]
        %v1377 = vld [vmem:[%s198 + $0x58] sm:$0xff]
        %v1378 = vld [vmem:[%s198 + $0x60] sm:$0xff]
        %v1379 = vld [vmem:[%s198 + $0x68] sm:$0xff]
        %v1380 = vld [vmem:[%s198 + $0x70] sm:$0xff]
        %1389 = vrot.lane.b32.xlu0 %v1373, 88
        %v1390 = vpop.permute.xlu0 %1389
        %1391 = vrot.lane.b32.xlu0 %v1374, 88
        %v1392 = vpop.permute.xlu0 %1391
        %1393 = vrot.lane.b32.xlu0 %v1375, 88
        %v1394 = vpop.permute.xlu0 %1393
        %1395 = vrot.lane.b32.xlu0 %v1376, 88
        %v1396 = vpop.permute.xlu0 %1395
        %1397 = vrot.lane.b32.xlu0 %v1377, 88
        %v1398 = vpop.permute.xlu0 %1397
        %1399 = vrot.lane.b32.xlu0 %v1378, 88
        %v1400 = vpop.permute.xlu0 %1399
        %1401 = vrot.lane.b32.xlu0 %v1379, 88
        %v1402 = vpop.permute.xlu0 %1401
        %1403 = vrot.lane.b32.xlu0 %v1380, 88
        %v1404 = vpop.permute.xlu0 %1403
        %vm1405 = vcmask 719872
        %v1406 = vsel %vm1405, %v1390, %v1392
        %v1407 = vsel %vm1405, %v1392, %v1394
        %v1408 = vsel %vm1405, %v1394, %v1396
        %v1409 = vsel %vm1405, %v1396, %v1398
        %v1410 = vsel %vm1405, %v1398, %v1400
        %v1411 = vsel %vm1405, %v1400, %v1402
        %v1412 = vsel %vm1405, %v1402, %v1404
        %1420 = vst [vmem:[#allocation2 + $0x4d0] sm:$0xff] %v1406
        %1421 = vst [vmem:[#allocation2 + $0x4d8] sm:$0xff] %v1407
        %1422 = vst [vmem:[#allocation2 + $0x4e0] sm:$0xff] %v1408
        %1423 = vst [vmem:[#allocation2 + $0x4e8] sm:$0xff] %v1409
        %1424 = vst [vmem:[#allocation2 + $0x4f0] sm:$0xff] %v1410
        %1425 = vst [vmem:[#allocation2 + $0x4f8] sm:$0xff] %v1411
        %1426 = vst [vmem:[#allocation2 + $0x500] sm:$0xff] %v1412
        %v1427 = vld [vmem:[%s198 + $0x38] sm:$0xff]
        %v1428 = vld [vmem:[%s198 + $0x40] sm:$0xff]
        %v1429 = vld [vmem:[%s198 + $0x48] sm:$0xff]
        %v1430 = vld [vmem:[%s198 + $0x50] sm:$0xff]
        %v1431 = vld [vmem:[%s198 + $0x58] sm:$0xff]
        %v1432 = vld [vmem:[%s198 + $0x60] sm:$0xff]
        %v1433 = vld [vmem:[%s198 + $0x68] sm:$0xff]
        %v1434 = vld [vmem:[%s198 + $0x70] sm:$0xff]
        %1443 = vrot.lane.b32.xlu0 %v1427, 70
        %v1444 = vpop.permute.xlu0 %1443
        %1445 = vrot.lane.b32.xlu0 %v1428, 70
        %v1446 = vpop.permute.xlu0 %1445
        %1447 = vrot.lane.b32.xlu0 %v1429, 70
        %v1448 = vpop.permute.xlu0 %1447
        %1449 = vrot.lane.b32.xlu0 %v1430, 70
        %v1450 = vpop.permute.xlu0 %1449
        %1451 = vrot.lane.b32.xlu0 %v1431, 70
        %v1452 = vpop.permute.xlu0 %1451
        %1453 = vrot.lane.b32.xlu0 %v1432, 70
        %v1454 = vpop.permute.xlu0 %1453
        %1455 = vrot.lane.b32.xlu0 %v1433, 70
        %v1456 = vpop.permute.xlu0 %1455
        %1457 = vrot.lane.b32.xlu0 %v1434, 70
        %v1458 = vpop.permute.xlu0 %1457
        %v1459 = vsel %vm259, %v1444, %v1446
        %v1460 = vsel %vm259, %v1446, %v1448
        %v1461 = vsel %vm259, %v1448, %v1450
        %v1462 = vsel %vm259, %v1450, %v1452
        %v1463 = vsel %vm259, %v1452, %v1454
        %v1464 = vsel %vm259, %v1454, %v1456
        %v1465 = vsel %vm259, %v1456, %v1458
        %1473 = vst [vmem:[#allocation2 + $0x508] sm:$0xff] %v1459
        %1474 = vst [vmem:[#allocation2 + $0x510] sm:$0xff] %v1460
        %1475 = vst [vmem:[#allocation2 + $0x518] sm:$0xff] %v1461
        %1476 = vst [vmem:[#allocation2 + $0x520] sm:$0xff] %v1462
        %1477 = vst [vmem:[#allocation2 + $0x528] sm:$0xff] %v1463
        %1478 = vst [vmem:[#allocation2 + $0x530] sm:$0xff] %v1464
        %1479 = vst [vmem:[#allocation2 + $0x538] sm:$0xff] %v1465
        %v1480 = vld [vmem:[%s198 + $0x38] sm:$0xff]
        %v1481 = vld [vmem:[%s198 + $0x40] sm:$0xff]
        %v1482 = vld [vmem:[%s198 + $0x48] sm:$0xff]
        %v1483 = vld [vmem:[%s198 + $0x50] sm:$0xff]
        %v1484 = vld [vmem:[%s198 + $0x58] sm:$0xff]
        %v1485 = vld [vmem:[%s198 + $0x60] sm:$0xff]
        %v1486 = vld [vmem:[%s198 + $0x68] sm:$0xff]
        %v1487 = vld [vmem:[%s198 + $0x70] sm:$0xff]
        %1496 = vrot.lane.b32.xlu0 %v1480, 52
        %v1497 = vpop.permute.xlu0 %1496
        %1498 = vrot.lane.b32.xlu0 %v1481, 52
        %v1499 = vpop.permute.xlu0 %1498
        %1500 = vrot.lane.b32.xlu0 %v1482, 52
        %v1501 = vpop.permute.xlu0 %1500
        %1502 = vrot.lane.b32.xlu0 %v1483, 52
        %v1503 = vpop.permute.xlu0 %1502
        %1504 = vrot.lane.b32.xlu0 %v1484, 52
        %v1505 = vpop.permute.xlu0 %1504
        %1506 = vrot.lane.b32.xlu0 %v1485, 52
        %v1507 = vpop.permute.xlu0 %1506
        %1508 = vrot.lane.b32.xlu0 %v1486, 52
        %v1509 = vpop.permute.xlu0 %1508
        %1510 = vrot.lane.b32.xlu0 %v1487, 52
        %v1511 = vpop.permute.xlu0 %1510
        %vm1512 = vcmask 424960
        %v1513 = vsel %vm1512, %v1497, %v1499
        %v1514 = vsel %vm1512, %v1499, %v1501
        %v1515 = vsel %vm1512, %v1501, %v1503
        %v1516 = vsel %vm1512, %v1503, %v1505
        %v1517 = vsel %vm1512, %v1505, %v1507
        %v1518 = vsel %vm1512, %v1507, %v1509
        %v1519 = vsel %vm1512, %v1509, %v1511
        %1527 = vst [vmem:[#allocation2 + $0x540] sm:$0xff] %v1513
        %1528 = vst [vmem:[#allocation2 + $0x548] sm:$0xff] %v1514
        %1529 = vst [vmem:[#allocation2 + $0x550] sm:$0xff] %v1515
        %1530 = vst [vmem:[#allocation2 + $0x558] sm:$0xff] %v1516
        %1531 = vst [vmem:[#allocation2 + $0x560] sm:$0xff] %v1517
        %1532 = vst [vmem:[#allocation2 + $0x568] sm:$0xff] %v1518
        %1533 = vst [vmem:[#allocation2 + $0x570] sm:$0xff] %v1519
        %v1534 = vld [vmem:[%s198 + $0x70] sm:$0xff]
        %v1535 = vld [vmem:[%s198 + $0x78] sm:$0xff]
        %v1536 = vld [vmem:[%s198 + $0x80] sm:$0xff]
        %v1537 = vld [vmem:[%s198 + $0x88] sm:$0xff]
        %v1538 = vld [vmem:[%s198 + $0x90] sm:$0xff]
        %v1539 = vld [vmem:[%s198 + $0x98] sm:$0xff]
        %v1540 = vld [vmem:[%s198 + $0xa0] sm:$0xff]
        %v1541 = vld [vmem:[%s198 + $0xa8] sm:$0xff]
        %1550 = vrot.lane.b32.xlu0 %v1534, 48
        %v1551 = vpop.permute.xlu0 %1550
        %1552 = vrot.lane.b32.xlu0 %v1535, 48
        %v1553 = vpop.permute.xlu0 %1552
        %1554 = vrot.lane.b32.xlu0 %v1536, 48
        %v1555 = vpop.permute.xlu0 %1554
        %1556 = vrot.lane.b32.xlu0 %v1537, 48
        %v1557 = vpop.permute.xlu0 %1556
        %1558 = vrot.lane.b32.xlu0 %v1538, 48
        %v1559 = vpop.permute.xlu0 %1558
        %1560 = vrot.lane.b32.xlu0 %v1539, 48
        %v1561 = vpop.permute.xlu0 %1560
        %1562 = vrot.lane.b32.xlu0 %v1540, 48
        %v1563 = vpop.permute.xlu0 %1562
        %1564 = vrot.lane.b32.xlu0 %v1541, 48
        %v1565 = vpop.permute.xlu0 %1564
        %vm1566 = vcmask 392192
        %v1567 = vsel %vm1566, %v1551, %v1553
        %v1568 = vsel %vm1566, %v1553, %v1555
        %v1569 = vsel %vm1566, %v1555, %v1557
        %v1570 = vsel %vm1566, %v1557, %v1559
        %v1571 = vsel %vm1566, %v1559, %v1561
        %v1572 = vsel %vm1566, %v1561, %v1563
        %v1573 = vsel %vm1566, %v1563, %v1565
        %1581 = vst [vmem:[#allocation2 + $0x578] sm:$0xff] %v1567
        %1582 = vst [vmem:[#allocation2 + $0x580] sm:$0xff] %v1568
        %1583 = vst [vmem:[#allocation2 + $0x588] sm:$0xff] %v1569
        %1584 = vst [vmem:[#allocation2 + $0x590] sm:$0xff] %v1570
        %1585 = vst [vmem:[#allocation2 + $0x598] sm:$0xff] %v1571
        %1586 = vst [vmem:[#allocation2 + $0x5a0] sm:$0xff] %v1572
        %1587 = vst [vmem:[#allocation2 + $0x5a8] sm:$0xff] %v1573
        %v1588 = vld [vmem:[%s198 + $0x70] sm:$0xff]
        %v1589 = vld [vmem:[%s198 + $0x78] sm:$0xff]
        %v1590 = vld [vmem:[%s198 + $0x80] sm:$0xff]
        %v1591 = vld [vmem:[%s198 + $0x88] sm:$0xff]
        %v1592 = vld [vmem:[%s198 + $0x90] sm:$0xff]
        %v1593 = vld [vmem:[%s198 + $0x98] sm:$0xff]
        %v1594 = vld [vmem:[%s198 + $0xa0] sm:$0xff]
        %v1595 = vld [vmem:[%s198 + $0xa8] sm:$0xff]
        %1604 = vrot.lane.b32.xlu0 %v1588, 30
        %v1605 = vpop.permute.xlu0 %1604
        %1606 = vrot.lane.b32.xlu0 %v1589, 30
        %v1607 = vpop.permute.xlu0 %1606
        %1608 = vrot.lane.b32.xlu0 %v1590, 30
        %v1609 = vpop.permute.xlu0 %1608
        %1610 = vrot.lane.b32.xlu0 %v1591, 30
        %v1611 = vpop.permute.xlu0 %1610
        %1612 = vrot.lane.b32.xlu0 %v1592, 30
        %v1613 = vpop.permute.xlu0 %1612
        %1614 = vrot.lane.b32.xlu0 %v1593, 30
        %v1615 = vpop.permute.xlu0 %1614
        %1616 = vrot.lane.b32.xlu0 %v1594, 30
        %v1617 = vpop.permute.xlu0 %1616
        %1618 = vrot.lane.b32.xlu0 %v1595, 30
        %v1619 = vpop.permute.xlu0 %1618
        %vm1620 = vcmask 244736
        %v1621 = vsel %vm1620, %v1605, %v1607
        %v1622 = vsel %vm1620, %v1607, %v1609
        %v1623 = vsel %vm1620, %v1609, %v1611
        %v1624 = vsel %vm1620, %v1611, %v1613
        %v1625 = vsel %vm1620, %v1613, %v1615
        %v1626 = vsel %vm1620, %v1615, %v1617
        %v1627 = vsel %vm1620, %v1617, %v1619
        %1635 = vst [vmem:[#allocation2 + $0x5b0] sm:$0xff] %v1621
        %1636 = vst [vmem:[#allocation2 + $0x5b8] sm:$0xff] %v1622
        %1637 = vst [vmem:[#allocation2 + $0x5c0] sm:$0xff] %v1623
        %1638 = vst [vmem:[#allocation2 + $0x5c8] sm:$0xff] %v1624
        %1639 = vst [vmem:[#allocation2 + $0x5d0] sm:$0xff] %v1625
        %1640 = vst [vmem:[#allocation2 + $0x5d8] sm:$0xff] %v1626
        %1641 = vst [vmem:[#allocation2 + $0x5e0] sm:$0xff] %v1627
        %v1642 = vld [vmem:[%s198 + $0x70] sm:$0xff]
        %v1643 = vld [vmem:[%s198 + $0x78] sm:$0xff]
        %v1644 = vld [vmem:[%s198 + $0x80] sm:$0xff]
        %v1645 = vld [vmem:[%s198 + $0x88] sm:$0xff]
        %v1646 = vld [vmem:[%s198 + $0x90] sm:$0xff]
        %v1647 = vld [vmem:[%s198 + $0x98] sm:$0xff]
        %v1648 = vld [vmem:[%s198 + $0xa0] sm:$0xff]
        %v1649 = vld [vmem:[%s198 + $0xa8] sm:$0xff]
        %1658 = vrot.lane.b32.xlu0 %v1642, 12
        %v1659 = vpop.permute.xlu0 %1658
        %1660 = vrot.lane.b32.xlu0 %v1643, 12
        %v1661 = vpop.permute.xlu0 %1660
        %1662 = vrot.lane.b32.xlu0 %v1644, 12
        %v1663 = vpop.permute.xlu0 %1662
        %1664 = vrot.lane.b32.xlu0 %v1645, 12
        %v1665 = vpop.permute.xlu0 %1664
        %1666 = vrot.lane.b32.xlu0 %v1646, 12
        %v1667 = vpop.permute.xlu0 %1666
        %1668 = vrot.lane.b32.xlu0 %v1647, 12
        %v1669 = vpop.permute.xlu0 %1668
        %1670 = vrot.lane.b32.xlu0 %v1648, 12
        %v1671 = vpop.permute.xlu0 %1670
        %1672 = vrot.lane.b32.xlu0 %v1649, 12
        %v1673 = vpop.permute.xlu0 %1672
        %vm1674 = vcmask 97280
        %v1675 = vsel %vm1674, %v1659, %v1661
        %v1676 = vsel %vm1674, %v1661, %v1663
        %v1677 = vsel %vm1674, %v1663, %v1665
        %v1678 = vsel %vm1674, %v1665, %v1667
        %v1679 = vsel %vm1674, %v1667, %v1669
        %v1680 = vsel %vm1674, %v1669, %v1671
        %v1681 = vsel %vm1674, %v1671, %v1673
        %1689 = vst [vmem:[#allocation2 + $0x5e8] sm:$0xff] %v1675
        %1690 = vst [vmem:[#allocation2 + $0x5f0] sm:$0xff] %v1676
        %1691 = vst [vmem:[#allocation2 + $0x5f8] sm:$0xff] %v1677
        %1692 = vst [vmem:[#allocation2 + $0x600] sm:$0xff] %v1678
        %1693 = vst [vmem:[#allocation2 + $0x608] sm:$0xff] %v1679
        %1694 = vst [vmem:[#allocation2 + $0x610] sm:$0xff] %v1680
        %1695 = vst [vmem:[#allocation2 + $0x618] sm:$0xff] %v1681
        %v1696 = vld [vmem:[#allocation6] sm:$0xff]
        %v1697 = vld [vmem:[#allocation6 + $0x8] sm:$0xff]
        %v1698 = vld [vmem:[#allocation2] sm:$0xff]
        %v1699 = vld [vmem:[#allocation2 + $0x8] sm:$0xff]
        %v1700 = vld [vmem:[#allocation2 + $0x10] sm:$0xff]
        %v1701 = vld [vmem:[#allocation2 + $0x18] sm:$0xff]
        %v1702 = vld [vmem:[#allocation2 + $0x20] sm:$0xff]
        %v1703 = vld [vmem:[#allocation2 + $0x28] sm:$0xff]
        %v1704 = vld [vmem:[#allocation2 + $0x30] sm:$0xff]
        %v1705 = vld [vmem:[#allocation2 + $0x38] sm:$0xff]
        %v1706 = vld [vmem:[#allocation2 + $0x40] sm:$0xff]
        %v1707 = vld [vmem:[#allocation2 + $0x48] sm:$0xff]
        %v1708 = vld [vmem:[#allocation2 + $0x50] sm:$0xff]
        %v1709 = vld [vmem:[#allocation2 + $0x58] sm:$0xff]
        %v1710 = vld [vmem:[#allocation2 + $0x60] sm:$0xff]
        %v1711 = vld [vmem:[#allocation2 + $0x68] sm:$0xff]
        %v1712 = vld [vmem:[#allocation2 + $0x70] sm:$0xff]
        %v1713 = vld [vmem:[#allocation2 + $0x78] sm:$0xff]
        %v1714 = vld [vmem:[#allocation2 + $0x80] sm:$0xff]
        %v1715 = vld [vmem:[#allocation2 + $0x88] sm:$0xff]
        %v1716 = vld [vmem:[#allocation2 + $0x90] sm:$0xff]
        %v1717 = vld [vmem:[#allocation2 + $0x98] sm:$0xff]
        %v1718 = vld [vmem:[#allocation2 + $0xa0] sm:$0xff]
        %v1719 = vld [vmem:[#allocation2 + $0xa8] sm:$0xff]
        %v1720 = vld [vmem:[#allocation2 + $0xb0] sm:$0xff]
        %v1721 = vld [vmem:[#allocation2 + $0xb8] sm:$0xff]
        %v1722 = vld [vmem:[#allocation2 + $0xc0] sm:$0xff]
        %v1723 = vld [vmem:[#allocation2 + $0xc8] sm:$0xff]
        %v1724 = vld [vmem:[#allocation2 + $0xd0] sm:$0xff]
        %v1725 = vld [vmem:[#allocation2 + $0xd8] sm:$0xff]
        %v1726 = vld [vmem:[#allocation2 + $0xe0] sm:$0xff]
        %v1727 = vld [vmem:[#allocation2 + $0xe8] sm:$0xff]
        %v1728 = vld [vmem:[#allocation2 + $0xf0] sm:$0xff]
        %v1729 = vld [vmem:[#allocation2 + $0xf8] sm:$0xff]
        %v1730 = vld [vmem:[#allocation2 + $0x100] sm:$0xff]
        %v1731 = vld [vmem:[#allocation2 + $0x108] sm:$0xff]
        %v1732 = vld [vmem:[#allocation2 + $0x110] sm:$0xff]
        %v1733 = vld [vmem:[#allocation2 + $0x118] sm:$0xff]
        %v1734 = vld [vmem:[#allocation2 + $0x120] sm:$0xff]
        %v1735 = vld [vmem:[#allocation2 + $0x128] sm:$0xff]
        %v1736 = vld [vmem:[#allocation2 + $0x130] sm:$0xff]
        %v1737 = vld [vmem:[#allocation2 + $0x138] sm:$0xff]
        %v1738 = vld [vmem:[#allocation2 + $0x140] sm:$0xff]
        %v1739 = vld [vmem:[#allocation2 + $0x148] sm:$0xff]
        %v1740 = vld [vmem:[#allocation2 + $0x150] sm:$0xff]
        %v1741 = vld [vmem:[#allocation2 + $0x158] sm:$0xff]
        %v1742 = vld [vmem:[#allocation2 + $0x160] sm:$0xff]
        %v1743 = vld [vmem:[#allocation2 + $0x168] sm:$0xff]
        %v1744 = vld [vmem:[#allocation2 + $0x170] sm:$0xff]
        %v1745 = vld [vmem:[#allocation2 + $0x178] sm:$0xff]
        %v1746 = vld [vmem:[#allocation2 + $0x180] sm:$0xff]
        %v1747 = vld [vmem:[#allocation2 + $0x188] sm:$0xff]
        %v1748 = vld [vmem:[#allocation2 + $0x190] sm:$0xff]
        %v1749 = vld [vmem:[#allocation2 + $0x198] sm:$0xff]
        %v1750 = vld [vmem:[#allocation2 + $0x1a0] sm:$0xff]
        %v1751 = vld [vmem:[#allocation2 + $0x1a8] sm:$0xff]
        %v1752 = vld [vmem:[#allocation2 + $0x1b0] sm:$0xff]
        %v1753 = vld [vmem:[#allocation2 + $0x1b8] sm:$0xff]
        %v1754 = vld [vmem:[#allocation2 + $0x1c0] sm:$0xff]
        %v1755 = vld [vmem:[#allocation2 + $0x1c8] sm:$0xff]
        %v1756 = vld [vmem:[#allocation2 + $0x1d0] sm:$0xff]
        %v1757 = vld [vmem:[#allocation2 + $0x1d8] sm:$0xff]
        %v1758 = vld [vmem:[#allocation2 + $0x1e0] sm:$0xff]
        %v1759 = vld [vmem:[#allocation2 + $0x1e8] sm:$0xff]
        %v1760 = vld [vmem:[#allocation2 + $0x1f0] sm:$0xff]
        %v1761 = vld [vmem:[#allocation2 + $0x1f8] sm:$0xff]
        %v1762 = vld [vmem:[#allocation2 + $0x200] sm:$0xff]
        %v1763 = vld [vmem:[#allocation2 + $0x208] sm:$0xff]
        %v1764 = vld [vmem:[#allocation2 + $0x210] sm:$0xff]
        %v1765 = vld [vmem:[#allocation2 + $0x218] sm:$0xff]
        %v1766 = vld [vmem:[#allocation2 + $0x220] sm:$0xff]
        %v1767 = vld [vmem:[#allocation2 + $0x228] sm:$0xff]
        %v1768 = vld [vmem:[#allocation2 + $0x230] sm:$0xff]
        %v1769 = vld [vmem:[#allocation2 + $0x238] sm:$0xff]
        %v1770 = vld [vmem:[#allocation2 + $0x240] sm:$0xff]
        %v1771 = vld [vmem:[#allocation2 + $0x248] sm:$0xff]
        %v1772 = vld [vmem:[#allocation2 + $0x250] sm:$0xff]
        %v1773 = vld [vmem:[#allocation2 + $0x258] sm:$0xff]
        %v1774 = vld [vmem:[#allocation2 + $0x260] sm:$0xff]
        %v1775 = vld [vmem:[#allocation2 + $0x268] sm:$0xff]
        %v1776 = vld [vmem:[#allocation2 + $0x270] sm:$0xff]
        %v1777 = vld [vmem:[#allocation2 + $0x278] sm:$0xff]
        %v1778 = vld [vmem:[#allocation2 + $0x280] sm:$0xff]
        %v1779 = vld [vmem:[#allocation2 + $0x288] sm:$0xff]
        %v1780 = vld [vmem:[#allocation2 + $0x290] sm:$0xff]
        %v1781 = vld [vmem:[#allocation2 + $0x298] sm:$0xff]
        %v1782 = vld [vmem:[#allocation2 + $0x2a0] sm:$0xff]
        %v1783 = vld [vmem:[#allocation2 + $0x2a8] sm:$0xff]
        %v1784 = vld [vmem:[#allocation2 + $0x2b0] sm:$0xff]
        %v1785 = vld [vmem:[#allocation2 + $0x2b8] sm:$0xff]
        %v1786 = vld [vmem:[#allocation2 + $0x2c0] sm:$0xff]
        %v1787 = vld [vmem:[#allocation2 + $0x2c8] sm:$0xff]
        %v1788 = vld [vmem:[#allocation2 + $0x2d0] sm:$0xff]
        %v1789 = vld [vmem:[#allocation2 + $0x2d8] sm:$0xff]
        %v1790 = vld [vmem:[#allocation2 + $0x2e0] sm:$0xff]
        %v1791 = vld [vmem:[#allocation2 + $0x2e8] sm:$0xff]
        %v1792 = vld [vmem:[#allocation2 + $0x2f0] sm:$0xff]
        %v1793 = vld [vmem:[#allocation2 + $0x2f8] sm:$0xff]
        %v1794 = vld [vmem:[#allocation2 + $0x300] sm:$0xff]
        %v1795 = vld [vmem:[#allocation2 + $0x308] sm:$0xff]
        %v1796 = vld [vmem:[#allocation2 + $0x310] sm:$0xff]
        %v1797 = vld [vmem:[#allocation2 + $0x318] sm:$0xff]
        %v1798 = vld [vmem:[#allocation2 + $0x320] sm:$0xff]
        %v1799 = vld [vmem:[#allocation2 + $0x328] sm:$0xff]
        %v1800 = vld [vmem:[#allocation2 + $0x330] sm:$0xff]
        %v1801 = vld [vmem:[#allocation2 + $0x338] sm:$0xff]
        %v1802 = vld [vmem:[#allocation2 + $0x340] sm:$0xff]
        %v1803 = vld [vmem:[#allocation2 + $0x348] sm:$0xff]
        %v1804 = vld [vmem:[#allocation2 + $0x350] sm:$0xff]
        %v1805 = vld [vmem:[#allocation2 + $0x358] sm:$0xff]
        %v1806 = vld [vmem:[#allocation2 + $0x360] sm:$0xff]
        %v1807 = vld [vmem:[#allocation2 + $0x368] sm:$0xff]
        %v1808 = vld [vmem:[#allocation2 + $0x370] sm:$0xff]
        %v1809 = vld [vmem:[#allocation2 + $0x378] sm:$0xff]
        %v1810 = vld [vmem:[#allocation2 + $0x380] sm:$0xff]
        %v1811 = vld [vmem:[#allocation2 + $0x388] sm:$0xff]
        %v1812 = vld [vmem:[#allocation2 + $0x390] sm:$0xff]
        %v1813 = vld [vmem:[#allocation2 + $0x398] sm:$0xff]
        %v1814 = vld [vmem:[#allocation2 + $0x3a0] sm:$0xff]
        %v1815 = vld [vmem:[#allocation2 + $0x3a8] sm:$0xff]
        %v1816 = vld [vmem:[#allocation2 + $0x3b0] sm:$0xff]
        %v1817 = vld [vmem:[#allocation2 + $0x3b8] sm:$0xff]
        %v1818 = vld [vmem:[#allocation2 + $0x3c0] sm:$0xff]
        %v1819 = vld [vmem:[#allocation2 + $0x3c8] sm:$0xff]
        %v1820 = vld [vmem:[#allocation2 + $0x3d0] sm:$0xff]
        %v1821 = vld [vmem:[#allocation2 + $0x3d8] sm:$0xff]
        %v1822 = vld [vmem:[#allocation2 + $0x3e0] sm:$0xff]
        %v1823 = vld [vmem:[#allocation2 + $0x3e8] sm:$0xff]
        %v1824 = vld [vmem:[#allocation2 + $0x3f0] sm:$0xff]
        %v1825 = vld [vmem:[#allocation2 + $0x3f8] sm:$0xff]
        %v1826 = vld [vmem:[#allocation2 + $0x400] sm:$0xff]
        %v1827 = vld [vmem:[#allocation2 + $0x408] sm:$0xff]
        %v1828 = vld [vmem:[#allocation2 + $0x410] sm:$0xff]
        %v1829 = vld [vmem:[#allocation2 + $0x418] sm:$0xff]
        %v1830 = vld [vmem:[#allocation2 + $0x420] sm:$0xff]
        %v1831 = vld [vmem:[#allocation2 + $0x428] sm:$0xff]
        %v1832 = vld [vmem:[#allocation2 + $0x430] sm:$0xff]
        %v1833 = vld [vmem:[#allocation2 + $0x438] sm:$0xff]
        %v1834 = vld [vmem:[#allocation2 + $0x440] sm:$0xff]
        %v1835 = vld [vmem:[#allocation2 + $0x448] sm:$0xff]
        %v1836 = vld [vmem:[#allocation2 + $0x450] sm:$0xff]
        %v1837 = vld [vmem:[#allocation2 + $0x458] sm:$0xff]
        %v1838 = vld [vmem:[#allocation2 + $0x460] sm:$0xff]
        %v1839 = vld [vmem:[#allocation2 + $0x468] sm:$0xff]
        %v1840 = vld [vmem:[#allocation2 + $0x470] sm:$0xff]
        %v1841 = vld [vmem:[#allocation2 + $0x478] sm:$0xff]
        %v1842 = vld [vmem:[#allocation2 + $0x480] sm:$0xff]
        %v1843 = vld [vmem:[#allocation2 + $0x488] sm:$0xff]
        %v1844 = vld [vmem:[#allocation2 + $0x490] sm:$0xff]
        %v1845 = vld [vmem:[#allocation2 + $0x498] sm:$0xff]
        %v1846 = vld [vmem:[#allocation2 + $0x4a0] sm:$0xff]
        %v1847 = vld [vmem:[#allocation2 + $0x4a8] sm:$0xff]
        %v1848 = vld [vmem:[#allocation2 + $0x4b0] sm:$0xff]
        %v1849 = vld [vmem:[#allocation2 + $0x4b8] sm:$0xff]
        %v1850 = vld [vmem:[#allocation2 + $0x4c0] sm:$0xff]
        %v1851 = vld [vmem:[#allocation2 + $0x4c8] sm:$0xff]
        %v1852 = vld [vmem:[#allocation2 + $0x4d0] sm:$0xff]
        %v1853 = vld [vmem:[#allocation2 + $0x4d8] sm:$0xff]
        %v1854 = vld [vmem:[#allocation2 + $0x4e0] sm:$0xff]
        %v1855 = vld [vmem:[#allocation2 + $0x4e8] sm:$0xff]
        %v1856 = vld [vmem:[#allocation2 + $0x4f0] sm:$0xff]
        %v1857 = vld [vmem:[#allocation2 + $0x4f8] sm:$0xff]
        %v1858 = vld [vmem:[#allocation2 + $0x500] sm:$0xff]
        %v1859 = vld [vmem:[#allocation2 + $0x508] sm:$0xff]
        %v1860 = vld [vmem:[#allocation2 + $0x510] sm:$0xff]
        %v1861 = vld [vmem:[#allocation2 + $0x518] sm:$0xff]
        %v1862 = vld [vmem:[#allocation2 + $0x520] sm:$0xff]
        %v1863 = vld [vmem:[#allocation2 + $0x528] sm:$0xff]
        %v1864 = vld [vmem:[#allocation2 + $0x530] sm:$0xff]
        %v1865 = vld [vmem:[#allocation2 + $0x538] sm:$0xff]
        %v1866 = vld [vmem:[#allocation2 + $0x540] sm:$0xff]
        %v1867 = vld [vmem:[#allocation2 + $0x548] sm:$0xff]
        %v1868 = vld [vmem:[#allocation2 + $0x550] sm:$0xff]
        %v1869 = vld [vmem:[#allocation2 + $0x558] sm:$0xff]
        %v1870 = vld [vmem:[#allocation2 + $0x560] sm:$0xff]
        %v1871 = vld [vmem:[#allocation2 + $0x568] sm:$0xff]
        %v1872 = vld [vmem:[#allocation2 + $0x570] sm:$0xff]
        %v1873 = vld [vmem:[#allocation2 + $0x578] sm:$0xff]
        %v1874 = vld [vmem:[#allocation2 + $0x580] sm:$0xff]
        %v1875 = vld [vmem:[#allocation2 + $0x588] sm:$0xff]
        %v1876 = vld [vmem:[#allocation2 + $0x590] sm:$0xff]
        %v1877 = vld [vmem:[#allocation2 + $0x598] sm:$0xff]
        %v1878 = vld [vmem:[#allocation2 + $0x5a0] sm:$0xff]
        %v1879 = vld [vmem:[#allocation2 + $0x5a8] sm:$0xff]
        %v1880 = vld [vmem:[#allocation2 + $0x5b0] sm:$0xff]
        %v1881 = vld [vmem:[#allocation2 + $0x5b8] sm:$0xff]
        %v1882 = vld [vmem:[#allocation2 + $0x5c0] sm:$0xff]
        %v1883 = vld [vmem:[#allocation2 + $0x5c8] sm:$0xff]
        %v1884 = vld [vmem:[#allocation2 + $0x5d0] sm:$0xff]
        %v1885 = vld [vmem:[#allocation2 + $0x5d8] sm:$0xff]
        %v1886 = vld [vmem:[#allocation2 + $0x5e0] sm:$0xff]
        %v1887 = vld [vmem:[#allocation2 + $0x5e8] sm:$0xff]
        %v1888 = vld [vmem:[#allocation2 + $0x5f0] sm:$0xff]
        %v1889 = vld [vmem:[#allocation2 + $0x5f8] sm:$0xff]
        %v1890 = vld [vmem:[#allocation2 + $0x600] sm:$0xff]
        %v1891 = vld [vmem:[#allocation2 + $0x608] sm:$0xff]
        %v1892 = vld [vmem:[#allocation2 + $0x610] sm:$0xff]
        %v1893 = vld [vmem:[#allocation2 + $0x618] sm:$0xff]
        %v1894 = vld [vmem:[%s198 + $0x38] sm:$0xff]
        %v1895 = vld [vmem:[%s198 + $0x40] sm:$0xff]
        %v1896 = vld [vmem:[%s198 + $0x48] sm:$0xff]
        %v1897 = vld [vmem:[%s198 + $0x50] sm:$0xff]
        %v1898 = vld [vmem:[%s198 + $0x58] sm:$0xff]
        %v1899 = vld [vmem:[%s198 + $0x60] sm:$0xff]
        %v1900 = vld [vmem:[%s198 + $0x68] sm:$0xff]
        %v1901 = vld [vmem:[%s198 + $0x70] sm:$0xff]
        %1910 = vrot.lane.b32.xlu0 %v1894, 70
        %v1911 = vpop.permute.xlu0 %1910
        %1912 = vrot.lane.b32.xlu0 %v1895, 70
        %v1913 = vpop.permute.xlu0 %1912
        %1914 = vrot.lane.b32.xlu0 %v1896, 70
        %v1915 = vpop.permute.xlu0 %1914
        %1916 = vrot.lane.b32.xlu0 %v1897, 70
        %v1917 = vpop.permute.xlu0 %1916
        %1918 = vrot.lane.b32.xlu0 %v1898, 70
        %v1919 = vpop.permute.xlu0 %1918
        %1920 = vrot.lane.b32.xlu0 %v1899, 70
        %v1921 = vpop.permute.xlu0 %1920
        %1922 = vrot.lane.b32.xlu0 %v1900, 70
        %v1923 = vpop.permute.xlu0 %1922
        %1924 = vrot.lane.b32.xlu0 %v1901, 70
        %v1925 = vpop.permute.xlu0 %1924
        %v1926 = vsel %vm259, %v1911, %v1913
        %v1927 = vsel %vm259, %v1913, %v1915
        %v1928 = vsel %vm259, %v1915, %v1917
        %v1929 = vsel %vm259, %v1917, %v1919
        %v1930 = vsel %vm259, %v1919, %v1921
        %v1931 = vsel %vm259, %v1921, %v1923
        %v1932 = vsel %vm259, %v1923, %v1925
        %v1940 = vadd.f32 %v1926, %v1927
        %v1941 = vadd.f32 %v1940, %v1928
        %v1942 = vadd.f32 %v1941, %v1929
        %v1943 = vadd.f32 %v1942, %v1930
        %v1944 = vadd.f32 %v1943, %v1931
        %v1945 = vadd.f32 %v1944, %v1932
        %1946 = vadd.xlane.f32.xlu0 %v1945
        %v1947 = vpop.xlane.xlu0 %1946
        %v1948 = vmul.f32 %v1947, 0.00390625
        %v1949 = vld [vmem:[%s2] sm:$0xff]
        %v1950 = vld [vmem:[%s3] sm:$0xff]
        %v1952 = vsel %vm744, %v1949, 0
        %1954 = vmatprep.subr.mxu0 0.0
        %v1955 = vand.u32 %v1948, 4294901760
        %1956 = vmatpush1.msra.mxu0 %v1955
        %1957 = vmatprep.subr.mxu0 0.0
        %1958 = vmatpush1.msra.mxu0 0.0
        %1959 = vmatprep.subr.mxu0 0.0
        %1960 = vmatpush1.msra.mxu0 0.0
        %1961 = vmatprep.subr.mxu0 0.0
        %1962 = vmatpush1.msra.mxu0 0.0
        %1963 = vmatprep.subr.mxu0 0.0
        %1964 = vmatpush1.msra.mxu0 0.0
        %1965 = vmatprep.subr.mxu0 0.0
        %1966 = vmatpush1.msra.mxu0 0.0
        %1967 = vmatprep.subr.mxu0 0.0
        %1968 = vmatpush1.msra.mxu0 0.0
        %1969 = vmatprep.subr.mxu0 0.0
        %1970 = vmatpush1.msra.mxu0 0.0
        %1971 = vmatprep.subr.mxu0 0.0
        %1972 = vmatpush1.msra.mxu0 0.0
        %1973 = vmatprep.subr.mxu0 0.0
        %1974 = vmatpush1.msra.mxu0 0.0
        %1975 = vmatprep.subr.mxu0 0.0
        %1976 = vmatpush1.msra.mxu0 0.0
        %1977 = vmatprep.subr.mxu0 0.0
        %1978 = vmatpush1.msra.mxu0 0.0
        %1979 = vmatprep.subr.mxu0 0.0
        %1980 = vmatpush1.msra.mxu0 0.0
        %1981 = vmatprep.subr.mxu0 0.0
        %1982 = vmatpush1.msra.mxu0 0.0
        %1983 = vmatprep.subr.mxu0 0.0
        %1984 = vmatpush1.msra.mxu0 0.0
        %1985 = vmatprep.subr.mxu0 0.0
        %1986 = vmatpush1.msra.mxu0 0.0
        %1987 = vmatprep.subr.mxu0 0.0
        %1988 = vmatpush1.msra.mxu0 0.0
        %1989 = vmatprep.subr.mxu0 0.0
        %1990 = vmatpush1.msra.mxu0 0.0
        %1991 = vmatprep.subr.mxu0 0.0
        %1992 = vmatpush1.msra.mxu0 0.0
        %1993 = vmatprep.subr.mxu0 0.0
        %1994 = vmatpush1.msra.mxu0 0.0
        %1995 = vmatprep.subr.mxu0 0.0
        %1996 = vmatpush1.msra.mxu0 0.0
        %1997 = vmatprep.subr.mxu0 0.0
        %1998 = vmatpush1.msra.mxu0 0.0
        %1999 = vmatprep.subr.mxu0 0.0
        %2000 = vmatpush1.msra.mxu0 0.0
        %2001 = vmatprep.subr.mxu0 0.0
        %2002 = vmatpush1.msra.mxu0 0.0
        %2003 = vmatprep.subr.mxu0 0.0
        %2004 = vmatpush1.msra.mxu0 0.0
        %2005 = vmatprep.subr.mxu0 0.0
        %2006 = vmatpush1.msra.mxu0 0.0
        %2007 = vmatprep.subr.mxu0 0.0
        %2008 = vmatpush1.msra.mxu0 0.0
        %2009 = vmatprep.subr.mxu0 0.0
        %2010 = vmatpush1.msra.mxu0 0.0
        %2011 = vmatprep.subr.mxu0 0.0
        %2012 = vmatpush1.msra.mxu0 0.0
        %2013 = vmatprep.subr.mxu0 0.0
        %2014 = vmatpush1.msra.mxu0 0.0
        %2015 = vmatprep.subr.mxu0 0.0
        %2016 = vmatpush1.msra.mxu0 0.0
        %2017 = vmatprep.subr.mxu0 0.0
        %2018 = vmatpush1.msra.mxu0 0.0
        %2019 = vmatprep.mubr.f32.mxu0 0.0
        %v2020 = vand.u32 %v1952, 4294901760
        %v2021 = vsub.f32 %v1952, %v2020
        %v2022 = vand.u32 %v2021, 4294901760
        %v2023 = vsub.f32 %v2021, %v2022
        %v2024 = vand.u32 %v2023, 4294901760
        %2025 = vmatmul.mubr.f32.gmra.mrb[0].mxu0 %v2024
        %v2026 = vpop.f32.mrb[0].mxu0
        %v2027 = vadd.f32 %v1950, %v2026
        %v2028 = vpop.f32.mrb[0].mxu0
        %2029 = vdwg.mxu0
        %2030 = vmatprep.subr.mxu0 0.0
        %v2031 = vand.u32 %v1948, 4294901760
        %v2032 = vsub.f32 %v1948, %v2031
        %v2033 = vand.u32 %v2032, 4294901760
        %v2034 = vsub.f32 %v2032, %v2033
        %v2035 = vand.u32 %v2034, 4294901760
        %2036 = vmatpush1.msra.mxu0 %v2035
        %2037 = vmatprep.subr.mxu0 0.0
        %2038 = vmatpush1.msra.mxu0 0.0
        %2039 = vmatprep.subr.mxu0 0.0
        %2040 = vmatpush1.msra.mxu0 0.0
        %2041 = vmatprep.subr.mxu0 0.0
        %2042 = vmatpush1.msra.mxu0 0.0
        %2043 = vmatprep.subr.mxu0 0.0
        %2044 = vmatpush1.msra.mxu0 0.0
        %2045 = vmatprep.subr.mxu0 0.0
        %2046 = vmatpush1.msra.mxu0 0.0
        %2047 = vmatprep.subr.mxu0 0.0
        %2048 = vmatpush1.msra.mxu0 0.0
        %2049 = vmatprep.subr.mxu0 0.0
        %2050 = vmatpush1.msra.mxu0 0.0
        %2051 = vmatprep.subr.mxu0 0.0
        %2052 = vmatpush1.msra.mxu0 0.0
        %2053 = vmatprep.subr.mxu0 0.0
        %2054 = vmatpush1.msra.mxu0 0.0
        %2055 = vmatprep.subr.mxu0 0.0
        %2056 = vmatpush1.msra.mxu0 0.0
        %2057 = vmatprep.subr.mxu0 0.0
        %2058 = vmatpush1.msra.mxu0 0.0
        %2059 = vmatprep.subr.mxu0 0.0
        %2060 = vmatpush1.msra.mxu0 0.0
        %2061 = vmatprep.subr.mxu0 0.0
        %2062 = vmatpush1.msra.mxu0 0.0
        %2063 = vmatprep.subr.mxu0 0.0
        %2064 = vmatpush1.msra.mxu0 0.0
        %2065 = vmatprep.subr.mxu0 0.0
        %2066 = vmatpush1.msra.mxu0 0.0
        %2067 = vmatprep.subr.mxu0 0.0
        %2068 = vmatpush1.msra.mxu0 0.0
        %2069 = vmatprep.subr.mxu0 0.0
        %2070 = vmatpush1.msra.mxu0 0.0
        %2071 = vmatprep.subr.mxu0 0.0
        %2072 = vmatpush1.msra.mxu0 0.0
        %2073 = vmatprep.subr.mxu0 0.0
        %2074 = vmatpush1.msra.mxu0 0.0
        %2075 = vmatprep.subr.mxu0 0.0
        %2076 = vmatpush1.msra.mxu0 0.0
        %2077 = vmatprep.subr.mxu0 0.0
        %2078 = vmatpush1.msra.mxu0 0.0
        %2079 = vmatprep.subr.mxu0 0.0
        %2080 = vmatpush1.msra.mxu0 0.0
        %2081 = vmatprep.subr.mxu0 0.0
        %2082 = vmatpush1.msra.mxu0 0.0
        %2083 = vmatprep.subr.mxu0 0.0
        %2084 = vmatpush1.msra.mxu0 0.0
        %2085 = vmatprep.subr.mxu0 0.0
        %2086 = vmatpush1.msra.mxu0 0.0
        %2087 = vmatprep.subr.mxu0 0.0
        %2088 = vmatpush1.msra.mxu0 0.0
        %2089 = vmatprep.subr.mxu0 0.0
        %2090 = vmatpush1.msra.mxu0 0.0
        %2091 = vmatprep.subr.mxu0 0.0
        %2092 = vmatpush1.msra.mxu0 0.0
        %2093 = vmatprep.subr.mxu0 0.0
        %2094 = vmatpush1.msra.mxu0 0.0
        %2095 = vmatprep.subr.mxu0 0.0
        %2096 = vmatpush1.msra.mxu0 0.0
        %2097 = vmatprep.subr.mxu0 0.0
        %2098 = vmatpush1.msra.mxu0 0.0
        %2099 = vmatprep.mubr.f32.mxu0 0.0
        %v2100 = vand.u32 %v1952, 4294901760
        %2101 = vmatmul.mubr.f32.gmra.mrb[0].mxu0 %v2100
        %v2102 = vpop.f32.mrb[0].mxu0
        %v2103 = vadd.f32 %v2027, %v2102
        %v2104 = vpop.f32.mrb[0].mxu0
        %2105 = vdwg.mxu0
        %2106 = vmatprep.subr.mxu0 0.0
        %v2107 = vand.u32 %v1948, 4294901760
        %v2108 = vsub.f32 %v1948, %v2107
        %2109 = vmatpush1.msra.mxu0 %v2108
        %2110 = vmatprep.subr.mxu0 0.0
        %2111 = vmatpush1.msra.mxu0 0.0
        %2112 = vmatprep.subr.mxu0 0.0
        %2113 = vmatpush1.msra.mxu0 0.0
        %2114 = vmatprep.subr.mxu0 0.0
        %2115 = vmatpush1.msra.mxu0 0.0
        %2116 = vmatprep.subr.mxu0 0.0
        %2117 = vmatpush1.msra.mxu0 0.0
        %2118 = vmatprep.subr.mxu0 0.0
        %2119 = vmatpush1.msra.mxu0 0.0
        %2120 = vmatprep.subr.mxu0 0.0
        %2121 = vmatpush1.msra.mxu0 0.0
        %2122 = vmatprep.subr.mxu0 0.0
        %2123 = vmatpush1.msra.mxu0 0.0
        %2124 = vmatprep.subr.mxu0 0.0
        %2125 = vmatpush1.msra.mxu0 0.0
        %2126 = vmatprep.subr.mxu0 0.0
        %2127 = vmatpush1.msra.mxu0 0.0
        %2128 = vmatprep.subr.mxu0 0.0
        %2129 = vmatpush1.msra.mxu0 0.0
        %2130 = vmatprep.subr.mxu0 0.0
        %2131 = vmatpush1.msra.mxu0 0.0
        %2132 = vmatprep.subr.mxu0 0.0
        %2133 = vmatpush1.msra.mxu0 0.0
        %2134 = vmatprep.subr.mxu0 0.0
        %2135 = vmatpush1.msra.mxu0 0.0
        %2136 = vmatprep.subr.mxu0 0.0
        %2137 = vmatpush1.msra.mxu0 0.0
        %2138 = vmatprep.subr.mxu0 0.0
        %2139 = vmatpush1.msra.mxu0 0.0
        %2140 = vmatprep.subr.mxu0 0.0
        %2141 = vmatpush1.msra.mxu0 0.0
        %2142 = vmatprep.subr.mxu0 0.0
        %2143 = vmatpush1.msra.mxu0 0.0
        %2144 = vmatprep.subr.mxu0 0.0
        %2145 = vmatpush1.msra.mxu0 0.0
        %2146 = vmatprep.subr.mxu0 0.0
        %2147 = vmatpush1.msra.mxu0 0.0
        %2148 = vmatprep.subr.mxu0 0.0
        %2149 = vmatpush1.msra.mxu0 0.0
        %2150 = vmatprep.subr.mxu0 0.0
        %2151 = vmatpush1.msra.mxu0 0.0
        %2152 = vmatprep.subr.mxu0 0.0
        %2153 = vmatpush1.msra.mxu0 0.0
        %2154 = vmatprep.subr.mxu0 0.0
        %2155 = vmatpush1.msra.mxu0 0.0
        %2156 = vmatprep.subr.mxu0 0.0
        %2157 = vmatpush1.msra.mxu0 0.0
        %2158 = vmatprep.subr.mxu0 0.0
        %2159 = vmatpush1.msra.mxu0 0.0
        %2160 = vmatprep.subr.mxu0 0.0
        %2161 = vmatpush1.msra.mxu0 0.0
        %2162 = vmatprep.subr.mxu0 0.0
        %2163 = vmatpush1.msra.mxu0 0.0
        %2164 = vmatprep.subr.mxu0 0.0
        %2165 = vmatpush1.msra.mxu0 0.0
        %2166 = vmatprep.subr.mxu0 0.0
        %2167 = vmatpush1.msra.mxu0 0.0
        %2168 = vmatprep.subr.mxu0 0.0
        %2169 = vmatpush1.msra.mxu0 0.0
        %2170 = vmatprep.subr.mxu0 0.0
        %2171 = vmatpush1.msra.mxu0 0.0
        %2172 = vmatprep.mubr.f32.mxu0 0.0
        %v2173 = vand.u32 %v1952, 4294901760
        %v2174 = vsub.f32 %v1952, %v2173
        %2175 = vmatmul.mubr.f32.gmra.mrb[0].mxu0 %v2174
        %v2176 = vpop.f32.mrb[0].mxu0
        %v2177 = vadd.f32 %v2103, %v2176
        %v2178 = vpop.f32.mrb[0].mxu0
        %2179 = vdwg.mxu0
        %2180 = vmatprep.subr.mxu0 0.0
        %v2181 = vand.u32 %v1948, 4294901760
        %2182 = vmatpush1.msra.mxu0 %v2181
        %2183 = vmatprep.subr.mxu0 0.0
        %2184 = vmatpush1.msra.mxu0 0.0
        %2185 = vmatprep.subr.mxu0 0.0
        %2186 = vmatpush1.msra.mxu0 0.0
        %2187 = vmatprep.subr.mxu0 0.0
        %2188 = vmatpush1.msra.mxu0 0.0
        %2189 = vmatprep.subr.mxu0 0.0
        %2190 = vmatpush1.msra.mxu0 0.0
        %2191 = vmatprep.subr.mxu0 0.0
        %2192 = vmatpush1.msra.mxu0 0.0
        %2193 = vmatprep.subr.mxu0 0.0
        %2194 = vmatpush1.msra.mxu0 0.0
        %2195 = vmatprep.subr.mxu0 0.0
        %2196 = vmatpush1.msra.mxu0 0.0
        %2197 = vmatprep.subr.mxu0 0.0
        %2198 = vmatpush1.msra.mxu0 0.0
        %2199 = vmatprep.subr.mxu0 0.0
        %2200 = vmatpush1.msra.mxu0 0.0
        %2201 = vmatprep.subr.mxu0 0.0
        %2202 = vmatpush1.msra.mxu0 0.0
        %2203 = vmatprep.subr.mxu0 0.0
        %2204 = vmatpush1.msra.mxu0 0.0
        %2205 = vmatprep.subr.mxu0 0.0
        %2206 = vmatpush1.msra.mxu0 0.0
        %2207 = vmatprep.subr.mxu0 0.0
        %2208 = vmatpush1.msra.mxu0 0.0
        %2209 = vmatprep.subr.mxu0 0.0
        %2210 = vmatpush1.msra.mxu0 0.0
        %2211 = vmatprep.subr.mxu0 0.0
        %2212 = vmatpush1.msra.mxu0 0.0
        %2213 = vmatprep.subr.mxu0 0.0
        %2214 = vmatpush1.msra.mxu0 0.0
        %2215 = vmatprep.subr.mxu0 0.0
        %2216 = vmatpush1.msra.mxu0 0.0
        %2217 = vmatprep.subr.mxu0 0.0
        %2218 = vmatpush1.msra.mxu0 0.0
        %2219 = vmatprep.subr.mxu0 0.0
        %2220 = vmatpush1.msra.mxu0 0.0
        %2221 = vmatprep.subr.mxu0 0.0
        %2222 = vmatpush1.msra.mxu0 0.0
        %2223 = vmatprep.subr.mxu0 0.0
        %2224 = vmatpush1.msra.mxu0 0.0
        %2225 = vmatprep.subr.mxu0 0.0
        %2226 = vmatpush1.msra.mxu0 0.0
        %2227 = vmatprep.subr.mxu0 0.0
        %2228 = vmatpush1.msra.mxu0 0.0
        %2229 = vmatprep.subr.mxu0 0.0
        %2230 = vmatpush1.msra.mxu0 0.0
        %2231 = vmatprep.subr.mxu0 0.0
        %2232 = vmatpush1.msra.mxu0 0.0
        %2233 = vmatprep.subr.mxu0 0.0
        %2234 = vmatpush1.msra.mxu0 0.0
        %2235 = vmatprep.subr.mxu0 0.0
        %2236 = vmatpush1.msra.mxu0 0.0
        %2237 = vmatprep.subr.mxu0 0.0
        %2238 = vmatpush1.msra.mxu0 0.0
        %2239 = vmatprep.subr.mxu0 0.0
        %2240 = vmatpush1.msra.mxu0 0.0
        %2241 = vmatprep.subr.mxu0 0.0
        %2242 = vmatpush1.msra.mxu0 0.0
        %2243 = vmatprep.subr.mxu0 0.0
        %2244 = vmatpush1.msra.mxu0 0.0
        %2245 = vmatprep.mubr.f32.mxu0 0.0
        %v2246 = vand.u32 %v1952, 4294901760
        %v2247 = vsub.f32 %v1952, %v2246
        %v2248 = vand.u32 %v2247, 4294901760
        %2249 = vmatmul.mubr.f32.gmra.mrb[0].mxu0 %v2248
        %v2250 = vpop.f32.mrb[0].mxu0
        %v2251 = vadd.f32 %v2177, %v2250
        %v2252 = vpop.f32.mrb[0].mxu0
        %2253 = vdwg.mxu0
        %2254 = vmatprep.subr.mxu0 0.0
        %v2255 = vand.u32 %v1948, 4294901760
        %v2256 = vsub.f32 %v1948, %v2255
        %v2257 = vand.u32 %v2256, 4294901760
        %2258 = vmatpush1.msra.mxu0 %v2257
        %2259 = vmatprep.subr.mxu0 0.0
        %2260 = vmatpush1.msra.mxu0 0.0
        %2261 = vmatprep.subr.mxu0 0.0
        %2262 = vmatpush1.msra.mxu0 0.0
        %2263 = vmatprep.subr.mxu0 0.0
        %2264 = vmatpush1.msra.mxu0 0.0
        %2265 = vmatprep.subr.mxu0 0.0
        %2266 = vmatpush1.msra.mxu0 0.0
        %2267 = vmatprep.subr.mxu0 0.0
        %2268 = vmatpush1.msra.mxu0 0.0
        %2269 = vmatprep.subr.mxu0 0.0
        %2270 = vmatpush1.msra.mxu0 0.0
        %2271 = vmatprep.subr.mxu0 0.0
        %2272 = vmatpush1.msra.mxu0 0.0
        %2273 = vmatprep.subr.mxu0 0.0
        %2274 = vmatpush1.msra.mxu0 0.0
        %2275 = vmatprep.subr.mxu0 0.0
        %2276 = vmatpush1.msra.mxu0 0.0
        %2277 = vmatprep.subr.mxu0 0.0
        %2278 = vmatpush1.msra.mxu0 0.0
        %2279 = vmatprep.subr.mxu0 0.0
        %2280 = vmatpush1.msra.mxu0 0.0
        %2281 = vmatprep.subr.mxu0 0.0
        %2282 = vmatpush1.msra.mxu0 0.0
        %2283 = vmatprep.subr.mxu0 0.0
        %2284 = vmatpush1.msra.mxu0 0.0
        %2285 = vmatprep.subr.mxu0 0.0
        %2286 = vmatpush1.msra.mxu0 0.0
        %2287 = vmatprep.subr.mxu0 0.0
        %2288 = vmatpush1.msra.mxu0 0.0
        %2289 = vmatprep.subr.mxu0 0.0
        %2290 = vmatpush1.msra.mxu0 0.0
        %2291 = vmatprep.subr.mxu0 0.0
        %2292 = vmatpush1.msra.mxu0 0.0
        %2293 = vmatprep.subr.mxu0 0.0
        %2294 = vmatpush1.msra.mxu0 0.0
        %2295 = vmatprep.subr.mxu0 0.0
        %2296 = vmatpush1.msra.mxu0 0.0
        %2297 = vmatprep.subr.mxu0 0.0
        %2298 = vmatpush1.msra.mxu0 0.0
        %2299 = vmatprep.subr.mxu0 0.0
        %2300 = vmatpush1.msra.mxu0 0.0
        %2301 = vmatprep.subr.mxu0 0.0
        %2302 = vmatpush1.msra.mxu0 0.0
        %2303 = vmatprep.subr.mxu0 0.0
        %2304 = vmatpush1.msra.mxu0 0.0
        %2305 = vmatprep.subr.mxu0 0.0
        %2306 = vmatpush1.msra.mxu0 0.0
        %2307 = vmatprep.subr.mxu0 0.0
        %2308 = vmatpush1.msra.mxu0 0.0
        %2309 = vmatprep.subr.mxu0 0.0
        %2310 = vmatpush1.msra.mxu0 0.0
        %2311 = vmatprep.subr.mxu0 0.0
        %2312 = vmatpush1.msra.mxu0 0.0
        %2313 = vmatprep.subr.mxu0 0.0
        %2314 = vmatpush1.msra.mxu0 0.0
        %2315 = vmatprep.subr.mxu0 0.0
        %2316 = vmatpush1.msra.mxu0 0.0
        %2317 = vmatprep.subr.mxu0 0.0
        %2318 = vmatpush1.msra.mxu0 0.0
        %2319 = vmatprep.subr.mxu0 0.0
        %2320 = vmatpush1.msra.mxu0 0.0
        %2321 = vmatprep.mubr.f32.mxu0 0.0
        %v2322 = vand.u32 %v1952, 4294901760
        %2323 = vmatmul.mubr.f32.gmra.mrb[0].mxu0 %v2322
        %v2324 = vpop.f32.mrb[0].mxu0
        %v2325 = vadd.f32 %v2251, %v2324
        %v2326 = vpop.f32.mrb[0].mxu0
        %2327 = vdwg.mxu0
        %2328 = vmatprep.subr.mxu0 0.0
        %v2329 = vand.u32 %v1948, 4294901760
        %2330 = vmatpush1.msra.mxu0 %v2329
        %2331 = vmatprep.subr.mxu0 0.0
        %2332 = vmatpush1.msra.mxu0 0.0
        %2333 = vmatprep.subr.mxu0 0.0
        %2334 = vmatpush1.msra.mxu0 0.0
        %2335 = vmatprep.subr.mxu0 0.0
        %2336 = vmatpush1.msra.mxu0 0.0
        %2337 = vmatprep.subr.mxu0 0.0
        %2338 = vmatpush1.msra.mxu0 0.0
        %2339 = vmatprep.subr.mxu0 0.0
        %2340 = vmatpush1.msra.mxu0 0.0
        %2341 = vmatprep.subr.mxu0 0.0
        %2342 = vmatpush1.msra.mxu0 0.0
        %2343 = vmatprep.subr.mxu0 0.0
        %2344 = vmatpush1.msra.mxu0 0.0
        %2345 = vmatprep.subr.mxu0 0.0
        %2346 = vmatpush1.msra.mxu0 0.0
        %2347 = vmatprep.subr.mxu0 0.0
        %2348 = vmatpush1.msra.mxu0 0.0
        %2349 = vmatprep.subr.mxu0 0.0
        %2350 = vmatpush1.msra.mxu0 0.0
        %2351 = vmatprep.subr.mxu0 0.0
        %2352 = vmatpush1.msra.mxu0 0.0
        %2353 = vmatprep.subr.mxu0 0.0
        %2354 = vmatpush1.msra.mxu0 0.0
        %2355 = vmatprep.subr.mxu0 0.0
        %2356 = vmatpush1.msra.mxu0 0.0
        %2357 = vmatprep.subr.mxu0 0.0
        %2358 = vmatpush1.msra.mxu0 0.0
        %2359 = vmatprep.subr.mxu0 0.0
        %2360 = vmatpush1.msra.mxu0 0.0
        %2361 = vmatprep.subr.mxu0 0.0
        %2362 = vmatpush1.msra.mxu0 0.0
        %2363 = vmatprep.subr.mxu0 0.0
        %2364 = vmatpush1.msra.mxu0 0.0
        %2365 = vmatprep.subr.mxu0 0.0
        %2366 = vmatpush1.msra.mxu0 0.0
        %2367 = vmatprep.subr.mxu0 0.0
        %2368 = vmatpush1.msra.mxu0 0.0
        %2369 = vmatprep.subr.mxu0 0.0
        %2370 = vmatpush1.msra.mxu0 0.0
        %2371 = vmatprep.subr.mxu0 0.0
        %2372 = vmatpush1.msra.mxu0 0.0
        %2373 = vmatprep.subr.mxu0 0.0
        %2374 = vmatpush1.msra.mxu0 0.0
        %2375 = vmatprep.subr.mxu0 0.0
        %2376 = vmatpush1.msra.mxu0 0.0
        %2377 = vmatprep.subr.mxu0 0.0
        %2378 = vmatpush1.msra.mxu0 0.0
        %2379 = vmatprep.subr.mxu0 0.0
        %2380 = vmatpush1.msra.mxu0 0.0
        %2381 = vmatprep.subr.mxu0 0.0
        %2382 = vmatpush1.msra.mxu0 0.0
        %2383 = vmatprep.subr.mxu0 0.0
        %2384 = vmatpush1.msra.mxu0 0.0
        %2385 = vmatprep.subr.mxu0 0.0
        %2386 = vmatpush1.msra.mxu0 0.0
        %2387 = vmatprep.subr.mxu0 0.0
        %2388 = vmatpush1.msra.mxu0 0.0
        %2389 = vmatprep.subr.mxu0 0.0
        %2390 = vmatpush1.msra.mxu0 0.0
        %2391 = vmatprep.subr.mxu0 0.0
        %2392 = vmatpush1.msra.mxu0 0.0
        %2393 = vmatprep.mubr.f32.mxu0 0.0
        %v2394 = vand.u32 %v1952, 4294901760
        %2395 = vmatmul.mubr.f32.gmra.mrb[0].mxu0 %v2394
        %v2396 = vpop.f32.mrb[0].mxu0
        %v2397 = vadd.f32 %v2325, %v2396
        %v2398 = vpop.f32.mrb[0].mxu0
        %2399 = vdwg.mxu0
        %2401 = vset.pattern.permute.xlu0 0
        %2402 = vperm.xlu0 %2401, %v2397
        %v2403 = vpop.permute.xlu0 %2402
        %vm2405 = vcmask 785408
        %v2407 = vsel %vm2405, %v1697, 0
        %v2409 = vand.u32 %v1699, 4294901760
        %2410 = vmatprep.subr.mxu0 %v2409
        %v2411 = vand.u32 %v1698, 4294901760
        %2412 = vmatpush1.msra.mxu0 %v2411
        %v2413 = vand.u32 %v1706, 4294901760
        %2414 = vmatprep.subr.mxu0 %v2413
        %v2415 = vand.u32 %v1705, 4294901760
        %2416 = vmatpush1.msra.mxu0 %v2415
        %v2417 = vand.u32 %v1713, 4294901760
        %2418 = vmatprep.subr.mxu0 %v2417
        %v2419 = vand.u32 %v1712, 4294901760
        %2420 = vmatpush1.msra.mxu0 %v2419
        %v2421 = vand.u32 %v1720, 4294901760
        %2422 = vmatprep.subr.mxu0 %v2421
        %v2423 = vand.u32 %v1719, 4294901760
        %2424 = vmatpush1.msra.mxu0 %v2423
        %v2425 = vand.u32 %v1727, 4294901760
        %2426 = vmatprep.subr.mxu0 %v2425
        %v2427 = vand.u32 %v1726, 4294901760
        %2428 = vmatpush1.msra.mxu0 %v2427
        %v2429 = vand.u32 %v1734, 4294901760
        %2430 = vmatprep.subr.mxu0 %v2429
        %v2431 = vand.u32 %v1733, 4294901760
        %2432 = vmatpush1.msra.mxu0 %v2431
        %v2433 = vand.u32 %v1741, 4294901760
        %2434 = vmatprep.subr.mxu0 %v2433
        %v2435 = vand.u32 %v1740, 4294901760
        %2436 = vmatpush1.msra.mxu0 %v2435
        %v2437 = vand.u32 %v1748, 4294901760
        %2438 = vmatprep.subr.mxu0 %v2437
        %v2439 = vand.u32 %v1747, 4294901760
        %2440 = vmatpush1.msra.mxu0 %v2439
        %v2441 = vand.u32 %v1755, 4294901760
        %2442 = vmatprep.subr.mxu0 %v2441
        %v2443 = vand.u32 %v1754, 4294901760
        %2444 = vmatpush1.msra.mxu0 %v2443
        %v2445 = vand.u32 %v1762, 4294901760
        %2446 = vmatprep.subr.mxu0 %v2445
        %v2447 = vand.u32 %v1761, 4294901760
        %2448 = vmatpush1.msra.mxu0 %v2447
        %v2449 = vand.u32 %v1769, 4294901760
        %2450 = vmatprep.subr.mxu0 %v2449
        %v2451 = vand.u32 %v1768, 4294901760
        %2452 = vmatpush1.msra.mxu0 %v2451
        %v2453 = vand.u32 %v1776, 4294901760
        %2454 = vmatprep.subr.mxu0 %v2453
        %v2455 = vand.u32 %v1775, 4294901760
        %2456 = vmatpush1.msra.mxu0 %v2455
        %v2457 = vand.u32 %v1783, 4294901760
        %2458 = vmatprep.subr.mxu0 %v2457
        %v2459 = vand.u32 %v1782, 4294901760
        %2460 = vmatpush1.msra.mxu0 %v2459
        %v2461 = vand.u32 %v1790, 4294901760
        %2462 = vmatprep.subr.mxu0 %v2461
        %v2463 = vand.u32 %v1789, 4294901760
        %2464 = vmatpush1.msra.mxu0 %v2463
        %v2465 = vand.u32 %v1797, 4294901760
        %2466 = vmatprep.subr.mxu0 %v2465
        %v2467 = vand.u32 %v1796, 4294901760
        %2468 = vmatpush1.msra.mxu0 %v2467
        %v2469 = vand.u32 %v1804, 4294901760
        %2470 = vmatprep.subr.mxu0 %v2469
        %v2471 = vand.u32 %v1803, 4294901760
        %2472 = vmatpush1.msra.mxu0 %v2471
        %v2473 = vand.u32 %v1811, 4294901760
        %2474 = vmatprep.subr.mxu0 %v2473
        %v2475 = vand.u32 %v1810, 4294901760
        %2476 = vmatpush1.msra.mxu0 %v2475
        %v2477 = vand.u32 %v1818, 4294901760
        %2478 = vmatprep.subr.mxu0 %v2477
        %v2479 = vand.u32 %v1817, 4294901760
        %2480 = vmatpush1.msra.mxu0 %v2479
        %v2481 = vand.u32 %v1825, 4294901760
        %2482 = vmatprep.subr.mxu0 %v2481
        %v2483 = vand.u32 %v1824, 4294901760
        %2484 = vmatpush1.msra.mxu0 %v2483
        %v2485 = vand.u32 %v1832, 4294901760
        %2486 = vmatprep.subr.mxu0 %v2485
        %v2487 = vand.u32 %v1831, 4294901760
        %2488 = vmatpush1.msra.mxu0 %v2487
        %v2489 = vand.u32 %v1839, 4294901760
        %2490 = vmatprep.subr.mxu0 %v2489
        %v2491 = vand.u32 %v1838, 4294901760
        %2492 = vmatpush1.msra.mxu0 %v2491
        %v2493 = vand.u32 %v1846, 4294901760
        %2494 = vmatprep.subr.mxu0 %v2493
        %v2495 = vand.u32 %v1845, 4294901760
        %2496 = vmatpush1.msra.mxu0 %v2495
        %v2497 = vand.u32 %v1853, 4294901760
        %2498 = vmatprep.subr.mxu0 %v2497
        %v2499 = vand.u32 %v1852, 4294901760
        %2500 = vmatpush1.msra.mxu0 %v2499
        %v2501 = vand.u32 %v1860, 4294901760
        %2502 = vmatprep.subr.mxu0 %v2501
        %v2503 = vand.u32 %v1859, 4294901760
        %2504 = vmatpush1.msra.mxu0 %v2503
        %v2505 = vand.u32 %v1867, 4294901760
        %2506 = vmatprep.subr.mxu0 %v2505
        %v2507 = vand.u32 %v1866, 4294901760
        %2508 = vmatpush1.msra.mxu0 %v2507
        %v2509 = vand.u32 %v1874, 4294901760
        %2510 = vmatprep.subr.mxu0 %v2509
        %v2511 = vand.u32 %v1873, 4294901760
        %2512 = vmatpush1.msra.mxu0 %v2511
        %v2513 = vand.u32 %v1881, 4294901760
        %2514 = vmatprep.subr.mxu0 %v2513
        %v2515 = vand.u32 %v1880, 4294901760
        %2516 = vmatpush1.msra.mxu0 %v2515
        %v2517 = vand.u32 %v1888, 4294901760
        %2518 = vmatprep.subr.mxu0 %v2517
        %v2519 = vand.u32 %v1887, 4294901760
        %2520 = vmatpush1.msra.mxu0 %v2519
        %2521 = vmatprep.subr.mxu0 0.0
        %2522 = vmatpush1.msra.mxu0 0.0
        %2523 = vmatprep.subr.mxu0 0.0
        %2524 = vmatpush1.msra.mxu0 0.0
        %2525 = vmatprep.subr.mxu0 0.0
        %2526 = vmatpush1.msra.mxu0 0.0
        %2527 = vmatprep.subr.mxu0 0.0
        %2528 = vmatpush1.msra.mxu0 0.0
        %v2529 = vand.u32 %v2407, 4294901760
        %v2530 = vsub.f32 %v2407, %v2529
        %v2531 = vand.u32 %v2530, 4294901760
        %v2532 = vsub.f32 %v2530, %v2531
        %v2533 = vand.u32 %v2532, 4294901760
        %2534 = vmatprep.mubr.f32.mxu0 %v2533
        %v2535 = vand.u32 %v1696, 4294901760
        %v2536 = vsub.f32 %v1696, %v2535
        %v2537 = vand.u32 %v2536, 4294901760
        %v2538 = vsub.f32 %v2536, %v2537
        %v2539 = vand.u32 %v2538, 4294901760
        %2540 = vmatmul.mubr.f32.gmra.mrb[0].mxu0 %v2539
        %v2541 = vpop.f32.mrb[0].mxu0
        %v2542 = vadd.f32 %v2403, %v2541
        %v2543 = vpop.f32.mrb[0].mxu0
        %v2544 = vadd.f32 %v2403, %v2543
        %2545 = vdwg.mxu0
        %v2546 = vand.u32 %v1699, 4294901760
        %v2547 = vsub.f32 %v1699, %v2546
        %v2548 = vand.u32 %v2547, 4294901760
        %v2549 = vsub.f32 %v2547, %v2548
        %v2550 = vand.u32 %v2549, 4294901760
        %2551 = vmatprep.subr.mxu0 %v2550
        %v2552 = vand.u32 %v1698, 4294901760
        %v2553 = vsub.f32 %v1698, %v2552
        %v2554 = vand.u32 %v2553, 4294901760
        %v2555 = vsub.f32 %v2553, %v2554
        %v2556 = vand.u32 %v2555, 4294901760
        %2557 = vmatpush1.msra.mxu0 %v2556
        %v2558 = vand.u32 %v1706, 4294901760
        %v2559 = vsub.f32 %v1706, %v2558
        %v2560 = vand.u32 %v2559, 4294901760
        %v2561 = vsub.f32 %v2559, %v2560
        %v2562 = vand.u32 %v2561, 4294901760
        %2563 = vmatprep.subr.mxu0 %v2562
        %v2564 = vand.u32 %v1705, 4294901760
        %v2565 = vsub.f32 %v1705, %v2564
        %v2566 = vand.u32 %v2565, 4294901760
        %v2567 = vsub.f32 %v2565, %v2566
        %v2568 = vand.u32 %v2567, 4294901760
        %2569 = vmatpush1.msra.mxu0 %v2568
        %v2570 = vand.u32 %v1713, 4294901760
        %v2571 = vsub.f32 %v1713, %v2570
        %v2572 = vand.u32 %v2571, 4294901760
        %v2573 = vsub.f32 %v2571, %v2572
        %v2574 = vand.u32 %v2573, 4294901760
        %2575 = vmatprep.subr.mxu0 %v2574
        %v2576 = vand.u32 %v1712, 4294901760
        %v2577 = vsub.f32 %v1712, %v2576
        %v2578 = vand.u32 %v2577, 4294901760
        %v2579 = vsub.f32 %v2577, %v2578
        %v2580 = vand.u32 %v2579, 4294901760
        %2581 = vmatpush1.msra.mxu0 %v2580
        %v2582 = vand.u32 %v1720, 4294901760
        %v2583 = vsub.f32 %v1720, %v2582
        %v2584 = vand.u32 %v2583, 4294901760
        %v2585 = vsub.f32 %v2583, %v2584
        %v2586 = vand.u32 %v2585, 4294901760
        %2587 = vmatprep.subr.mxu0 %v2586
        %v2588 = vand.u32 %v1719, 4294901760
        %v2589 = vsub.f32 %v1719, %v2588
        %v2590 = vand.u32 %v2589, 4294901760
        %v2591 = vsub.f32 %v2589, %v2590
        %v2592 = vand.u32 %v2591, 4294901760
        %2593 = vmatpush1.msra.mxu0 %v2592
        %v2594 = vand.u32 %v1727, 4294901760
        %v2595 = vsub.f32 %v1727, %v2594
        %v2596 = vand.u32 %v2595, 4294901760
        %v2597 = vsub.f32 %v2595, %v2596
        %v2598 = vand.u32 %v2597, 4294901760
        %2599 = vmatprep.subr.mxu0 %v2598
        %v2600 = vand.u32 %v1726, 4294901760
        %v2601 = vsub.f32 %v1726, %v2600
        %v2602 = vand.u32 %v2601, 4294901760
        %v2603 = vsub.f32 %v2601, %v2602
        %v2604 = vand.u32 %v2603, 4294901760
        %2605 = vmatpush1.msra.mxu0 %v2604
        %v2606 = vand.u32 %v1734, 4294901760
        %v2607 = vsub.f32 %v1734, %v2606
        %v2608 = vand.u32 %v2607, 4294901760
        %v2609 = vsub.f32 %v2607, %v2608
        %v2610 = vand.u32 %v2609, 4294901760
        %2611 = vmatprep.subr.mxu0 %v2610
        %v2612 = vand.u32 %v1733, 4294901760
        %v2613 = vsub.f32 %v1733, %v2612
        %v2614 = vand.u32 %v2613, 4294901760
        %v2615 = vsub.f32 %v2613, %v2614
        %v2616 = vand.u32 %v2615, 4294901760
        %2617 = vmatpush1.msra.mxu0 %v2616
        %v2618 = vand.u32 %v1741, 4294901760
        %v2619 = vsub.f32 %v1741, %v2618
        %v2620 = vand.u32 %v2619, 4294901760
        %v2621 = vsub.f32 %v2619, %v2620
        %v2622 = vand.u32 %v2621, 4294901760
        %2623 = vmatprep.subr.mxu0 %v2622
        %v2624 = vand.u32 %v1740, 4294901760
        %v2625 = vsub.f32 %v1740, %v2624
        %v2626 = vand.u32 %v2625, 4294901760
        %v2627 = vsub.f32 %v2625, %v2626
        %v2628 = vand.u32 %v2627, 4294901760
        %2629 = vmatpush1.msra.mxu0 %v2628
        %v2630 = vand.u32 %v1748, 4294901760
        %v2631 = vsub.f32 %v1748, %v2630
        %v2632 = vand.u32 %v2631, 4294901760
        %v2633 = vsub.f32 %v2631, %v2632
        %v2634 = vand.u32 %v2633, 4294901760
        %2635 = vmatprep.subr.mxu0 %v2634
        %v2636 = vand.u32 %v1747, 4294901760
        %v2637 = vsub.f32 %v1747, %v2636
        %v2638 = vand.u32 %v2637, 4294901760
        %v2639 = vsub.f32 %v2637, %v2638
        %v2640 = vand.u32 %v2639, 4294901760
        %2641 = vmatpush1.msra.mxu0 %v2640
        %v2642 = vand.u32 %v1755, 4294901760
        %v2643 = vsub.f32 %v1755, %v2642
        %v2644 = vand.u32 %v2643, 4294901760
        %v2645 = vsub.f32 %v2643, %v2644
        %v2646 = vand.u32 %v2645, 4294901760
        %2647 = vmatprep.subr.mxu0 %v2646
        %v2648 = vand.u32 %v1754, 4294901760
        %v2649 = vsub.f32 %v1754, %v2648
        %v2650 = vand.u32 %v2649, 4294901760
        %v2651 = vsub.f32 %v2649, %v2650
        %v2652 = vand.u32 %v2651, 4294901760
        %2653 = vmatpush1.msra.mxu0 %v2652
        %v2654 = vand.u32 %v1762, 4294901760
        %v2655 = vsub.f32 %v1762, %v2654
        %v2656 = vand.u32 %v2655, 4294901760
        %v2657 = vsub.f32 %v2655, %v2656
        %v2658 = vand.u32 %v2657, 4294901760
        %2659 = vmatprep.subr.mxu0 %v2658
        %v2660 = vand.u32 %v1761, 4294901760
        %v2661 = vsub.f32 %v1761, %v2660
        %v2662 = vand.u32 %v2661, 4294901760
        %v2663 = vsub.f32 %v2661, %v2662
        %v2664 = vand.u32 %v2663, 4294901760
        %2665 = vmatpush1.msra.mxu0 %v2664
        %v2666 = vand.u32 %v1769, 4294901760
        %v2667 = vsub.f32 %v1769, %v2666
        %v2668 = vand.u32 %v2667, 4294901760
        %v2669 = vsub.f32 %v2667, %v2668
        %v2670 = vand.u32 %v2669, 4294901760
        %2671 = vmatprep.subr.mxu0 %v2670
        %v2672 = vand.u32 %v1768, 4294901760
        %v2673 = vsub.f32 %v1768, %v2672
        %v2674 = vand.u32 %v2673, 4294901760
        %v2675 = vsub.f32 %v2673, %v2674
        %v2676 = vand.u32 %v2675, 4294901760
        %2677 = vmatpush1.msra.mxu0 %v2676
        %v2678 = vand.u32 %v1776, 4294901760
        %v2679 = vsub.f32 %v1776, %v2678
        %v2680 = vand.u32 %v2679, 4294901760
        %v2681 = vsub.f32 %v2679, %v2680
        %v2682 = vand.u32 %v2681, 4294901760
        %2683 = vmatprep.subr.mxu0 %v2682
        %v2684 = vand.u32 %v1775, 4294901760
        %v2685 = vsub.f32 %v1775, %v2684
        %v2686 = vand.u32 %v2685, 4294901760
        %v2687 = vsub.f32 %v2685, %v2686
        %v2688 = vand.u32 %v2687, 4294901760
        %2689 = vmatpush1.msra.mxu0 %v2688
        %v2690 = vand.u32 %v1783, 4294901760
        %v2691 = vsub.f32 %v1783, %v2690
        %v2692 = vand.u32 %v2691, 4294901760
        %v2693 = vsub.f32 %v2691, %v2692
        %v2694 = vand.u32 %v2693, 4294901760
        %2695 = vmatprep.subr.mxu0 %v2694
        %v2696 = vand.u32 %v1782, 4294901760
        %v2697 = vsub.f32 %v1782, %v2696
        %v2698 = vand.u32 %v2697, 4294901760
        %v2699 = vsub.f32 %v2697, %v2698
        %v2700 = vand.u32 %v2699, 4294901760
        %2701 = vmatpush1.msra.mxu0 %v2700
        %v2702 = vand.u32 %v1790, 4294901760
        %v2703 = vsub.f32 %v1790, %v2702
        %v2704 = vand.u32 %v2703, 4294901760
        %v2705 = vsub.f32 %v2703, %v2704
        %v2706 = vand.u32 %v2705, 4294901760
        %2707 = vmatprep.subr.mxu0 %v2706
        %v2708 = vand.u32 %v1789, 4294901760
        %v2709 = vsub.f32 %v1789, %v2708
        %v2710 = vand.u32 %v2709, 4294901760
        %v2711 = vsub.f32 %v2709, %v2710
        %v2712 = vand.u32 %v2711, 4294901760
        %2713 = vmatpush1.msra.mxu0 %v2712
        %v2714 = vand.u32 %v1797, 4294901760
        %v2715 = vsub.f32 %v1797, %v2714
        %v2716 = vand.u32 %v2715, 4294901760
        %v2717 = vsub.f32 %v2715, %v2716
        %v2718 = vand.u32 %v2717, 4294901760
        %2719 = vmatprep.subr.mxu0 %v2718
        %v2720 = vand.u32 %v1796, 4294901760
        %v2721 = vsub.f32 %v1796, %v2720
        %v2722 = vand.u32 %v2721, 4294901760
        %v2723 = vsub.f32 %v2721, %v2722
        %v2724 = vand.u32 %v2723, 4294901760
        %2725 = vmatpush1.msra.mxu0 %v2724
        %v2726 = vand.u32 %v1804, 4294901760
        %v2727 = vsub.f32 %v1804, %v2726
        %v2728 = vand.u32 %v2727, 4294901760
        %v2729 = vsub.f32 %v2727, %v2728
        %v2730 = vand.u32 %v2729, 4294901760
        %2731 = vmatprep.subr.mxu0 %v2730
        %v2732 = vand.u32 %v1803, 4294901760
        %v2733 = vsub.f32 %v1803, %v2732
        %v2734 = vand.u32 %v2733, 4294901760
        %v2735 = vsub.f32 %v2733, %v2734
        %v2736 = vand.u32 %v2735, 4294901760
        %2737 = vmatpush1.msra.mxu0 %v2736
        %v2738 = vand.u32 %v1811, 4294901760
        %v2739 = vsub.f32 %v1811, %v2738
        %v2740 = vand.u32 %v2739, 4294901760
        %v2741 = vsub.f32 %v2739, %v2740
        %v2742 = vand.u32 %v2741, 4294901760
        %2743 = vmatprep.subr.mxu0 %v2742
        %v2744 = vand.u32 %v1810, 4294901760
        %v2745 = vsub.f32 %v1810, %v2744
        %v2746 = vand.u32 %v2745, 4294901760
        %v2747 = vsub.f32 %v2745, %v2746
        %v2748 = vand.u32 %v2747, 4294901760
        %2749 = vmatpush1.msra.mxu0 %v2748
        %v2750 = vand.u32 %v1818, 4294901760
        %v2751 = vsub.f32 %v1818, %v2750
        %v2752 = vand.u32 %v2751, 4294901760
        %v2753 = vsub.f32 %v2751, %v2752
        %v2754 = vand.u32 %v2753, 4294901760
        %2755 = vmatprep.subr.mxu0 %v2754
        %v2756 = vand.u32 %v1817, 4294901760
        %v2757 = vsub.f32 %v1817, %v2756
        %v2758 = vand.u32 %v2757, 4294901760
        %v2759 = vsub.f32 %v2757, %v2758
        %v2760 = vand.u32 %v2759, 4294901760
        %2761 = vmatpush1.msra.mxu0 %v2760
        %v2762 = vand.u32 %v1825, 4294901760
        %v2763 = vsub.f32 %v1825, %v2762
        %v2764 = vand.u32 %v2763, 4294901760
        %v2765 = vsub.f32 %v2763, %v2764
        %v2766 = vand.u32 %v2765, 4294901760
        %2767 = vmatprep.subr.mxu0 %v2766
        %v2768 = vand.u32 %v1824, 4294901760
        %v2769 = vsub.f32 %v1824, %v2768
        %v2770 = vand.u32 %v2769, 4294901760
        %v2771 = vsub.f32 %v2769, %v2770
        %v2772 = vand.u32 %v2771, 4294901760
        %2773 = vmatpush1.msra.mxu0 %v2772
        %v2774 = vand.u32 %v1832, 4294901760
        %v2775 = vsub.f32 %v1832, %v2774
        %v2776 = vand.u32 %v2775, 4294901760
        %v2777 = vsub.f32 %v2775, %v2776
        %v2778 = vand.u32 %v2777, 4294901760
        %2779 = vmatprep.subr.mxu0 %v2778
        %v2780 = vand.u32 %v1831, 4294901760
        %v2781 = vsub.f32 %v1831, %v2780
        %v2782 = vand.u32 %v2781, 4294901760
        %v2783 = vsub.f32 %v2781, %v2782
        %v2784 = vand.u32 %v2783, 4294901760
        %2785 = vmatpush1.msra.mxu0 %v2784
        %v2786 = vand.u32 %v1839, 4294901760
        %v2787 = vsub.f32 %v1839, %v2786
        %v2788 = vand.u32 %v2787, 4294901760
        %v2789 = vsub.f32 %v2787, %v2788
        %v2790 = vand.u32 %v2789, 4294901760
        %2791 = vmatprep.subr.mxu0 %v2790
        %v2792 = vand.u32 %v1838, 4294901760
        %v2793 = vsub.f32 %v1838, %v2792
        %v2794 = vand.u32 %v2793, 4294901760
        %v2795 = vsub.f32 %v2793, %v2794
        %v2796 = vand.u32 %v2795, 4294901760
        %2797 = vmatpush1.msra.mxu0 %v2796
        %v2798 = vand.u32 %v1846, 4294901760
        %v2799 = vsub.f32 %v1846, %v2798
        %v2800 = vand.u32 %v2799, 4294901760
        %v2801 = vsub.f32 %v2799, %v2800
        %v2802 = vand.u32 %v2801, 4294901760
        %2803 = vmatprep.subr.mxu0 %v2802
        %v2804 = vand.u32 %v1845, 4294901760
        %v2805 = vsub.f32 %v1845, %v2804
        %v2806 = vand.u32 %v2805, 4294901760
        %v2807 = vsub.f32 %v2805, %v2806
        %v2808 = vand.u32 %v2807, 4294901760
        %2809 = vmatpush1.msra.mxu0 %v2808
        %v2810 = vand.u32 %v1853, 4294901760
        %v2811 = vsub.f32 %v1853, %v2810
        %v2812 = vand.u32 %v2811, 4294901760
        %v2813 = vsub.f32 %v2811, %v2812
        %v2814 = vand.u32 %v2813, 4294901760
        %2815 = vmatprep.subr.mxu0 %v2814
        %v2816 = vand.u32 %v1852, 4294901760
        %v2817 = vsub.f32 %v1852, %v2816
        %v2818 = vand.u32 %v2817, 4294901760
        %v2819 = vsub.f32 %v2817, %v2818
        %v2820 = vand.u32 %v2819, 4294901760
        %2821 = vmatpush1.msra.mxu0 %v2820
        %v2822 = vand.u32 %v1860, 4294901760
        %v2823 = vsub.f32 %v1860, %v2822
        %v2824 = vand.u32 %v2823, 4294901760
        %v2825 = vsub.f32 %v2823, %v2824
        %v2826 = vand.u32 %v2825, 4294901760
        %2827 = vmatprep.subr.mxu0 %v2826
        %v2828 = vand.u32 %v1859, 4294901760
        %v2829 = vsub.f32 %v1859, %v2828
        %v2830 = vand.u32 %v2829, 4294901760
        %v2831 = vsub.f32 %v2829, %v2830
        %v2832 = vand.u32 %v2831, 4294901760
        %2833 = vmatpush1.msra.mxu0 %v2832
        %v2834 = vand.u32 %v1867, 4294901760
        %v2835 = vsub.f32 %v1867, %v2834
        %v2836 = vand.u32 %v2835, 4294901760
        %v2837 = vsub.f32 %v2835, %v2836
        %v2838 = vand.u32 %v2837, 4294901760
        %2839 = vmatprep.subr.mxu0 %v2838
        %v2840 = vand.u32 %v1866, 4294901760
        %v2841 = vsub.f32 %v1866, %v2840
        %v2842 = vand.u32 %v2841, 4294901760
        %v2843 = vsub.f32 %v2841, %v2842
        %v2844 = vand.u32 %v2843, 4294901760
        %2845 = vmatpush1.msra.mxu0 %v2844
        %v2846 = vand.u32 %v1874, 4294901760
        %v2847 = vsub.f32 %v1874, %v2846
        %v2848 = vand.u32 %v2847, 4294901760
        %v2849 = vsub.f32 %v2847, %v2848
        %v2850 = vand.u32 %v2849, 4294901760
        %2851 = vmatprep.subr.mxu0 %v2850
        %v2852 = vand.u32 %v1873, 4294901760
        %v2853 = vsub.f32 %v1873, %v2852
        %v2854 = vand.u32 %v2853, 4294901760
        %v2855 = vsub.f32 %v2853, %v2854
        %v2856 = vand.u32 %v2855, 4294901760
        %2857 = vmatpush1.msra.mxu0 %v2856
        %v2858 = vand.u32 %v1881, 4294901760
        %v2859 = vsub.f32 %v1881, %v2858
        %v2860 = vand.u32 %v2859, 4294901760
        %v2861 = vsub.f32 %v2859, %v2860
        %v2862 = vand.u32 %v2861, 4294901760
        %2863 = vmatprep.subr.mxu0 %v2862
        %v2864 = vand.u32 %v1880, 4294901760
        %v2865 = vsub.f32 %v1880, %v2864
        %v2866 = vand.u32 %v2865, 4294901760
        %v2867 = vsub.f32 %v2865, %v2866
        %v2868 = vand.u32 %v2867, 4294901760
        %2869 = vmatpush1.msra.mxu0 %v2868
        %v2870 = vand.u32 %v1888, 4294901760
        %v2871 = vsub.f32 %v1888, %v2870
        %v2872 = vand.u32 %v2871, 4294901760
        %v2873 = vsub.f32 %v2871, %v2872
        %v2874 = vand.u32 %v2873, 4294901760
        %2875 = vmatprep.subr.mxu0 %v2874
        %v2876 = vand.u32 %v1887, 4294901760
        %v2877 = vsub.f32 %v1887, %v2876
        %v2878 = vand.u32 %v2877, 4294901760
        %v2879 = vsub.f32 %v2877, %v2878
        %v2880 = vand.u32 %v2879, 4294901760
        %2881 = vmatpush1.msra.mxu0 %v2880
        %2882 = vmatprep.subr.mxu0 0.0
        %2883 = vmatpush1.msra.mxu0 0.0
        %2884 = vmatprep.subr.mxu0 0.0
        %2885 = vmatpush1.msra.mxu0 0.0
        %2886 = vmatprep.subr.mxu0 0.0
        %2887 = vmatpush1.msra.mxu0 0.0
        %2888 = vmatprep.subr.mxu0 0.0
        %2889 = vmatpush1.msra.mxu0 0.0
        %v2890 = vand.u32 %v2407, 4294901760
        %2891 = vmatprep.mubr.f32.mxu0 %v2890
        %v2892 = vand.u32 %v1696, 4294901760
        %2893 = vmatmul.mubr.f32.gmra.mrb[0].mxu0 %v2892
        %v2894 = vpop.f32.mrb[0].mxu0
        %v2895 = vadd.f32 %v2542, %v2894
        %v2896 = vpop.f32.mrb[0].mxu0
        %v2897 = vadd.f32 %v2544, %v2896
        %2898 = vdwg.mxu0
        %v2899 = vand.u32 %v1699, 4294901760
        %v2900 = vsub.f32 %v1699, %v2899
        %2901 = vmatprep.subr.mxu0 %v2900
        %v2902 = vand.u32 %v1698, 4294901760
        %v2903 = vsub.f32 %v1698, %v2902
        %2904 = vmatpush1.msra.mxu0 %v2903
        %v2905 = vand.u32 %v1706, 4294901760
        %v2906 = vsub.f32 %v1706, %v2905
        %2907 = vmatprep.subr.mxu0 %v2906
        %v2908 = vand.u32 %v1705, 4294901760
        %v2909 = vsub.f32 %v1705, %v2908
        %2910 = vmatpush1.msra.mxu0 %v2909
        %v2911 = vand.u32 %v1713, 4294901760
        %v2912 = vsub.f32 %v1713, %v2911
        %2913 = vmatprep.subr.mxu0 %v2912
        %v2914 = vand.u32 %v1712, 4294901760
        %v2915 = vsub.f32 %v1712, %v2914
        %2916 = vmatpush1.msra.mxu0 %v2915
        %v2917 = vand.u32 %v1720, 4294901760
        %v2918 = vsub.f32 %v1720, %v2917
        %2919 = vmatprep.subr.mxu0 %v2918
        %v2920 = vand.u32 %v1719, 4294901760
        %v2921 = vsub.f32 %v1719, %v2920
        %2922 = vmatpush1.msra.mxu0 %v2921
        %v2923 = vand.u32 %v1727, 4294901760
        %v2924 = vsub.f32 %v1727, %v2923
        %2925 = vmatprep.subr.mxu0 %v2924
        %v2926 = vand.u32 %v1726, 4294901760
        %v2927 = vsub.f32 %v1726, %v2926
        %2928 = vmatpush1.msra.mxu0 %v2927
        %v2929 = vand.u32 %v1734, 4294901760
        %v2930 = vsub.f32 %v1734, %v2929
        %2931 = vmatprep.subr.mxu0 %v2930
        %v2932 = vand.u32 %v1733, 4294901760
        %v2933 = vsub.f32 %v1733, %v2932
        %2934 = vmatpush1.msra.mxu0 %v2933
        %v2935 = vand.u32 %v1741, 4294901760
        %v2936 = vsub.f32 %v1741, %v2935
        %2937 = vmatprep.subr.mxu0 %v2936
        %v2938 = vand.u32 %v1740, 4294901760
        %v2939 = vsub.f32 %v1740, %v2938
        %2940 = vmatpush1.msra.mxu0 %v2939
        %v2941 = vand.u32 %v1748, 4294901760
        %v2942 = vsub.f32 %v1748, %v2941
        %2943 = vmatprep.subr.mxu0 %v2942
        %v2944 = vand.u32 %v1747, 4294901760
        %v2945 = vsub.f32 %v1747, %v2944
        %2946 = vmatpush1.msra.mxu0 %v2945
        %v2947 = vand.u32 %v1755, 4294901760
        %v2948 = vsub.f32 %v1755, %v2947
        %2949 = vmatprep.subr.mxu0 %v2948
        %v2950 = vand.u32 %v1754, 4294901760
        %v2951 = vsub.f32 %v1754, %v2950
        %2952 = vmatpush1.msra.mxu0 %v2951
        %v2953 = vand.u32 %v1762, 4294901760
        %v2954 = vsub.f32 %v1762, %v2953
        %2955 = vmatprep.subr.mxu0 %v2954
        %v2956 = vand.u32 %v1761, 4294901760
        %v2957 = vsub.f32 %v1761, %v2956
        %2958 = vmatpush1.msra.mxu0 %v2957
        %v2959 = vand.u32 %v1769, 4294901760
        %v2960 = vsub.f32 %v1769, %v2959
        %2961 = vmatprep.subr.mxu0 %v2960
        %v2962 = vand.u32 %v1768, 4294901760
        %v2963 = vsub.f32 %v1768, %v2962
        %2964 = vmatpush1.msra.mxu0 %v2963
        %v2965 = vand.u32 %v1776, 4294901760
        %v2966 = vsub.f32 %v1776, %v2965
        %2967 = vmatprep.subr.mxu0 %v2966
        %v2968 = vand.u32 %v1775, 4294901760
        %v2969 = vsub.f32 %v1775, %v2968
        %2970 = vmatpush1.msra.mxu0 %v2969
        %v2971 = vand.u32 %v1783, 4294901760
        %v2972 = vsub.f32 %v1783, %v2971
        %2973 = vmatprep.subr.mxu0 %v2972
        %v2974 = vand.u32 %v1782, 4294901760
        %v2975 = vsub.f32 %v1782, %v2974
        %2976 = vmatpush1.msra.mxu0 %v2975
        %v2977 = vand.u32 %v1790, 4294901760
        %v2978 = vsub.f32 %v1790, %v2977
        %2979 = vmatprep.subr.mxu0 %v2978
        %v2980 = vand.u32 %v1789, 4294901760
        %v2981 = vsub.f32 %v1789, %v2980
        %2982 = vmatpush1.msra.mxu0 %v2981
        %v2983 = vand.u32 %v1797, 4294901760
        %v2984 = vsub.f32 %v1797, %v2983
        %2985 = vmatprep.subr.mxu0 %v2984
        %v2986 = vand.u32 %v1796, 4294901760
        %v2987 = vsub.f32 %v1796, %v2986
        %2988 = vmatpush1.msra.mxu0 %v2987
        %v2989 = vand.u32 %v1804, 4294901760
        %v2990 = vsub.f32 %v1804, %v2989
        %2991 = vmatprep.subr.mxu0 %v2990
        %v2992 = vand.u32 %v1803, 4294901760
        %v2993 = vsub.f32 %v1803, %v2992
        %2994 = vmatpush1.msra.mxu0 %v2993
        %v2995 = vand.u32 %v1811, 4294901760
        %v2996 = vsub.f32 %v1811, %v2995
        %2997 = vmatprep.subr.mxu0 %v2996
        %v2998 = vand.u32 %v1810, 4294901760
        %v2999 = vsub.f32 %v1810, %v2998
        %3000 = vmatpush1.msra.mxu0 %v2999
        %v3001 = vand.u32 %v1818, 4294901760
        %v3002 = vsub.f32 %v1818, %v3001
        %3003 = vmatprep.subr.mxu0 %v3002
        %v3004 = vand.u32 %v1817, 4294901760
        %v3005 = vsub.f32 %v1817, %v3004
        %3006 = vmatpush1.msra.mxu0 %v3005
        %v3007 = vand.u32 %v1825, 4294901760
        %v3008 = vsub.f32 %v1825, %v3007
        %3009 = vmatprep.subr.mxu0 %v3008
        %v3010 = vand.u32 %v1824, 4294901760
        %v3011 = vsub.f32 %v1824, %v3010
        %3012 = vmatpush1.msra.mxu0 %v3011
        %v3013 = vand.u32 %v1832, 4294901760
        %v3014 = vsub.f32 %v1832, %v3013
        %3015 = vmatprep.subr.mxu0 %v3014
        %v3016 = vand.u32 %v1831, 4294901760
        %v3017 = vsub.f32 %v1831, %v3016
        %3018 = vmatpush1.msra.mxu0 %v3017
        %v3019 = vand.u32 %v1839, 4294901760
        %v3020 = vsub.f32 %v1839, %v3019
        %3021 = vmatprep.subr.mxu0 %v3020
        %v3022 = vand.u32 %v1838, 4294901760
        %v3023 = vsub.f32 %v1838, %v3022
        %3024 = vmatpush1.msra.mxu0 %v3023
        %v3025 = vand.u32 %v1846, 4294901760
        %v3026 = vsub.f32 %v1846, %v3025
        %3027 = vmatprep.subr.mxu0 %v3026
        %v3028 = vand.u32 %v1845, 4294901760
        %v3029 = vsub.f32 %v1845, %v3028
        %3030 = vmatpush1.msra.mxu0 %v3029
        %v3031 = vand.u32 %v1853, 4294901760
        %v3032 = vsub.f32 %v1853, %v3031
        %3033 = vmatprep.subr.mxu0 %v3032
        %v3034 = vand.u32 %v1852, 4294901760
        %v3035 = vsub.f32 %v1852, %v3034
        %3036 = vmatpush1.msra.mxu0 %v3035
        %v3037 = vand.u32 %v1860, 4294901760
        %v3038 = vsub.f32 %v1860, %v3037
        %3039 = vmatprep.subr.mxu0 %v3038
        %v3040 = vand.u32 %v1859, 4294901760
        %v3041 = vsub.f32 %v1859, %v3040
        %3042 = vmatpush1.msra.mxu0 %v3041
        %v3043 = vand.u32 %v1867, 4294901760
        %v3044 = vsub.f32 %v1867, %v3043
        %3045 = vmatprep.subr.mxu0 %v3044
        %v3046 = vand.u32 %v1866, 4294901760
        %v3047 = vsub.f32 %v1866, %v3046
        %3048 = vmatpush1.msra.mxu0 %v3047
        %v3049 = vand.u32 %v1874, 4294901760
        %v3050 = vsub.f32 %v1874, %v3049
        %3051 = vmatprep.subr.mxu0 %v3050
        %v3052 = vand.u32 %v1873, 4294901760
        %v3053 = vsub.f32 %v1873, %v3052
        %3054 = vmatpush1.msra.mxu0 %v3053
        %v3055 = vand.u32 %v1881, 4294901760
        %v3056 = vsub.f32 %v1881, %v3055
        %3057 = vmatprep.subr.mxu0 %v3056
        %v3058 = vand.u32 %v1880, 4294901760
        %v3059 = vsub.f32 %v1880, %v3058
        %3060 = vmatpush1.msra.mxu0 %v3059
        %v3061 = vand.u32 %v1888, 4294901760
        %v3062 = vsub.f32 %v1888, %v3061
        %3063 = vmatprep.subr.mxu0 %v3062
        %v3064 = vand.u32 %v1887, 4294901760
        %v3065 = vsub.f32 %v1887, %v3064
        %3066 = vmatpush1.msra.mxu0 %v3065
        %3067 = vmatprep.subr.mxu0 0.0
        %3068 = vmatpush1.msra.mxu0 0.0
        %3069 = vmatprep.subr.mxu0 0.0
        %3070 = vmatpush1.msra.mxu0 0.0
        %3071 = vmatprep.subr.mxu0 0.0
        %3072 = vmatpush1.msra.mxu0 0.0
        %3073 = vmatprep.subr.mxu0 0.0
        %3074 = vmatpush1.msra.mxu0 0.0
        %v3075 = vand.u32 %v2407, 4294901760
        %v3076 = vsub.f32 %v2407, %v3075
        %3077 = vmatprep.mubr.f32.mxu0 %v3076
        %v3078 = vand.u32 %v1696, 4294901760
        %v3079 = vsub.f32 %v1696, %v3078
        %3080 = vmatmul.mubr.f32.gmra.mrb[0].mxu0 %v3079
        %v3081 = vpop.f32.mrb[0].mxu0
        %v3082 = vadd.f32 %v2895, %v3081
        %v3083 = vpop.f32.mrb[0].mxu0
        %v3084 = vadd.f32 %v2897, %v3083
        %3085 = vdwg.mxu0
        %v3086 = vand.u32 %v1699, 4294901760
        %3087 = vmatprep.subr.mxu0 %v3086
        %v3088 = vand.u32 %v1698, 4294901760
        %3089 = vmatpush1.msra.mxu0 %v3088
        %v3090 = vand.u32 %v1706, 4294901760
        %3091 = vmatprep.subr.mxu0 %v3090
        %v3092 = vand.u32 %v1705, 4294901760
        %3093 = vmatpush1.msra.mxu0 %v3092
        %v3094 = vand.u32 %v1713, 4294901760
        %3095 = vmatprep.subr.mxu0 %v3094
        %v3096 = vand.u32 %v1712, 4294901760
        %3097 = vmatpush1.msra.mxu0 %v3096
        %v3098 = vand.u32 %v1720, 4294901760
        %3099 = vmatprep.subr.mxu0 %v3098
        %v3100 = vand.u32 %v1719, 4294901760
        %3101 = vmatpush1.msra.mxu0 %v3100
        %v3102 = vand.u32 %v1727, 4294901760
        %3103 = vmatprep.subr.mxu0 %v3102
        %v3104 = vand.u32 %v1726, 4294901760
        %3105 = vmatpush1.msra.mxu0 %v3104
        %v3106 = vand.u32 %v1734, 4294901760
        %3107 = vmatprep.subr.mxu0 %v3106
        %v3108 = vand.u32 %v1733, 4294901760
        %3109 = vmatpush1.msra.mxu0 %v3108
        %v3110 = vand.u32 %v1741, 4294901760
        %3111 = vmatprep.subr.mxu0 %v3110
        %v3112 = vand.u32 %v1740, 4294901760
        %3113 = vmatpush1.msra.mxu0 %v3112
        %v3114 = vand.u32 %v1748, 4294901760
        %3115 = vmatprep.subr.mxu0 %v3114
        %v3116 = vand.u32 %v1747, 4294901760
        %3117 = vmatpush1.msra.mxu0 %v3116
        %v3118 = vand.u32 %v1755, 4294901760
        %3119 = vmatprep.subr.mxu0 %v3118
        %v3120 = vand.u32 %v1754, 4294901760
        %3121 = vmatpush1.msra.mxu0 %v3120
        %v3122 = vand.u32 %v1762, 4294901760
        %3123 = vmatprep.subr.mxu0 %v3122
        %v3124 = vand.u32 %v1761, 4294901760
        %3125 = vmatpush1.msra.mxu0 %v3124
        %v3126 = vand.u32 %v1769, 4294901760
        %3127 = vmatprep.subr.mxu0 %v3126
        %v3128 = vand.u32 %v1768, 4294901760
        %3129 = vmatpush1.msra.mxu0 %v3128
        %v3130 = vand.u32 %v1776, 4294901760
        %3131 = vmatprep.subr.mxu0 %v3130
        %v3132 = vand.u32 %v1775, 4294901760
        %3133 = vmatpush1.msra.mxu0 %v3132
        %v3134 = vand.u32 %v1783, 4294901760
        %3135 = vmatprep.subr.mxu0 %v3134
        %v3136 = vand.u32 %v1782, 4294901760
        %3137 = vmatpush1.msra.mxu0 %v3136
        %v3138 = vand.u32 %v1790, 4294901760
        %3139 = vmatprep.subr.mxu0 %v3138
        %v3140 = vand.u32 %v1789, 4294901760
        %3141 = vmatpush1.msra.mxu0 %v3140
        %v3142 = vand.u32 %v1797, 4294901760
        %3143 = vmatprep.subr.mxu0 %v3142
        %v3144 = vand.u32 %v1796, 4294901760
        %3145 = vmatpush1.msra.mxu0 %v3144
        %v3146 = vand.u32 %v1804, 4294901760
        %3147 = vmatprep.subr.mxu0 %v3146
        %v3148 = vand.u32 %v1803, 4294901760
        %3149 = vmatpush1.msra.mxu0 %v3148
        %v3150 = vand.u32 %v1811, 4294901760
        %3151 = vmatprep.subr.mxu0 %v3150
        %v3152 = vand.u32 %v1810, 4294901760
        %3153 = vmatpush1.msra.mxu0 %v3152
        %v3154 = vand.u32 %v1818, 4294901760
        %3155 = vmatprep.subr.mxu0 %v3154
        %v3156 = vand.u32 %v1817, 4294901760
        %3157 = vmatpush1.msra.mxu0 %v3156
        %v3158 = vand.u32 %v1825, 4294901760
        %3159 = vmatprep.subr.mxu0 %v3158
        %v3160 = vand.u32 %v1824, 4294901760
        %3161 = vmatpush1.msra.mxu0 %v3160
        %v3162 = vand.u32 %v1832, 4294901760
        %3163 = vmatprep.subr.mxu0 %v3162
        %v3164 = vand.u32 %v1831, 4294901760
        %3165 = vmatpush1.msra.mxu0 %v3164
        %v3166 = vand.u32 %v1839, 4294901760
        %3167 = vmatprep.subr.mxu0 %v3166
        %v3168 = vand.u32 %v1838, 4294901760
        %3169 = vmatpush1.msra.mxu0 %v3168
        %v3170 = vand.u32 %v1846, 4294901760
        %3171 = vmatprep.subr.mxu0 %v3170
        %v3172 = vand.u32 %v1845, 4294901760
        %3173 = vmatpush1.msra.mxu0 %v3172
        %v3174 = vand.u32 %v1853, 4294901760
        %3175 = vmatprep.subr.mxu0 %v3174
        %v3176 = vand.u32 %v1852, 4294901760
        %3177 = vmatpush1.msra.mxu0 %v3176
        %v3178 = vand.u32 %v1860, 4294901760
        %3179 = vmatprep.subr.mxu0 %v3178
        %v3180 = vand.u32 %v1859, 4294901760
        %3181 = vmatpush1.msra.mxu0 %v3180
        %v3182 = vand.u32 %v1867, 4294901760
        %3183 = vmatprep.subr.mxu0 %v3182
        %v3184 = vand.u32 %v1866, 4294901760
        %3185 = vmatpush1.msra.mxu0 %v3184
        %v3186 = vand.u32 %v1874, 4294901760
        %3187 = vmatprep.subr.mxu0 %v3186
        %v3188 = vand.u32 %v1873, 4294901760
        %3189 = vmatpush1.msra.mxu0 %v3188
        %v3190 = vand.u32 %v1881, 4294901760
        %3191 = vmatprep.subr.mxu0 %v3190
        %v3192 = vand.u32 %v1880, 4294901760
        %3193 = vmatpush1.msra.mxu0 %v3192
        %v3194 = vand.u32 %v1888, 4294901760
        %3195 = vmatprep.subr.mxu0 %v3194
        %v3196 = vand.u32 %v1887, 4294901760
        %3197 = vmatpush1.msra.mxu0 %v3196
        %3198 = vmatprep.subr.mxu0 0.0
        %3199 = vmatpush1.msra.mxu0 0.0
        %3200 = vmatprep.subr.mxu0 0.0
        %3201 = vmatpush1.msra.mxu0 0.0
        %3202 = vmatprep.subr.mxu0 0.0
        %3203 = vmatpush1.msra.mxu0 0.0
        %3204 = vmatprep.subr.mxu0 0.0
        %3205 = vmatpush1.msra.mxu0 0.0
        %v3206 = vand.u32 %v2407, 4294901760
        %v3207 = vsub.f32 %v2407, %v3206
        %v3208 = vand.u32 %v3207, 4294901760
        %3209 = vmatprep.mubr.f32.mxu0 %v3208
        %v3210 = vand.u32 %v1696, 4294901760
        %v3211 = vsub.f32 %v1696, %v3210
        %v3212 = vand.u32 %v3211, 4294901760
        %3213 = vmatmul.mubr.f32.gmra.mrb[0].mxu0 %v3212
        %v3214 = vpop.f32.mrb[0].mxu0
        %v3215 = vadd.f32 %v3082, %v3214
        %v3216 = vpop.f32.mrb[0].mxu0
        %v3217 = vadd.f32 %v3084, %v3216
        %3218 = vdwg.mxu0
        %v3219 = vand.u32 %v1699, 4294901760
        %v3220 = vsub.f32 %v1699, %v3219
        %v3221 = vand.u32 %v3220, 4294901760
        %3222 = vmatprep.subr.mxu0 %v3221
        %v3223 = vand.u32 %v1698, 4294901760
        %v3224 = vsub.f32 %v1698, %v3223
        %v3225 = vand.u32 %v3224, 4294901760
        %3226 = vmatpush1.msra.mxu0 %v3225
        %v3227 = vand.u32 %v1706, 4294901760
        %v3228 = vsub.f32 %v1706, %v3227
        %v3229 = vand.u32 %v3228, 4294901760
        %3230 = vmatprep.subr.mxu0 %v3229
        %v3231 = vand.u32 %v1705, 4294901760
        %v3232 = vsub.f32 %v1705, %v3231
        %v3233 = vand.u32 %v3232, 4294901760
        %3234 = vmatpush1.msra.mxu0 %v3233
        %v3235 = vand.u32 %v1713, 4294901760
        %v3236 = vsub.f32 %v1713, %v3235
        %v3237 = vand.u32 %v3236, 4294901760
        %3238 = vmatprep.subr.mxu0 %v3237
        %v3239 = vand.u32 %v1712, 4294901760
        %v3240 = vsub.f32 %v1712, %v3239
        %v3241 = vand.u32 %v3240, 4294901760
        %3242 = vmatpush1.msra.mxu0 %v3241
        %v3243 = vand.u32 %v1720, 4294901760
        %v3244 = vsub.f32 %v1720, %v3243
        %v3245 = vand.u32 %v3244, 4294901760
        %3246 = vmatprep.subr.mxu0 %v3245
        %v3247 = vand.u32 %v1719, 4294901760
        %v3248 = vsub.f32 %v1719, %v3247
        %v3249 = vand.u32 %v3248, 4294901760
        %3250 = vmatpush1.msra.mxu0 %v3249
        %v3251 = vand.u32 %v1727, 4294901760
        %v3252 = vsub.f32 %v1727, %v3251
        %v3253 = vand.u32 %v3252, 4294901760
        %3254 = vmatprep.subr.mxu0 %v3253
        %v3255 = vand.u32 %v1726, 4294901760
        %v3256 = vsub.f32 %v1726, %v3255
        %v3257 = vand.u32 %v3256, 4294901760
        %3258 = vmatpush1.msra.mxu0 %v3257
        %v3259 = vand.u32 %v1734, 4294901760
        %v3260 = vsub.f32 %v1734, %v3259
        %v3261 = vand.u32 %v3260, 4294901760
        %3262 = vmatprep.subr.mxu0 %v3261
        %v3263 = vand.u32 %v1733, 4294901760
        %v3264 = vsub.f32 %v1733, %v3263
        %v3265 = vand.u32 %v3264, 4294901760
        %3266 = vmatpush1.msra.mxu0 %v3265
        %v3267 = vand.u32 %v1741, 4294901760
        %v3268 = vsub.f32 %v1741, %v3267
        %v3269 = vand.u32 %v3268, 4294901760
        %3270 = vmatprep.subr.mxu0 %v3269
        %v3271 = vand.u32 %v1740, 4294901760
        %v3272 = vsub.f32 %v1740, %v3271
        %v3273 = vand.u32 %v3272, 4294901760
        %3274 = vmatpush1.msra.mxu0 %v3273
        %v3275 = vand.u32 %v1748, 4294901760
        %v3276 = vsub.f32 %v1748, %v3275
        %v3277 = vand.u32 %v3276, 4294901760
        %3278 = vmatprep.subr.mxu0 %v3277
        %v3279 = vand.u32 %v1747, 4294901760
        %v3280 = vsub.f32 %v1747, %v3279
        %v3281 = vand.u32 %v3280, 4294901760
        %3282 = vmatpush1.msra.mxu0 %v3281
        %v3283 = vand.u32 %v1755, 4294901760
        %v3284 = vsub.f32 %v1755, %v3283
        %v3285 = vand.u32 %v3284, 4294901760
        %3286 = vmatprep.subr.mxu0 %v3285
        %v3287 = vand.u32 %v1754, 4294901760
        %v3288 = vsub.f32 %v1754, %v3287
        %v3289 = vand.u32 %v3288, 4294901760
        %3290 = vmatpush1.msra.mxu0 %v3289
        %v3291 = vand.u32 %v1762, 4294901760
        %v3292 = vsub.f32 %v1762, %v3291
        %v3293 = vand.u32 %v3292, 4294901760
        %3294 = vmatprep.subr.mxu0 %v3293
        %v3295 = vand.u32 %v1761, 4294901760
        %v3296 = vsub.f32 %v1761, %v3295
        %v3297 = vand.u32 %v3296, 4294901760
        %3298 = vmatpush1.msra.mxu0 %v3297
        %v3299 = vand.u32 %v1769, 4294901760
        %v3300 = vsub.f32 %v1769, %v3299
        %v3301 = vand.u32 %v3300, 4294901760
        %3302 = vmatprep.subr.mxu0 %v3301
        %v3303 = vand.u32 %v1768, 4294901760
        %v3304 = vsub.f32 %v1768, %v3303
        %v3305 = vand.u32 %v3304, 4294901760
        %3306 = vmatpush1.msra.mxu0 %v3305
        %v3307 = vand.u32 %v1776, 4294901760
        %v3308 = vsub.f32 %v1776, %v3307
        %v3309 = vand.u32 %v3308, 4294901760
        %3310 = vmatprep.subr.mxu0 %v3309
        %v3311 = vand.u32 %v1775, 4294901760
        %v3312 = vsub.f32 %v1775, %v3311
        %v3313 = vand.u32 %v3312, 4294901760
        %3314 = vmatpush1.msra.mxu0 %v3313
        %v3315 = vand.u32 %v1783, 4294901760
        %v3316 = vsub.f32 %v1783, %v3315
        %v3317 = vand.u32 %v3316, 4294901760
        %3318 = vmatprep.subr.mxu0 %v3317
        %v3319 = vand.u32 %v1782, 4294901760
        %v3320 = vsub.f32 %v1782, %v3319
        %v3321 = vand.u32 %v3320, 4294901760
        %3322 = vmatpush1.msra.mxu0 %v3321
        %v3323 = vand.u32 %v1790, 4294901760
        %v3324 = vsub.f32 %v1790, %v3323
        %v3325 = vand.u32 %v3324, 4294901760
        %3326 = vmatprep.subr.mxu0 %v3325
        %v3327 = vand.u32 %v1789, 4294901760
        %v3328 = vsub.f32 %v1789, %v3327
        %v3329 = vand.u32 %v3328, 4294901760
        %3330 = vmatpush1.msra.mxu0 %v3329
        %v3331 = vand.u32 %v1797, 4294901760
        %v3332 = vsub.f32 %v1797, %v3331
        %v3333 = vand.u32 %v3332, 4294901760
        %3334 = vmatprep.subr.mxu0 %v3333
        %v3335 = vand.u32 %v1796, 4294901760
        %v3336 = vsub.f32 %v1796, %v3335
        %v3337 = vand.u32 %v3336, 4294901760
        %3338 = vmatpush1.msra.mxu0 %v3337
        %v3339 = vand.u32 %v1804, 4294901760
        %v3340 = vsub.f32 %v1804, %v3339
        %v3341 = vand.u32 %v3340, 4294901760
        %3342 = vmatprep.subr.mxu0 %v3341
        %v3343 = vand.u32 %v1803, 4294901760
        %v3344 = vsub.f32 %v1803, %v3343
        %v3345 = vand.u32 %v3344, 4294901760
        %3346 = vmatpush1.msra.mxu0 %v3345
        %v3347 = vand.u32 %v1811, 4294901760
        %v3348 = vsub.f32 %v1811, %v3347
        %v3349 = vand.u32 %v3348, 4294901760
        %3350 = vmatprep.subr.mxu0 %v3349
        %v3351 = vand.u32 %v1810, 4294901760
        %v3352 = vsub.f32 %v1810, %v3351
        %v3353 = vand.u32 %v3352, 4294901760
        %3354 = vmatpush1.msra.mxu0 %v3353
        %v3355 = vand.u32 %v1818, 4294901760
        %v3356 = vsub.f32 %v1818, %v3355
        %v3357 = vand.u32 %v3356, 4294901760
        %3358 = vmatprep.subr.mxu0 %v3357
        %v3359 = vand.u32 %v1817, 4294901760
        %v3360 = vsub.f32 %v1817, %v3359
        %v3361 = vand.u32 %v3360, 4294901760
        %3362 = vmatpush1.msra.mxu0 %v3361
        %v3363 = vand.u32 %v1825, 4294901760
        %v3364 = vsub.f32 %v1825, %v3363
        %v3365 = vand.u32 %v3364, 4294901760
        %3366 = vmatprep.subr.mxu0 %v3365
        %v3367 = vand.u32 %v1824, 4294901760
        %v3368 = vsub.f32 %v1824, %v3367
        %v3369 = vand.u32 %v3368, 4294901760
        %3370 = vmatpush1.msra.mxu0 %v3369
        %v3371 = vand.u32 %v1832, 4294901760
        %v3372 = vsub.f32 %v1832, %v3371
        %v3373 = vand.u32 %v3372, 4294901760
        %3374 = vmatprep.subr.mxu0 %v3373
        %v3375 = vand.u32 %v1831, 4294901760
        %v3376 = vsub.f32 %v1831, %v3375
        %v3377 = vand.u32 %v3376, 4294901760
        %3378 = vmatpush1.msra.mxu0 %v3377
        %v3379 = vand.u32 %v1839, 4294901760
        %v3380 = vsub.f32 %v1839, %v3379
        %v3381 = vand.u32 %v3380, 4294901760
        %3382 = vmatprep.subr.mxu0 %v3381
        %v3383 = vand.u32 %v1838, 4294901760
        %v3384 = vsub.f32 %v1838, %v3383
        %v3385 = vand.u32 %v3384, 4294901760
        %3386 = vmatpush1.msra.mxu0 %v3385
        %v3387 = vand.u32 %v1846, 4294901760
        %v3388 = vsub.f32 %v1846, %v3387
        %v3389 = vand.u32 %v3388, 4294901760
        %3390 = vmatprep.subr.mxu0 %v3389
        %v3391 = vand.u32 %v1845, 4294901760
        %v3392 = vsub.f32 %v1845, %v3391
        %v3393 = vand.u32 %v3392, 4294901760
        %3394 = vmatpush1.msra.mxu0 %v3393
        %v3395 = vand.u32 %v1853, 4294901760
        %v3396 = vsub.f32 %v1853, %v3395
        %v3397 = vand.u32 %v3396, 4294901760
        %3398 = vmatprep.subr.mxu0 %v3397
        %v3399 = vand.u32 %v1852, 4294901760
        %v3400 = vsub.f32 %v1852, %v3399
        %v3401 = vand.u32 %v3400, 4294901760
        %3402 = vmatpush1.msra.mxu0 %v3401
        %v3403 = vand.u32 %v1860, 4294901760
        %v3404 = vsub.f32 %v1860, %v3403
        %v3405 = vand.u32 %v3404, 4294901760
        %3406 = vmatprep.subr.mxu0 %v3405
        %v3407 = vand.u32 %v1859, 4294901760
        %v3408 = vsub.f32 %v1859, %v3407
        %v3409 = vand.u32 %v3408, 4294901760
        %3410 = vmatpush1.msra.mxu0 %v3409
        %v3411 = vand.u32 %v1867, 4294901760
        %v3412 = vsub.f32 %v1867, %v3411
        %v3413 = vand.u32 %v3412, 4294901760
        %3414 = vmatprep.subr.mxu0 %v3413
        %v3415 = vand.u32 %v1866, 4294901760
        %v3416 = vsub.f32 %v1866, %v3415
        %v3417 = vand.u32 %v3416, 4294901760
        %3418 = vmatpush1.msra.mxu0 %v3417
        %v3419 = vand.u32 %v1874, 4294901760
        %v3420 = vsub.f32 %v1874, %v3419
        %v3421 = vand.u32 %v3420, 4294901760
        %3422 = vmatprep.subr.mxu0 %v3421
        %v3423 = vand.u32 %v1873, 4294901760
        %v3424 = vsub.f32 %v1873, %v3423
        %v3425 = vand.u32 %v3424, 4294901760
        %3426 = vmatpush1.msra.mxu0 %v3425
        %v3427 = vand.u32 %v1881, 4294901760
        %v3428 = vsub.f32 %v1881, %v3427
        %v3429 = vand.u32 %v3428, 4294901760
        %3430 = vmatprep.subr.mxu0 %v3429
        %v3431 = vand.u32 %v1880, 4294901760
        %v3432 = vsub.f32 %v1880, %v3431
        %v3433 = vand.u32 %v3432, 4294901760
        %3434 = vmatpush1.msra.mxu0 %v3433
        %v3435 = vand.u32 %v1888, 4294901760
        %v3436 = vsub.f32 %v1888, %v3435
        %v3437 = vand.u32 %v3436, 4294901760
        %3438 = vmatprep.subr.mxu0 %v3437
        %v3439 = vand.u32 %v1887, 4294901760
        %v3440 = vsub.f32 %v1887, %v3439
        %v3441 = vand.u32 %v3440, 4294901760
        %3442 = vmatpush1.msra.mxu0 %v3441
        %3443 = vmatprep.subr.mxu0 0.0
        %3444 = vmatpush1.msra.mxu0 0.0
        %3445 = vmatprep.subr.mxu0 0.0
        %3446 = vmatpush1.msra.mxu0 0.0
        %3447 = vmatprep.subr.mxu0 0.0
        %3448 = vmatpush1.msra.mxu0 0.0
        %3449 = vmatprep.subr.mxu0 0.0
        %3450 = vmatpush1.msra.mxu0 0.0
        %v3451 = vand.u32 %v2407, 4294901760
        %3452 = vmatprep.mubr.f32.mxu0 %v3451
        %v3453 = vand.u32 %v1696, 4294901760
        %3454 = vmatmul.mubr.f32.gmra.mrb[0].mxu0 %v3453
        %v3455 = vpop.f32.mrb[0].mxu0
        %v3456 = vadd.f32 %v3215, %v3455
        %v3457 = vpop.f32.mrb[0].mxu0
        %v3458 = vadd.f32 %v3217, %v3457
        %3459 = vdwg.mxu0
        %v3460 = vand.u32 %v1699, 4294901760
        %3461 = vmatprep.subr.mxu0 %v3460
        %v3462 = vand.u32 %v1698, 4294901760
        %3463 = vmatpush1.msra.mxu0 %v3462
        %v3464 = vand.u32 %v1706, 4294901760
        %3465 = vmatprep.subr.mxu0 %v3464
        %v3466 = vand.u32 %v1705, 4294901760
        %3467 = vmatpush1.msra.mxu0 %v3466
        %v3468 = vand.u32 %v1713, 4294901760
        %3469 = vmatprep.subr.mxu0 %v3468
        %v3470 = vand.u32 %v1712, 4294901760
        %3471 = vmatpush1.msra.mxu0 %v3470
        %v3472 = vand.u32 %v1720, 4294901760
        %3473 = vmatprep.subr.mxu0 %v3472
        %v3474 = vand.u32 %v1719, 4294901760
        %3475 = vmatpush1.msra.mxu0 %v3474
        %v3476 = vand.u32 %v1727, 4294901760
        %3477 = vmatprep.subr.mxu0 %v3476
        %v3478 = vand.u32 %v1726, 4294901760
        %3479 = vmatpush1.msra.mxu0 %v3478
        %v3480 = vand.u32 %v1734, 4294901760
        %3481 = vmatprep.subr.mxu0 %v3480
        %v3482 = vand.u32 %v1733, 4294901760
        %3483 = vmatpush1.msra.mxu0 %v3482
        %v3484 = vand.u32 %v1741, 4294901760
        %3485 = vmatprep.subr.mxu0 %v3484
        %v3486 = vand.u32 %v1740, 4294901760
        %3487 = vmatpush1.msra.mxu0 %v3486
        %v3488 = vand.u32 %v1748, 4294901760
        %3489 = vmatprep.subr.mxu0 %v3488
        %v3490 = vand.u32 %v1747, 4294901760
        %3491 = vmatpush1.msra.mxu0 %v3490
        %v3492 = vand.u32 %v1755, 4294901760
        %3493 = vmatprep.subr.mxu0 %v3492
        %v3494 = vand.u32 %v1754, 4294901760
        %3495 = vmatpush1.msra.mxu0 %v3494
        %v3496 = vand.u32 %v1762, 4294901760
        %3497 = vmatprep.subr.mxu0 %v3496
        %v3498 = vand.u32 %v1761, 4294901760
        %3499 = vmatpush1.msra.mxu0 %v3498
        %v3500 = vand.u32 %v1769, 4294901760
        %3501 = vmatprep.subr.mxu0 %v3500
        %v3502 = vand.u32 %v1768, 4294901760
        %3503 = vmatpush1.msra.mxu0 %v3502
        %v3504 = vand.u32 %v1776, 4294901760
        %3505 = vmatprep.subr.mxu0 %v3504
        %v3506 = vand.u32 %v1775, 4294901760
        %3507 = vmatpush1.msra.mxu0 %v3506
        %v3508 = vand.u32 %v1783, 4294901760
        %3509 = vmatprep.subr.mxu0 %v3508
        %v3510 = vand.u32 %v1782, 4294901760
        %3511 = vmatpush1.msra.mxu0 %v3510
        %v3512 = vand.u32 %v1790, 4294901760
        %3513 = vmatprep.subr.mxu0 %v3512
        %v3514 = vand.u32 %v1789, 4294901760
        %3515 = vmatpush1.msra.mxu0 %v3514
        %v3516 = vand.u32 %v1797, 4294901760
        %3517 = vmatprep.subr.mxu0 %v3516
        %v3518 = vand.u32 %v1796, 4294901760
        %3519 = vmatpush1.msra.mxu0 %v3518
        %v3520 = vand.u32 %v1804, 4294901760
        %3521 = vmatprep.subr.mxu0 %v3520
        %v3522 = vand.u32 %v1803, 4294901760
        %3523 = vmatpush1.msra.mxu0 %v3522
        %v3524 = vand.u32 %v1811, 4294901760
        %3525 = vmatprep.subr.mxu0 %v3524
        %v3526 = vand.u32 %v1810, 4294901760
        %3527 = vmatpush1.msra.mxu0 %v3526
        %v3528 = vand.u32 %v1818, 4294901760
        %3529 = vmatprep.subr.mxu0 %v3528
        %v3530 = vand.u32 %v1817, 4294901760
        %3531 = vmatpush1.msra.mxu0 %v3530
        %v3532 = vand.u32 %v1825, 4294901760
        %3533 = vmatprep.subr.mxu0 %v3532
        %v3534 = vand.u32 %v1824, 4294901760
        %3535 = vmatpush1.msra.mxu0 %v3534
        %v3536 = vand.u32 %v1832, 4294901760
        %3537 = vmatprep.subr.mxu0 %v3536
        %v3538 = vand.u32 %v1831, 4294901760
        %3539 = vmatpush1.msra.mxu0 %v3538
        %v3540 = vand.u32 %v1839, 4294901760
        %3541 = vmatprep.subr.mxu0 %v3540
        %v3542 = vand.u32 %v1838, 4294901760
        %3543 = vmatpush1.msra.mxu0 %v3542
        %v3544 = vand.u32 %v1846, 4294901760
        %3545 = vmatprep.subr.mxu0 %v3544
        %v3546 = vand.u32 %v1845, 4294901760
        %3547 = vmatpush1.msra.mxu0 %v3546
        %v3548 = vand.u32 %v1853, 4294901760
        %3549 = vmatprep.subr.mxu0 %v3548
        %v3550 = vand.u32 %v1852, 4294901760
        %3551 = vmatpush1.msra.mxu0 %v3550
        %v3552 = vand.u32 %v1860, 4294901760
        %3553 = vmatprep.subr.mxu0 %v3552
        %v3554 = vand.u32 %v1859, 4294901760
        %3555 = vmatpush1.msra.mxu0 %v3554
        %v3556 = vand.u32 %v1867, 4294901760
        %3557 = vmatprep.subr.mxu0 %v3556
        %v3558 = vand.u32 %v1866, 4294901760
        %3559 = vmatpush1.msra.mxu0 %v3558
        %v3560 = vand.u32 %v1874, 4294901760
        %3561 = vmatprep.subr.mxu0 %v3560
        %v3562 = vand.u32 %v1873, 4294901760
        %3563 = vmatpush1.msra.mxu0 %v3562
        %v3564 = vand.u32 %v1881, 4294901760
        %3565 = vmatprep.subr.mxu0 %v3564
        %v3566 = vand.u32 %v1880, 4294901760
        %3567 = vmatpush1.msra.mxu0 %v3566
        %v3568 = vand.u32 %v1888, 4294901760
        %3569 = vmatprep.subr.mxu0 %v3568
        %v3570 = vand.u32 %v1887, 4294901760
        %3571 = vmatpush1.msra.mxu0 %v3570
        %3572 = vmatprep.subr.mxu0 0.0
        %3573 = vmatpush1.msra.mxu0 0.0
        %3574 = vmatprep.subr.mxu0 0.0
        %3575 = vmatpush1.msra.mxu0 0.0
        %3576 = vmatprep.subr.mxu0 0.0
        %3577 = vmatpush1.msra.mxu0 0.0
        %3578 = vmatprep.subr.mxu0 0.0
        %3579 = vmatpush1.msra.mxu0 0.0
        %v3580 = vand.u32 %v2407, 4294901760
        %3581 = vmatprep.mubr.f32.mxu0 %v3580
        %v3582 = vand.u32 %v1696, 4294901760
        %3583 = vmatmul.mubr.f32.gmra.mrb[0].mxu0 %v3582
        %v3584 = vpop.f32.mrb[0].mxu0
        %v3585 = vadd.f32 %v3456, %v3584
        %v3586 = vpop.f32.mrb[0].mxu0
        %v3587 = vadd.f32 %v3458, %v3586
        %3588 = vdwg.mxu0
        %v3589 = vand.u32 %v1701, 4294901760
        %3590 = vmatprep.subr.mxu0 %v3589
        %v3591 = vand.u32 %v1700, 4294901760
        %3592 = vmatpush1.msra.mxu0 %v3591
        %v3593 = vand.u32 %v1708, 4294901760
        %3594 = vmatprep.subr.mxu0 %v3593
        %v3595 = vand.u32 %v1707, 4294901760
        %3596 = vmatpush1.msra.mxu0 %v3595
        %v3597 = vand.u32 %v1715, 4294901760
        %3598 = vmatprep.subr.mxu0 %v3597
        %v3599 = vand.u32 %v1714, 4294901760
        %3600 = vmatpush1.msra.mxu0 %v3599
        %v3601 = vand.u32 %v1722, 4294901760
        %3602 = vmatprep.subr.mxu0 %v3601
        %v3603 = vand.u32 %v1721, 4294901760
        %3604 = vmatpush1.msra.mxu0 %v3603
        %v3605 = vand.u32 %v1729, 4294901760
        %3606 = vmatprep.subr.mxu0 %v3605
        %v3607 = vand.u32 %v1728, 4294901760
        %3608 = vmatpush1.msra.mxu0 %v3607
        %v3609 = vand.u32 %v1736, 4294901760
        %3610 = vmatprep.subr.mxu0 %v3609
        %v3611 = vand.u32 %v1735, 4294901760
        %3612 = vmatpush1.msra.mxu0 %v3611
        %v3613 = vand.u32 %v1743, 4294901760
        %3614 = vmatprep.subr.mxu0 %v3613
        %v3615 = vand.u32 %v1742, 4294901760
        %3616 = vmatpush1.msra.mxu0 %v3615
        %v3617 = vand.u32 %v1750, 4294901760
        %3618 = vmatprep.subr.mxu0 %v3617
        %v3619 = vand.u32 %v1749, 4294901760
        %3620 = vmatpush1.msra.mxu0 %v3619
        %v3621 = vand.u32 %v1757, 4294901760
        %3622 = vmatprep.subr.mxu0 %v3621
        %v3623 = vand.u32 %v1756, 4294901760
        %3624 = vmatpush1.msra.mxu0 %v3623
        %v3625 = vand.u32 %v1764, 4294901760
        %3626 = vmatprep.subr.mxu0 %v3625
        %v3627 = vand.u32 %v1763, 4294901760
        %3628 = vmatpush1.msra.mxu0 %v3627
        %v3629 = vand.u32 %v1771, 4294901760
        %3630 = vmatprep.subr.mxu0 %v3629
        %v3631 = vand.u32 %v1770, 4294901760
        %3632 = vmatpush1.msra.mxu0 %v3631
        %v3633 = vand.u32 %v1778, 4294901760
        %3634 = vmatprep.subr.mxu0 %v3633
        %v3635 = vand.u32 %v1777, 4294901760
        %3636 = vmatpush1.msra.mxu0 %v3635
        %v3637 = vand.u32 %v1785, 4294901760
        %3638 = vmatprep.subr.mxu0 %v3637
        %v3639 = vand.u32 %v1784, 4294901760
        %3640 = vmatpush1.msra.mxu0 %v3639
        %v3641 = vand.u32 %v1792, 4294901760
        %3642 = vmatprep.subr.mxu0 %v3641
        %v3643 = vand.u32 %v1791, 4294901760
        %3644 = vmatpush1.msra.mxu0 %v3643
        %v3645 = vand.u32 %v1799, 4294901760
        %3646 = vmatprep.subr.mxu0 %v3645
        %v3647 = vand.u32 %v1798, 4294901760
        %3648 = vmatpush1.msra.mxu0 %v3647
        %v3649 = vand.u32 %v1806, 4294901760
        %3650 = vmatprep.subr.mxu0 %v3649
        %v3651 = vand.u32 %v1805, 4294901760
        %3652 = vmatpush1.msra.mxu0 %v3651
        %v3653 = vand.u32 %v1813, 4294901760
        %3654 = vmatprep.subr.mxu0 %v3653
        %v3655 = vand.u32 %v1812, 4294901760
        %3656 = vmatpush1.msra.mxu0 %v3655
        %v3657 = vand.u32 %v1820, 4294901760
        %3658 = vmatprep.subr.mxu0 %v3657
        %v3659 = vand.u32 %v1819, 4294901760
        %3660 = vmatpush1.msra.mxu0 %v3659
        %v3661 = vand.u32 %v1827, 4294901760
        %3662 = vmatprep.subr.mxu0 %v3661
        %v3663 = vand.u32 %v1826, 4294901760
        %3664 = vmatpush1.msra.mxu0 %v3663
        %v3665 = vand.u32 %v1834, 4294901760
        %3666 = vmatprep.subr.mxu0 %v3665
        %v3667 = vand.u32 %v1833, 4294901760
        %3668 = vmatpush1.msra.mxu0 %v3667
        %v3669 = vand.u32 %v1841, 4294901760
        %3670 = vmatprep.subr.mxu0 %v3669
        %v3671 = vand.u32 %v1840, 4294901760
        %3672 = vmatpush1.msra.mxu0 %v3671
        %v3673 = vand.u32 %v1848, 4294901760
        %3674 = vmatprep.subr.mxu0 %v3673
        %v3675 = vand.u32 %v1847, 4294901760
        %3676 = vmatpush1.msra.mxu0 %v3675
        %v3677 = vand.u32 %v1855, 4294901760
        %3678 = vmatprep.subr.mxu0 %v3677
        %v3679 = vand.u32 %v1854, 4294901760
        %3680 = vmatpush1.msra.mxu0 %v3679
        %v3681 = vand.u32 %v1862, 4294901760
        %3682 = vmatprep.subr.mxu0 %v3681
        %v3683 = vand.u32 %v1861, 4294901760
        %3684 = vmatpush1.msra.mxu0 %v3683
        %v3685 = vand.u32 %v1869, 4294901760
        %3686 = vmatprep.subr.mxu0 %v3685
        %v3687 = vand.u32 %v1868, 4294901760
        %3688 = vmatpush1.msra.mxu0 %v3687
        %v3689 = vand.u32 %v1876, 4294901760
        %3690 = vmatprep.subr.mxu0 %v3689
        %v3691 = vand.u32 %v1875, 4294901760
        %3692 = vmatpush1.msra.mxu0 %v3691
        %v3693 = vand.u32 %v1883, 4294901760
        %3694 = vmatprep.subr.mxu0 %v3693
        %v3695 = vand.u32 %v1882, 4294901760
        %3696 = vmatpush1.msra.mxu0 %v3695
        %v3697 = vand.u32 %v1890, 4294901760
        %3698 = vmatprep.subr.mxu0 %v3697
        %v3699 = vand.u32 %v1889, 4294901760
        %3700 = vmatpush1.msra.mxu0 %v3699
        %3701 = vmatprep.subr.mxu0 0.0
        %3702 = vmatpush1.msra.mxu0 0.0
        %3703 = vmatprep.subr.mxu0 0.0
        %3704 = vmatpush1.msra.mxu0 0.0
        %3705 = vmatprep.subr.mxu0 0.0
        %3706 = vmatpush1.msra.mxu0 0.0
        %3707 = vmatprep.subr.mxu0 0.0
        %3708 = vmatpush1.msra.mxu0 0.0
        %v3709 = vand.u32 %v2407, 4294901760
        %v3710 = vsub.f32 %v2407, %v3709
        %v3711 = vand.u32 %v3710, 4294901760
        %v3712 = vsub.f32 %v3710, %v3711
        %v3713 = vand.u32 %v3712, 4294901760
        %3714 = vmatprep.mubr.f32.mxu0 %v3713
        %v3715 = vand.u32 %v1696, 4294901760
        %v3716 = vsub.f32 %v1696, %v3715
        %v3717 = vand.u32 %v3716, 4294901760
        %v3718 = vsub.f32 %v3716, %v3717
        %v3719 = vand.u32 %v3718, 4294901760
        %3720 = vmatmul.mubr.f32.gmra.mrb[0].mxu0 %v3719
        %v3721 = vpop.f32.mrb[0].mxu0
        %v3722 = vadd.f32 %v2403, %v3721
        %v3723 = vpop.f32.mrb[0].mxu0
        %v3724 = vadd.f32 %v2403, %v3723
        %3725 = vdwg.mxu0
        %v3726 = vand.u32 %v1701, 4294901760
        %v3727 = vsub.f32 %v1701, %v3726
        %v3728 = vand.u32 %v3727, 4294901760
        %v3729 = vsub.f32 %v3727, %v3728
        %v3730 = vand.u32 %v3729, 4294901760
        %3731 = vmatprep.subr.mxu0 %v3730
        %v3732 = vand.u32 %v1700, 4294901760
        %v3733 = vsub.f32 %v1700, %v3732
        %v3734 = vand.u32 %v3733, 4294901760
        %v3735 = vsub.f32 %v3733, %v3734
        %v3736 = vand.u32 %v3735, 4294901760
        %3737 = vmatpush1.msra.mxu0 %v3736
        %v3738 = vand.u32 %v1708, 4294901760
        %v3739 = vsub.f32 %v1708, %v3738
        %v3740 = vand.u32 %v3739, 4294901760
        %v3741 = vsub.f32 %v3739, %v3740
        %v3742 = vand.u32 %v3741, 4294901760
        %3743 = vmatprep.subr.mxu0 %v3742
        %v3744 = vand.u32 %v1707, 4294901760
        %v3745 = vsub.f32 %v1707, %v3744
        %v3746 = vand.u32 %v3745, 4294901760
        %v3747 = vsub.f32 %v3745, %v3746
        %v3748 = vand.u32 %v3747, 4294901760
        %3749 = vmatpush1.msra.mxu0 %v3748
        %v3750 = vand.u32 %v1715, 4294901760
        %v3751 = vsub.f32 %v1715, %v3750
        %v3752 = vand.u32 %v3751, 4294901760
        %v3753 = vsub.f32 %v3751, %v3752
        %v3754 = vand.u32 %v3753, 4294901760
        %3755 = vmatprep.subr.mxu0 %v3754
        %v3756 = vand.u32 %v1714, 4294901760
        %v3757 = vsub.f32 %v1714, %v3756
        %v3758 = vand.u32 %v3757, 4294901760
        %v3759 = vsub.f32 %v3757, %v3758
        %v3760 = vand.u32 %v3759, 4294901760
        %3761 = vmatpush1.msra.mxu0 %v3760
        %v3762 = vand.u32 %v1722, 4294901760
        %v3763 = vsub.f32 %v1722, %v3762
        %v3764 = vand.u32 %v3763, 4294901760
        %v3765 = vsub.f32 %v3763, %v3764
        %v3766 = vand.u32 %v3765, 4294901760
        %3767 = vmatprep.subr.mxu0 %v3766
        %v3768 = vand.u32 %v1721, 4294901760
        %v3769 = vsub.f32 %v1721, %v3768
        %v3770 = vand.u32 %v3769, 4294901760
        %v3771 = vsub.f32 %v3769, %v3770
        %v3772 = vand.u32 %v3771, 4294901760
        %3773 = vmatpush1.msra.mxu0 %v3772
        %v3774 = vand.u32 %v1729, 4294901760
        %v3775 = vsub.f32 %v1729, %v3774
        %v3776 = vand.u32 %v3775, 4294901760
        %v3777 = vsub.f32 %v3775, %v3776
        %v3778 = vand.u32 %v3777, 4294901760
        %3779 = vmatprep.subr.mxu0 %v3778
        %v3780 = vand.u32 %v1728, 4294901760
        %v3781 = vsub.f32 %v1728, %v3780
        %v3782 = vand.u32 %v3781, 4294901760
        %v3783 = vsub.f32 %v3781, %v3782
        %v3784 = vand.u32 %v3783, 4294901760
        %3785 = vmatpush1.msra.mxu0 %v3784
        %v3786 = vand.u32 %v1736, 4294901760
        %v3787 = vsub.f32 %v1736, %v3786
        %v3788 = vand.u32 %v3787, 4294901760
        %v3789 = vsub.f32 %v3787, %v3788
        %v3790 = vand.u32 %v3789, 4294901760
        %3791 = vmatprep.subr.mxu0 %v3790
        %v3792 = vand.u32 %v1735, 4294901760
        %v3793 = vsub.f32 %v1735, %v3792
        %v3794 = vand.u32 %v3793, 4294901760
        %v3795 = vsub.f32 %v3793, %v3794
        %v3796 = vand.u32 %v3795, 4294901760
        %3797 = vmatpush1.msra.mxu0 %v3796
        %v3798 = vand.u32 %v1743, 4294901760
        %v3799 = vsub.f32 %v1743, %v3798
        %v3800 = vand.u32 %v3799, 4294901760
        %v3801 = vsub.f32 %v3799, %v3800
        %v3802 = vand.u32 %v3801, 4294901760
        %3803 = vmatprep.subr.mxu0 %v3802
        %v3804 = vand.u32 %v1742, 4294901760
        %v3805 = vsub.f32 %v1742, %v3804
        %v3806 = vand.u32 %v3805, 4294901760
        %v3807 = vsub.f32 %v3805, %v3806
        %v3808 = vand.u32 %v3807, 4294901760
        %3809 = vmatpush1.msra.mxu0 %v3808
        %v3810 = vand.u32 %v1750, 4294901760
        %v3811 = vsub.f32 %v1750, %v3810
        %v3812 = vand.u32 %v3811, 4294901760
        %v3813 = vsub.f32 %v3811, %v3812
        %v3814 = vand.u32 %v3813, 4294901760
        %3815 = vmatprep.subr.mxu0 %v3814
        %v3816 = vand.u32 %v1749, 4294901760
        %v3817 = vsub.f32 %v1749, %v3816
        %v3818 = vand.u32 %v3817, 4294901760
        %v3819 = vsub.f32 %v3817, %v3818
        %v3820 = vand.u32 %v3819, 4294901760
        %3821 = vmatpush1.msra.mxu0 %v3820
        %v3822 = vand.u32 %v1757, 4294901760
        %v3823 = vsub.f32 %v1757, %v3822
        %v3824 = vand.u32 %v3823, 4294901760
        %v3825 = vsub.f32 %v3823, %v3824
        %v3826 = vand.u32 %v3825, 4294901760
        %3827 = vmatprep.subr.mxu0 %v3826
        %v3828 = vand.u32 %v1756, 4294901760
        %v3829 = vsub.f32 %v1756, %v3828
        %v3830 = vand.u32 %v3829, 4294901760
        %v3831 = vsub.f32 %v3829, %v3830
        %v3832 = vand.u32 %v3831, 4294901760
        %3833 = vmatpush1.msra.mxu0 %v3832
        %v3834 = vand.u32 %v1764, 4294901760
        %v3835 = vsub.f32 %v1764, %v3834
        %v3836 = vand.u32 %v3835, 4294901760
        %v3837 = vsub.f32 %v3835, %v3836
        %v3838 = vand.u32 %v3837, 4294901760
        %3839 = vmatprep.subr.mxu0 %v3838
        %v3840 = vand.u32 %v1763, 4294901760
        %v3841 = vsub.f32 %v1763, %v3840
        %v3842 = vand.u32 %v3841, 4294901760
        %v3843 = vsub.f32 %v3841, %v3842
        %v3844 = vand.u32 %v3843, 4294901760
        %3845 = vmatpush1.msra.mxu0 %v3844
        %v3846 = vand.u32 %v1771, 4294901760
        %v3847 = vsub.f32 %v1771, %v3846
        %v3848 = vand.u32 %v3847, 4294901760
        %v3849 = vsub.f32 %v3847, %v3848
        %v3850 = vand.u32 %v3849, 4294901760
        %3851 = vmatprep.subr.mxu0 %v3850
        %v3852 = vand.u32 %v1770, 4294901760
        %v3853 = vsub.f32 %v1770, %v3852
        %v3854 = vand.u32 %v3853, 4294901760
        %v3855 = vsub.f32 %v3853, %v3854
        %v3856 = vand.u32 %v3855, 4294901760
        %3857 = vmatpush1.msra.mxu0 %v3856
        %v3858 = vand.u32 %v1778, 4294901760
        %v3859 = vsub.f32 %v1778, %v3858
        %v3860 = vand.u32 %v3859, 4294901760
        %v3861 = vsub.f32 %v3859, %v3860
        %v3862 = vand.u32 %v3861, 4294901760
        %3863 = vmatprep.subr.mxu0 %v3862
        %v3864 = vand.u32 %v1777, 4294901760
        %v3865 = vsub.f32 %v1777, %v3864
        %v3866 = vand.u32 %v3865, 4294901760
        %v3867 = vsub.f32 %v3865, %v3866
        %v3868 = vand.u32 %v3867, 4294901760
        %3869 = vmatpush1.msra.mxu0 %v3868
        %v3870 = vand.u32 %v1785, 4294901760
        %v3871 = vsub.f32 %v1785, %v3870
        %v3872 = vand.u32 %v3871, 4294901760
        %v3873 = vsub.f32 %v3871, %v3872
        %v3874 = vand.u32 %v3873, 4294901760
        %3875 = vmatprep.subr.mxu0 %v3874
        %v3876 = vand.u32 %v1784, 4294901760
        %v3877 = vsub.f32 %v1784, %v3876
        %v3878 = vand.u32 %v3877, 4294901760
        %v3879 = vsub.f32 %v3877, %v3878
        %v3880 = vand.u32 %v3879, 4294901760
        %3881 = vmatpush1.msra.mxu0 %v3880
        %v3882 = vand.u32 %v1792, 4294901760
        %v3883 = vsub.f32 %v1792, %v3882
        %v3884 = vand.u32 %v3883, 4294901760
        %v3885 = vsub.f32 %v3883, %v3884
        %v3886 = vand.u32 %v3885, 4294901760
        %3887 = vmatprep.subr.mxu0 %v3886
        %v3888 = vand.u32 %v1791, 4294901760
        %v3889 = vsub.f32 %v1791, %v3888
        %v3890 = vand.u32 %v3889, 4294901760
        %v3891 = vsub.f32 %v3889, %v3890
        %v3892 = vand.u32 %v3891, 4294901760
        %3893 = vmatpush1.msra.mxu0 %v3892
        %v3894 = vand.u32 %v1799, 4294901760
        %v3895 = vsub.f32 %v1799, %v3894
        %v3896 = vand.u32 %v3895, 4294901760
        %v3897 = vsub.f32 %v3895, %v3896
        %v3898 = vand.u32 %v3897, 4294901760
        %3899 = vmatprep.subr.mxu0 %v3898
        %v3900 = vand.u32 %v1798, 4294901760
        %v3901 = vsub.f32 %v1798, %v3900
        %v3902 = vand.u32 %v3901, 4294901760
        %v3903 = vsub.f32 %v3901, %v3902
        %v3904 = vand.u32 %v3903, 4294901760
        %3905 = vmatpush1.msra.mxu0 %v3904
        %v3906 = vand.u32 %v1806, 4294901760
        %v3907 = vsub.f32 %v1806, %v3906
        %v3908 = vand.u32 %v3907, 4294901760
        %v3909 = vsub.f32 %v3907, %v3908
        %v3910 = vand.u32 %v3909, 4294901760
        %3911 = vmatprep.subr.mxu0 %v3910
        %v3912 = vand.u32 %v1805, 4294901760
        %v3913 = vsub.f32 %v1805, %v3912
        %v3914 = vand.u32 %v3913, 4294901760
        %v3915 = vsub.f32 %v3913, %v3914
        %v3916 = vand.u32 %v3915, 4294901760
        %3917 = vmatpush1.msra.mxu0 %v3916
        %v3918 = vand.u32 %v1813, 4294901760
        %v3919 = vsub.f32 %v1813, %v3918
        %v3920 = vand.u32 %v3919, 4294901760
        %v3921 = vsub.f32 %v3919, %v3920
        %v3922 = vand.u32 %v3921, 4294901760
        %3923 = vmatprep.subr.mxu0 %v3922
        %v3924 = vand.u32 %v1812, 4294901760
        %v3925 = vsub.f32 %v1812, %v3924
        %v3926 = vand.u32 %v3925, 4294901760
        %v3927 = vsub.f32 %v3925, %v3926
        %v3928 = vand.u32 %v3927, 4294901760
        %3929 = vmatpush1.msra.mxu0 %v3928
        %v3930 = vand.u32 %v1820, 4294901760
        %v3931 = vsub.f32 %v1820, %v3930
        %v3932 = vand.u32 %v3931, 4294901760
        %v3933 = vsub.f32 %v3931, %v3932
        %v3934 = vand.u32 %v3933, 4294901760
        %3935 = vmatprep.subr.mxu0 %v3934
        %v3936 = vand.u32 %v1819, 4294901760
        %v3937 = vsub.f32 %v1819, %v3936
        %v3938 = vand.u32 %v3937, 4294901760
        %v3939 = vsub.f32 %v3937, %v3938
        %v3940 = vand.u32 %v3939, 4294901760
        %3941 = vmatpush1.msra.mxu0 %v3940
        %v3942 = vand.u32 %v1827, 4294901760
        %v3943 = vsub.f32 %v1827, %v3942
        %v3944 = vand.u32 %v3943, 4294901760
        %v3945 = vsub.f32 %v3943, %v3944
        %v3946 = vand.u32 %v3945, 4294901760
        %3947 = vmatprep.subr.mxu0 %v3946
        %v3948 = vand.u32 %v1826, 4294901760
        %v3949 = vsub.f32 %v1826, %v3948
        %v3950 = vand.u32 %v3949, 4294901760
        %v3951 = vsub.f32 %v3949, %v3950
        %v3952 = vand.u32 %v3951, 4294901760
        %3953 = vmatpush1.msra.mxu0 %v3952
        %v3954 = vand.u32 %v1834, 4294901760
        %v3955 = vsub.f32 %v1834, %v3954
        %v3956 = vand.u32 %v3955, 4294901760
        %v3957 = vsub.f32 %v3955, %v3956
        %v3958 = vand.u32 %v3957, 4294901760
        %3959 = vmatprep.subr.mxu0 %v3958
        %v3960 = vand.u32 %v1833, 4294901760
        %v3961 = vsub.f32 %v1833, %v3960
        %v3962 = vand.u32 %v3961, 4294901760
        %v3963 = vsub.f32 %v3961, %v3962
        %v3964 = vand.u32 %v3963, 4294901760
        %3965 = vmatpush1.msra.mxu0 %v3964
        %v3966 = vand.u32 %v1841, 4294901760
        %v3967 = vsub.f32 %v1841, %v3966
        %v3968 = vand.u32 %v3967, 4294901760
        %v3969 = vsub.f32 %v3967, %v3968
        %v3970 = vand.u32 %v3969, 4294901760
        %3971 = vmatprep.subr.mxu0 %v3970
        %v3972 = vand.u32 %v1840, 4294901760
        %v3973 = vsub.f32 %v1840, %v3972
        %v3974 = vand.u32 %v3973, 4294901760
        %v3975 = vsub.f32 %v3973, %v3974
        %v3976 = vand.u32 %v3975, 4294901760
        %3977 = vmatpush1.msra.mxu0 %v3976
        %v3978 = vand.u32 %v1848, 4294901760
        %v3979 = vsub.f32 %v1848, %v3978
        %v3980 = vand.u32 %v3979, 4294901760
        %v3981 = vsub.f32 %v3979, %v3980
        %v3982 = vand.u32 %v3981, 4294901760
        %3983 = vmatprep.subr.mxu0 %v3982
        %v3984 = vand.u32 %v1847, 4294901760
        %v3985 = vsub.f32 %v1847, %v3984
        %v3986 = vand.u32 %v3985, 4294901760
        %v3987 = vsub.f32 %v3985, %v3986
        %v3988 = vand.u32 %v3987, 4294901760
        %3989 = vmatpush1.msra.mxu0 %v3988
        %v3990 = vand.u32 %v1855, 4294901760
        %v3991 = vsub.f32 %v1855, %v3990
        %v3992 = vand.u32 %v3991, 4294901760
        %v3993 = vsub.f32 %v3991, %v3992
        %v3994 = vand.u32 %v3993, 4294901760
        %3995 = vmatprep.subr.mxu0 %v3994
        %v3996 = vand.u32 %v1854, 4294901760
        %v3997 = vsub.f32 %v1854, %v3996
        %v3998 = vand.u32 %v3997, 4294901760
        %v3999 = vsub.f32 %v3997, %v3998
        %v4000 = vand.u32 %v3999, 4294901760
        %4001 = vmatpush1.msra.mxu0 %v4000
        %v4002 = vand.u32 %v1862, 4294901760
        %v4003 = vsub.f32 %v1862, %v4002
        %v4004 = vand.u32 %v4003, 4294901760
        %v4005 = vsub.f32 %v4003, %v4004
        %v4006 = vand.u32 %v4005, 4294901760
        %4007 = vmatprep.subr.mxu0 %v4006
        %v4008 = vand.u32 %v1861, 4294901760
        %v4009 = vsub.f32 %v1861, %v4008
        %v4010 = vand.u32 %v4009, 4294901760
        %v4011 = vsub.f32 %v4009, %v4010
        %v4012 = vand.u32 %v4011, 4294901760
        %4013 = vmatpush1.msra.mxu0 %v4012
        %v4014 = vand.u32 %v1869, 4294901760
        %v4015 = vsub.f32 %v1869, %v4014
        %v4016 = vand.u32 %v4015, 4294901760
        %v4017 = vsub.f32 %v4015, %v4016
        %v4018 = vand.u32 %v4017, 4294901760
        %4019 = vmatprep.subr.mxu0 %v4018
        %v4020 = vand.u32 %v1868, 4294901760
        %v4021 = vsub.f32 %v1868, %v4020
        %v4022 = vand.u32 %v4021, 4294901760
        %v4023 = vsub.f32 %v4021, %v4022
        %v4024 = vand.u32 %v4023, 4294901760
        %4025 = vmatpush1.msra.mxu0 %v4024
        %v4026 = vand.u32 %v1876, 4294901760
        %v4027 = vsub.f32 %v1876, %v4026
        %v4028 = vand.u32 %v4027, 4294901760
        %v4029 = vsub.f32 %v4027, %v4028
        %v4030 = vand.u32 %v4029, 4294901760
        %4031 = vmatprep.subr.mxu0 %v4030
        %v4032 = vand.u32 %v1875, 4294901760
        %v4033 = vsub.f32 %v1875, %v4032
        %v4034 = vand.u32 %v4033, 4294901760
        %v4035 = vsub.f32 %v4033, %v4034
        %v4036 = vand.u32 %v4035, 4294901760
        %4037 = vmatpush1.msra.mxu0 %v4036
        %v4038 = vand.u32 %v1883, 4294901760
        %v4039 = vsub.f32 %v1883, %v4038
        %v4040 = vand.u32 %v4039, 4294901760
        %v4041 = vsub.f32 %v4039, %v4040
        %v4042 = vand.u32 %v4041, 4294901760
        %4043 = vmatprep.subr.mxu0 %v4042
        %v4044 = vand.u32 %v1882, 4294901760
        %v4045 = vsub.f32 %v1882, %v4044
        %v4046 = vand.u32 %v4045, 4294901760
        %v4047 = vsub.f32 %v4045, %v4046
        %v4048 = vand.u32 %v4047, 4294901760
        %4049 = vmatpush1.msra.mxu0 %v4048
        %v4050 = vand.u32 %v1890, 4294901760
        %v4051 = vsub.f32 %v1890, %v4050
        %v4052 = vand.u32 %v4051, 4294901760
        %v4053 = vsub.f32 %v4051, %v4052
        %v4054 = vand.u32 %v4053, 4294901760
        %4055 = vmatprep.subr.mxu0 %v4054
        %v4056 = vand.u32 %v1889, 4294901760
        %v4057 = vsub.f32 %v1889, %v4056
        %v4058 = vand.u32 %v4057, 4294901760
        %v4059 = vsub.f32 %v4057, %v4058
        %v4060 = vand.u32 %v4059, 4294901760
        %4061 = vmatpush1.msra.mxu0 %v4060
        %4062 = vmatprep.subr.mxu0 0.0
        %4063 = vmatpush1.msra.mxu0 0.0
        %4064 = vmatprep.subr.mxu0 0.0
        %4065 = vmatpush1.msra.mxu0 0.0
        %4066 = vmatprep.subr.mxu0 0.0
        %4067 = vmatpush1.msra.mxu0 0.0
        %4068 = vmatprep.subr.mxu0 0.0
        %4069 = vmatpush1.msra.mxu0 0.0
        %v4070 = vand.u32 %v2407, 4294901760
        %4071 = vmatprep.mubr.f32.mxu0 %v4070
        %v4072 = vand.u32 %v1696, 4294901760
        %4073 = vmatmul.mubr.f32.gmra.mrb[0].mxu0 %v4072
        %v4074 = vpop.f32.mrb[0].mxu0
        %v4075 = vadd.f32 %v3722, %v4074
        %v4076 = vpop.f32.mrb[0].mxu0
        %v4077 = vadd.f32 %v3724, %v4076
        %4078 = vdwg.mxu0
        %v4079 = vand.u32 %v1701, 4294901760
        %v4080 = vsub.f32 %v1701, %v4079
        %4081 = vmatprep.subr.mxu0 %v4080
        %v4082 = vand.u32 %v1700, 4294901760
        %v4083 = vsub.f32 %v1700, %v4082
        %4084 = vmatpush1.msra.mxu0 %v4083
        %v4085 = vand.u32 %v1708, 4294901760
        %v4086 = vsub.f32 %v1708, %v4085
        %4087 = vmatprep.subr.mxu0 %v4086
        %v4088 = vand.u32 %v1707, 4294901760
        %v4089 = vsub.f32 %v1707, %v4088
        %4090 = vmatpush1.msra.mxu0 %v4089
        %v4091 = vand.u32 %v1715, 4294901760
        %v4092 = vsub.f32 %v1715, %v4091
        %4093 = vmatprep.subr.mxu0 %v4092
        %v4094 = vand.u32 %v1714, 4294901760
        %v4095 = vsub.f32 %v1714, %v4094
        %4096 = vmatpush1.msra.mxu0 %v4095
        %v4097 = vand.u32 %v1722, 4294901760
        %v4098 = vsub.f32 %v1722, %v4097
        %4099 = vmatprep.subr.mxu0 %v4098
        %v4100 = vand.u32 %v1721, 4294901760
        %v4101 = vsub.f32 %v1721, %v4100
        %4102 = vmatpush1.msra.mxu0 %v4101
        %v4103 = vand.u32 %v1729, 4294901760
        %v4104 = vsub.f32 %v1729, %v4103
        %4105 = vmatprep.subr.mxu0 %v4104
        %v4106 = vand.u32 %v1728, 4294901760
        %v4107 = vsub.f32 %v1728, %v4106
        %4108 = vmatpush1.msra.mxu0 %v4107
        %v4109 = vand.u32 %v1736, 4294901760
        %v4110 = vsub.f32 %v1736, %v4109
        %4111 = vmatprep.subr.mxu0 %v4110
        %v4112 = vand.u32 %v1735, 4294901760
        %v4113 = vsub.f32 %v1735, %v4112
        %4114 = vmatpush1.msra.mxu0 %v4113
        %v4115 = vand.u32 %v1743, 4294901760
        %v4116 = vsub.f32 %v1743, %v4115
        %4117 = vmatprep.subr.mxu0 %v4116
        %v4118 = vand.u32 %v1742, 4294901760
        %v4119 = vsub.f32 %v1742, %v4118
        %4120 = vmatpush1.msra.mxu0 %v4119
        %v4121 = vand.u32 %v1750, 4294901760
        %v4122 = vsub.f32 %v1750, %v4121
        %4123 = vmatprep.subr.mxu0 %v4122
        %v4124 = vand.u32 %v1749, 4294901760
        %v4125 = vsub.f32 %v1749, %v4124
        %4126 = vmatpush1.msra.mxu0 %v4125
        %v4127 = vand.u32 %v1757, 4294901760
        %v4128 = vsub.f32 %v1757, %v4127
        %4129 = vmatprep.subr.mxu0 %v4128
        %v4130 = vand.u32 %v1756, 4294901760
        %v4131 = vsub.f32 %v1756, %v4130
        %4132 = vmatpush1.msra.mxu0 %v4131
        %v4133 = vand.u32 %v1764, 4294901760
        %v4134 = vsub.f32 %v1764, %v4133
        %4135 = vmatprep.subr.mxu0 %v4134
        %v4136 = vand.u32 %v1763, 4294901760
        %v4137 = vsub.f32 %v1763, %v4136
        %4138 = vmatpush1.msra.mxu0 %v4137
        %v4139 = vand.u32 %v1771, 4294901760
        %v4140 = vsub.f32 %v1771, %v4139
        %4141 = vmatprep.subr.mxu0 %v4140
        %v4142 = vand.u32 %v1770, 4294901760
        %v4143 = vsub.f32 %v1770, %v4142
        %4144 = vmatpush1.msra.mxu0 %v4143
        %v4145 = vand.u32 %v1778, 4294901760
        %v4146 = vsub.f32 %v1778, %v4145
        %4147 = vmatprep.subr.mxu0 %v4146
        %v4148 = vand.u32 %v1777, 4294901760
        %v4149 = vsub.f32 %v1777, %v4148
        %4150 = vmatpush1.msra.mxu0 %v4149
        %v4151 = vand.u32 %v1785, 4294901760
        %v4152 = vsub.f32 %v1785, %v4151
        %4153 = vmatprep.subr.mxu0 %v4152
        %v4154 = vand.u32 %v1784, 4294901760
        %v4155 = vsub.f32 %v1784, %v4154
        %4156 = vmatpush1.msra.mxu0 %v4155
        %v4157 = vand.u32 %v1792, 4294901760
        %v4158 = vsub.f32 %v1792, %v4157
        %4159 = vmatprep.subr.mxu0 %v4158
        %v4160 = vand.u32 %v1791, 4294901760
        %v4161 = vsub.f32 %v1791, %v4160
        %4162 = vmatpush1.msra.mxu0 %v4161
        %v4163 = vand.u32 %v1799, 4294901760
        %v4164 = vsub.f32 %v1799, %v4163
        %4165 = vmatprep.subr.mxu0 %v4164
        %v4166 = vand.u32 %v1798, 4294901760
        %v4167 = vsub.f32 %v1798, %v4166
        %4168 = vmatpush1.msra.mxu0 %v4167
        %v4169 = vand.u32 %v1806, 4294901760
        %v4170 = vsub.f32 %v1806, %v4169
        %4171 = vmatprep.subr.mxu0 %v4170
        %v4172 = vand.u32 %v1805, 4294901760
        %v4173 = vsub.f32 %v1805, %v4172
        %4174 = vmatpush1.msra.mxu0 %v4173
        %v4175 = vand.u32 %v1813, 4294901760
        %v4176 = vsub.f32 %v1813, %v4175
        %4177 = vmatprep.subr.mxu0 %v4176
        %v4178 = vand.u32 %v1812, 4294901760
        %v4179 = vsub.f32 %v1812, %v4178
        %4180 = vmatpush1.msra.mxu0 %v4179
        %v4181 = vand.u32 %v1820, 4294901760
        %v4182 = vsub.f32 %v1820, %v4181
        %4183 = vmatprep.subr.mxu0 %v4182
        %v4184 = vand.u32 %v1819, 4294901760
        %v4185 = vsub.f32 %v1819, %v4184
        %4186 = vmatpush1.msra.mxu0 %v4185
        %v4187 = vand.u32 %v1827, 4294901760
        %v4188 = vsub.f32 %v1827, %v4187
        %4189 = vmatprep.subr.mxu0 %v4188
        %v4190 = vand.u32 %v1826, 4294901760
        %v4191 = vsub.f32 %v1826, %v4190
        %4192 = vmatpush1.msra.mxu0 %v4191
        %v4193 = vand.u32 %v1834, 4294901760
        %v4194 = vsub.f32 %v1834, %v4193
        %4195 = vmatprep.subr.mxu0 %v4194
        %v4196 = vand.u32 %v1833, 4294901760
        %v4197 = vsub.f32 %v1833, %v4196
        %4198 = vmatpush1.msra.mxu0 %v4197
        %v4199 = vand.u32 %v1841, 4294901760
        %v4200 = vsub.f32 %v1841, %v4199
        %4201 = vmatprep.subr.mxu0 %v4200
        %v4202 = vand.u32 %v1840, 4294901760
        %v4203 = vsub.f32 %v1840, %v4202
        %4204 = vmatpush1.msra.mxu0 %v4203
        %v4205 = vand.u32 %v1848, 4294901760
        %v4206 = vsub.f32 %v1848, %v4205
        %4207 = vmatprep.subr.mxu0 %v4206
        %v4208 = vand.u32 %v1847, 4294901760
        %v4209 = vsub.f32 %v1847, %v4208
        %4210 = vmatpush1.msra.mxu0 %v4209
        %v4211 = vand.u32 %v1855, 4294901760
        %v4212 = vsub.f32 %v1855, %v4211
        %4213 = vmatprep.subr.mxu0 %v4212
        %v4214 = vand.u32 %v1854, 4294901760
        %v4215 = vsub.f32 %v1854, %v4214
        %4216 = vmatpush1.msra.mxu0 %v4215
        %v4217 = vand.u32 %v1862, 4294901760
        %v4218 = vsub.f32 %v1862, %v4217
        %4219 = vmatprep.subr.mxu0 %v4218
        %v4220 = vand.u32 %v1861, 4294901760
        %v4221 = vsub.f32 %v1861, %v4220
        %4222 = vmatpush1.msra.mxu0 %v4221
        %v4223 = vand.u32 %v1869, 4294901760
        %v4224 = vsub.f32 %v1869, %v4223
        %4225 = vmatprep.subr.mxu0 %v4224
        %v4226 = vand.u32 %v1868, 4294901760
        %v4227 = vsub.f32 %v1868, %v4226
        %4228 = vmatpush1.msra.mxu0 %v4227
        %v4229 = vand.u32 %v1876, 4294901760
        %v4230 = vsub.f32 %v1876, %v4229
        %4231 = vmatprep.subr.mxu0 %v4230
        %v4232 = vand.u32 %v1875, 4294901760
        %v4233 = vsub.f32 %v1875, %v4232
        %4234 = vmatpush1.msra.mxu0 %v4233
        %v4235 = vand.u32 %v1883, 4294901760
        %v4236 = vsub.f32 %v1883, %v4235
        %4237 = vmatprep.subr.mxu0 %v4236
        %v4238 = vand.u32 %v1882, 4294901760
        %v4239 = vsub.f32 %v1882, %v4238
        %4240 = vmatpush1.msra.mxu0 %v4239
        %v4241 = vand.u32 %v1890, 4294901760
        %v4242 = vsub.f32 %v1890, %v4241
        %4243 = vmatprep.subr.mxu0 %v4242
        %v4244 = vand.u32 %v1889, 4294901760
        %v4245 = vsub.f32 %v1889, %v4244
        %4246 = vmatpush1.msra.mxu0 %v4245
        %4247 = vmatprep.subr.mxu0 0.0
        %4248 = vmatpush1.msra.mxu0 0.0
        %4249 = vmatprep.subr.mxu0 0.0
        %4250 = vmatpush1.msra.mxu0 0.0
        %4251 = vmatprep.subr.mxu0 0.0
        %4252 = vmatpush1.msra.mxu0 0.0
        %4253 = vmatprep.subr.mxu0 0.0
        %4254 = vmatpush1.msra.mxu0 0.0
        %v4255 = vand.u32 %v2407, 4294901760
        %v4256 = vsub.f32 %v2407, %v4255
        %4257 = vmatprep.mubr.f32.mxu0 %v4256
        %v4258 = vand.u32 %v1696, 4294901760
        %v4259 = vsub.f32 %v1696, %v4258
        %4260 = vmatmul.mubr.f32.gmra.mrb[0].mxu0 %v4259
        %v4261 = vpop.f32.mrb[0].mxu0
        %v4262 = vadd.f32 %v4075, %v4261
        %v4263 = vpop.f32.mrb[0].mxu0
        %v4264 = vadd.f32 %v4077, %v4263
        %4265 = vdwg.mxu0
        %v4266 = vand.u32 %v1701, 4294901760
        %4267 = vmatprep.subr.mxu0 %v4266
        %v4268 = vand.u32 %v1700, 4294901760
        %4269 = vmatpush1.msra.mxu0 %v4268
        %v4270 = vand.u32 %v1708, 4294901760
        %4271 = vmatprep.subr.mxu0 %v4270
        %v4272 = vand.u32 %v1707, 4294901760
        %4273 = vmatpush1.msra.mxu0 %v4272
        %v4274 = vand.u32 %v1715, 4294901760
        %4275 = vmatprep.subr.mxu0 %v4274
        %v4276 = vand.u32 %v1714, 4294901760
        %4277 = vmatpush1.msra.mxu0 %v4276
        %v4278 = vand.u32 %v1722, 4294901760
        %4279 = vmatprep.subr.mxu0 %v4278
        %v4280 = vand.u32 %v1721, 4294901760
        %4281 = vmatpush1.msra.mxu0 %v4280
        %v4282 = vand.u32 %v1729, 4294901760
        %4283 = vmatprep.subr.mxu0 %v4282
        %v4284 = vand.u32 %v1728, 4294901760
        %4285 = vmatpush1.msra.mxu0 %v4284
        %v4286 = vand.u32 %v1736, 4294901760
        %4287 = vmatprep.subr.mxu0 %v4286
        %v4288 = vand.u32 %v1735, 4294901760
        %4289 = vmatpush1.msra.mxu0 %v4288
        %v4290 = vand.u32 %v1743, 4294901760
        %4291 = vmatprep.subr.mxu0 %v4290
        %v4292 = vand.u32 %v1742, 4294901760
        %4293 = vmatpush1.msra.mxu0 %v4292
        %v4294 = vand.u32 %v1750, 4294901760
        %4295 = vmatprep.subr.mxu0 %v4294
        %v4296 = vand.u32 %v1749, 4294901760
        %4297 = vmatpush1.msra.mxu0 %v4296
        %v4298 = vand.u32 %v1757, 4294901760
        %4299 = vmatprep.subr.mxu0 %v4298
        %v4300 = vand.u32 %v1756, 4294901760
        %4301 = vmatpush1.msra.mxu0 %v4300
        %v4302 = vand.u32 %v1764, 4294901760
        %4303 = vmatprep.subr.mxu0 %v4302
        %v4304 = vand.u32 %v1763, 4294901760
        %4305 = vmatpush1.msra.mxu0 %v4304
        %v4306 = vand.u32 %v1771, 4294901760
        %4307 = vmatprep.subr.mxu0 %v4306
        %v4308 = vand.u32 %v1770, 4294901760
        %4309 = vmatpush1.msra.mxu0 %v4308
        %v4310 = vand.u32 %v1778, 4294901760
        %4311 = vmatprep.subr.mxu0 %v4310
        %v4312 = vand.u32 %v1777, 4294901760
        %4313 = vmatpush1.msra.mxu0 %v4312
        %v4314 = vand.u32 %v1785, 4294901760
        %4315 = vmatprep.subr.mxu0 %v4314
        %v4316 = vand.u32 %v1784, 4294901760
        %4317 = vmatpush1.msra.mxu0 %v4316
        %v4318 = vand.u32 %v1792, 4294901760
        %4319 = vmatprep.subr.mxu0 %v4318
        %v4320 = vand.u32 %v1791, 4294901760
        %4321 = vmatpush1.msra.mxu0 %v4320
        %v4322 = vand.u32 %v1799, 4294901760
        %4323 = vmatprep.subr.mxu0 %v4322
        %v4324 = vand.u32 %v1798, 4294901760
        %4325 = vmatpush1.msra.mxu0 %v4324
        %v4326 = vand.u32 %v1806, 4294901760
        %4327 = vmatprep.subr.mxu0 %v4326
        %v4328 = vand.u32 %v1805, 4294901760
        %4329 = vmatpush1.msra.mxu0 %v4328
        %v4330 = vand.u32 %v1813, 4294901760
        %4331 = vmatprep.subr.mxu0 %v4330
        %v4332 = vand.u32 %v1812, 4294901760
        %4333 = vmatpush1.msra.mxu0 %v4332
        %v4334 = vand.u32 %v1820, 4294901760
        %4335 = vmatprep.subr.mxu0 %v4334
        %v4336 = vand.u32 %v1819, 4294901760
        %4337 = vmatpush1.msra.mxu0 %v4336
        %v4338 = vand.u32 %v1827, 4294901760
        %4339 = vmatprep.subr.mxu0 %v4338
        %v4340 = vand.u32 %v1826, 4294901760
        %4341 = vmatpush1.msra.mxu0 %v4340
        %v4342 = vand.u32 %v1834, 4294901760
        %4343 = vmatprep.subr.mxu0 %v4342
        %v4344 = vand.u32 %v1833, 4294901760
        %4345 = vmatpush1.msra.mxu0 %v4344
        %v4346 = vand.u32 %v1841, 4294901760
        %4347 = vmatprep.subr.mxu0 %v4346
        %v4348 = vand.u32 %v1840, 4294901760
        %4349 = vmatpush1.msra.mxu0 %v4348
        %v4350 = vand.u32 %v1848, 4294901760
        %4351 = vmatprep.subr.mxu0 %v4350
        %v4352 = vand.u32 %v1847, 4294901760
        %4353 = vmatpush1.msra.mxu0 %v4352
        %v4354 = vand.u32 %v1855, 4294901760
        %4355 = vmatprep.subr.mxu0 %v4354
        %v4356 = vand.u32 %v1854, 4294901760
        %4357 = vmatpush1.msra.mxu0 %v4356
        %v4358 = vand.u32 %v1862, 4294901760
        %4359 = vmatprep.subr.mxu0 %v4358
        %v4360 = vand.u32 %v1861, 4294901760
        %4361 = vmatpush1.msra.mxu0 %v4360
        %v4362 = vand.u32 %v1869, 4294901760
        %4363 = vmatprep.subr.mxu0 %v4362
        %v4364 = vand.u32 %v1868, 4294901760
        %4365 = vmatpush1.msra.mxu0 %v4364
        %v4366 = vand.u32 %v1876, 4294901760
        %4367 = vmatprep.subr.mxu0 %v4366
        %v4368 = vand.u32 %v1875, 4294901760
        %4369 = vmatpush1.msra.mxu0 %v4368
        %v4370 = vand.u32 %v1883, 4294901760
        %4371 = vmatprep.subr.mxu0 %v4370
        %v4372 = vand.u32 %v1882, 4294901760
        %4373 = vmatpush1.msra.mxu0 %v4372
        %v4374 = vand.u32 %v1890, 4294901760
        %4375 = vmatprep.subr.mxu0 %v4374
        %v4376 = vand.u32 %v1889, 4294901760
        %4377 = vmatpush1.msra.mxu0 %v4376
        %4378 = vmatprep.subr.mxu0 0.0
        %4379 = vmatpush1.msra.mxu0 0.0
        %4380 = vmatprep.subr.mxu0 0.0
        %4381 = vmatpush1.msra.mxu0 0.0
        %4382 = vmatprep.subr.mxu0 0.0
        %4383 = vmatpush1.msra.mxu0 0.0
        %4384 = vmatprep.subr.mxu0 0.0
        %4385 = vmatpush1.msra.mxu0 0.0
        %v4386 = vand.u32 %v2407, 4294901760
        %v4387 = vsub.f32 %v2407, %v4386
        %v4388 = vand.u32 %v4387, 4294901760
        %4389 = vmatprep.mubr.f32.mxu0 %v4388
        %v4390 = vand.u32 %v1696, 4294901760
        %v4391 = vsub.f32 %v1696, %v4390
        %v4392 = vand.u32 %v4391, 4294901760
        %4393 = vmatmul.mubr.f32.gmra.mrb[0].mxu0 %v4392
        %v4394 = vpop.f32.mrb[0].mxu0
        %v4395 = vadd.f32 %v4262, %v4394
        %v4396 = vpop.f32.mrb[0].mxu0
        %v4397 = vadd.f32 %v4264, %v4396
        %4398 = vdwg.mxu0
        %v4399 = vand.u32 %v1701, 4294901760
        %v4400 = vsub.f32 %v1701, %v4399
        %v4401 = vand.u32 %v4400, 4294901760
        %4402 = vmatprep.subr.mxu0 %v4401
        %v4403 = vand.u32 %v1700, 4294901760
        %v4404 = vsub.f32 %v1700, %v4403
        %v4405 = vand.u32 %v4404, 4294901760
        %4406 = vmatpush1.msra.mxu0 %v4405
        %v4407 = vand.u32 %v1708, 4294901760
        %v4408 = vsub.f32 %v1708, %v4407
        %v4409 = vand.u32 %v4408, 4294901760
        %4410 = vmatprep.subr.mxu0 %v4409
        %v4411 = vand.u32 %v1707, 4294901760
        %v4412 = vsub.f32 %v1707, %v4411
        %v4413 = vand.u32 %v4412, 4294901760
        %4414 = vmatpush1.msra.mxu0 %v4413
        %v4415 = vand.u32 %v1715, 4294901760
        %v4416 = vsub.f32 %v1715, %v4415
        %v4417 = vand.u32 %v4416, 4294901760
        %4418 = vmatprep.subr.mxu0 %v4417
        %v4419 = vand.u32 %v1714, 4294901760
        %v4420 = vsub.f32 %v1714, %v4419
        %v4421 = vand.u32 %v4420, 4294901760
        %4422 = vmatpush1.msra.mxu0 %v4421
        %v4423 = vand.u32 %v1722, 4294901760
        %v4424 = vsub.f32 %v1722, %v4423
        %v4425 = vand.u32 %v4424, 4294901760
        %4426 = vmatprep.subr.mxu0 %v4425
        %v4427 = vand.u32 %v1721, 4294901760
        %v4428 = vsub.f32 %v1721, %v4427
        %v4429 = vand.u32 %v4428, 4294901760
        %4430 = vmatpush1.msra.mxu0 %v4429
        %v4431 = vand.u32 %v1729, 4294901760
        %v4432 = vsub.f32 %v1729, %v4431
        %v4433 = vand.u32 %v4432, 4294901760
        %4434 = vmatprep.subr.mxu0 %v4433
        %v4435 = vand.u32 %v1728, 4294901760
        %v4436 = vsub.f32 %v1728, %v4435
        %v4437 = vand.u32 %v4436, 4294901760
        %4438 = vmatpush1.msra.mxu0 %v4437
        %v4439 = vand.u32 %v1736, 4294901760
        %v4440 = vsub.f32 %v1736, %v4439
        %v4441 = vand.u32 %v4440, 4294901760
        %4442 = vmatprep.subr.mxu0 %v4441
        %v4443 = vand.u32 %v1735, 4294901760
        %v4444 = vsub.f32 %v1735, %v4443
        %v4445 = vand.u32 %v4444, 4294901760
        %4446 = vmatpush1.msra.mxu0 %v4445
        %v4447 = vand.u32 %v1743, 4294901760
        %v4448 = vsub.f32 %v1743, %v4447
        %v4449 = vand.u32 %v4448, 4294901760
        %4450 = vmatprep.subr.mxu0 %v4449
        %v4451 = vand.u32 %v1742, 4294901760
        %v4452 = vsub.f32 %v1742, %v4451
        %v4453 = vand.u32 %v4452, 4294901760
        %4454 = vmatpush1.msra.mxu0 %v4453
        %v4455 = vand.u32 %v1750, 4294901760
        %v4456 = vsub.f32 %v1750, %v4455
        %v4457 = vand.u32 %v4456, 4294901760
        %4458 = vmatprep.subr.mxu0 %v4457
        %v4459 = vand.u32 %v1749, 4294901760
        %v4460 = vsub.f32 %v1749, %v4459
        %v4461 = vand.u32 %v4460, 4294901760
        %4462 = vmatpush1.msra.mxu0 %v4461
        %v4463 = vand.u32 %v1757, 4294901760
        %v4464 = vsub.f32 %v1757, %v4463
        %v4465 = vand.u32 %v4464, 4294901760
        %4466 = vmatprep.subr.mxu0 %v4465
        %v4467 = vand.u32 %v1756, 4294901760
        %v4468 = vsub.f32 %v1756, %v4467
        %v4469 = vand.u32 %v4468, 4294901760
        %4470 = vmatpush1.msra.mxu0 %v4469
        %v4471 = vand.u32 %v1764, 4294901760
        %v4472 = vsub.f32 %v1764, %v4471
        %v4473 = vand.u32 %v4472, 4294901760
        %4474 = vmatprep.subr.mxu0 %v4473
        %v4475 = vand.u32 %v1763, 4294901760
        %v4476 = vsub.f32 %v1763, %v4475
        %v4477 = vand.u32 %v4476, 4294901760
        %4478 = vmatpush1.msra.mxu0 %v4477
        %v4479 = vand.u32 %v1771, 4294901760
        %v4480 = vsub.f32 %v1771, %v4479
        %v4481 = vand.u32 %v4480, 4294901760
        %4482 = vmatprep.subr.mxu0 %v4481
        %v4483 = vand.u32 %v1770, 4294901760
        %v4484 = vsub.f32 %v1770, %v4483
        %v4485 = vand.u32 %v4484, 4294901760
        %4486 = vmatpush1.msra.mxu0 %v4485
        %v4487 = vand.u32 %v1778, 4294901760
        %v4488 = vsub.f32 %v1778, %v4487
        %v4489 = vand.u32 %v4488, 4294901760
        %4490 = vmatprep.subr.mxu0 %v4489
        %v4491 = vand.u32 %v1777, 4294901760
        %v4492 = vsub.f32 %v1777, %v4491
        %v4493 = vand.u32 %v4492, 4294901760
        %4494 = vmatpush1.msra.mxu0 %v4493
        %v4495 = vand.u32 %v1785, 4294901760
        %v4496 = vsub.f32 %v1785, %v4495
        %v4497 = vand.u32 %v4496, 4294901760
        %4498 = vmatprep.subr.mxu0 %v4497
        %v4499 = vand.u32 %v1784, 4294901760
        %v4500 = vsub.f32 %v1784, %v4499
        %v4501 = vand.u32 %v4500, 4294901760
        %4502 = vmatpush1.msra.mxu0 %v4501
        %v4503 = vand.u32 %v1792, 4294901760
        %v4504 = vsub.f32 %v1792, %v4503
        %v4505 = vand.u32 %v4504, 4294901760
        %4506 = vmatprep.subr.mxu0 %v4505
        %v4507 = vand.u32 %v1791, 4294901760
        %v4508 = vsub.f32 %v1791, %v4507
        %v4509 = vand.u32 %v4508, 4294901760
        %4510 = vmatpush1.msra.mxu0 %v4509
        %v4511 = vand.u32 %v1799, 4294901760
        %v4512 = vsub.f32 %v1799, %v4511
        %v4513 = vand.u32 %v4512, 4294901760
        %4514 = vmatprep.subr.mxu0 %v4513
        %v4515 = vand.u32 %v1798, 4294901760
        %v4516 = vsub.f32 %v1798, %v4515
        %v4517 = vand.u32 %v4516, 4294901760
        %4518 = vmatpush1.msra.mxu0 %v4517
        %v4519 = vand.u32 %v1806, 4294901760
        %v4520 = vsub.f32 %v1806, %v4519
        %v4521 = vand.u32 %v4520, 4294901760
        %4522 = vmatprep.subr.mxu0 %v4521
        %v4523 = vand.u32 %v1805, 4294901760
        %v4524 = vsub.f32 %v1805, %v4523
        %v4525 = vand.u32 %v4524, 4294901760
        %4526 = vmatpush1.msra.mxu0 %v4525
        %v4527 = vand.u32 %v1813, 4294901760
        %v4528 = vsub.f32 %v1813, %v4527
        %v4529 = vand.u32 %v4528, 4294901760
        %4530 = vmatprep.subr.mxu0 %v4529
        %v4531 = vand.u32 %v1812, 4294901760
        %v4532 = vsub.f32 %v1812, %v4531
        %v4533 = vand.u32 %v4532, 4294901760
        %4534 = vmatpush1.msra.mxu0 %v4533
        %v4535 = vand.u32 %v1820, 4294901760
        %v4536 = vsub.f32 %v1820, %v4535
        %v4537 = vand.u32 %v4536, 4294901760
        %4538 = vmatprep.subr.mxu0 %v4537
        %v4539 = vand.u32 %v1819, 4294901760
        %v4540 = vsub.f32 %v1819, %v4539
        %v4541 = vand.u32 %v4540, 4294901760
        %4542 = vmatpush1.msra.mxu0 %v4541
        %v4543 = vand.u32 %v1827, 4294901760
        %v4544 = vsub.f32 %v1827, %v4543
        %v4545 = vand.u32 %v4544, 4294901760
        %4546 = vmatprep.subr.mxu0 %v4545
        %v4547 = vand.u32 %v1826, 4294901760
        %v4548 = vsub.f32 %v1826, %v4547
        %v4549 = vand.u32 %v4548, 4294901760
        %4550 = vmatpush1.msra.mxu0 %v4549
        %v4551 = vand.u32 %v1834, 4294901760
        %v4552 = vsub.f32 %v1834, %v4551
        %v4553 = vand.u32 %v4552, 4294901760
        %4554 = vmatprep.subr.mxu0 %v4553
        %v4555 = vand.u32 %v1833, 4294901760
        %v4556 = vsub.f32 %v1833, %v4555
        %v4557 = vand.u32 %v4556, 4294901760
        %4558 = vmatpush1.msra.mxu0 %v4557
        %v4559 = vand.u32 %v1841, 4294901760
        %v4560 = vsub.f32 %v1841, %v4559
        %v4561 = vand.u32 %v4560, 4294901760
        %4562 = vmatprep.subr.mxu0 %v4561
        %v4563 = vand.u32 %v1840, 4294901760
        %v4564 = vsub.f32 %v1840, %v4563
        %v4565 = vand.u32 %v4564, 4294901760
        %4566 = vmatpush1.msra.mxu0 %v4565
        %v4567 = vand.u32 %v1848, 4294901760
        %v4568 = vsub.f32 %v1848, %v4567
        %v4569 = vand.u32 %v4568, 4294901760
        %4570 = vmatprep.subr.mxu0 %v4569
        %v4571 = vand.u32 %v1847, 4294901760
        %v4572 = vsub.f32 %v1847, %v4571
        %v4573 = vand.u32 %v4572, 4294901760
        %4574 = vmatpush1.msra.mxu0 %v4573
        %v4575 = vand.u32 %v1855, 4294901760
        %v4576 = vsub.f32 %v1855, %v4575
        %v4577 = vand.u32 %v4576, 4294901760
        %4578 = vmatprep.subr.mxu0 %v4577
        %v4579 = vand.u32 %v1854, 4294901760
        %v4580 = vsub.f32 %v1854, %v4579
        %v4581 = vand.u32 %v4580, 4294901760
        %4582 = vmatpush1.msra.mxu0 %v4581
        %v4583 = vand.u32 %v1862, 4294901760
        %v4584 = vsub.f32 %v1862, %v4583
        %v4585 = vand.u32 %v4584, 4294901760
        %4586 = vmatprep.subr.mxu0 %v4585
        %v4587 = vand.u32 %v1861, 4294901760
        %v4588 = vsub.f32 %v1861, %v4587
        %v4589 = vand.u32 %v4588, 4294901760
        %4590 = vmatpush1.msra.mxu0 %v4589
        %v4591 = vand.u32 %v1869, 4294901760
        %v4592 = vsub.f32 %v1869, %v4591
        %v4593 = vand.u32 %v4592, 4294901760
        %4594 = vmatprep.subr.mxu0 %v4593
        %v4595 = vand.u32 %v1868, 4294901760
        %v4596 = vsub.f32 %v1868, %v4595
        %v4597 = vand.u32 %v4596, 4294901760
        %4598 = vmatpush1.msra.mxu0 %v4597
        %v4599 = vand.u32 %v1876, 4294901760
        %v4600 = vsub.f32 %v1876, %v4599
        %v4601 = vand.u32 %v4600, 4294901760
        %4602 = vmatprep.subr.mxu0 %v4601
        %v4603 = vand.u32 %v1875, 4294901760
        %v4604 = vsub.f32 %v1875, %v4603
        %v4605 = vand.u32 %v4604, 4294901760
        %4606 = vmatpush1.msra.mxu0 %v4605
        %v4607 = vand.u32 %v1883, 4294901760
        %v4608 = vsub.f32 %v1883, %v4607
        %v4609 = vand.u32 %v4608, 4294901760
        %4610 = vmatprep.subr.mxu0 %v4609
        %v4611 = vand.u32 %v1882, 4294901760
        %v4612 = vsub.f32 %v1882, %v4611
        %v4613 = vand.u32 %v4612, 4294901760
        %4614 = vmatpush1.msra.mxu0 %v4613
        %v4615 = vand.u32 %v1890, 4294901760
        %v4616 = vsub.f32 %v1890, %v4615
        %v4617 = vand.u32 %v4616, 4294901760
        %4618 = vmatprep.subr.mxu0 %v4617
        %v4619 = vand.u32 %v1889, 4294901760
        %v4620 = vsub.f32 %v1889, %v4619
        %v4621 = vand.u32 %v4620, 4294901760
        %4622 = vmatpush1.msra.mxu0 %v4621
        %4623 = vmatprep.subr.mxu0 0.0
        %4624 = vmatpush1.msra.mxu0 0.0
        %4625 = vmatprep.subr.mxu0 0.0
        %4626 = vmatpush1.msra.mxu0 0.0
        %4627 = vmatprep.subr.mxu0 0.0
        %4628 = vmatpush1.msra.mxu0 0.0
        %4629 = vmatprep.subr.mxu0 0.0
        %4630 = vmatpush1.msra.mxu0 0.0
        %v4631 = vand.u32 %v2407, 4294901760
        %4632 = vmatprep.mubr.f32.mxu0 %v4631
        %v4633 = vand.u32 %v1696, 4294901760
        %4634 = vmatmul.mubr.f32.gmra.mrb[0].mxu0 %v4633
        %v4635 = vpop.f32.mrb[0].mxu0
        %v4636 = vadd.f32 %v4395, %v4635
        %v4637 = vpop.f32.mrb[0].mxu0
        %v4638 = vadd.f32 %v4397, %v4637
        %4639 = vdwg.mxu0
        %v4640 = vand.u32 %v1701, 4294901760
        %4641 = vmatprep.subr.mxu0 %v4640
        %v4642 = vand.u32 %v1700, 4294901760
        %4643 = vmatpush1.msra.mxu0 %v4642
        %v4644 = vand.u32 %v1708, 4294901760
        %4645 = vmatprep.subr.mxu0 %v4644
        %v4646 = vand.u32 %v1707, 4294901760
        %4647 = vmatpush1.msra.mxu0 %v4646
        %v4648 = vand.u32 %v1715, 4294901760
        %4649 = vmatprep.subr.mxu0 %v4648
        %v4650 = vand.u32 %v1714, 4294901760
        %4651 = vmatpush1.msra.mxu0 %v4650
        %v4652 = vand.u32 %v1722, 4294901760
        %4653 = vmatprep.subr.mxu0 %v4652
        %v4654 = vand.u32 %v1721, 4294901760
        %4655 = vmatpush1.msra.mxu0 %v4654
        %v4656 = vand.u32 %v1729, 4294901760
        %4657 = vmatprep.subr.mxu0 %v4656
        %v4658 = vand.u32 %v1728, 4294901760
        %4659 = vmatpush1.msra.mxu0 %v4658
        %v4660 = vand.u32 %v1736, 4294901760
        %4661 = vmatprep.subr.mxu0 %v4660
        %v4662 = vand.u32 %v1735, 4294901760
        %4663 = vmatpush1.msra.mxu0 %v4662
        %v4664 = vand.u32 %v1743, 4294901760
        %4665 = vmatprep.subr.mxu0 %v4664
        %v4666 = vand.u32 %v1742, 4294901760
        %4667 = vmatpush1.msra.mxu0 %v4666
        %v4668 = vand.u32 %v1750, 4294901760
        %4669 = vmatprep.subr.mxu0 %v4668
        %v4670 = vand.u32 %v1749, 4294901760
        %4671 = vmatpush1.msra.mxu0 %v4670
        %v4672 = vand.u32 %v1757, 4294901760
        %4673 = vmatprep.subr.mxu0 %v4672
        %v4674 = vand.u32 %v1756, 4294901760
        %4675 = vmatpush1.msra.mxu0 %v4674
        %v4676 = vand.u32 %v1764, 4294901760
        %4677 = vmatprep.subr.mxu0 %v4676
        %v4678 = vand.u32 %v1763, 4294901760
        %4679 = vmatpush1.msra.mxu0 %v4678
        %v4680 = vand.u32 %v1771, 4294901760
        %4681 = vmatprep.subr.mxu0 %v4680
        %v4682 = vand.u32 %v1770, 4294901760
        %4683 = vmatpush1.msra.mxu0 %v4682
        %v4684 = vand.u32 %v1778, 4294901760
        %4685 = vmatprep.subr.mxu0 %v4684
        %v4686 = vand.u32 %v1777, 4294901760
        %4687 = vmatpush1.msra.mxu0 %v4686
        %v4688 = vand.u32 %v1785, 4294901760
        %4689 = vmatprep.subr.mxu0 %v4688
        %v4690 = vand.u32 %v1784, 4294901760
        %4691 = vmatpush1.msra.mxu0 %v4690
        %v4692 = vand.u32 %v1792, 4294901760
        %4693 = vmatprep.subr.mxu0 %v4692
        %v4694 = vand.u32 %v1791, 4294901760
        %4695 = vmatpush1.msra.mxu0 %v4694
        %v4696 = vand.u32 %v1799, 4294901760
        %4697 = vmatprep.subr.mxu0 %v4696
        %v4698 = vand.u32 %v1798, 4294901760
        %4699 = vmatpush1.msra.mxu0 %v4698
        %v4700 = vand.u32 %v1806, 4294901760
        %4701 = vmatprep.subr.mxu0 %v4700
        %v4702 = vand.u32 %v1805, 4294901760
        %4703 = vmatpush1.msra.mxu0 %v4702
        %v4704 = vand.u32 %v1813, 4294901760
        %4705 = vmatprep.subr.mxu0 %v4704
        %v4706 = vand.u32 %v1812, 4294901760
        %4707 = vmatpush1.msra.mxu0 %v4706
        %v4708 = vand.u32 %v1820, 4294901760
        %4709 = vmatprep.subr.mxu0 %v4708
        %v4710 = vand.u32 %v1819, 4294901760
        %4711 = vmatpush1.msra.mxu0 %v4710
        %v4712 = vand.u32 %v1827, 4294901760
        %4713 = vmatprep.subr.mxu0 %v4712
        %v4714 = vand.u32 %v1826, 4294901760
        %4715 = vmatpush1.msra.mxu0 %v4714
        %v4716 = vand.u32 %v1834, 4294901760
        %4717 = vmatprep.subr.mxu0 %v4716
        %v4718 = vand.u32 %v1833, 4294901760
        %4719 = vmatpush1.msra.mxu0 %v4718
        %v4720 = vand.u32 %v1841, 4294901760
        %4721 = vmatprep.subr.mxu0 %v4720
        %v4722 = vand.u32 %v1840, 4294901760
        %4723 = vmatpush1.msra.mxu0 %v4722
        %v4724 = vand.u32 %v1848, 4294901760
        %4725 = vmatprep.subr.mxu0 %v4724
        %v4726 = vand.u32 %v1847, 4294901760
        %4727 = vmatpush1.msra.mxu0 %v4726
        %v4728 = vand.u32 %v1855, 4294901760
        %4729 = vmatprep.subr.mxu0 %v4728
        %v4730 = vand.u32 %v1854, 4294901760
        %4731 = vmatpush1.msra.mxu0 %v4730
        %v4732 = vand.u32 %v1862, 4294901760
        %4733 = vmatprep.subr.mxu0 %v4732
        %v4734 = vand.u32 %v1861, 4294901760
        %4735 = vmatpush1.msra.mxu0 %v4734
        %v4736 = vand.u32 %v1869, 4294901760
        %4737 = vmatprep.subr.mxu0 %v4736
        %v4738 = vand.u32 %v1868, 4294901760
        %4739 = vmatpush1.msra.mxu0 %v4738
        %v4740 = vand.u32 %v1876, 4294901760
        %4741 = vmatprep.subr.mxu0 %v4740
        %v4742 = vand.u32 %v1875, 4294901760
        %4743 = vmatpush1.msra.mxu0 %v4742
        %v4744 = vand.u32 %v1883, 4294901760
        %4745 = vmatprep.subr.mxu0 %v4744
        %v4746 = vand.u32 %v1882, 4294901760
        %4747 = vmatpush1.msra.mxu0 %v4746
        %v4748 = vand.u32 %v1890, 4294901760
        %4749 = vmatprep.subr.mxu0 %v4748
        %v4750 = vand.u32 %v1889, 4294901760
        %4751 = vmatpush1.msra.mxu0 %v4750
        %4752 = vmatprep.subr.mxu0 0.0
        %4753 = vmatpush1.msra.mxu0 0.0
        %4754 = vmatprep.subr.mxu0 0.0
        %4755 = vmatpush1.msra.mxu0 0.0
        %4756 = vmatprep.subr.mxu0 0.0
        %4757 = vmatpush1.msra.mxu0 0.0
        %4758 = vmatprep.subr.mxu0 0.0
        %4759 = vmatpush1.msra.mxu0 0.0
        %v4760 = vand.u32 %v2407, 4294901760
        %4761 = vmatprep.mubr.f32.mxu0 %v4760
        %v4762 = vand.u32 %v1696, 4294901760
        %4763 = vmatmul.mubr.f32.gmra.mrb[0].mxu0 %v4762
        %v4764 = vpop.f32.mrb[0].mxu0
        %v4765 = vadd.f32 %v4636, %v4764
        %v4766 = vpop.f32.mrb[0].mxu0
        %v4767 = vadd.f32 %v4638, %v4766
        %4768 = vdwg.mxu0
        %v4769 = vand.u32 %v1703, 4294901760
        %4770 = vmatprep.subr.mxu0 %v4769
        %v4771 = vand.u32 %v1702, 4294901760
        %4772 = vmatpush1.msra.mxu0 %v4771
        %v4773 = vand.u32 %v1710, 4294901760
        %4774 = vmatprep.subr.mxu0 %v4773
        %v4775 = vand.u32 %v1709, 4294901760
        %4776 = vmatpush1.msra.mxu0 %v4775
        %v4777 = vand.u32 %v1717, 4294901760
        %4778 = vmatprep.subr.mxu0 %v4777
        %v4779 = vand.u32 %v1716, 4294901760
        %4780 = vmatpush1.msra.mxu0 %v4779
        %v4781 = vand.u32 %v1724, 4294901760
        %4782 = vmatprep.subr.mxu0 %v4781
        %v4783 = vand.u32 %v1723, 4294901760
        %4784 = vmatpush1.msra.mxu0 %v4783
        %v4785 = vand.u32 %v1731, 4294901760
        %4786 = vmatprep.subr.mxu0 %v4785
        %v4787 = vand.u32 %v1730, 4294901760
        %4788 = vmatpush1.msra.mxu0 %v4787
        %v4789 = vand.u32 %v1738, 4294901760
        %4790 = vmatprep.subr.mxu0 %v4789
        %v4791 = vand.u32 %v1737, 4294901760
        %4792 = vmatpush1.msra.mxu0 %v4791
        %v4793 = vand.u32 %v1745, 4294901760
        %4794 = vmatprep.subr.mxu0 %v4793
        %v4795 = vand.u32 %v1744, 4294901760
        %4796 = vmatpush1.msra.mxu0 %v4795
        %v4797 = vand.u32 %v1752, 4294901760
        %4798 = vmatprep.subr.mxu0 %v4797
        %v4799 = vand.u32 %v1751, 4294901760
        %4800 = vmatpush1.msra.mxu0 %v4799
        %v4801 = vand.u32 %v1759, 4294901760
        %4802 = vmatprep.subr.mxu0 %v4801
        %v4803 = vand.u32 %v1758, 4294901760
        %4804 = vmatpush1.msra.mxu0 %v4803
        %v4805 = vand.u32 %v1766, 4294901760
        %4806 = vmatprep.subr.mxu0 %v4805
        %v4807 = vand.u32 %v1765, 4294901760
        %4808 = vmatpush1.msra.mxu0 %v4807
        %v4809 = vand.u32 %v1773, 4294901760
        %4810 = vmatprep.subr.mxu0 %v4809
        %v4811 = vand.u32 %v1772, 4294901760
        %4812 = vmatpush1.msra.mxu0 %v4811
        %v4813 = vand.u32 %v1780, 4294901760
        %4814 = vmatprep.subr.mxu0 %v4813
        %v4815 = vand.u32 %v1779, 4294901760
        %4816 = vmatpush1.msra.mxu0 %v4815
        %v4817 = vand.u32 %v1787, 4294901760
        %4818 = vmatprep.subr.mxu0 %v4817
        %v4819 = vand.u32 %v1786, 4294901760
        %4820 = vmatpush1.msra.mxu0 %v4819
        %v4821 = vand.u32 %v1794, 4294901760
        %4822 = vmatprep.subr.mxu0 %v4821
        %v4823 = vand.u32 %v1793, 4294901760
        %4824 = vmatpush1.msra.mxu0 %v4823
        %v4825 = vand.u32 %v1801, 4294901760
        %4826 = vmatprep.subr.mxu0 %v4825
        %v4827 = vand.u32 %v1800, 4294901760
        %4828 = vmatpush1.msra.mxu0 %v4827
        %v4829 = vand.u32 %v1808, 4294901760
        %4830 = vmatprep.subr.mxu0 %v4829
        %v4831 = vand.u32 %v1807, 4294901760
        %4832 = vmatpush1.msra.mxu0 %v4831
        %v4833 = vand.u32 %v1815, 4294901760
        %4834 = vmatprep.subr.mxu0 %v4833
        %v4835 = vand.u32 %v1814, 4294901760
        %4836 = vmatpush1.msra.mxu0 %v4835
        %v4837 = vand.u32 %v1822, 4294901760
        %4838 = vmatprep.subr.mxu0 %v4837
        %v4839 = vand.u32 %v1821, 4294901760
        %4840 = vmatpush1.msra.mxu0 %v4839
        %v4841 = vand.u32 %v1829, 4294901760
        %4842 = vmatprep.subr.mxu0 %v4841
        %v4843 = vand.u32 %v1828, 4294901760
        %4844 = vmatpush1.msra.mxu0 %v4843
        %v4845 = vand.u32 %v1836, 4294901760
        %4846 = vmatprep.subr.mxu0 %v4845
        %v4847 = vand.u32 %v1835, 4294901760
        %4848 = vmatpush1.msra.mxu0 %v4847
        %v4849 = vand.u32 %v1843, 4294901760
        %4850 = vmatprep.subr.mxu0 %v4849
        %v4851 = vand.u32 %v1842, 4294901760
        %4852 = vmatpush1.msra.mxu0 %v4851
        %v4853 = vand.u32 %v1850, 4294901760
        %4854 = vmatprep.subr.mxu0 %v4853
        %v4855 = vand.u32 %v1849, 4294901760
        %4856 = vmatpush1.msra.mxu0 %v4855
        %v4857 = vand.u32 %v1857, 4294901760
        %4858 = vmatprep.subr.mxu0 %v4857
        %v4859 = vand.u32 %v1856, 4294901760
        %4860 = vmatpush1.msra.mxu0 %v4859
        %v4861 = vand.u32 %v1864, 4294901760
        %4862 = vmatprep.subr.mxu0 %v4861
        %v4863 = vand.u32 %v1863, 4294901760
        %4864 = vmatpush1.msra.mxu0 %v4863
        %v4865 = vand.u32 %v1871, 4294901760
        %4866 = vmatprep.subr.mxu0 %v4865
        %v4867 = vand.u32 %v1870, 4294901760
        %4868 = vmatpush1.msra.mxu0 %v4867
        %v4869 = vand.u32 %v1878, 4294901760
        %4870 = vmatprep.subr.mxu0 %v4869
        %v4871 = vand.u32 %v1877, 4294901760
        %4872 = vmatpush1.msra.mxu0 %v4871
        %v4873 = vand.u32 %v1885, 4294901760
        %4874 = vmatprep.subr.mxu0 %v4873
        %v4875 = vand.u32 %v1884, 4294901760
        %4876 = vmatpush1.msra.mxu0 %v4875
        %v4877 = vand.u32 %v1892, 4294901760
        %4878 = vmatprep.subr.mxu0 %v4877
        %v4879 = vand.u32 %v1891, 4294901760
        %4880 = vmatpush1.msra.mxu0 %v4879
        %4881 = vmatprep.subr.mxu0 0.0
        %4882 = vmatpush1.msra.mxu0 0.0
        %4883 = vmatprep.subr.mxu0 0.0
        %4884 = vmatpush1.msra.mxu0 0.0
        %4885 = vmatprep.subr.mxu0 0.0
        %4886 = vmatpush1.msra.mxu0 0.0
        %4887 = vmatprep.subr.mxu0 0.0
        %4888 = vmatpush1.msra.mxu0 0.0
        %v4889 = vand.u32 %v2407, 4294901760
        %v4890 = vsub.f32 %v2407, %v4889
        %v4891 = vand.u32 %v4890, 4294901760
        %v4892 = vsub.f32 %v4890, %v4891
        %v4893 = vand.u32 %v4892, 4294901760
        %4894 = vmatprep.mubr.f32.mxu0 %v4893
        %v4895 = vand.u32 %v1696, 4294901760
        %v4896 = vsub.f32 %v1696, %v4895
        %v4897 = vand.u32 %v4896, 4294901760
        %v4898 = vsub.f32 %v4896, %v4897
        %v4899 = vand.u32 %v4898, 4294901760
        %4900 = vmatmul.mubr.f32.gmra.mrb[0].mxu0 %v4899
        %v4901 = vpop.f32.mrb[0].mxu0
        %v4902 = vadd.f32 %v2403, %v4901
        %v4903 = vpop.f32.mrb[0].mxu0
        %v4904 = vadd.f32 %v2403, %v4903
        %4905 = vdwg.mxu0
        %v4906 = vand.u32 %v1703, 4294901760
        %v4907 = vsub.f32 %v1703, %v4906
        %v4908 = vand.u32 %v4907, 4294901760
        %v4909 = vsub.f32 %v4907, %v4908
        %v4910 = vand.u32 %v4909, 4294901760
        %4911 = vmatprep.subr.mxu0 %v4910
        %v4912 = vand.u32 %v1702, 4294901760
        %v4913 = vsub.f32 %v1702, %v4912
        %v4914 = vand.u32 %v4913, 4294901760
        %v4915 = vsub.f32 %v4913, %v4914
        %v4916 = vand.u32 %v4915, 4294901760
        %4917 = vmatpush1.msra.mxu0 %v4916
        %v4918 = vand.u32 %v1710, 4294901760
        %v4919 = vsub.f32 %v1710, %v4918
        %v4920 = vand.u32 %v4919, 4294901760
        %v4921 = vsub.f32 %v4919, %v4920
        %v4922 = vand.u32 %v4921, 4294901760
        %4923 = vmatprep.subr.mxu0 %v4922
        %v4924 = vand.u32 %v1709, 4294901760
        %v4925 = vsub.f32 %v1709, %v4924
        %v4926 = vand.u32 %v4925, 4294901760
        %v4927 = vsub.f32 %v4925, %v4926
        %v4928 = vand.u32 %v4927, 4294901760
        %4929 = vmatpush1.msra.mxu0 %v4928
        %v4930 = vand.u32 %v1717, 4294901760
        %v4931 = vsub.f32 %v1717, %v4930
        %v4932 = vand.u32 %v4931, 4294901760
        %v4933 = vsub.f32 %v4931, %v4932
        %v4934 = vand.u32 %v4933, 4294901760
        %4935 = vmatprep.subr.mxu0 %v4934
        %v4936 = vand.u32 %v1716, 4294901760
        %v4937 = vsub.f32 %v1716, %v4936
        %v4938 = vand.u32 %v4937, 4294901760
        %v4939 = vsub.f32 %v4937, %v4938
        %v4940 = vand.u32 %v4939, 4294901760
        %4941 = vmatpush1.msra.mxu0 %v4940
        %v4942 = vand.u32 %v1724, 4294901760
        %v4943 = vsub.f32 %v1724, %v4942
        %v4944 = vand.u32 %v4943, 4294901760
        %v4945 = vsub.f32 %v4943, %v4944
        %v4946 = vand.u32 %v4945, 4294901760
        %4947 = vmatprep.subr.mxu0 %v4946
        %v4948 = vand.u32 %v1723, 4294901760
        %v4949 = vsub.f32 %v1723, %v4948
        %v4950 = vand.u32 %v4949, 4294901760
        %v4951 = vsub.f32 %v4949, %v4950
        %v4952 = vand.u32 %v4951, 4294901760
        %4953 = vmatpush1.msra.mxu0 %v4952
        %v4954 = vand.u32 %v1731, 4294901760
        %v4955 = vsub.f32 %v1731, %v4954
        %v4956 = vand.u32 %v4955, 4294901760
        %v4957 = vsub.f32 %v4955, %v4956
        %v4958 = vand.u32 %v4957, 4294901760
        %4959 = vmatprep.subr.mxu0 %v4958
        %v4960 = vand.u32 %v1730, 4294901760
        %v4961 = vsub.f32 %v1730, %v4960
        %v4962 = vand.u32 %v4961, 4294901760
        %v4963 = vsub.f32 %v4961, %v4962
        %v4964 = vand.u32 %v4963, 4294901760
        %4965 = vmatpush1.msra.mxu0 %v4964
        %v4966 = vand.u32 %v1738, 4294901760
        %v4967 = vsub.f32 %v1738, %v4966
        %v4968 = vand.u32 %v4967, 4294901760
        %v4969 = vsub.f32 %v4967, %v4968
        %v4970 = vand.u32 %v4969, 4294901760
        %4971 = vmatprep.subr.mxu0 %v4970
        %v4972 = vand.u32 %v1737, 4294901760
        %v4973 = vsub.f32 %v1737, %v4972
        %v4974 = vand.u32 %v4973, 4294901760
        %v4975 = vsub.f32 %v4973, %v4974
        %v4976 = vand.u32 %v4975, 4294901760
        %4977 = vmatpush1.msra.mxu0 %v4976
        %v4978 = vand.u32 %v1745, 4294901760
        %v4979 = vsub.f32 %v1745, %v4978
        %v4980 = vand.u32 %v4979, 4294901760
        %v4981 = vsub.f32 %v4979, %v4980
        %v4982 = vand.u32 %v4981, 4294901760
        %4983 = vmatprep.subr.mxu0 %v4982
        %v4984 = vand.u32 %v1744, 4294901760
        %v4985 = vsub.f32 %v1744, %v4984
        %v4986 = vand.u32 %v4985, 4294901760
        %v4987 = vsub.f32 %v4985, %v4986
        %v4988 = vand.u32 %v4987, 4294901760
        %4989 = vmatpush1.msra.mxu0 %v4988
        %v4990 = vand.u32 %v1752, 4294901760
        %v4991 = vsub.f32 %v1752, %v4990
        %v4992 = vand.u32 %v4991, 4294901760
        %v4993 = vsub.f32 %v4991, %v4992
        %v4994 = vand.u32 %v4993, 4294901760
        %4995 = vmatprep.subr.mxu0 %v4994
        %v4996 = vand.u32 %v1751, 4294901760
        %v4997 = vsub.f32 %v1751, %v4996
        %v4998 = vand.u32 %v4997, 4294901760
        %v4999 = vsub.f32 %v4997, %v4998
        %v5000 = vand.u32 %v4999, 4294901760
        %5001 = vmatpush1.msra.mxu0 %v5000
        %v5002 = vand.u32 %v1759, 4294901760
        %v5003 = vsub.f32 %v1759, %v5002
        %v5004 = vand.u32 %v5003, 4294901760
        %v5005 = vsub.f32 %v5003, %v5004
        %v5006 = vand.u32 %v5005, 4294901760
        %5007 = vmatprep.subr.mxu0 %v5006
        %v5008 = vand.u32 %v1758, 4294901760
        %v5009 = vsub.f32 %v1758, %v5008
        %v5010 = vand.u32 %v5009, 4294901760
        %v5011 = vsub.f32 %v5009, %v5010
        %v5012 = vand.u32 %v5011, 4294901760
        %5013 = vmatpush1.msra.mxu0 %v5012
        %v5014 = vand.u32 %v1766, 4294901760
        %v5015 = vsub.f32 %v1766, %v5014
        %v5016 = vand.u32 %v5015, 4294901760
        %v5017 = vsub.f32 %v5015, %v5016
        %v5018 = vand.u32 %v5017, 4294901760
        %5019 = vmatprep.subr.mxu0 %v5018
        %v5020 = vand.u32 %v1765, 4294901760
        %v5021 = vsub.f32 %v1765, %v5020
        %v5022 = vand.u32 %v5021, 4294901760
        %v5023 = vsub.f32 %v5021, %v5022
        %v5024 = vand.u32 %v5023, 4294901760
        %5025 = vmatpush1.msra.mxu0 %v5024
        %v5026 = vand.u32 %v1773, 4294901760
        %v5027 = vsub.f32 %v1773, %v5026
        %v5028 = vand.u32 %v5027, 4294901760
        %v5029 = vsub.f32 %v5027, %v5028
        %v5030 = vand.u32 %v5029, 4294901760
        %5031 = vmatprep.subr.mxu0 %v5030
        %v5032 = vand.u32 %v1772, 4294901760
        %v5033 = vsub.f32 %v1772, %v5032
        %v5034 = vand.u32 %v5033, 4294901760
        %v5035 = vsub.f32 %v5033, %v5034
        %v5036 = vand.u32 %v5035, 4294901760
        %5037 = vmatpush1.msra.mxu0 %v5036
        %v5038 = vand.u32 %v1780, 4294901760
        %v5039 = vsub.f32 %v1780, %v5038
        %v5040 = vand.u32 %v5039, 4294901760
        %v5041 = vsub.f32 %v5039, %v5040
        %v5042 = vand.u32 %v5041, 4294901760
        %5043 = vmatprep.subr.mxu0 %v5042
        %v5044 = vand.u32 %v1779, 4294901760
        %v5045 = vsub.f32 %v1779, %v5044
        %v5046 = vand.u32 %v5045, 4294901760
        %v5047 = vsub.f32 %v5045, %v5046
        %v5048 = vand.u32 %v5047, 4294901760
        %5049 = vmatpush1.msra.mxu0 %v5048
        %v5050 = vand.u32 %v1787, 4294901760
        %v5051 = vsub.f32 %v1787, %v5050
        %v5052 = vand.u32 %v5051, 4294901760
        %v5053 = vsub.f32 %v5051, %v5052
        %v5054 = vand.u32 %v5053, 4294901760
        %5055 = vmatprep.subr.mxu0 %v5054
        %v5056 = vand.u32 %v1786, 4294901760
        %v5057 = vsub.f32 %v1786, %v5056
        %v5058 = vand.u32 %v5057, 4294901760
        %v5059 = vsub.f32 %v5057, %v5058
        %v5060 = vand.u32 %v5059, 4294901760
        %5061 = vmatpush1.msra.mxu0 %v5060
        %v5062 = vand.u32 %v1794, 4294901760
        %v5063 = vsub.f32 %v1794, %v5062
        %v5064 = vand.u32 %v5063, 4294901760
        %v5065 = vsub.f32 %v5063, %v5064
        %v5066 = vand.u32 %v5065, 4294901760
        %5067 = vmatprep.subr.mxu0 %v5066
        %v5068 = vand.u32 %v1793, 4294901760
        %v5069 = vsub.f32 %v1793, %v5068
        %v5070 = vand.u32 %v5069, 4294901760
        %v5071 = vsub.f32 %v5069, %v5070
        %v5072 = vand.u32 %v5071, 4294901760
        %5073 = vmatpush1.msra.mxu0 %v5072
        %v5074 = vand.u32 %v1801, 4294901760
        %v5075 = vsub.f32 %v1801, %v5074
        %v5076 = vand.u32 %v5075, 4294901760
        %v5077 = vsub.f32 %v5075, %v5076
        %v5078 = vand.u32 %v5077, 4294901760
        %5079 = vmatprep.subr.mxu0 %v5078
        %v5080 = vand.u32 %v1800, 4294901760
        %v5081 = vsub.f32 %v1800, %v5080
        %v5082 = vand.u32 %v5081, 4294901760
        %v5083 = vsub.f32 %v5081, %v5082
        %v5084 = vand.u32 %v5083, 4294901760
        %5085 = vmatpush1.msra.mxu0 %v5084
        %v5086 = vand.u32 %v1808, 4294901760
        %v5087 = vsub.f32 %v1808, %v5086
        %v5088 = vand.u32 %v5087, 4294901760
        %v5089 = vsub.f32 %v5087, %v5088
        %v5090 = vand.u32 %v5089, 4294901760
        %5091 = vmatprep.subr.mxu0 %v5090
        %v5092 = vand.u32 %v1807, 4294901760
        %v5093 = vsub.f32 %v1807, %v5092
        %v5094 = vand.u32 %v5093, 4294901760
        %v5095 = vsub.f32 %v5093, %v5094
        %v5096 = vand.u32 %v5095, 4294901760
        %5097 = vmatpush1.msra.mxu0 %v5096
        %v5098 = vand.u32 %v1815, 4294901760
        %v5099 = vsub.f32 %v1815, %v5098
        %v5100 = vand.u32 %v5099, 4294901760
        %v5101 = vsub.f32 %v5099, %v5100
        %v5102 = vand.u32 %v5101, 4294901760
        %5103 = vmatprep.subr.mxu0 %v5102
        %v5104 = vand.u32 %v1814, 4294901760
        %v5105 = vsub.f32 %v1814, %v5104
        %v5106 = vand.u32 %v5105, 4294901760
        %v5107 = vsub.f32 %v5105, %v5106
        %v5108 = vand.u32 %v5107, 4294901760
        %5109 = vmatpush1.msra.mxu0 %v5108
        %v5110 = vand.u32 %v1822, 4294901760
        %v5111 = vsub.f32 %v1822, %v5110
        %v5112 = vand.u32 %v5111, 4294901760
        %v5113 = vsub.f32 %v5111, %v5112
        %v5114 = vand.u32 %v5113, 4294901760
        %5115 = vmatprep.subr.mxu0 %v5114
        %v5116 = vand.u32 %v1821, 4294901760
        %v5117 = vsub.f32 %v1821, %v5116
        %v5118 = vand.u32 %v5117, 4294901760
        %v5119 = vsub.f32 %v5117, %v5118
        %v5120 = vand.u32 %v5119, 4294901760
        %5121 = vmatpush1.msra.mxu0 %v5120
        %v5122 = vand.u32 %v1829, 4294901760
        %v5123 = vsub.f32 %v1829, %v5122
        %v5124 = vand.u32 %v5123, 4294901760
        %v5125 = vsub.f32 %v5123, %v5124
        %v5126 = vand.u32 %v5125, 4294901760
        %5127 = vmatprep.subr.mxu0 %v5126
        %v5128 = vand.u32 %v1828, 4294901760
        %v5129 = vsub.f32 %v1828, %v5128
        %v5130 = vand.u32 %v5129, 4294901760
        %v5131 = vsub.f32 %v5129, %v5130
        %v5132 = vand.u32 %v5131, 4294901760
        %5133 = vmatpush1.msra.mxu0 %v5132
        %v5134 = vand.u32 %v1836, 4294901760
        %v5135 = vsub.f32 %v1836, %v5134
        %v5136 = vand.u32 %v5135, 4294901760
        %v5137 = vsub.f32 %v5135, %v5136
        %v5138 = vand.u32 %v5137, 4294901760
        %5139 = vmatprep.subr.mxu0 %v5138
        %v5140 = vand.u32 %v1835, 4294901760
        %v5141 = vsub.f32 %v1835, %v5140
        %v5142 = vand.u32 %v5141, 4294901760
        %v5143 = vsub.f32 %v5141, %v5142
        %v5144 = vand.u32 %v5143, 4294901760
        %5145 = vmatpush1.msra.mxu0 %v5144
        %v5146 = vand.u32 %v1843, 4294901760
        %v5147 = vsub.f32 %v1843, %v5146
        %v5148 = vand.u32 %v5147, 4294901760
        %v5149 = vsub.f32 %v5147, %v5148
        %v5150 = vand.u32 %v5149, 4294901760
        %5151 = vmatprep.subr.mxu0 %v5150
        %v5152 = vand.u32 %v1842, 4294901760
        %v5153 = vsub.f32 %v1842, %v5152
        %v5154 = vand.u32 %v5153, 4294901760
        %v5155 = vsub.f32 %v5153, %v5154
        %v5156 = vand.u32 %v5155, 4294901760
        %5157 = vmatpush1.msra.mxu0 %v5156
        %v5158 = vand.u32 %v1850, 4294901760
        %v5159 = vsub.f32 %v1850, %v5158
        %v5160 = vand.u32 %v5159, 4294901760
        %v5161 = vsub.f32 %v5159, %v5160
        %v5162 = vand.u32 %v5161, 4294901760
        %5163 = vmatprep.subr.mxu0 %v5162
        %v5164 = vand.u32 %v1849, 4294901760
        %v5165 = vsub.f32 %v1849, %v5164
        %v5166 = vand.u32 %v5165, 4294901760
        %v5167 = vsub.f32 %v5165, %v5166
        %v5168 = vand.u32 %v5167, 4294901760
        %5169 = vmatpush1.msra.mxu0 %v5168
        %v5170 = vand.u32 %v1857, 4294901760
        %v5171 = vsub.f32 %v1857, %v5170
        %v5172 = vand.u32 %v5171, 4294901760
        %v5173 = vsub.f32 %v5171, %v5172
        %v5174 = vand.u32 %v5173, 4294901760
        %5175 = vmatprep.subr.mxu0 %v5174
        %v5176 = vand.u32 %v1856, 4294901760
        %v5177 = vsub.f32 %v1856, %v5176
        %v5178 = vand.u32 %v5177, 4294901760
        %v5179 = vsub.f32 %v5177, %v5178
        %v5180 = vand.u32 %v5179, 4294901760
        %5181 = vmatpush1.msra.mxu0 %v5180
        %v5182 = vand.u32 %v1864, 4294901760
        %v5183 = vsub.f32 %v1864, %v5182
        %v5184 = vand.u32 %v5183, 4294901760
        %v5185 = vsub.f32 %v5183, %v5184
        %v5186 = vand.u32 %v5185, 4294901760
        %5187 = vmatprep.subr.mxu0 %v5186
        %v5188 = vand.u32 %v1863, 4294901760
        %v5189 = vsub.f32 %v1863, %v5188
        %v5190 = vand.u32 %v5189, 4294901760
        %v5191 = vsub.f32 %v5189, %v5190
        %v5192 = vand.u32 %v5191, 4294901760
        %5193 = vmatpush1.msra.mxu0 %v5192
        %v5194 = vand.u32 %v1871, 4294901760
        %v5195 = vsub.f32 %v1871, %v5194
        %v5196 = vand.u32 %v5195, 4294901760
        %v5197 = vsub.f32 %v5195, %v5196
        %v5198 = vand.u32 %v5197, 4294901760
        %5199 = vmatprep.subr.mxu0 %v5198
        %v5200 = vand.u32 %v1870, 4294901760
        %v5201 = vsub.f32 %v1870, %v5200
        %v5202 = vand.u32 %v5201, 4294901760
        %v5203 = vsub.f32 %v5201, %v5202
        %v5204 = vand.u32 %v5203, 4294901760
        %5205 = vmatpush1.msra.mxu0 %v5204
        %v5206 = vand.u32 %v1878, 4294901760
        %v5207 = vsub.f32 %v1878, %v5206
        %v5208 = vand.u32 %v5207, 4294901760
        %v5209 = vsub.f32 %v5207, %v5208
        %v5210 = vand.u32 %v5209, 4294901760
        %5211 = vmatprep.subr.mxu0 %v5210
        %v5212 = vand.u32 %v1877, 4294901760
        %v5213 = vsub.f32 %v1877, %v5212
        %v5214 = vand.u32 %v5213, 4294901760
        %v5215 = vsub.f32 %v5213, %v5214
        %v5216 = vand.u32 %v5215, 4294901760
        %5217 = vmatpush1.msra.mxu0 %v5216
        %v5218 = vand.u32 %v1885, 4294901760
        %v5219 = vsub.f32 %v1885, %v5218
        %v5220 = vand.u32 %v5219, 4294901760
        %v5221 = vsub.f32 %v5219, %v5220
        %v5222 = vand.u32 %v5221, 4294901760
        %5223 = vmatprep.subr.mxu0 %v5222
        %v5224 = vand.u32 %v1884, 4294901760
        %v5225 = vsub.f32 %v1884, %v5224
        %v5226 = vand.u32 %v5225, 4294901760
        %v5227 = vsub.f32 %v5225, %v5226
        %v5228 = vand.u32 %v5227, 4294901760
        %5229 = vmatpush1.msra.mxu0 %v5228
        %v5230 = vand.u32 %v1892, 4294901760
        %v5231 = vsub.f32 %v1892, %v5230
        %v5232 = vand.u32 %v5231, 4294901760
        %v5233 = vsub.f32 %v5231, %v5232
        %v5234 = vand.u32 %v5233, 4294901760
        %5235 = vmatprep.subr.mxu0 %v5234
        %v5236 = vand.u32 %v1891, 4294901760
        %v5237 = vsub.f32 %v1891, %v5236
        %v5238 = vand.u32 %v5237, 4294901760
        %v5239 = vsub.f32 %v5237, %v5238
        %v5240 = vand.u32 %v5239, 4294901760
        %5241 = vmatpush1.msra.mxu0 %v5240
        %5242 = vmatprep.subr.mxu0 0.0
        %5243 = vmatpush1.msra.mxu0 0.0
        %5244 = vmatprep.subr.mxu0 0.0
        %5245 = vmatpush1.msra.mxu0 0.0
        %5246 = vmatprep.subr.mxu0 0.0
        %5247 = vmatpush1.msra.mxu0 0.0
        %5248 = vmatprep.subr.mxu0 0.0
        %5249 = vmatpush1.msra.mxu0 0.0
        %v5250 = vand.u32 %v2407, 4294901760
        %5251 = vmatprep.mubr.f32.mxu0 %v5250
        %v5252 = vand.u32 %v1696, 4294901760
        %5253 = vmatmul.mubr.f32.gmra.mrb[0].mxu0 %v5252
        %v5254 = vpop.f32.mrb[0].mxu0
        %v5255 = vadd.f32 %v4902, %v5254
        %v5256 = vpop.f32.mrb[0].mxu0
        %v5257 = vadd.f32 %v4904, %v5256
        %5258 = vdwg.mxu0
        %v5259 = vand.u32 %v1703, 4294901760
        %v5260 = vsub.f32 %v1703, %v5259
        %5261 = vmatprep.subr.mxu0 %v5260
        %v5262 = vand.u32 %v1702, 4294901760
        %v5263 = vsub.f32 %v1702, %v5262
        %5264 = vmatpush1.msra.mxu0 %v5263
        %v5265 = vand.u32 %v1710, 4294901760
        %v5266 = vsub.f32 %v1710, %v5265
        %5267 = vmatprep.subr.mxu0 %v5266
        %v5268 = vand.u32 %v1709, 4294901760
        %v5269 = vsub.f32 %v1709, %v5268
        %5270 = vmatpush1.msra.mxu0 %v5269
        %v5271 = vand.u32 %v1717, 4294901760
        %v5272 = vsub.f32 %v1717, %v5271
        %5273 = vmatprep.subr.mxu0 %v5272
        %v5274 = vand.u32 %v1716, 4294901760
        %v5275 = vsub.f32 %v1716, %v5274
        %5276 = vmatpush1.msra.mxu0 %v5275
        %v5277 = vand.u32 %v1724, 4294901760
        %v5278 = vsub.f32 %v1724, %v5277
        %5279 = vmatprep.subr.mxu0 %v5278
        %v5280 = vand.u32 %v1723, 4294901760
        %v5281 = vsub.f32 %v1723, %v5280
        %5282 = vmatpush1.msra.mxu0 %v5281
        %v5283 = vand.u32 %v1731, 4294901760
        %v5284 = vsub.f32 %v1731, %v5283
        %5285 = vmatprep.subr.mxu0 %v5284
        %v5286 = vand.u32 %v1730, 4294901760
        %v5287 = vsub.f32 %v1730, %v5286
        %5288 = vmatpush1.msra.mxu0 %v5287
        %v5289 = vand.u32 %v1738, 4294901760
        %v5290 = vsub.f32 %v1738, %v5289
        %5291 = vmatprep.subr.mxu0 %v5290
        %v5292 = vand.u32 %v1737, 4294901760
        %v5293 = vsub.f32 %v1737, %v5292
        %5294 = vmatpush1.msra.mxu0 %v5293
        %v5295 = vand.u32 %v1745, 4294901760
        %v5296 = vsub.f32 %v1745, %v5295
        %5297 = vmatprep.subr.mxu0 %v5296
        %v5298 = vand.u32 %v1744, 4294901760
        %v5299 = vsub.f32 %v1744, %v5298
        %5300 = vmatpush1.msra.mxu0 %v5299
        %v5301 = vand.u32 %v1752, 4294901760
        %v5302 = vsub.f32 %v1752, %v5301
        %5303 = vmatprep.subr.mxu0 %v5302
        %v5304 = vand.u32 %v1751, 4294901760
        %v5305 = vsub.f32 %v1751, %v5304
        %5306 = vmatpush1.msra.mxu0 %v5305
        %v5307 = vand.u32 %v1759, 4294901760
        %v5308 = vsub.f32 %v1759, %v5307
        %5309 = vmatprep.subr.mxu0 %v5308
        %v5310 = vand.u32 %v1758, 4294901760
        %v5311 = vsub.f32 %v1758, %v5310
        %5312 = vmatpush1.msra.mxu0 %v5311
        %v5313 = vand.u32 %v1766, 4294901760
        %v5314 = vsub.f32 %v1766, %v5313
        %5315 = vmatprep.subr.mxu0 %v5314
        %v5316 = vand.u32 %v1765, 4294901760
        %v5317 = vsub.f32 %v1765, %v5316
        %5318 = vmatpush1.msra.mxu0 %v5317
        %v5319 = vand.u32 %v1773, 4294901760
        %v5320 = vsub.f32 %v1773, %v5319
        %5321 = vmatprep.subr.mxu0 %v5320
        %v5322 = vand.u32 %v1772, 4294901760
        %v5323 = vsub.f32 %v1772, %v5322
        %5324 = vmatpush1.msra.mxu0 %v5323
        %v5325 = vand.u32 %v1780, 4294901760
        %v5326 = vsub.f32 %v1780, %v5325
        %5327 = vmatprep.subr.mxu0 %v5326
        %v5328 = vand.u32 %v1779, 4294901760
        %v5329 = vsub.f32 %v1779, %v5328
        %5330 = vmatpush1.msra.mxu0 %v5329
        %v5331 = vand.u32 %v1787, 4294901760
        %v5332 = vsub.f32 %v1787, %v5331
        %5333 = vmatprep.subr.mxu0 %v5332
        %v5334 = vand.u32 %v1786, 4294901760
        %v5335 = vsub.f32 %v1786, %v5334
        %5336 = vmatpush1.msra.mxu0 %v5335
        %v5337 = vand.u32 %v1794, 4294901760
        %v5338 = vsub.f32 %v1794, %v5337
        %5339 = vmatprep.subr.mxu0 %v5338
        %v5340 = vand.u32 %v1793, 4294901760
        %v5341 = vsub.f32 %v1793, %v5340
        %5342 = vmatpush1.msra.mxu0 %v5341
        %v5343 = vand.u32 %v1801, 4294901760
        %v5344 = vsub.f32 %v1801, %v5343
        %5345 = vmatprep.subr.mxu0 %v5344
        %v5346 = vand.u32 %v1800, 4294901760
        %v5347 = vsub.f32 %v1800, %v5346
        %5348 = vmatpush1.msra.mxu0 %v5347
        %v5349 = vand.u32 %v1808, 4294901760
        %v5350 = vsub.f32 %v1808, %v5349
        %5351 = vmatprep.subr.mxu0 %v5350
        %v5352 = vand.u32 %v1807, 4294901760
        %v5353 = vsub.f32 %v1807, %v5352
        %5354 = vmatpush1.msra.mxu0 %v5353
        %v5355 = vand.u32 %v1815, 4294901760
        %v5356 = vsub.f32 %v1815, %v5355
        %5357 = vmatprep.subr.mxu0 %v5356
        %v5358 = vand.u32 %v1814, 4294901760
        %v5359 = vsub.f32 %v1814, %v5358
        %5360 = vmatpush1.msra.mxu0 %v5359
        %v5361 = vand.u32 %v1822, 4294901760
        %v5362 = vsub.f32 %v1822, %v5361
        %5363 = vmatprep.subr.mxu0 %v5362
        %v5364 = vand.u32 %v1821, 4294901760
        %v5365 = vsub.f32 %v1821, %v5364
        %5366 = vmatpush1.msra.mxu0 %v5365
        %v5367 = vand.u32 %v1829, 4294901760
        %v5368 = vsub.f32 %v1829, %v5367
        %5369 = vmatprep.subr.mxu0 %v5368
        %v5370 = vand.u32 %v1828, 4294901760
        %v5371 = vsub.f32 %v1828, %v5370
        %5372 = vmatpush1.msra.mxu0 %v5371
        %v5373 = vand.u32 %v1836, 4294901760
        %v5374 = vsub.f32 %v1836, %v5373
        %5375 = vmatprep.subr.mxu0 %v5374
        %v5376 = vand.u32 %v1835, 4294901760
        %v5377 = vsub.f32 %v1835, %v5376
        %5378 = vmatpush1.msra.mxu0 %v5377
        %v5379 = vand.u32 %v1843, 4294901760
        %v5380 = vsub.f32 %v1843, %v5379
        %5381 = vmatprep.subr.mxu0 %v5380
        %v5382 = vand.u32 %v1842, 4294901760
        %v5383 = vsub.f32 %v1842, %v5382
        %5384 = vmatpush1.msra.mxu0 %v5383
        %v5385 = vand.u32 %v1850, 4294901760
        %v5386 = vsub.f32 %v1850, %v5385
        %5387 = vmatprep.subr.mxu0 %v5386
        %v5388 = vand.u32 %v1849, 4294901760
        %v5389 = vsub.f32 %v1849, %v5388
        %5390 = vmatpush1.msra.mxu0 %v5389
        %v5391 = vand.u32 %v1857, 4294901760
        %v5392 = vsub.f32 %v1857, %v5391
        %5393 = vmatprep.subr.mxu0 %v5392
        %v5394 = vand.u32 %v1856, 4294901760
        %v5395 = vsub.f32 %v1856, %v5394
        %5396 = vmatpush1.msra.mxu0 %v5395
        %v5397 = vand.u32 %v1864, 4294901760
        %v5398 = vsub.f32 %v1864, %v5397
        %5399 = vmatprep.subr.mxu0 %v5398
        %v5400 = vand.u32 %v1863, 4294901760
        %v5401 = vsub.f32 %v1863, %v5400
        %5402 = vmatpush1.msra.mxu0 %v5401
        %v5403 = vand.u32 %v1871, 4294901760
        %v5404 = vsub.f32 %v1871, %v5403
        %5405 = vmatprep.subr.mxu0 %v5404
        %v5406 = vand.u32 %v1870, 4294901760
        %v5407 = vsub.f32 %v1870, %v5406
        %5408 = vmatpush1.msra.mxu0 %v5407
        %v5409 = vand.u32 %v1878, 4294901760
        %v5410 = vsub.f32 %v1878, %v5409
        %5411 = vmatprep.subr.mxu0 %v5410
        %v5412 = vand.u32 %v1877, 4294901760
        %v5413 = vsub.f32 %v1877, %v5412
        %5414 = vmatpush1.msra.mxu0 %v5413
        %v5415 = vand.u32 %v1885, 4294901760
        %v5416 = vsub.f32 %v1885, %v5415
        %5417 = vmatprep.subr.mxu0 %v5416
        %v5418 = vand.u32 %v1884, 4294901760
        %v5419 = vsub.f32 %v1884, %v5418
        %5420 = vmatpush1.msra.mxu0 %v5419
        %v5421 = vand.u32 %v1892, 4294901760
        %v5422 = vsub.f32 %v1892, %v5421
        %5423 = vmatprep.subr.mxu0 %v5422
        %v5424 = vand.u32 %v1891, 4294901760
        %v5425 = vsub.f32 %v1891, %v5424
        %5426 = vmatpush1.msra.mxu0 %v5425
        %5427 = vmatprep.subr.mxu0 0.0
        %5428 = vmatpush1.msra.mxu0 0.0
        %5429 = vmatprep.subr.mxu0 0.0
        %5430 = vmatpush1.msra.mxu0 0.0
        %5431 = vmatprep.subr.mxu0 0.0
        %5432 = vmatpush1.msra.mxu0 0.0
        %5433 = vmatprep.subr.mxu0 0.0
        %5434 = vmatpush1.msra.mxu0 0.0
        %v5435 = vand.u32 %v2407, 4294901760
        %v5436 = vsub.f32 %v2407, %v5435
        %5437 = vmatprep.mubr.f32.mxu0 %v5436
        %v5438 = vand.u32 %v1696, 4294901760
        %v5439 = vsub.f32 %v1696, %v5438
        %5440 = vmatmul.mubr.f32.gmra.mrb[0].mxu0 %v5439
        %v5441 = vpop.f32.mrb[0].mxu0
        %v5442 = vadd.f32 %v5255, %v5441
        %v5443 = vpop.f32.mrb[0].mxu0
        %v5444 = vadd.f32 %v5257, %v5443
        %5445 = vdwg.mxu0
        %v5446 = vand.u32 %v1703, 4294901760
        %5447 = vmatprep.subr.mxu0 %v5446
        %v5448 = vand.u32 %v1702, 4294901760
        %5449 = vmatpush1.msra.mxu0 %v5448
        %v5450 = vand.u32 %v1710, 4294901760
        %5451 = vmatprep.subr.mxu0 %v5450
        %v5452 = vand.u32 %v1709, 4294901760
        %5453 = vmatpush1.msra.mxu0 %v5452
        %v5454 = vand.u32 %v1717, 4294901760
        %5455 = vmatprep.subr.mxu0 %v5454
        %v5456 = vand.u32 %v1716, 4294901760
        %5457 = vmatpush1.msra.mxu0 %v5456
        %v5458 = vand.u32 %v1724, 4294901760
        %5459 = vmatprep.subr.mxu0 %v5458
        %v5460 = vand.u32 %v1723, 4294901760
        %5461 = vmatpush1.msra.mxu0 %v5460
        %v5462 = vand.u32 %v1731, 4294901760
        %5463 = vmatprep.subr.mxu0 %v5462
        %v5464 = vand.u32 %v1730, 4294901760
        %5465 = vmatpush1.msra.mxu0 %v5464
        %v5466 = vand.u32 %v1738, 4294901760
        %5467 = vmatprep.subr.mxu0 %v5466
        %v5468 = vand.u32 %v1737, 4294901760
        %5469 = vmatpush1.msra.mxu0 %v5468
        %v5470 = vand.u32 %v1745, 4294901760
        %5471 = vmatprep.subr.mxu0 %v5470
        %v5472 = vand.u32 %v1744, 4294901760
        %5473 = vmatpush1.msra.mxu0 %v5472
        %v5474 = vand.u32 %v1752, 4294901760
        %5475 = vmatprep.subr.mxu0 %v5474
        %v5476 = vand.u32 %v1751, 4294901760
        %5477 = vmatpush1.msra.mxu0 %v5476
        %v5478 = vand.u32 %v1759, 4294901760
        %5479 = vmatprep.subr.mxu0 %v5478
        %v5480 = vand.u32 %v1758, 4294901760
        %5481 = vmatpush1.msra.mxu0 %v5480
        %v5482 = vand.u32 %v1766, 4294901760
        %5483 = vmatprep.subr.mxu0 %v5482
        %v5484 = vand.u32 %v1765, 4294901760
        %5485 = vmatpush1.msra.mxu0 %v5484
        %v5486 = vand.u32 %v1773, 4294901760
        %5487 = vmatprep.subr.mxu0 %v5486
        %v5488 = vand.u32 %v1772, 4294901760
        %5489 = vmatpush1.msra.mxu0 %v5488
        %v5490 = vand.u32 %v1780, 4294901760
        %5491 = vmatprep.subr.mxu0 %v5490
        %v5492 = vand.u32 %v1779, 4294901760
        %5493 = vmatpush1.msra.mxu0 %v5492
        %v5494 = vand.u32 %v1787, 4294901760
        %5495 = vmatprep.subr.mxu0 %v5494
        %v5496 = vand.u32 %v1786, 4294901760
        %5497 = vmatpush1.msra.mxu0 %v5496
        %v5498 = vand.u32 %v1794, 4294901760
        %5499 = vmatprep.subr.mxu0 %v5498
        %v5500 = vand.u32 %v1793, 4294901760
        %5501 = vmatpush1.msra.mxu0 %v5500
        %v5502 = vand.u32 %v1801, 4294901760
        %5503 = vmatprep.subr.mxu0 %v5502
        %v5504 = vand.u32 %v1800, 4294901760
        %5505 = vmatpush1.msra.mxu0 %v5504
        %v5506 = vand.u32 %v1808, 4294901760
        %5507 = vmatprep.subr.mxu0 %v5506
        %v5508 = vand.u32 %v1807, 4294901760
        %5509 = vmatpush1.msra.mxu0 %v5508
        %v5510 = vand.u32 %v1815, 4294901760
        %5511 = vmatprep.subr.mxu0 %v5510
        %v5512 = vand.u32 %v1814, 4294901760
        %5513 = vmatpush1.msra.mxu0 %v5512
        %v5514 = vand.u32 %v1822, 4294901760
        %5515 = vmatprep.subr.mxu0 %v5514
        %v5516 = vand.u32 %v1821, 4294901760
        %5517 = vmatpush1.msra.mxu0 %v5516
        %v5518 = vand.u32 %v1829, 4294901760
        %5519 = vmatprep.subr.mxu0 %v5518
        %v5520 = vand.u32 %v1828, 4294901760
        %5521 = vmatpush1.msra.mxu0 %v5520
        %v5522 = vand.u32 %v1836, 4294901760
        %5523 = vmatprep.subr.mxu0 %v5522
        %v5524 = vand.u32 %v1835, 4294901760
        %5525 = vmatpush1.msra.mxu0 %v5524
        %v5526 = vand.u32 %v1843, 4294901760
        %5527 = vmatprep.subr.mxu0 %v5526
        %v5528 = vand.u32 %v1842, 4294901760
        %5529 = vmatpush1.msra.mxu0 %v5528
        %v5530 = vand.u32 %v1850, 4294901760
        %5531 = vmatprep.subr.mxu0 %v5530
        %v5532 = vand.u32 %v1849, 4294901760
        %5533 = vmatpush1.msra.mxu0 %v5532
        %v5534 = vand.u32 %v1857, 4294901760
        %5535 = vmatprep.subr.mxu0 %v5534
        %v5536 = vand.u32 %v1856, 4294901760
        %5537 = vmatpush1.msra.mxu0 %v5536
        %v5538 = vand.u32 %v1864, 4294901760
        %5539 = vmatprep.subr.mxu0 %v5538
        %v5540 = vand.u32 %v1863, 4294901760
        %5541 = vmatpush1.msra.mxu0 %v5540
        %v5542 = vand.u32 %v1871, 4294901760
        %5543 = vmatprep.subr.mxu0 %v5542
        %v5544 = vand.u32 %v1870, 4294901760
        %5545 = vmatpush1.msra.mxu0 %v5544
        %v5546 = vand.u32 %v1878, 4294901760
        %5547 = vmatprep.subr.mxu0 %v5546
        %v5548 = vand.u32 %v1877, 4294901760
        %5549 = vmatpush1.msra.mxu0 %v5548
        %v5550 = vand.u32 %v1885, 4294901760
        %5551 = vmatprep.subr.mxu0 %v5550
        %v5552 = vand.u32 %v1884, 4294901760
        %5553 = vmatpush1.msra.mxu0 %v5552
        %v5554 = vand.u32 %v1892, 4294901760
        %5555 = vmatprep.subr.mxu0 %v5554
        %v5556 = vand.u32 %v1891, 4294901760
        %5557 = vmatpush1.msra.mxu0 %v5556
        %5558 = vmatprep.subr.mxu0 0.0
        %5559 = vmatpush1.msra.mxu0 0.0
        %5560 = vmatprep.subr.mxu0 0.0
        %5561 = vmatpush1.msra.mxu0 0.0
        %5562 = vmatprep.subr.mxu0 0.0
        %5563 = vmatpush1.msra.mxu0 0.0
        %5564 = vmatprep.subr.mxu0 0.0
        %5565 = vmatpush1.msra.mxu0 0.0
        %v5566 = vand.u32 %v2407, 4294901760
        %v5567 = vsub.f32 %v2407, %v5566
        %v5568 = vand.u32 %v5567, 4294901760
        %5569 = vmatprep.mubr.f32.mxu0 %v5568
        %v5570 = vand.u32 %v1696, 4294901760
        %v5571 = vsub.f32 %v1696, %v5570
        %v5572 = vand.u32 %v5571, 4294901760
        %5573 = vmatmul.mubr.f32.gmra.mrb[0].mxu0 %v5572
        %v5574 = vpop.f32.mrb[0].mxu0
        %v5575 = vadd.f32 %v5442, %v5574
        %v5576 = vpop.f32.mrb[0].mxu0
        %v5577 = vadd.f32 %v5444, %v5576
        %5578 = vdwg.mxu0
        %v5579 = vand.u32 %v1703, 4294901760
        %v5580 = vsub.f32 %v1703, %v5579
        %v5581 = vand.u32 %v5580, 4294901760
        %5582 = vmatprep.subr.mxu0 %v5581
        %v5583 = vand.u32 %v1702, 4294901760
        %v5584 = vsub.f32 %v1702, %v5583
        %v5585 = vand.u32 %v5584, 4294901760
        %5586 = vmatpush1.msra.mxu0 %v5585
        %v5587 = vand.u32 %v1710, 4294901760
        %v5588 = vsub.f32 %v1710, %v5587
        %v5589 = vand.u32 %v5588, 4294901760
        %5590 = vmatprep.subr.mxu0 %v5589
        %v5591 = vand.u32 %v1709, 4294901760
        %v5592 = vsub.f32 %v1709, %v5591
        %v5593 = vand.u32 %v5592, 4294901760
        %5594 = vmatpush1.msra.mxu0 %v5593
        %v5595 = vand.u32 %v1717, 4294901760
        %v5596 = vsub.f32 %v1717, %v5595
        %v5597 = vand.u32 %v5596, 4294901760
        %5598 = vmatprep.subr.mxu0 %v5597
        %v5599 = vand.u32 %v1716, 4294901760
        %v5600 = vsub.f32 %v1716, %v5599
        %v5601 = vand.u32 %v5600, 4294901760
        %5602 = vmatpush1.msra.mxu0 %v5601
        %v5603 = vand.u32 %v1724, 4294901760
        %v5604 = vsub.f32 %v1724, %v5603
        %v5605 = vand.u32 %v5604, 4294901760
        %5606 = vmatprep.subr.mxu0 %v5605
        %v5607 = vand.u32 %v1723, 4294901760
        %v5608 = vsub.f32 %v1723, %v5607
        %v5609 = vand.u32 %v5608, 4294901760
        %5610 = vmatpush1.msra.mxu0 %v5609
        %v5611 = vand.u32 %v1731, 4294901760
        %v5612 = vsub.f32 %v1731, %v5611
        %v5613 = vand.u32 %v5612, 4294901760
        %5614 = vmatprep.subr.mxu0 %v5613
        %v5615 = vand.u32 %v1730, 4294901760
        %v5616 = vsub.f32 %v1730, %v5615
        %v5617 = vand.u32 %v5616, 4294901760
        %5618 = vmatpush1.msra.mxu0 %v5617
        %v5619 = vand.u32 %v1738, 4294901760
        %v5620 = vsub.f32 %v1738, %v5619
        %v5621 = vand.u32 %v5620, 4294901760
        %5622 = vmatprep.subr.mxu0 %v5621
        %v5623 = vand.u32 %v1737, 4294901760
        %v5624 = vsub.f32 %v1737, %v5623
        %v5625 = vand.u32 %v5624, 4294901760
        %5626 = vmatpush1.msra.mxu0 %v5625
        %v5627 = vand.u32 %v1745, 4294901760
        %v5628 = vsub.f32 %v1745, %v5627
        %v5629 = vand.u32 %v5628, 4294901760
        %5630 = vmatprep.subr.mxu0 %v5629
        %v5631 = vand.u32 %v1744, 4294901760
        %v5632 = vsub.f32 %v1744, %v5631
        %v5633 = vand.u32 %v5632, 4294901760
        %5634 = vmatpush1.msra.mxu0 %v5633
        %v5635 = vand.u32 %v1752, 4294901760
        %v5636 = vsub.f32 %v1752, %v5635
        %v5637 = vand.u32 %v5636, 4294901760
        %5638 = vmatprep.subr.mxu0 %v5637
        %v5639 = vand.u32 %v1751, 4294901760
        %v5640 = vsub.f32 %v1751, %v5639
        %v5641 = vand.u32 %v5640, 4294901760
        %5642 = vmatpush1.msra.mxu0 %v5641
        %v5643 = vand.u32 %v1759, 4294901760
        %v5644 = vsub.f32 %v1759, %v5643
        %v5645 = vand.u32 %v5644, 4294901760
        %5646 = vmatprep.subr.mxu0 %v5645
        %v5647 = vand.u32 %v1758, 4294901760
        %v5648 = vsub.f32 %v1758, %v5647
        %v5649 = vand.u32 %v5648, 4294901760
        %5650 = vmatpush1.msra.mxu0 %v5649
        %v5651 = vand.u32 %v1766, 4294901760
        %v5652 = vsub.f32 %v1766, %v5651
        %v5653 = vand.u32 %v5652, 4294901760
        %5654 = vmatprep.subr.mxu0 %v5653
        %v5655 = vand.u32 %v1765, 4294901760
        %v5656 = vsub.f32 %v1765, %v5655
        %v5657 = vand.u32 %v5656, 4294901760
        %5658 = vmatpush1.msra.mxu0 %v5657
        %v5659 = vand.u32 %v1773, 4294901760
        %v5660 = vsub.f32 %v1773, %v5659
        %v5661 = vand.u32 %v5660, 4294901760
        %5662 = vmatprep.subr.mxu0 %v5661
        %v5663 = vand.u32 %v1772, 4294901760
        %v5664 = vsub.f32 %v1772, %v5663
        %v5665 = vand.u32 %v5664, 4294901760
        %5666 = vmatpush1.msra.mxu0 %v5665
        %v5667 = vand.u32 %v1780, 4294901760
        %v5668 = vsub.f32 %v1780, %v5667
        %v5669 = vand.u32 %v5668, 4294901760
        %5670 = vmatprep.subr.mxu0 %v5669
        %v5671 = vand.u32 %v1779, 4294901760
        %v5672 = vsub.f32 %v1779, %v5671
        %v5673 = vand.u32 %v5672, 4294901760
        %5674 = vmatpush1.msra.mxu0 %v5673
        %v5675 = vand.u32 %v1787, 4294901760
        %v5676 = vsub.f32 %v1787, %v5675
        %v5677 = vand.u32 %v5676, 4294901760
        %5678 = vmatprep.subr.mxu0 %v5677
        %v5679 = vand.u32 %v1786, 4294901760
        %v5680 = vsub.f32 %v1786, %v5679
        %v5681 = vand.u32 %v5680, 4294901760
        %5682 = vmatpush1.msra.mxu0 %v5681
        %v5683 = vand.u32 %v1794, 4294901760
        %v5684 = vsub.f32 %v1794, %v5683
        %v5685 = vand.u32 %v5684, 4294901760
        %5686 = vmatprep.subr.mxu0 %v5685
        %v5687 = vand.u32 %v1793, 4294901760
        %v5688 = vsub.f32 %v1793, %v5687
        %v5689 = vand.u32 %v5688, 4294901760
        %5690 = vmatpush1.msra.mxu0 %v5689
        %v5691 = vand.u32 %v1801, 4294901760
        %v5692 = vsub.f32 %v1801, %v5691
        %v5693 = vand.u32 %v5692, 4294901760
        %5694 = vmatprep.subr.mxu0 %v5693
        %v5695 = vand.u32 %v1800, 4294901760
        %v5696 = vsub.f32 %v1800, %v5695
        %v5697 = vand.u32 %v5696, 4294901760
        %5698 = vmatpush1.msra.mxu0 %v5697
        %v5699 = vand.u32 %v1808, 4294901760
        %v5700 = vsub.f32 %v1808, %v5699
        %v5701 = vand.u32 %v5700, 4294901760
        %5702 = vmatprep.subr.mxu0 %v5701
        %v5703 = vand.u32 %v1807, 4294901760
        %v5704 = vsub.f32 %v1807, %v5703
        %v5705 = vand.u32 %v5704, 4294901760
        %5706 = vmatpush1.msra.mxu0 %v5705
        %v5707 = vand.u32 %v1815, 4294901760
        %v5708 = vsub.f32 %v1815, %v5707
        %v5709 = vand.u32 %v5708, 4294901760
        %5710 = vmatprep.subr.mxu0 %v5709
        %v5711 = vand.u32 %v1814, 4294901760
        %v5712 = vsub.f32 %v1814, %v5711
        %v5713 = vand.u32 %v5712, 4294901760
        %5714 = vmatpush1.msra.mxu0 %v5713
        %v5715 = vand.u32 %v1822, 4294901760
        %v5716 = vsub.f32 %v1822, %v5715
        %v5717 = vand.u32 %v5716, 4294901760
        %5718 = vmatprep.subr.mxu0 %v5717
        %v5719 = vand.u32 %v1821, 4294901760
        %v5720 = vsub.f32 %v1821, %v5719
        %v5721 = vand.u32 %v5720, 4294901760
        %5722 = vmatpush1.msra.mxu0 %v5721
        %v5723 = vand.u32 %v1829, 4294901760
        %v5724 = vsub.f32 %v1829, %v5723
        %v5725 = vand.u32 %v5724, 4294901760
        %5726 = vmatprep.subr.mxu0 %v5725
        %v5727 = vand.u32 %v1828, 4294901760
        %v5728 = vsub.f32 %v1828, %v5727
        %v5729 = vand.u32 %v5728, 4294901760
        %5730 = vmatpush1.msra.mxu0 %v5729
        %v5731 = vand.u32 %v1836, 4294901760
        %v5732 = vsub.f32 %v1836, %v5731
        %v5733 = vand.u32 %v5732, 4294901760
        %5734 = vmatprep.subr.mxu0 %v5733
        %v5735 = vand.u32 %v1835, 4294901760
        %v5736 = vsub.f32 %v1835, %v5735
        %v5737 = vand.u32 %v5736, 4294901760
        %5738 = vmatpush1.msra.mxu0 %v5737
        %v5739 = vand.u32 %v1843, 4294901760
        %v5740 = vsub.f32 %v1843, %v5739
        %v5741 = vand.u32 %v5740, 4294901760
        %5742 = vmatprep.subr.mxu0 %v5741
        %v5743 = vand.u32 %v1842, 4294901760
        %v5744 = vsub.f32 %v1842, %v5743
        %v5745 = vand.u32 %v5744, 4294901760
        %5746 = vmatpush1.msra.mxu0 %v5745
        %v5747 = vand.u32 %v1850, 4294901760
        %v5748 = vsub.f32 %v1850, %v5747
        %v5749 = vand.u32 %v5748, 4294901760
        %5750 = vmatprep.subr.mxu0 %v5749
        %v5751 = vand.u32 %v1849, 4294901760
        %v5752 = vsub.f32 %v1849, %v5751
        %v5753 = vand.u32 %v5752, 4294901760
        %5754 = vmatpush1.msra.mxu0 %v5753
        %v5755 = vand.u32 %v1857, 4294901760
        %v5756 = vsub.f32 %v1857, %v5755
        %v5757 = vand.u32 %v5756, 4294901760
        %5758 = vmatprep.subr.mxu0 %v5757
        %v5759 = vand.u32 %v1856, 4294901760
        %v5760 = vsub.f32 %v1856, %v5759
        %v5761 = vand.u32 %v5760, 4294901760
        %5762 = vmatpush1.msra.mxu0 %v5761
        %v5763 = vand.u32 %v1864, 4294901760
        %v5764 = vsub.f32 %v1864, %v5763
        %v5765 = vand.u32 %v5764, 4294901760
        %5766 = vmatprep.subr.mxu0 %v5765
        %v5767 = vand.u32 %v1863, 4294901760
        %v5768 = vsub.f32 %v1863, %v5767
        %v5769 = vand.u32 %v5768, 4294901760
        %5770 = vmatpush1.msra.mxu0 %v5769
        %v5771 = vand.u32 %v1871, 4294901760
        %v5772 = vsub.f32 %v1871, %v5771
        %v5773 = vand.u32 %v5772, 4294901760
        %5774 = vmatprep.subr.mxu0 %v5773
        %v5775 = vand.u32 %v1870, 4294901760
        %v5776 = vsub.f32 %v1870, %v5775
        %v5777 = vand.u32 %v5776, 4294901760
        %5778 = vmatpush1.msra.mxu0 %v5777
        %v5779 = vand.u32 %v1878, 4294901760
        %v5780 = vsub.f32 %v1878, %v5779
        %v5781 = vand.u32 %v5780, 4294901760
        %5782 = vmatprep.subr.mxu0 %v5781
        %v5783 = vand.u32 %v1877, 4294901760
        %v5784 = vsub.f32 %v1877, %v5783
        %v5785 = vand.u32 %v5784, 4294901760
        %5786 = vmatpush1.msra.mxu0 %v5785
        %v5787 = vand.u32 %v1885, 4294901760
        %v5788 = vsub.f32 %v1885, %v5787
        %v5789 = vand.u32 %v5788, 4294901760
        %5790 = vmatprep.subr.mxu0 %v5789
        %v5791 = vand.u32 %v1884, 4294901760
        %v5792 = vsub.f32 %v1884, %v5791
        %v5793 = vand.u32 %v5792, 4294901760
        %5794 = vmatpush1.msra.mxu0 %v5793
        %v5795 = vand.u32 %v1892, 4294901760
        %v5796 = vsub.f32 %v1892, %v5795
        %v5797 = vand.u32 %v5796, 4294901760
        %5798 = vmatprep.subr.mxu0 %v5797
        %v5799 = vand.u32 %v1891, 4294901760
        %v5800 = vsub.f32 %v1891, %v5799
        %v5801 = vand.u32 %v5800, 4294901760
        %5802 = vmatpush1.msra.mxu0 %v5801
        %5803 = vmatprep.subr.mxu0 0.0
        %5804 = vmatpush1.msra.mxu0 0.0
        %5805 = vmatprep.subr.mxu0 0.0
        %5806 = vmatpush1.msra.mxu0 0.0
        %5807 = vmatprep.subr.mxu0 0.0
        %5808 = vmatpush1.msra.mxu0 0.0
        %5809 = vmatprep.subr.mxu0 0.0
        %5810 = vmatpush1.msra.mxu0 0.0
        %v5811 = vand.u32 %v2407, 4294901760
        %5812 = vmatprep.mubr.f32.mxu0 %v5811
        %v5813 = vand.u32 %v1696, 4294901760
        %5814 = vmatmul.mubr.f32.gmra.mrb[0].mxu0 %v5813
        %v5815 = vpop.f32.mrb[0].mxu0
        %v5816 = vadd.f32 %v5575, %v5815
        %v5817 = vpop.f32.mrb[0].mxu0
        %v5818 = vadd.f32 %v5577, %v5817
        %5819 = vdwg.mxu0
        %v5820 = vand.u32 %v1703, 4294901760
        %5821 = vmatprep.subr.mxu0 %v5820
        %v5822 = vand.u32 %v1702, 4294901760
        %5823 = vmatpush1.msra.mxu0 %v5822
        %v5824 = vand.u32 %v1710, 4294901760
        %5825 = vmatprep.subr.mxu0 %v5824
        %v5826 = vand.u32 %v1709, 4294901760
        %5827 = vmatpush1.msra.mxu0 %v5826
        %v5828 = vand.u32 %v1717, 4294901760
        %5829 = vmatprep.subr.mxu0 %v5828
        %v5830 = vand.u32 %v1716, 4294901760
        %5831 = vmatpush1.msra.mxu0 %v5830
        %v5832 = vand.u32 %v1724, 4294901760
        %5833 = vmatprep.subr.mxu0 %v5832
        %v5834 = vand.u32 %v1723, 4294901760
        %5835 = vmatpush1.msra.mxu0 %v5834
        %v5836 = vand.u32 %v1731, 4294901760
        %5837 = vmatprep.subr.mxu0 %v5836
        %v5838 = vand.u32 %v1730, 4294901760
        %5839 = vmatpush1.msra.mxu0 %v5838
        %v5840 = vand.u32 %v1738, 4294901760
        %5841 = vmatprep.subr.mxu0 %v5840
        %v5842 = vand.u32 %v1737, 4294901760
        %5843 = vmatpush1.msra.mxu0 %v5842
        %v5844 = vand.u32 %v1745, 4294901760
        %5845 = vmatprep.subr.mxu0 %v5844
        %v5846 = vand.u32 %v1744, 4294901760
        %5847 = vmatpush1.msra.mxu0 %v5846
        %v5848 = vand.u32 %v1752, 4294901760
        %5849 = vmatprep.subr.mxu0 %v5848
        %v5850 = vand.u32 %v1751, 4294901760
        %5851 = vmatpush1.msra.mxu0 %v5850
        %v5852 = vand.u32 %v1759, 4294901760
        %5853 = vmatprep.subr.mxu0 %v5852
        %v5854 = vand.u32 %v1758, 4294901760
        %5855 = vmatpush1.msra.mxu0 %v5854
        %v5856 = vand.u32 %v1766, 4294901760
        %5857 = vmatprep.subr.mxu0 %v5856
        %v5858 = vand.u32 %v1765, 4294901760
        %5859 = vmatpush1.msra.mxu0 %v5858
        %v5860 = vand.u32 %v1773, 4294901760
        %5861 = vmatprep.subr.mxu0 %v5860
        %v5862 = vand.u32 %v1772, 4294901760
        %5863 = vmatpush1.msra.mxu0 %v5862
        %v5864 = vand.u32 %v1780, 4294901760
        %5865 = vmatprep.subr.mxu0 %v5864
        %v5866 = vand.u32 %v1779, 4294901760
        %5867 = vmatpush1.msra.mxu0 %v5866
        %v5868 = vand.u32 %v1787, 4294901760
        %5869 = vmatprep.subr.mxu0 %v5868
        %v5870 = vand.u32 %v1786, 4294901760
        %5871 = vmatpush1.msra.mxu0 %v5870
        %v5872 = vand.u32 %v1794, 4294901760
        %5873 = vmatprep.subr.mxu0 %v5872
        %v5874 = vand.u32 %v1793, 4294901760
        %5875 = vmatpush1.msra.mxu0 %v5874
        %v5876 = vand.u32 %v1801, 4294901760
        %5877 = vmatprep.subr.mxu0 %v5876
        %v5878 = vand.u32 %v1800, 4294901760
        %5879 = vmatpush1.msra.mxu0 %v5878
        %v5880 = vand.u32 %v1808, 4294901760
        %5881 = vmatprep.subr.mxu0 %v5880
        %v5882 = vand.u32 %v1807, 4294901760
        %5883 = vmatpush1.msra.mxu0 %v5882
        %v5884 = vand.u32 %v1815, 4294901760
        %5885 = vmatprep.subr.mxu0 %v5884
        %v5886 = vand.u32 %v1814, 4294901760
        %5887 = vmatpush1.msra.mxu0 %v5886
        %v5888 = vand.u32 %v1822, 4294901760
        %5889 = vmatprep.subr.mxu0 %v5888
        %v5890 = vand.u32 %v1821, 4294901760
        %5891 = vmatpush1.msra.mxu0 %v5890
        %v5892 = vand.u32 %v1829, 4294901760
        %5893 = vmatprep.subr.mxu0 %v5892
        %v5894 = vand.u32 %v1828, 4294901760
        %5895 = vmatpush1.msra.mxu0 %v5894
        %v5896 = vand.u32 %v1836, 4294901760
        %5897 = vmatprep.subr.mxu0 %v5896
        %v5898 = vand.u32 %v1835, 4294901760
        %5899 = vmatpush1.msra.mxu0 %v5898
        %v5900 = vand.u32 %v1843, 4294901760
        %5901 = vmatprep.subr.mxu0 %v5900
        %v5902 = vand.u32 %v1842, 4294901760
        %5903 = vmatpush1.msra.mxu0 %v5902
        %v5904 = vand.u32 %v1850, 4294901760
        %5905 = vmatprep.subr.mxu0 %v5904
        %v5906 = vand.u32 %v1849, 4294901760
        %5907 = vmatpush1.msra.mxu0 %v5906
        %v5908 = vand.u32 %v1857, 4294901760
        %5909 = vmatprep.subr.mxu0 %v5908
        %v5910 = vand.u32 %v1856, 4294901760
        %5911 = vmatpush1.msra.mxu0 %v5910
        %v5912 = vand.u32 %v1864, 4294901760
        %5913 = vmatprep.subr.mxu0 %v5912
        %v5914 = vand.u32 %v1863, 4294901760
        %5915 = vmatpush1.msra.mxu0 %v5914
        %v5916 = vand.u32 %v1871, 4294901760
        %5917 = vmatprep.subr.mxu0 %v5916
        %v5918 = vand.u32 %v1870, 4294901760
        %5919 = vmatpush1.msra.mxu0 %v5918
        %v5920 = vand.u32 %v1878, 4294901760
        %5921 = vmatprep.subr.mxu0 %v5920
        %v5922 = vand.u32 %v1877, 4294901760
        %5923 = vmatpush1.msra.mxu0 %v5922
        %v5924 = vand.u32 %v1885, 4294901760
        %5925 = vmatprep.subr.mxu0 %v5924
        %v5926 = vand.u32 %v1884, 4294901760
        %5927 = vmatpush1.msra.mxu0 %v5926
        %v5928 = vand.u32 %v1892, 4294901760
        %5929 = vmatprep.subr.mxu0 %v5928
        %v5930 = vand.u32 %v1891, 4294901760
        %5931 = vmatpush1.msra.mxu0 %v5930
        %5932 = vmatprep.subr.mxu0 0.0
        %5933 = vmatpush1.msra.mxu0 0.0
        %5934 = vmatprep.subr.mxu0 0.0
        %5935 = vmatpush1.msra.mxu0 0.0
        %5936 = vmatprep.subr.mxu0 0.0
        %5937 = vmatpush1.msra.mxu0 0.0
        %5938 = vmatprep.subr.mxu0 0.0
        %5939 = vmatpush1.msra.mxu0 0.0
        %v5940 = vand.u32 %v2407, 4294901760
        %5941 = vmatprep.mubr.f32.mxu0 %v5940
        %v5942 = vand.u32 %v1696, 4294901760
        %5943 = vmatmul.mubr.f32.gmra.mrb[0].mxu0 %v5942
        %v5944 = vpop.f32.mrb[0].mxu0
        %v5945 = vadd.f32 %v5816, %v5944
        %v5946 = vpop.f32.mrb[0].mxu0
        %v5947 = vadd.f32 %v5818, %v5946
        %5948 = vdwg.mxu0
        %5949 = vmatprep.subr.mxu0 0.0
        %v5950 = vand.u32 %v1704, 4294901760
        %5951 = vmatpush1.msra.mxu0 %v5950
        %5952 = vmatprep.subr.mxu0 0.0
        %v5953 = vand.u32 %v1711, 4294901760
        %5954 = vmatpush1.msra.mxu0 %v5953
        %5955 = vmatprep.subr.mxu0 0.0
        %v5956 = vand.u32 %v1718, 4294901760
        %5957 = vmatpush1.msra.mxu0 %v5956
        %5958 = vmatprep.subr.mxu0 0.0
        %v5959 = vand.u32 %v1725, 4294901760
        %5960 = vmatpush1.msra.mxu0 %v5959
        %5961 = vmatprep.subr.mxu0 0.0
        %v5962 = vand.u32 %v1732, 4294901760
        %5963 = vmatpush1.msra.mxu0 %v5962
        %5964 = vmatprep.subr.mxu0 0.0
        %v5965 = vand.u32 %v1739, 4294901760
        %5966 = vmatpush1.msra.mxu0 %v5965
        %5967 = vmatprep.subr.mxu0 0.0
        %v5968 = vand.u32 %v1746, 4294901760
        %5969 = vmatpush1.msra.mxu0 %v5968
        %5970 = vmatprep.subr.mxu0 0.0
        %v5971 = vand.u32 %v1753, 4294901760
        %5972 = vmatpush1.msra.mxu0 %v5971
        %5973 = vmatprep.subr.mxu0 0.0
        %v5974 = vand.u32 %v1760, 4294901760
        %5975 = vmatpush1.msra.mxu0 %v5974
        %5976 = vmatprep.subr.mxu0 0.0
        %v5977 = vand.u32 %v1767, 4294901760
        %5978 = vmatpush1.msra.mxu0 %v5977
        %5979 = vmatprep.subr.mxu0 0.0
        %v5980 = vand.u32 %v1774, 4294901760
        %5981 = vmatpush1.msra.mxu0 %v5980
        %5982 = vmatprep.subr.mxu0 0.0
        %v5983 = vand.u32 %v1781, 4294901760
        %5984 = vmatpush1.msra.mxu0 %v5983
        %5985 = vmatprep.subr.mxu0 0.0
        %v5986 = vand.u32 %v1788, 4294901760
        %5987 = vmatpush1.msra.mxu0 %v5986
        %5988 = vmatprep.subr.mxu0 0.0
        %v5989 = vand.u32 %v1795, 4294901760
        %5990 = vmatpush1.msra.mxu0 %v5989
        %5991 = vmatprep.subr.mxu0 0.0
        %v5992 = vand.u32 %v1802, 4294901760
        %5993 = vmatpush1.msra.mxu0 %v5992
        %5994 = vmatprep.subr.mxu0 0.0
        %v5995 = vand.u32 %v1809, 4294901760
        %5996 = vmatpush1.msra.mxu0 %v5995
        %5997 = vmatprep.subr.mxu0 0.0
        %v5998 = vand.u32 %v1816, 4294901760
        %5999 = vmatpush1.msra.mxu0 %v5998
        %6000 = vmatprep.subr.mxu0 0.0
        %v6001 = vand.u32 %v1823, 4294901760
        %6002 = vmatpush1.msra.mxu0 %v6001
        %6003 = vmatprep.subr.mxu0 0.0
        %v6004 = vand.u32 %v1830, 4294901760
        %6005 = vmatpush1.msra.mxu0 %v6004
        %6006 = vmatprep.subr.mxu0 0.0
        %v6007 = vand.u32 %v1837, 4294901760
        %6008 = vmatpush1.msra.mxu0 %v6007
        %6009 = vmatprep.subr.mxu0 0.0
        %v6010 = vand.u32 %v1844, 4294901760
        %6011 = vmatpush1.msra.mxu0 %v6010
        %6012 = vmatprep.subr.mxu0 0.0
        %v6013 = vand.u32 %v1851, 4294901760
        %6014 = vmatpush1.msra.mxu0 %v6013
        %6015 = vmatprep.subr.mxu0 0.0
        %v6016 = vand.u32 %v1858, 4294901760
        %6017 = vmatpush1.msra.mxu0 %v6016
        %6018 = vmatprep.subr.mxu0 0.0
        %v6019 = vand.u32 %v1865, 4294901760
        %6020 = vmatpush1.msra.mxu0 %v6019
        %6021 = vmatprep.subr.mxu0 0.0
        %v6022 = vand.u32 %v1872, 4294901760
        %6023 = vmatpush1.msra.mxu0 %v6022
        %6024 = vmatprep.subr.mxu0 0.0
        %v6025 = vand.u32 %v1879, 4294901760
        %6026 = vmatpush1.msra.mxu0 %v6025
        %6027 = vmatprep.subr.mxu0 0.0
        %v6028 = vand.u32 %v1886, 4294901760
        %6029 = vmatpush1.msra.mxu0 %v6028
        %6030 = vmatprep.subr.mxu0 0.0
        %v6031 = vand.u32 %v1893, 4294901760
        %6032 = vmatpush1.msra.mxu0 %v6031
        %6033 = vmatprep.subr.mxu0 0.0
        %6034 = vmatpush1.msra.mxu0 0.0
        %6035 = vmatprep.subr.mxu0 0.0
        %6036 = vmatpush1.msra.mxu0 0.0
        %6037 = vmatprep.subr.mxu0 0.0
        %6038 = vmatpush1.msra.mxu0 0.0
        %6039 = vmatprep.subr.mxu0 0.0
        %6040 = vmatpush1.msra.mxu0 0.0
        %v6041 = vand.u32 %v2407, 4294901760
        %v6042 = vsub.f32 %v2407, %v6041
        %v6043 = vand.u32 %v6042, 4294901760
        %v6044 = vsub.f32 %v6042, %v6043
        %v6045 = vand.u32 %v6044, 4294901760
        %6046 = vmatprep.mubr.f32.mxu0 %v6045
        %v6047 = vand.u32 %v1696, 4294901760
        %v6048 = vsub.f32 %v1696, %v6047
        %v6049 = vand.u32 %v6048, 4294901760
        %v6050 = vsub.f32 %v6048, %v6049
        %v6051 = vand.u32 %v6050, 4294901760
        %6052 = vmatmul.mubr.f32.gmra.mrb[0].mxu0 %v6051
        %v6053 = vpop.f32.mrb[0].mxu0
        %v6054 = vadd.f32 %v2403, %v6053
        %v6055 = vpop.f32.mrb[0].mxu0
        %6056 = vdwg.mxu0
        %6057 = vmatprep.subr.mxu0 0.0
        %v6058 = vand.u32 %v1704, 4294901760
        %v6059 = vsub.f32 %v1704, %v6058
        %v6060 = vand.u32 %v6059, 4294901760
        %v6061 = vsub.f32 %v6059, %v6060
        %v6062 = vand.u32 %v6061, 4294901760
        %6063 = vmatpush1.msra.mxu0 %v6062
        %6064 = vmatprep.subr.mxu0 0.0
        %v6065 = vand.u32 %v1711, 4294901760
        %v6066 = vsub.f32 %v1711, %v6065
        %v6067 = vand.u32 %v6066, 4294901760
        %v6068 = vsub.f32 %v6066, %v6067
        %v6069 = vand.u32 %v6068, 4294901760
        %6070 = vmatpush1.msra.mxu0 %v6069
        %6071 = vmatprep.subr.mxu0 0.0
        %v6072 = vand.u32 %v1718, 4294901760
        %v6073 = vsub.f32 %v1718, %v6072
        %v6074 = vand.u32 %v6073, 4294901760
        %v6075 = vsub.f32 %v6073, %v6074
        %v6076 = vand.u32 %v6075, 4294901760
        %6077 = vmatpush1.msra.mxu0 %v6076
        %6078 = vmatprep.subr.mxu0 0.0
        %v6079 = vand.u32 %v1725, 4294901760
        %v6080 = vsub.f32 %v1725, %v6079
        %v6081 = vand.u32 %v6080, 4294901760
        %v6082 = vsub.f32 %v6080, %v6081
        %v6083 = vand.u32 %v6082, 4294901760
        %6084 = vmatpush1.msra.mxu0 %v6083
        %6085 = vmatprep.subr.mxu0 0.0
        %v6086 = vand.u32 %v1732, 4294901760
        %v6087 = vsub.f32 %v1732, %v6086
        %v6088 = vand.u32 %v6087, 4294901760
        %v6089 = vsub.f32 %v6087, %v6088
        %v6090 = vand.u32 %v6089, 4294901760
        %6091 = vmatpush1.msra.mxu0 %v6090
        %6092 = vmatprep.subr.mxu0 0.0
        %v6093 = vand.u32 %v1739, 4294901760
        %v6094 = vsub.f32 %v1739, %v6093
        %v6095 = vand.u32 %v6094, 4294901760
        %v6096 = vsub.f32 %v6094, %v6095
        %v6097 = vand.u32 %v6096, 4294901760
        %6098 = vmatpush1.msra.mxu0 %v6097
        %6099 = vmatprep.subr.mxu0 0.0
        %v6100 = vand.u32 %v1746, 4294901760
        %v6101 = vsub.f32 %v1746, %v6100
        %v6102 = vand.u32 %v6101, 4294901760
        %v6103 = vsub.f32 %v6101, %v6102
        %v6104 = vand.u32 %v6103, 4294901760
        %6105 = vmatpush1.msra.mxu0 %v6104
        %6106 = vmatprep.subr.mxu0 0.0
        %v6107 = vand.u32 %v1753, 4294901760
        %v6108 = vsub.f32 %v1753, %v6107
        %v6109 = vand.u32 %v6108, 4294901760
        %v6110 = vsub.f32 %v6108, %v6109
        %v6111 = vand.u32 %v6110, 4294901760
        %6112 = vmatpush1.msra.mxu0 %v6111
        %6113 = vmatprep.subr.mxu0 0.0
        %v6114 = vand.u32 %v1760, 4294901760
        %v6115 = vsub.f32 %v1760, %v6114
        %v6116 = vand.u32 %v6115, 4294901760
        %v6117 = vsub.f32 %v6115, %v6116
        %v6118 = vand.u32 %v6117, 4294901760
        %6119 = vmatpush1.msra.mxu0 %v6118
        %6120 = vmatprep.subr.mxu0 0.0
        %v6121 = vand.u32 %v1767, 4294901760
        %v6122 = vsub.f32 %v1767, %v6121
        %v6123 = vand.u32 %v6122, 4294901760
        %v6124 = vsub.f32 %v6122, %v6123
        %v6125 = vand.u32 %v6124, 4294901760
        %6126 = vmatpush1.msra.mxu0 %v6125
        %6127 = vmatprep.subr.mxu0 0.0
        %v6128 = vand.u32 %v1774, 4294901760
        %v6129 = vsub.f32 %v1774, %v6128
        %v6130 = vand.u32 %v6129, 4294901760
        %v6131 = vsub.f32 %v6129, %v6130
        %v6132 = vand.u32 %v6131, 4294901760
        %6133 = vmatpush1.msra.mxu0 %v6132
        %6134 = vmatprep.subr.mxu0 0.0
        %v6135 = vand.u32 %v1781, 4294901760
        %v6136 = vsub.f32 %v1781, %v6135
        %v6137 = vand.u32 %v6136, 4294901760
        %v6138 = vsub.f32 %v6136, %v6137
        %v6139 = vand.u32 %v6138, 4294901760
        %6140 = vmatpush1.msra.mxu0 %v6139
        %6141 = vmatprep.subr.mxu0 0.0
        %v6142 = vand.u32 %v1788, 4294901760
        %v6143 = vsub.f32 %v1788, %v6142
        %v6144 = vand.u32 %v6143, 4294901760
        %v6145 = vsub.f32 %v6143, %v6144
        %v6146 = vand.u32 %v6145, 4294901760
        %6147 = vmatpush1.msra.mxu0 %v6146
        %6148 = vmatprep.subr.mxu0 0.0
        %v6149 = vand.u32 %v1795, 4294901760
        %v6150 = vsub.f32 %v1795, %v6149
        %v6151 = vand.u32 %v6150, 4294901760
        %v6152 = vsub.f32 %v6150, %v6151
        %v6153 = vand.u32 %v6152, 4294901760
        %6154 = vmatpush1.msra.mxu0 %v6153
        %6155 = vmatprep.subr.mxu0 0.0
        %v6156 = vand.u32 %v1802, 4294901760
        %v6157 = vsub.f32 %v1802, %v6156
        %v6158 = vand.u32 %v6157, 4294901760
        %v6159 = vsub.f32 %v6157, %v6158
        %v6160 = vand.u32 %v6159, 4294901760
        %6161 = vmatpush1.msra.mxu0 %v6160
        %6162 = vmatprep.subr.mxu0 0.0
        %v6163 = vand.u32 %v1809, 4294901760
        %v6164 = vsub.f32 %v1809, %v6163
        %v6165 = vand.u32 %v6164, 4294901760
        %v6166 = vsub.f32 %v6164, %v6165
        %v6167 = vand.u32 %v6166, 4294901760
        %6168 = vmatpush1.msra.mxu0 %v6167
        %6169 = vmatprep.subr.mxu0 0.0
        %v6170 = vand.u32 %v1816, 4294901760
        %v6171 = vsub.f32 %v1816, %v6170
        %v6172 = vand.u32 %v6171, 4294901760
        %v6173 = vsub.f32 %v6171, %v6172
        %v6174 = vand.u32 %v6173, 4294901760
        %6175 = vmatpush1.msra.mxu0 %v6174
        %6176 = vmatprep.subr.mxu0 0.0
        %v6177 = vand.u32 %v1823, 4294901760
        %v6178 = vsub.f32 %v1823, %v6177
        %v6179 = vand.u32 %v6178, 4294901760
        %v6180 = vsub.f32 %v6178, %v6179
        %v6181 = vand.u32 %v6180, 4294901760
        %6182 = vmatpush1.msra.mxu0 %v6181
        %6183 = vmatprep.subr.mxu0 0.0
        %v6184 = vand.u32 %v1830, 4294901760
        %v6185 = vsub.f32 %v1830, %v6184
        %v6186 = vand.u32 %v6185, 4294901760
        %v6187 = vsub.f32 %v6185, %v6186
        %v6188 = vand.u32 %v6187, 4294901760
        %6189 = vmatpush1.msra.mxu0 %v6188
        %6190 = vmatprep.subr.mxu0 0.0
        %v6191 = vand.u32 %v1837, 4294901760
        %v6192 = vsub.f32 %v1837, %v6191
        %v6193 = vand.u32 %v6192, 4294901760
        %v6194 = vsub.f32 %v6192, %v6193
        %v6195 = vand.u32 %v6194, 4294901760
        %6196 = vmatpush1.msra.mxu0 %v6195
        %6197 = vmatprep.subr.mxu0 0.0
        %v6198 = vand.u32 %v1844, 4294901760
        %v6199 = vsub.f32 %v1844, %v6198
        %v6200 = vand.u32 %v6199, 4294901760
        %v6201 = vsub.f32 %v6199, %v6200
        %v6202 = vand.u32 %v6201, 4294901760
        %6203 = vmatpush1.msra.mxu0 %v6202
        %6204 = vmatprep.subr.mxu0 0.0
        %v6205 = vand.u32 %v1851, 4294901760
        %v6206 = vsub.f32 %v1851, %v6205
        %v6207 = vand.u32 %v6206, 4294901760
        %v6208 = vsub.f32 %v6206, %v6207
        %v6209 = vand.u32 %v6208, 4294901760
        %6210 = vmatpush1.msra.mxu0 %v6209
        %6211 = vmatprep.subr.mxu0 0.0
        %v6212 = vand.u32 %v1858, 4294901760
        %v6213 = vsub.f32 %v1858, %v6212
        %v6214 = vand.u32 %v6213, 4294901760
        %v6215 = vsub.f32 %v6213, %v6214
        %v6216 = vand.u32 %v6215, 4294901760
        %6217 = vmatpush1.msra.mxu0 %v6216
        %6218 = vmatprep.subr.mxu0 0.0
        %v6219 = vand.u32 %v1865, 4294901760
        %v6220 = vsub.f32 %v1865, %v6219
        %v6221 = vand.u32 %v6220, 4294901760
        %v6222 = vsub.f32 %v6220, %v6221
        %v6223 = vand.u32 %v6222, 4294901760
        %6224 = vmatpush1.msra.mxu0 %v6223
        %6225 = vmatprep.subr.mxu0 0.0
        %v6226 = vand.u32 %v1872, 4294901760
        %v6227 = vsub.f32 %v1872, %v6226
        %v6228 = vand.u32 %v6227, 4294901760
        %v6229 = vsub.f32 %v6227, %v6228
        %v6230 = vand.u32 %v6229, 4294901760
        %6231 = vmatpush1.msra.mxu0 %v6230
        %6232 = vmatprep.subr.mxu0 0.0
        %v6233 = vand.u32 %v1879, 4294901760
        %v6234 = vsub.f32 %v1879, %v6233
        %v6235 = vand.u32 %v6234, 4294901760
        %v6236 = vsub.f32 %v6234, %v6235
        %v6237 = vand.u32 %v6236, 4294901760
        %6238 = vmatpush1.msra.mxu0 %v6237
        %6239 = vmatprep.subr.mxu0 0.0
        %v6240 = vand.u32 %v1886, 4294901760
        %v6241 = vsub.f32 %v1886, %v6240
        %v6242 = vand.u32 %v6241, 4294901760
        %v6243 = vsub.f32 %v6241, %v6242
        %v6244 = vand.u32 %v6243, 4294901760
        %6245 = vmatpush1.msra.mxu0 %v6244
        %6246 = vmatprep.subr.mxu0 0.0
        %v6247 = vand.u32 %v1893, 4294901760
        %v6248 = vsub.f32 %v1893, %v6247
        %v6249 = vand.u32 %v6248, 4294901760
        %v6250 = vsub.f32 %v6248, %v6249
        %v6251 = vand.u32 %v6250, 4294901760
        %6252 = vmatpush1.msra.mxu0 %v6251
        %6253 = vmatprep.subr.mxu0 0.0
        %6254 = vmatpush1.msra.mxu0 0.0
        %6255 = vmatprep.subr.mxu0 0.0
        %6256 = vmatpush1.msra.mxu0 0.0
        %6257 = vmatprep.subr.mxu0 0.0
        %6258 = vmatpush1.msra.mxu0 0.0
        %6259 = vmatprep.subr.mxu0 0.0
        %6260 = vmatpush1.msra.mxu0 0.0
        %v6261 = vand.u32 %v2407, 4294901760
        %6262 = vmatprep.mubr.f32.mxu0 %v6261
        %v6263 = vand.u32 %v1696, 4294901760
        %6264 = vmatmul.mubr.f32.gmra.mrb[0].mxu0 %v6263
        %v6265 = vpop.f32.mrb[0].mxu0
        %v6266 = vadd.f32 %v6054, %v6265
        %v6267 = vpop.f32.mrb[0].mxu0
        %6268 = vdwg.mxu0
        %6269 = vmatprep.subr.mxu0 0.0
        %v6270 = vand.u32 %v1704, 4294901760
        %v6271 = vsub.f32 %v1704, %v6270
        %6272 = vmatpush1.msra.mxu0 %v6271
        %6273 = vmatprep.subr.mxu0 0.0
        %v6274 = vand.u32 %v1711, 4294901760
        %v6275 = vsub.f32 %v1711, %v6274
        %6276 = vmatpush1.msra.mxu0 %v6275
        %6277 = vmatprep.subr.mxu0 0.0
        %v6278 = vand.u32 %v1718, 4294901760
        %v6279 = vsub.f32 %v1718, %v6278
        %6280 = vmatpush1.msra.mxu0 %v6279
        %6281 = vmatprep.subr.mxu0 0.0
        %v6282 = vand.u32 %v1725, 4294901760
        %v6283 = vsub.f32 %v1725, %v6282
        %6284 = vmatpush1.msra.mxu0 %v6283
        %6285 = vmatprep.subr.mxu0 0.0
        %v6286 = vand.u32 %v1732, 4294901760
        %v6287 = vsub.f32 %v1732, %v6286
        %6288 = vmatpush1.msra.mxu0 %v6287
        %6289 = vmatprep.subr.mxu0 0.0
        %v6290 = vand.u32 %v1739, 4294901760
        %v6291 = vsub.f32 %v1739, %v6290
        %6292 = vmatpush1.msra.mxu0 %v6291
        %6293 = vmatprep.subr.mxu0 0.0
        %v6294 = vand.u32 %v1746, 4294901760
        %v6295 = vsub.f32 %v1746, %v6294
        %6296 = vmatpush1.msra.mxu0 %v6295
        %6297 = vmatprep.subr.mxu0 0.0
        %v6298 = vand.u32 %v1753, 4294901760
        %v6299 = vsub.f32 %v1753, %v6298
        %6300 = vmatpush1.msra.mxu0 %v6299
        %6301 = vmatprep.subr.mxu0 0.0
        %v6302 = vand.u32 %v1760, 4294901760
        %v6303 = vsub.f32 %v1760, %v6302
        %6304 = vmatpush1.msra.mxu0 %v6303
        %6305 = vmatprep.subr.mxu0 0.0
        %v6306 = vand.u32 %v1767, 4294901760
        %v6307 = vsub.f32 %v1767, %v6306
        %6308 = vmatpush1.msra.mxu0 %v6307
        %6309 = vmatprep.subr.mxu0 0.0
        %v6310 = vand.u32 %v1774, 4294901760
        %v6311 = vsub.f32 %v1774, %v6310
        %6312 = vmatpush1.msra.mxu0 %v6311
        %6313 = vmatprep.subr.mxu0 0.0
        %v6314 = vand.u32 %v1781, 4294901760
        %v6315 = vsub.f32 %v1781, %v6314
        %6316 = vmatpush1.msra.mxu0 %v6315
        %6317 = vmatprep.subr.mxu0 0.0
        %v6318 = vand.u32 %v1788, 4294901760
        %v6319 = vsub.f32 %v1788, %v6318
        %6320 = vmatpush1.msra.mxu0 %v6319
        %6321 = vmatprep.subr.mxu0 0.0
        %v6322 = vand.u32 %v1795, 4294901760
        %v6323 = vsub.f32 %v1795, %v6322
        %6324 = vmatpush1.msra.mxu0 %v6323
        %6325 = vmatprep.subr.mxu0 0.0
        %v6326 = vand.u32 %v1802, 4294901760
        %v6327 = vsub.f32 %v1802, %v6326
        %6328 = vmatpush1.msra.mxu0 %v6327
        %6329 = vmatprep.subr.mxu0 0.0
        %v6330 = vand.u32 %v1809, 4294901760
        %v6331 = vsub.f32 %v1809, %v6330
        %6332 = vmatpush1.msra.mxu0 %v6331
        %6333 = vmatprep.subr.mxu0 0.0
        %v6334 = vand.u32 %v1816, 4294901760
        %v6335 = vsub.f32 %v1816, %v6334
        %6336 = vmatpush1.msra.mxu0 %v6335
        %6337 = vmatprep.subr.mxu0 0.0
        %v6338 = vand.u32 %v1823, 4294901760
        %v6339 = vsub.f32 %v1823, %v6338
        %6340 = vmatpush1.msra.mxu0 %v6339
        %6341 = vmatprep.subr.mxu0 0.0
        %v6342 = vand.u32 %v1830, 4294901760
        %v6343 = vsub.f32 %v1830, %v6342
        %6344 = vmatpush1.msra.mxu0 %v6343
        %6345 = vmatprep.subr.mxu0 0.0
        %v6346 = vand.u32 %v1837, 4294901760
        %v6347 = vsub.f32 %v1837, %v6346
        %6348 = vmatpush1.msra.mxu0 %v6347
        %6349 = vmatprep.subr.mxu0 0.0
        %v6350 = vand.u32 %v1844, 4294901760
        %v6351 = vsub.f32 %v1844, %v6350
        %6352 = vmatpush1.msra.mxu0 %v6351
        %6353 = vmatprep.subr.mxu0 0.0
        %v6354 = vand.u32 %v1851, 4294901760
        %v6355 = vsub.f32 %v1851, %v6354
        %6356 = vmatpush1.msra.mxu0 %v6355
        %6357 = vmatprep.subr.mxu0 0.0
        %v6358 = vand.u32 %v1858, 4294901760
        %v6359 = vsub.f32 %v1858, %v6358
        %6360 = vmatpush1.msra.mxu0 %v6359
        %6361 = vmatprep.subr.mxu0 0.0
        %v6362 = vand.u32 %v1865, 4294901760
        %v6363 = vsub.f32 %v1865, %v6362
        %6364 = vmatpush1.msra.mxu0 %v6363
        %6365 = vmatprep.subr.mxu0 0.0
        %v6366 = vand.u32 %v1872, 4294901760
        %v6367 = vsub.f32 %v1872, %v6366
        %6368 = vmatpush1.msra.mxu0 %v6367
        %6369 = vmatprep.subr.mxu0 0.0
        %v6370 = vand.u32 %v1879, 4294901760
        %v6371 = vsub.f32 %v1879, %v6370
        %6372 = vmatpush1.msra.mxu0 %v6371
        %6373 = vmatprep.subr.mxu0 0.0
        %v6374 = vand.u32 %v1886, 4294901760
        %v6375 = vsub.f32 %v1886, %v6374
        %6376 = vmatpush1.msra.mxu0 %v6375
        %6377 = vmatprep.subr.mxu0 0.0
        %v6378 = vand.u32 %v1893, 4294901760
        %v6379 = vsub.f32 %v1893, %v6378
        %6380 = vmatpush1.msra.mxu0 %v6379
        %6381 = vmatprep.subr.mxu0 0.0
        %6382 = vmatpush1.msra.mxu0 0.0
        %6383 = vmatprep.subr.mxu0 0.0
        %6384 = vmatpush1.msra.mxu0 0.0
        %6385 = vmatprep.subr.mxu0 0.0
        %6386 = vmatpush1.msra.mxu0 0.0
        %6387 = vmatprep.subr.mxu0 0.0
        %6388 = vmatpush1.msra.mxu0 0.0
        %v6389 = vand.u32 %v2407, 4294901760
        %v6390 = vsub.f32 %v2407, %v6389
        %6391 = vmatprep.mubr.f32.mxu0 %v6390
        %v6392 = vand.u32 %v1696, 4294901760
        %v6393 = vsub.f32 %v1696, %v6392
        %6394 = vmatmul.mubr.f32.gmra.mrb[0].mxu0 %v6393
        %v6395 = vpop.f32.mrb[0].mxu0
        %v6396 = vadd.f32 %v6266, %v6395
        %v6397 = vpop.f32.mrb[0].mxu0
        %6398 = vdwg.mxu0
        %6399 = vmatprep.subr.mxu0 0.0
        %v6400 = vand.u32 %v1704, 4294901760
        %6401 = vmatpush1.msra.mxu0 %v6400
        %6402 = vmatprep.subr.mxu0 0.0
        %v6403 = vand.u32 %v1711, 4294901760
        %6404 = vmatpush1.msra.mxu0 %v6403
        %6405 = vmatprep.subr.mxu0 0.0
        %v6406 = vand.u32 %v1718, 4294901760
        %6407 = vmatpush1.msra.mxu0 %v6406
        %6408 = vmatprep.subr.mxu0 0.0
        %v6409 = vand.u32 %v1725, 4294901760
        %6410 = vmatpush1.msra.mxu0 %v6409
        %6411 = vmatprep.subr.mxu0 0.0
        %v6412 = vand.u32 %v1732, 4294901760
        %6413 = vmatpush1.msra.mxu0 %v6412
        %6414 = vmatprep.subr.mxu0 0.0
        %v6415 = vand.u32 %v1739, 4294901760
        %6416 = vmatpush1.msra.mxu0 %v6415
        %6417 = vmatprep.subr.mxu0 0.0
        %v6418 = vand.u32 %v1746, 4294901760
        %6419 = vmatpush1.msra.mxu0 %v6418
        %6420 = vmatprep.subr.mxu0 0.0
        %v6421 = vand.u32 %v1753, 4294901760
        %6422 = vmatpush1.msra.mxu0 %v6421
        %6423 = vmatprep.subr.mxu0 0.0
        %v6424 = vand.u32 %v1760, 4294901760
        %6425 = vmatpush1.msra.mxu0 %v6424
        %6426 = vmatprep.subr.mxu0 0.0
        %v6427 = vand.u32 %v1767, 4294901760
        %6428 = vmatpush1.msra.mxu0 %v6427
        %6429 = vmatprep.subr.mxu0 0.0
        %v6430 = vand.u32 %v1774, 4294901760
        %6431 = vmatpush1.msra.mxu0 %v6430
        %6432 = vmatprep.subr.mxu0 0.0
        %v6433 = vand.u32 %v1781, 4294901760
        %6434 = vmatpush1.msra.mxu0 %v6433
        %6435 = vmatprep.subr.mxu0 0.0
        %v6436 = vand.u32 %v1788, 4294901760
        %6437 = vmatpush1.msra.mxu0 %v6436
        %6438 = vmatprep.subr.mxu0 0.0
        %v6439 = vand.u32 %v1795, 4294901760
        %6440 = vmatpush1.msra.mxu0 %v6439
        %6441 = vmatprep.subr.mxu0 0.0
        %v6442 = vand.u32 %v1802, 4294901760
        %6443 = vmatpush1.msra.mxu0 %v6442
        %6444 = vmatprep.subr.mxu0 0.0
        %v6445 = vand.u32 %v1809, 4294901760
        %6446 = vmatpush1.msra.mxu0 %v6445
        %6447 = vmatprep.subr.mxu0 0.0
        %v6448 = vand.u32 %v1816, 4294901760
        %6449 = vmatpush1.msra.mxu0 %v6448
        %6450 = vmatprep.subr.mxu0 0.0
        %v6451 = vand.u32 %v1823, 4294901760
        %6452 = vmatpush1.msra.mxu0 %v6451
        %6453 = vmatprep.subr.mxu0 0.0
        %v6454 = vand.u32 %v1830, 4294901760
        %6455 = vmatpush1.msra.mxu0 %v6454
        %6456 = vmatprep.subr.mxu0 0.0
        %v6457 = vand.u32 %v1837, 4294901760
        %6458 = vmatpush1.msra.mxu0 %v6457
        %6459 = vmatprep.subr.mxu0 0.0
        %v6460 = vand.u32 %v1844, 4294901760
        %6461 = vmatpush1.msra.mxu0 %v6460
        %6462 = vmatprep.subr.mxu0 0.0
        %v6463 = vand.u32 %v1851, 4294901760
        %6464 = vmatpush1.msra.mxu0 %v6463
        %6465 = vmatprep.subr.mxu0 0.0
        %v6466 = vand.u32 %v1858, 4294901760
        %6467 = vmatpush1.msra.mxu0 %v6466
        %6468 = vmatprep.subr.mxu0 0.0
        %v6469 = vand.u32 %v1865, 4294901760
        %6470 = vmatpush1.msra.mxu0 %v6469
        %6471 = vmatprep.subr.mxu0 0.0
        %v6472 = vand.u32 %v1872, 4294901760
        %6473 = vmatpush1.msra.mxu0 %v6472
        %6474 = vmatprep.subr.mxu0 0.0
        %v6475 = vand.u32 %v1879, 4294901760
        %6476 = vmatpush1.msra.mxu0 %v6475
        %6477 = vmatprep.subr.mxu0 0.0
        %v6478 = vand.u32 %v1886, 4294901760
        %6479 = vmatpush1.msra.mxu0 %v6478
        %6480 = vmatprep.subr.mxu0 0.0
        %v6481 = vand.u32 %v1893, 4294901760
        %6482 = vmatpush1.msra.mxu0 %v6481
        %6483 = vmatprep.subr.mxu0 0.0
        %6484 = vmatpush1.msra.mxu0 0.0
        %6485 = vmatprep.subr.mxu0 0.0
        %6486 = vmatpush1.msra.mxu0 0.0
        %6487 = vmatprep.subr.mxu0 0.0
        %6488 = vmatpush1.msra.mxu0 0.0
        %6489 = vmatprep.subr.mxu0 0.0
        %6490 = vmatpush1.msra.mxu0 0.0
        %v6491 = vand.u32 %v2407, 4294901760
        %v6492 = vsub.f32 %v2407, %v6491
        %v6493 = vand.u32 %v6492, 4294901760
        %6494 = vmatprep.mubr.f32.mxu0 %v6493
        %v6495 = vand.u32 %v1696, 4294901760
        %v6496 = vsub.f32 %v1696, %v6495
        %v6497 = vand.u32 %v6496, 4294901760
        %6498 = vmatmul.mubr.f32.gmra.mrb[0].mxu0 %v6497
        %v6499 = vpop.f32.mrb[0].mxu0
        %v6500 = vadd.f32 %v6396, %v6499
        %v6501 = vpop.f32.mrb[0].mxu0
        %6502 = vdwg.mxu0
        %6503 = vmatprep.subr.mxu0 0.0
        %v6504 = vand.u32 %v1704, 4294901760
        %v6505 = vsub.f32 %v1704, %v6504
        %v6506 = vand.u32 %v6505, 4294901760
        %6507 = vmatpush1.msra.mxu0 %v6506
        %6508 = vmatprep.subr.mxu0 0.0
        %v6509 = vand.u32 %v1711, 4294901760
        %v6510 = vsub.f32 %v1711, %v6509
        %v6511 = vand.u32 %v6510, 4294901760
        %6512 = vmatpush1.msra.mxu0 %v6511
        %6513 = vmatprep.subr.mxu0 0.0
        %v6514 = vand.u32 %v1718, 4294901760
        %v6515 = vsub.f32 %v1718, %v6514
        %v6516 = vand.u32 %v6515, 4294901760
        %6517 = vmatpush1.msra.mxu0 %v6516
        %6518 = vmatprep.subr.mxu0 0.0
        %v6519 = vand.u32 %v1725, 4294901760
        %v6520 = vsub.f32 %v1725, %v6519
        %v6521 = vand.u32 %v6520, 4294901760
        %6522 = vmatpush1.msra.mxu0 %v6521
        %6523 = vmatprep.subr.mxu0 0.0
        %v6524 = vand.u32 %v1732, 4294901760
        %v6525 = vsub.f32 %v1732, %v6524
        %v6526 = vand.u32 %v6525, 4294901760
        %6527 = vmatpush1.msra.mxu0 %v6526
        %6528 = vmatprep.subr.mxu0 0.0
        %v6529 = vand.u32 %v1739, 4294901760
        %v6530 = vsub.f32 %v1739, %v6529
        %v6531 = vand.u32 %v6530, 4294901760
        %6532 = vmatpush1.msra.mxu0 %v6531
        %6533 = vmatprep.subr.mxu0 0.0
        %v6534 = vand.u32 %v1746, 4294901760
        %v6535 = vsub.f32 %v1746, %v6534
        %v6536 = vand.u32 %v6535, 4294901760
        %6537 = vmatpush1.msra.mxu0 %v6536
        %6538 = vmatprep.subr.mxu0 0.0
        %v6539 = vand.u32 %v1753, 4294901760
        %v6540 = vsub.f32 %v1753, %v6539
        %v6541 = vand.u32 %v6540, 4294901760
        %6542 = vmatpush1.msra.mxu0 %v6541
        %6543 = vmatprep.subr.mxu0 0.0
        %v6544 = vand.u32 %v1760, 4294901760
        %v6545 = vsub.f32 %v1760, %v6544
        %v6546 = vand.u32 %v6545, 4294901760
        %6547 = vmatpush1.msra.mxu0 %v6546
        %6548 = vmatprep.subr.mxu0 0.0
        %v6549 = vand.u32 %v1767, 4294901760
        %v6550 = vsub.f32 %v1767, %v6549
        %v6551 = vand.u32 %v6550, 4294901760
        %6552 = vmatpush1.msra.mxu0 %v6551
        %6553 = vmatprep.subr.mxu0 0.0
        %v6554 = vand.u32 %v1774, 4294901760
        %v6555 = vsub.f32 %v1774, %v6554
        %v6556 = vand.u32 %v6555, 4294901760
        %6557 = vmatpush1.msra.mxu0 %v6556
        %6558 = vmatprep.subr.mxu0 0.0
        %v6559 = vand.u32 %v1781, 4294901760
        %v6560 = vsub.f32 %v1781, %v6559
        %v6561 = vand.u32 %v6560, 4294901760
        %6562 = vmatpush1.msra.mxu0 %v6561
        %6563 = vmatprep.subr.mxu0 0.0
        %v6564 = vand.u32 %v1788, 4294901760
        %v6565 = vsub.f32 %v1788, %v6564
        %v6566 = vand.u32 %v6565, 4294901760
        %6567 = vmatpush1.msra.mxu0 %v6566
        %6568 = vmatprep.subr.mxu0 0.0
        %v6569 = vand.u32 %v1795, 4294901760
        %v6570 = vsub.f32 %v1795, %v6569
        %v6571 = vand.u32 %v6570, 4294901760
        %6572 = vmatpush1.msra.mxu0 %v6571
        %6573 = vmatprep.subr.mxu0 0.0
        %v6574 = vand.u32 %v1802, 4294901760
        %v6575 = vsub.f32 %v1802, %v6574
        %v6576 = vand.u32 %v6575, 4294901760
        %6577 = vmatpush1.msra.mxu0 %v6576
        %6578 = vmatprep.subr.mxu0 0.0
        %v6579 = vand.u32 %v1809, 4294901760
        %v6580 = vsub.f32 %v1809, %v6579
        %v6581 = vand.u32 %v6580, 4294901760
        %6582 = vmatpush1.msra.mxu0 %v6581
        %6583 = vmatprep.subr.mxu0 0.0
        %v6584 = vand.u32 %v1816, 4294901760
        %v6585 = vsub.f32 %v1816, %v6584
        %v6586 = vand.u32 %v6585, 4294901760
        %6587 = vmatpush1.msra.mxu0 %v6586
        %6588 = vmatprep.subr.mxu0 0.0
        %v6589 = vand.u32 %v1823, 4294901760
        %v6590 = vsub.f32 %v1823, %v6589
        %v6591 = vand.u32 %v6590, 4294901760
        %6592 = vmatpush1.msra.mxu0 %v6591
        %6593 = vmatprep.subr.mxu0 0.0
        %v6594 = vand.u32 %v1830, 4294901760
        %v6595 = vsub.f32 %v1830, %v6594
        %v6596 = vand.u32 %v6595, 4294901760
        %6597 = vmatpush1.msra.mxu0 %v6596
        %6598 = vmatprep.subr.mxu0 0.0
        %v6599 = vand.u32 %v1837, 4294901760
        %v6600 = vsub.f32 %v1837, %v6599
        %v6601 = vand.u32 %v6600, 4294901760
        %6602 = vmatpush1.msra.mxu0 %v6601
        %6603 = vmatprep.subr.mxu0 0.0
        %v6604 = vand.u32 %v1844, 4294901760
        %v6605 = vsub.f32 %v1844, %v6604
        %v6606 = vand.u32 %v6605, 4294901760
        %6607 = vmatpush1.msra.mxu0 %v6606
        %6608 = vmatprep.subr.mxu0 0.0
        %v6609 = vand.u32 %v1851, 4294901760
        %v6610 = vsub.f32 %v1851, %v6609
        %v6611 = vand.u32 %v6610, 4294901760
        %6612 = vmatpush1.msra.mxu0 %v6611
        %6613 = vmatprep.subr.mxu0 0.0
        %v6614 = vand.u32 %v1858, 4294901760
        %v6615 = vsub.f32 %v1858, %v6614
        %v6616 = vand.u32 %v6615, 4294901760
        %6617 = vmatpush1.msra.mxu0 %v6616
        %6618 = vmatprep.subr.mxu0 0.0
        %v6619 = vand.u32 %v1865, 4294901760
        %v6620 = vsub.f32 %v1865, %v6619
        %v6621 = vand.u32 %v6620, 4294901760
        %6622 = vmatpush1.msra.mxu0 %v6621
        %6623 = vmatprep.subr.mxu0 0.0
        %v6624 = vand.u32 %v1872, 4294901760
        %v6625 = vsub.f32 %v1872, %v6624
        %v6626 = vand.u32 %v6625, 4294901760
        %6627 = vmatpush1.msra.mxu0 %v6626
        %6628 = vmatprep.subr.mxu0 0.0
        %v6629 = vand.u32 %v1879, 4294901760
        %v6630 = vsub.f32 %v1879, %v6629
        %v6631 = vand.u32 %v6630, 4294901760
        %6632 = vmatpush1.msra.mxu0 %v6631
        %6633 = vmatprep.subr.mxu0 0.0
        %v6634 = vand.u32 %v1886, 4294901760
        %v6635 = vsub.f32 %v1886, %v6634
        %v6636 = vand.u32 %v6635, 4294901760
        %6637 = vmatpush1.msra.mxu0 %v6636
        %6638 = vmatprep.subr.mxu0 0.0
        %v6639 = vand.u32 %v1893, 4294901760
        %v6640 = vsub.f32 %v1893, %v6639
        %v6641 = vand.u32 %v6640, 4294901760
        %6642 = vmatpush1.msra.mxu0 %v6641
        %6643 = vmatprep.subr.mxu0 0.0
        %6644 = vmatpush1.msra.mxu0 0.0
        %6645 = vmatprep.subr.mxu0 0.0
        %6646 = vmatpush1.msra.mxu0 0.0
        %6647 = vmatprep.subr.mxu0 0.0
        %6648 = vmatpush1.msra.mxu0 0.0
        %6649 = vmatprep.subr.mxu0 0.0
        %6650 = vmatpush1.msra.mxu0 0.0
        %v6651 = vand.u32 %v2407, 4294901760
        %6652 = vmatprep.mubr.f32.mxu0 %v6651
        %v6653 = vand.u32 %v1696, 4294901760
        %6654 = vmatmul.mubr.f32.gmra.mrb[0].mxu0 %v6653
        %v6655 = vpop.f32.mrb[0].mxu0
        %v6656 = vadd.f32 %v6500, %v6655
        %v6657 = vpop.f32.mrb[0].mxu0
        %6658 = vdwg.mxu0
        %6659 = vmatprep.subr.mxu0 0.0
        %v6660 = vand.u32 %v1704, 4294901760
        %6661 = vmatpush1.msra.mxu0 %v6660
        %6662 = vmatprep.subr.mxu0 0.0
        %v6663 = vand.u32 %v1711, 4294901760
        %6664 = vmatpush1.msra.mxu0 %v6663
        %6665 = vmatprep.subr.mxu0 0.0
        %v6666 = vand.u32 %v1718, 4294901760
        %6667 = vmatpush1.msra.mxu0 %v6666
        %6668 = vmatprep.subr.mxu0 0.0
        %v6669 = vand.u32 %v1725, 4294901760
        %6670 = vmatpush1.msra.mxu0 %v6669
        %6671 = vmatprep.subr.mxu0 0.0
        %v6672 = vand.u32 %v1732, 4294901760
        %6673 = vmatpush1.msra.mxu0 %v6672
        %6674 = vmatprep.subr.mxu0 0.0
        %v6675 = vand.u32 %v1739, 4294901760
        %6676 = vmatpush1.msra.mxu0 %v6675
        %6677 = vmatprep.subr.mxu0 0.0
        %v6678 = vand.u32 %v1746, 4294901760
        %6679 = vmatpush1.msra.mxu0 %v6678
        %6680 = vmatprep.subr.mxu0 0.0
        %v6681 = vand.u32 %v1753, 4294901760
        %6682 = vmatpush1.msra.mxu0 %v6681
        %6683 = vmatprep.subr.mxu0 0.0
        %v6684 = vand.u32 %v1760, 4294901760
        %6685 = vmatpush1.msra.mxu0 %v6684
        %6686 = vmatprep.subr.mxu0 0.0
        %v6687 = vand.u32 %v1767, 4294901760
        %6688 = vmatpush1.msra.mxu0 %v6687
        %6689 = vmatprep.subr.mxu0 0.0
        %v6690 = vand.u32 %v1774, 4294901760
        %6691 = vmatpush1.msra.mxu0 %v6690
        %6692 = vmatprep.subr.mxu0 0.0
        %v6693 = vand.u32 %v1781, 4294901760
        %6694 = vmatpush1.msra.mxu0 %v6693
        %6695 = vmatprep.subr.mxu0 0.0
        %v6696 = vand.u32 %v1788, 4294901760
        %6697 = vmatpush1.msra.mxu0 %v6696
        %6698 = vmatprep.subr.mxu0 0.0
        %v6699 = vand.u32 %v1795, 4294901760
        %6700 = vmatpush1.msra.mxu0 %v6699
        %6701 = vmatprep.subr.mxu0 0.0
        %v6702 = vand.u32 %v1802, 4294901760
        %6703 = vmatpush1.msra.mxu0 %v6702
        %6704 = vmatprep.subr.mxu0 0.0
        %v6705 = vand.u32 %v1809, 4294901760
        %6706 = vmatpush1.msra.mxu0 %v6705
        %6707 = vmatprep.subr.mxu0 0.0
        %v6708 = vand.u32 %v1816, 4294901760
        %6709 = vmatpush1.msra.mxu0 %v6708
        %6710 = vmatprep.subr.mxu0 0.0
        %v6711 = vand.u32 %v1823, 4294901760
        %6712 = vmatpush1.msra.mxu0 %v6711
        %6713 = vmatprep.subr.mxu0 0.0
        %v6714 = vand.u32 %v1830, 4294901760
        %6715 = vmatpush1.msra.mxu0 %v6714
        %6716 = vmatprep.subr.mxu0 0.0
        %v6717 = vand.u32 %v1837, 4294901760
        %6718 = vmatpush1.msra.mxu0 %v6717
        %6719 = vmatprep.subr.mxu0 0.0
        %v6720 = vand.u32 %v1844, 4294901760
        %6721 = vmatpush1.msra.mxu0 %v6720
        %6722 = vmatprep.subr.mxu0 0.0
        %v6723 = vand.u32 %v1851, 4294901760
        %6724 = vmatpush1.msra.mxu0 %v6723
        %6725 = vmatprep.subr.mxu0 0.0
        %v6726 = vand.u32 %v1858, 4294901760
        %6727 = vmatpush1.msra.mxu0 %v6726
        %6728 = vmatprep.subr.mxu0 0.0
        %v6729 = vand.u32 %v1865, 4294901760
        %6730 = vmatpush1.msra.mxu0 %v6729
        %6731 = vmatprep.subr.mxu0 0.0
        %v6732 = vand.u32 %v1872, 4294901760
        %6733 = vmatpush1.msra.mxu0 %v6732
        %6734 = vmatprep.subr.mxu0 0.0
        %v6735 = vand.u32 %v1879, 4294901760
        %6736 = vmatpush1.msra.mxu0 %v6735
        %6737 = vmatprep.subr.mxu0 0.0
        %v6738 = vand.u32 %v1886, 4294901760
        %6739 = vmatpush1.msra.mxu0 %v6738
        %6740 = vmatprep.subr.mxu0 0.0
        %v6741 = vand.u32 %v1893, 4294901760
        %6742 = vmatpush1.msra.mxu0 %v6741
        %6743 = vmatprep.subr.mxu0 0.0
        %6744 = vmatpush1.msra.mxu0 0.0
        %6745 = vmatprep.subr.mxu0 0.0
        %6746 = vmatpush1.msra.mxu0 0.0
        %6747 = vmatprep.subr.mxu0 0.0
        %6748 = vmatpush1.msra.mxu0 0.0
        %6749 = vmatprep.subr.mxu0 0.0
        %6750 = vmatpush1.msra.mxu0 0.0
        %v6751 = vand.u32 %v2407, 4294901760
        %6752 = vmatprep.mubr.f32.mxu0 %v6751
        %v6753 = vand.u32 %v1696, 4294901760
        %6754 = vmatmul.mubr.f32.gmra.mrb[0].mxu0 %v6753
        %v6755 = vpop.f32.mrb[0].mxu0
        %v6756 = vadd.f32 %v6656, %v6755
        %v6757 = vpop.f32.mrb[0].mxu0
        %6758 = vdwg.mxu0
        %6759 = vst [vmem:[%s226] sm:$0xff] %v3585
        %6760 = vst [vmem:[%s226 + $0x8] sm:$0xff] %v3587
        %6761 = vst [vmem:[%s226 + $0x10] sm:$0xff] %v4765
        %6762 = vst [vmem:[%s226 + $0x18] sm:$0xff] %v4767
        %6763 = vst [vmem:[%s226 + $0x20] sm:$0xff] %v5945
        %6764 = vst [vmem:[%s226 + $0x28] sm:$0xff] %v5947
        %6765 = vst [vmem:[%s226 + $0x30] sm:$0xff] %v6756
        %s6766 = sand.u32 %s119, 1
        %s6767 = scalar_lea.sflag [#allocation5], %s6766
        %s6768 = sand.u32 %s119, 1
        %s6769 = smul.addr %s6768, 56
        %s6770 = scalar_lea.vmem [#allocation8], %s6769
        // Predicated region
        $region45: #{tpu_custom_call.1} parent=35 // pred_check
          %p6771 = pneg %p129
        $region46: #{tpu_custom_call.1} parent=35 // pred_check_branch
          %6773 = sbr.rel (%p6771) target = $region48
        $region47: #{tpu_custom_call.1} parent=35 // pred_region
          %s6775 = ssub.s32 896, 896
          %6776 = vsyncadd %s6767, %s6775
          %s6777 = smul.addr %s22, 7
          %s6778 = smul.addr %s6777, 128
          %s6779 = scalar_lea.hbm %s4, %s6778
          %s6781 = sshll.u32 %s6770, 4
          %s6782 = int_to_ptr.vmem [resolvable:$true] %s6781
          %6784 = dma.vmem_to_hbm [thread:$0]  %s6782, 896, %s6779, %s6767
        $region48: #{tpu_custom_call.1} parent=35 // pred_fallthru
          _
      $region36: #{tpu_custom_call.1} parent=5 // pred_fallthru
        _
      %p6785 = scmp.le.s32.totalorder 2, %s17
      // Predicated region
      $region49: #{tpu_custom_call.1} parent=5 // pred_check
        %p6786 = pneg %p6785
      $region50: #{tpu_custom_call.1} parent=5 // pred_check_branch
        %6788 = sbr.rel (%p6786) target = $region52
      $region51: #{tpu_custom_call.1} parent=5 // pred_region
        %s6789 = ssub.s32 %s17, 2
        // Predicated region
        $region53: #{tpu_custom_call.1} parent=51 // pred_check
          %p6790 = pneg %p135
        $region54: #{tpu_custom_call.1} parent=51 // pred_check_branch
          %6792 = sbr.rel (%p6790) target = $region56
        $region55: #{tpu_custom_call.1} parent=51 // pred_region
          %s6793 = sand.u32 %s120, 1
          %s6794 = scalar_lea.sflag [#allocation5], %s6793
          %s6795 = sand.u32 %s120, 1
          %s6796 = smul.addr %s6795, 56
          %s6797 = scalar_lea.vmem [#allocation8], %s6796
          %6798 = dma.done %s6794, 896
        $region56: #{tpu_custom_call.1} parent=51 // pred_fallthru
          _
      $region52: #{tpu_custom_call.1} parent=5 // pred_fallthru
        _
    $region6: #{tpu_custom_call.1} parent=1 // loop_footer
      %s21 = sadd.s32 1, %s17
    $region7: #{tpu_custom_call.1} parent=1 // loop_footer_branch
      %16 = sbr.rel target = $region3
    $region8: #{tpu_custom_call.1} parent=1 // loop_exit
      _
    %6799 = vsyncpa [#allocation4], 1
    %s6800 = scalar_lea.sflag [#allocation4], 1
    %6801 = vsyncpa %s6800, 1
    %6802 = vsyncpa [#allocation7], 1
    %6803 = vsyncpa [#allocation5], 1
    %s6804 = scalar_lea.sflag [#allocation5], 1
    %6805 = vsyncpa %s6804, 1

</llo_original>
